<compile_context>
chip_gen: v5e
topology: v5e:2x2
jax: 0.10.0
libtpu: 0.0.40
codegen_flags: <defaults>
</compile_context>

<pallas_src>
import jax
import jax.numpy as jnp
from jax.experimental import pallas as pl
from jax.experimental.pallas import tpu as pltpu

N_CLASSES = 10
VMEM_LIMIT_BYTES = 32 * 1024 * 1024  # above v5e's 16 MiB scoped default, safe on v6e/v7x


def _round_up(x, m):
    return ((x + m - 1) // m) * m


# ----------------------------- Pallas kernels ------------------------------ #

def _conv_pool_relu_kernel(q_ref, w_ref, b_ref, o_ref):
    """Fused conv(as matmul) + bias + 2x2 maxpool + ReLU.

    q_ref holds the four im2col patch matrices (one per position inside each
    2x2 pooling window) stacked on the leading axis.  Maxpool commutes with the
    per-channel bias add and with ReLU, so: out = relu(max_i(q_i @ w) + b).
    bf16 operands, f32 accumulation / epilogue.
    """
    w = w_ref[...]
    m = jnp.dot(q_ref[0], w, preferred_element_type=jnp.float32)
    m = jnp.maximum(m, jnp.dot(q_ref[1], w, preferred_element_type=jnp.float32))
    m = jnp.maximum(m, jnp.dot(q_ref[2], w, preferred_element_type=jnp.float32))
    m = jnp.maximum(m, jnp.dot(q_ref[3], w, preferred_element_type=jnp.float32))
    o_ref[...] = jnp.maximum(m + b_ref[...], 0.0).astype(o_ref.dtype)


def _classifier_kernel(x_ref, w1_ref, b1_ref, w2_ref, b2_ref, w3_ref, b3_ref,
                       logits_ref, probs_ref):
    """Fused fc1+ReLU -> fc2+ReLU -> fc3 -> softmax (exact, no lane padding)."""
    h = jnp.dot(x_ref[...], w1_ref[...], preferred_element_type=jnp.float32) + b1_ref[...]
    h = jnp.maximum(h, 0.0).astype(jnp.bfloat16)
    h = jnp.dot(h, w2_ref[...], preferred_element_type=jnp.float32) + b2_ref[...]
    h = jnp.maximum(h, 0.0).astype(jnp.bfloat16)
    logits = jnp.dot(h, w3_ref[...], preferred_element_type=jnp.float32) + b3_ref[...]
    logits_ref[...] = logits
    m = jnp.max(logits, axis=-1, keepdims=True)
    e = jnp.exp(logits - m)
    probs_ref[...] = e / jnp.sum(e, axis=-1, keepdims=True)   # exact softmax


# ------------------------------- wrappers ----------------------------------- #

def _choose_tile_m(M, K, N, in_bytes=2, out_bytes=2, budget_bytes=12 * 1024 * 1024):
    """Pick an M-tile (multiple of 8) such that:
      (a) resident weight/bias + double-buffered (4,tm,K) input and (tm,N) output
          blocks fit a conservative VMEM budget (safe under v5e's 16 MiB scoped
          default and v7x's smaller physical VMEM), and
      (b) there are >=2 grid programs whenever M allows it (v7x second TensorCore
          + DMA/compute pipelining even at small batch)."""
    resident = K * N * in_bytes * 2 + N * 4 * 2              # weight + bias, double-buffered
    per_row = (4 * K * in_bytes + N * out_bytes) * 2         # quad rows + out row, double-buffered
    avail = max(budget_bytes - resident, per_row * 8)
    tm = int(max(8, min(1024, (avail // per_row) // 8 * 8)))
    if tm >= M:
        tm = _round_up(max(1, (M + 1) // 2), 8) if M > 8 else _round_up(M, 8)
    return tm


def _im2col_pool_quadrant(x_nhwc, kh, kw, hp, wp, di, dj):
    """Patch matrix for conv-output positions (2h+di, 2w+dj); K ordered (kh, kw, C)."""
    b, _, _, c = x_nhwc.shape
    cols = []
    for ki in range(kh):
        for kj in range(kw):
            cols.append(x_nhwc[:, di + ki: di + ki + 2 * hp: 2,
                               dj + kj: dj + kj + 2 * wp: 2, :])
    p = jnp.stack(cols, axis=3)                      # (B, hp, wp, kh*kw, C) -- no transpose
    return p.reshape(b * hp * wp, kh * kw * c)


def conv_pool_relu(x_nhwc, w, b, kh=5, kw=5):
    """Conv2d(k=5, s=1, valid) + bias -> MaxPool(2) -> ReLU as one Pallas call."""
    B, H, W, C = x_nhwc.shape
    Ho, Wo = H - kh + 1, W - kw + 1
    Hp, Wp = Ho // 2, Wo // 2
    K, N = w.shape
    assert K == kh * kw * C

    # Four pool-quadrant patch matrices, stacked so a single BlockSpec / pad covers them.
    quads = jnp.stack([_im2col_pool_quadrant(x_nhwc, kh, kw, Hp, Wp, di, dj)
                       for di in (0, 1) for dj in (0, 1)], axis=0)     # (4, M, K) bf16

    M = B * Hp * Wp
    tm = _choose_tile_m(M, K, N)
    Mp = _round_up(M, tm)
    if Mp != M:
        quads = jnp.pad(quads, ((0, 0), (0, Mp - M), (0, 0)))

    out = pl.pallas_call(
        _conv_pool_relu_kernel,
        out_shape=jax.ShapeDtypeStruct((Mp, N), jnp.bfloat16),
        grid=(Mp // tm,),
        in_specs=[pl.BlockSpec((4, tm, K), lambda i: (0, i, 0)),
                  pl.BlockSpec((K, N), lambda i: (0, 0)),
                  pl.BlockSpec((1, N), lambda i: (0, 0))],
        out_specs=pl.BlockSpec((tm, N), lambda i: (i, 0)),
        compiler_params=pltpu.CompilerParams(
            dimension_semantics=("parallel",),
            vmem_limit_bytes=VMEM_LIMIT_BYTES),
    )(quads, w, b)
    return out[:M].reshape(B, Hp, Wp, N)


def classifier(feat, p):
    """Fused fc1+ReLU+fc2+ReLU+fc3+softmax; returns (logits, probs)."""
    B, Kf = feat.shape
    w1, b1 = p["fc1_w"], p["fc1_b"]
    w2, b2 = p["fc2_w"], p["fc2_b"]
    w3, b3 = p["fc3_w"], p["fc3_b"]
    assert Kf == w1.shape[0]
    N1, N2, N3 = w1.shape[1], w2.shape[1], w3.shape[1]

    tb = 256
    if tb >= B:
        tb = _round_up(max(1, (B + 1) // 2), 8) if B > 8 else _round_up(B, 8)
    Bp = _round_up(B, tb)
    if Bp != B:
        feat = jnp.pad(feat, ((0, Bp - B), (0, 0)))

    logits_p, probs_p = pl.pallas_call(
        _classifier_kernel,
        out_shape=(jax.ShapeDtypeStruct((Bp, N3), jnp.float32),
                   jax.ShapeDtypeStruct((Bp, N3), jnp.float32)),
        grid=(Bp // tb,),
        in_specs=[pl.BlockSpec((tb, Kf), lambda i: (i, 0)),
                  pl.BlockSpec((Kf, N1), lambda i: (0, 0)),
                  pl.BlockSpec((1, N1), lambda i: (0, 0)),
                  pl.BlockSpec((N1, N2), lambda i: (0, 0)),
                  pl.BlockSpec((1, N2), lambda i: (0, 0)),
                  pl.BlockSpec((N2, N3), lambda i: (0, 0)),
                  pl.BlockSpec((1, N3), lambda i: (0, 0))],
        out_specs=(pl.BlockSpec((tb, N3), lambda i: (i, 0)),
                   pl.BlockSpec((tb, N3), lambda i: (i, 0))),
        compiler_params=pltpu.CompilerParams(
            dimension_semantics=("parallel",),
            vmem_limit_bytes=VMEM_LIMIT_BYTES),
    )(feat, w1, b1, w2, b2, w3, b3)
    return logits_p[:B], probs_p[:B]


# ------------------------------- parameters --------------------------------- #

def init_params(key):
    """Synthetic params in PyTorch layout, with the layout permutations folded in
    once at init (no runtime activation transposes) and matmul weights in bf16."""
    ks = jax.random.split(key, 10)

    def conv_weight(k, out_c, in_c, kh, kw):
        # torch Conv2d weight (out_c, in_c, kh, kw) -> rows in (kh, kw, in_c) order.
        w = jax.random.normal(k, (out_c, in_c, kh, kw), jnp.float32) * 0.05
        w = jnp.transpose(w, (2, 3, 1, 0)).reshape(kh * kw * in_c, out_c)
        return w.astype(jnp.bfloat16)

    def bias(k, n):
        return (jax.random.normal(k, (n,), jnp.float32) * 0.01).reshape(1, n)  # f32 epilogue

    def fc1_weight(k, c=64, h=5, wsp=5, out_f=384):
        # torch Linear weight (out_f, c*h*w) with NCHW-flatten input order; fold the
        # runtime NHWC flatten (h, w, c) ordering in.
        w = jax.random.normal(k, (out_f, c, h, wsp), jnp.float32) * 0.05
        w = jnp.transpose(w, (2, 3, 1, 0)).reshape(h * wsp * c, out_f)          # (1600, 384)
        return w.astype(jnp.bfloat16)

    def fc_weight(k, in_f, out_f):
        w = jax.random.normal(k, (out_f, in_f), jnp.float32) * 0.05
        return jnp.transpose(w, (1, 0)).astype(jnp.bfloat16)

    return {
        "w1": conv_weight(ks[0], 64, 3, 5, 5),       # (75, 64)
        "b1": bias(ks[1], 64),
        "w2": conv_weight(ks[2], 64, 64, 5, 5),      # (1600, 64)
        "b2": bias(ks[3], 64),
        "fc1_w": fc1_weight(ks[4]),                  # (1600, 384)
        "fc1_b": bias(ks[5], 384),
        "fc2_w": fc_weight(ks[6], 384, 192),         # (384, 192)
        "fc2_b": bias(ks[7], 192),
        "fc3_w": fc_weight(ks[8], 192, N_CLASSES),   # (192, 10)
        "fc3_b": bias(ks[9], N_CLASSES),
    }


# -------------------------------- forward ----------------------------------- #

def lenet_forward(x_nchw, params):
    # NOTE: only the BATCH_NORM=False / GROUP_NORM=False branch is implemented.
    x = jnp.transpose(x_nchw, (0, 2, 3, 1)).astype(jnp.bfloat16)   # NCHW -> NHWC once, bf16
    y = conv_pool_relu(x, params["w1"], params["b1"])              # (B, 14, 14, 64) bf16
    y = conv_pool_relu(y, params["w2"], params["b2"])              # (B, 5, 5, 64)   bf16
    feat = y.reshape(y.shape[0], -1)   # NHWC flatten; fc1_w rows are permuted to match
    logits, probs = classifier(feat, params)
    return logits, probs


if __name__ == "__main__":
    key = jax.random.PRNGKey(0)
    pkey, xkey = jax.random.split(key)
    params = init_params(pkey)

    # The classifier's 64*5*5 flatten fixes the spatial size to 32x32 (CIFAR-like).
    x = jax.random.normal(xkey, (2, 3, 32, 32), jnp.float32)

    fwd = jax.jit(lenet_forward)
    logits, probs = fwd(x, params)
    jax.block_until_ready((logits, probs))

    assert logits.shape == (2, N_CLASSES)
    assert probs.shape == (2, N_CLASSES)
    assert bool(jnp.all(jnp.isfinite(logits)))
    assert bool(jnp.all(probs >= 0.0))
    assert bool(jnp.allclose(jnp.sum(probs, axis=1), 1.0, atol=1e-3))
    print("KERNEL_OK")
</pallas_src>

<mosaic_0001>
module attributes {stable_mosaic.version = 11 : i64} {
  func.func @_conv_pool_relu_kernel(%arg0: i32, %arg1: memref<4x200x75xbf16, #tpu.memory_space<vmem>>, %arg2: memref<75x64xbf16, #tpu.memory_space<vmem>>, %arg3: memref<1x64xf32, #tpu.memory_space<vmem>>, %arg4: memref<200x64xbf16, #tpu.memory_space<vmem>>) attributes {dimension_semantics = [#tpu.dimension_semantics<parallel>], iteration_bounds = array<i64: 2>, scalar_prefetch = 0 : i64, scratch_operands = 0 : i64, tpu.core_type = #tpu.core_type<tc>, window_params = [{transform_indices = @transform_0, window_bounds = array<i64: 4, 200, 75>}, {pipeline_mode = #tpu.pipeline_mode<synchronous>, transform_indices = @transform_1, window_bounds = array<i64: 75, 64>}, {pipeline_mode = #tpu.pipeline_mode<synchronous>, transform_indices = @transform_2, window_bounds = array<i64: 1, 64>}, {transform_indices = @transform_3, window_bounds = array<i64: 200, 64>}]} {
    %c0 = arith.constant 0 : index
    %c0_0 = arith.constant 0 : index
    %0 = vector.load %arg2[%c0, %c0_0] : memref<75x64xbf16, #tpu.memory_space<vmem>>, vector<75x64xbf16>
    %c0_1 = arith.constant 0 : index
    %c0_2 = arith.constant 0 : index
    %c0_3 = arith.constant 0 : index
    %1 = vector.load %arg1[%c0_1, %c0_2, %c0_3] : memref<4x200x75xbf16, #tpu.memory_space<vmem>>, vector<1x200x75xbf16>
    %2 = vector.shape_cast %1 : vector<1x200x75xbf16> to vector<200x75xbf16>
    %cst = arith.constant dense<0.000000e+00> : vector<200x64xf32>
    %3 = tpu.matmul %2, %0, %cst {dimension_numbers = #tpu.dot_dimension_numbers<[1], [0], [0], [1], [0, 0, 1, 1], [], []>} : vector<200x75xbf16>, vector<75x64xbf16>, vector<200x64xf32> -> vector<200x64xf32>
    %c1 = arith.constant 1 : index
    %c0_4 = arith.constant 0 : index
    %c0_5 = arith.constant 0 : index
    %4 = vector.load %arg1[%c1, %c0_4, %c0_5] : memref<4x200x75xbf16, #tpu.memory_space<vmem>>, vector<1x200x75xbf16>
    %5 = vector.shape_cast %4 : vector<1x200x75xbf16> to vector<200x75xbf16>
    %cst_6 = arith.constant dense<0.000000e+00> : vector<200x64xf32>
    %6 = tpu.matmul %5, %0, %cst_6 {dimension_numbers = #tpu.dot_dimension_numbers<[1], [0], [0], [1], [0, 0, 1, 1], [], []>} : vector<200x75xbf16>, vector<75x64xbf16>, vector<200x64xf32> -> vector<200x64xf32>
    %7 = arith.maximumf %3, %6 : vector<200x64xf32>
    %c2 = arith.constant 2 : index
    %c0_7 = arith.constant 0 : index
    %c0_8 = arith.constant 0 : index
    %8 = vector.load %arg1[%c2, %c0_7, %c0_8] : memref<4x200x75xbf16, #tpu.memory_space<vmem>>, vector<1x200x75xbf16>
    %9 = vector.shape_cast %8 : vector<1x200x75xbf16> to vector<200x75xbf16>
    %cst_9 = arith.constant dense<0.000000e+00> : vector<200x64xf32>
    %10 = tpu.matmul %9, %0, %cst_9 {dimension_numbers = #tpu.dot_dimension_numbers<[1], [0], [0], [1], [0, 0, 1, 1], [], []>} : vector<200x75xbf16>, vector<75x64xbf16>, vector<200x64xf32> -> vector<200x64xf32>
    %11 = arith.maximumf %7, %10 : vector<200x64xf32>
    %c3 = arith.constant 3 : index
    %c0_10 = arith.constant 0 : index
    %c0_11 = arith.constant 0 : index
    %12 = vector.load %arg1[%c3, %c0_10, %c0_11] : memref<4x200x75xbf16, #tpu.memory_space<vmem>>, vector<1x200x75xbf16>
    %13 = vector.shape_cast %12 : vector<1x200x75xbf16> to vector<200x75xbf16>
    %cst_12 = arith.constant dense<0.000000e+00> : vector<200x64xf32>
    %14 = tpu.matmul %13, %0, %cst_12 {dimension_numbers = #tpu.dot_dimension_numbers<[1], [0], [0], [1], [0, 0, 1, 1], [], []>} : vector<200x75xbf16>, vector<75x64xbf16>, vector<200x64xf32> -> vector<200x64xf32>
    %15 = arith.maximumf %11, %14 : vector<200x64xf32>
    %c0_13 = arith.constant 0 : index
    %c0_14 = arith.constant 0 : index
    %16 = vector.load %arg3[%c0_13, %c0_14] : memref<1x64xf32, #tpu.memory_space<vmem>>, vector<1x64xf32>
    %17 = vector.broadcast %16 : vector<1x64xf32> to vector<200x64xf32>
    %18 = arith.addf %15, %17 : vector<200x64xf32>
    %cst_15 = arith.constant 0.000000e+00 : f32
    %19 = vector.broadcast %cst_15 : f32 to vector<200x64xf32>
    %20 = arith.maximumf %18, %19 : vector<200x64xf32>
    %21 = arith.truncf %20 : vector<200x64xf32> to vector<200x64xbf16>
    %c0_16 = arith.constant 0 : index
    %c0_17 = arith.constant 0 : index
    %22 = vector.load %arg4[%c0_16, %c0_17] : memref<200x64xbf16, #tpu.memory_space<vmem>>, vector<200x64xbf16>
    tpu.vector_store %arg4[%c0_16, %c0_17], %21 {strides = array<i32>} : memref<200x64xbf16, #tpu.memory_space<vmem>>, vector<200x64xbf16>,
    return
  }
  func.func @transform_0(%arg0: i32) -> (i32, i32, i32) {
    %c0_i32 = arith.constant 0 : i32
    %c0_i32_0 = arith.constant 0 : i32
    %c0_i32_1 = arith.constant 0 : i32
    return %c0_i32, %arg0, %c0_i32_0 : i32, i32, i32
  }
  func.func @transform_1(%arg0: i32) -> (i32, i32) {
    %c0_i32 = arith.constant 0 : i32
    %c0_i32_0 = arith.constant 0 : i32
    %c0_i32_1 = arith.constant 0 : i32
    return %c0_i32, %c0_i32_0 : i32, i32
  }
  func.func @transform_2(%arg0: i32) -> (i32, i32) {
    %c0_i32 = arith.constant 0 : i32
    %c0_i32_0 = arith.constant 0 : i32
    %c0_i32_1 = arith.constant 0 : i32
    return %c0_i32, %c0_i32_0 : i32, i32
  }
  func.func @transform_3(%arg0: i32) -> (i32, i32) {
    %c0_i32 = arith.constant 0 : i32
    %c0_i32_0 = arith.constant 0 : i32
    return %arg0, %c0_i32 : i32, i32
  }
}

module attributes {stable_mosaic.version = 11 : i64} {
  func.func @_conv_pool_relu_kernel(%arg0: i32, %arg1: memref<4x32x1600xbf16, #tpu.memory_space<vmem>>, %arg2: memref<1600x64xbf16, #tpu.memory_space<vmem>>, %arg3: memref<1x64xf32, #tpu.memory_space<vmem>>, %arg4: memref<32x64xbf16, #tpu.memory_space<vmem>>) attributes {dimension_semantics = [#tpu.dimension_semantics<parallel>], iteration_bounds = array<i64: 2>, scalar_prefetch = 0 : i64, scratch_operands = 0 : i64, tpu.core_type = #tpu.core_type<tc>, window_params = [{transform_indices = @transform_0, window_bounds = array<i64: 4, 32, 1600>}, {pipeline_mode = #tpu.pipeline_mode<synchronous>, transform_indices = @transform_1, window_bounds = array<i64: 1600, 64>}, {pipeline_mode = #tpu.pipeline_mode<synchronous>, transform_indices = @transform_2, window_bounds = array<i64: 1, 64>}, {transform_indices = @transform_3, window_bounds = array<i64: 32, 64>}]} {
    %c0 = arith.constant 0 : index
    %c0_0 = arith.constant 0 : index
    %0 = vector.load %arg2[%c0, %c0_0] : memref<1600x64xbf16, #tpu.memory_space<vmem>>, vector<1600x64xbf16>
    %c0_1 = arith.constant 0 : index
    %c0_2 = arith.constant 0 : index
    %c0_3 = arith.constant 0 : index
    %1 = vector.load %arg1[%c0_1, %c0_2, %c0_3] : memref<4x32x1600xbf16, #tpu.memory_space<vmem>>, vector<1x32x1600xbf16>
    %2 = vector.shape_cast %1 : vector<1x32x1600xbf16> to vector<32x1600xbf16>
    %cst = arith.constant dense<0.000000e+00> : vector<32x64xf32>
    %3 = tpu.matmul %2, %0, %cst {dimension_numbers = #tpu.dot_dimension_numbers<[1], [0], [0], [1], [0, 0, 1, 1], [], []>} : vector<32x1600xbf16>, vector<1600x64xbf16>, vector<32x64xf32> -> vector<32x64xf32>
    %c1 = arith.constant 1 : index
    %c0_4 = arith.constant 0 : index
    %c0_5 = arith.constant 0 : index
    %4 = vector.load %arg1[%c1, %c0_4, %c0_5] : memref<4x32x1600xbf16, #tpu.memory_space<vmem>>, vector<1x32x1600xbf16>
    %5 = vector.shape_cast %4 : vector<1x32x1600xbf16> to vector<32x1600xbf16>
    %cst_6 = arith.constant dense<0.000000e+00> : vector<32x64xf32>
    %6 = tpu.matmul %5, %0, %cst_6 {dimension_numbers = #tpu.dot_dimension_numbers<[1], [0], [0], [1], [0, 0, 1, 1], [], []>} : vector<32x1600xbf16>, vector<1600x64xbf16>, vector<32x64xf32> -> vector<32x64xf32>
    %7 = arith.maximumf %3, %6 : vector<32x64xf32>
    %c2 = arith.constant 2 : index
    %c0_7 = arith.constant 0 : index
    %c0_8 = arith.constant 0 : index
    %8 = vector.load %arg1[%c2, %c0_7, %c0_8] : memref<4x32x1600xbf16, #tpu.memory_space<vmem>>, vector<1x32x1600xbf16>
    %9 = vector.shape_cast %8 : vector<1x32x1600xbf16> to vector<32x1600xbf16>
    %cst_9 = arith.constant dense<0.000000e+00> : vector<32x64xf32>
    %10 = tpu.matmul %9, %0, %cst_9 {dimension_numbers = #tpu.dot_dimension_numbers<[1], [0], [0], [1], [0, 0, 1, 1], [], []>} : vector<32x1600xbf16>, vector<1600x64xbf16>, vector<32x64xf32> -> vector<32x64xf32>
    %11 = arith.maximumf %7, %10 : vector<32x64xf32>
    %c3 = arith.constant 3 : index
    %c0_10 = arith.constant 0 : index
    %c0_11 = arith.constant 0 : index
    %12 = vector.load %arg1[%c3, %c0_10, %c0_11] : memref<4x32x1600xbf16, #tpu.memory_space<vmem>>, vector<1x32x1600xbf16>
    %13 = vector.shape_cast %12 : vector<1x32x1600xbf16> to vector<32x1600xbf16>
    %cst_12 = arith.constant dense<0.000000e+00> : vector<32x64xf32>
    %14 = tpu.matmul %13, %0, %cst_12 {dimension_numbers = #tpu.dot_dimension_numbers<[1], [0], [0], [1], [0, 0, 1, 1], [], []>} : vector<32x1600xbf16>, vector<1600x64xbf16>, vector<32x64xf32> -> vector<32x64xf32>
    %15 = arith.maximumf %11, %14 : vector<32x64xf32>
    %c0_13 = arith.constant 0 : index
    %c0_14 = arith.constant 0 : index
    %16 = vector.load %arg3[%c0_13, %c0_14] : memref<1x64xf32, #tpu.memory_space<vmem>>, vector<1x64xf32>
    %17 = vector.broadcast %16 : vector<1x64xf32> to vector<32x64xf32>
    %18 = arith.addf %15, %17 : vector<32x64xf32>
    %cst_15 = arith.constant 0.000000e+00 : f32
    %19 = vector.broadcast %cst_15 : f32 to vector<32x64xf32>
    %20 = arith.maximumf %18, %19 : vector<32x64xf32>
    %21 = arith.truncf %20 : vector<32x64xf32> to vector<32x64xbf16>
    %c0_16 = arith.constant 0 : index
    %c0_17 = arith.constant 0 : index
    %22 = vector.load %arg4[%c0_16, %c0_17] : memref<32x64xbf16, #tpu.memory_space<vmem>>, vector<32x64xbf16>
    tpu.vector_store %arg4[%c0_16, %c0_17], %21 {strides = array<i32>} : memref<32x64xbf16, #tpu.memory_space<vmem>>, vector<32x64xbf16>,
    return
  }
  func.func @transform_0(%arg0: i32) -> (i32, i32, i32) {
    %c0_i32 = arith.constant 0 : i32
    %c0_i32_0 = arith.constant 0 : i32
    %c0_i32_1 = arith.constant 0 : i32
    return %c0_i32, %arg0, %c0_i32_0 : i32, i32, i32
  }
  func.func @transform_1(%arg0: i32) -> (i32, i32) {
    %c0_i32 = arith.constant 0 : i32
    %c0_i32_0 = arith.constant 0 : i32
    %c0_i32_1 = arith.constant 0 : i32
    return %c0_i32, %c0_i32_0 : i32, i32
  }
  func.func @transform_2(%arg0: i32) -> (i32, i32) {
    %c0_i32 = arith.constant 0 : i32
    %c0_i32_0 = arith.constant 0 : i32
    %c0_i32_1 = arith.constant 0 : i32
    return %c0_i32, %c0_i32_0 : i32, i32
  }
  func.func @transform_3(%arg0: i32) -> (i32, i32) {
    %c0_i32 = arith.constant 0 : i32
    %c0_i32_0 = arith.constant 0 : i32
    return %arg0, %c0_i32 : i32, i32
  }
}

module attributes {stable_mosaic.version = 11 : i64} {
  func.func @_classifier_kernel(%arg0: i32, %arg1: memref<8x1600xbf16, #tpu.memory_space<vmem>>, %arg2: memref<1600x384xbf16, #tpu.memory_space<vmem>>, %arg3: memref<1x384xf32, #tpu.memory_space<vmem>>, %arg4: memref<384x192xbf16, #tpu.memory_space<vmem>>, %arg5: memref<1x192xf32, #tpu.memory_space<vmem>>, %arg6: memref<192x10xbf16, #tpu.memory_space<vmem>>, %arg7: memref<1x10xf32, #tpu.memory_space<vmem>>, %arg8: memref<8x10xf32, #tpu.memory_space<vmem>>, %arg9: memref<8x10xf32, #tpu.memory_space<vmem>>) attributes {dimension_semantics = [#tpu.dimension_semantics<parallel>], iteration_bounds = array<i64: 1>, scalar_prefetch = 0 : i64, scratch_operands = 0 : i64, tpu.core_type = #tpu.core_type<tc>, window_params = [{transform_indices = @transform_0, window_bounds = array<i64: 8, 1600>}, {pipeline_mode = #tpu.pipeline_mode<synchronous>, transform_indices = @transform_1, window_bounds = array<i64: 1600, 384>}, {pipeline_mode = #tpu.pipeline_mode<synchronous>, transform_indices = @transform_2, window_bounds = array<i64: 1, 384>}, {pipeline_mode = #tpu.pipeline_mode<synchronous>, transform_indices = @transform_3, window_bounds = array<i64: 384, 192>}, {pipeline_mode = #tpu.pipeline_mode<synchronous>, transform_indices = @transform_4, window_bounds = array<i64: 1, 192>}, {pipeline_mode = #tpu.pipeline_mode<synchronous>, transform_indices = @transform_5, window_bounds = array<i64: 192, 10>}, {pipeline_mode = #tpu.pipeline_mode<synchronous>, transform_indices = @transform_6, window_bounds = array<i64: 1, 10>}, {transform_indices = @transform_7, window_bounds = array<i64: 8, 10>}, {transform_indices = @transform_8, window_bounds = array<i64: 8, 10>}]} {
    %c0 = arith.constant 0 : index
    %c0_0 = arith.constant 0 : index
    %0 = vector.load %arg1[%c0, %c0_0] : memref<8x1600xbf16, #tpu.memory_space<vmem>>, vector<8x1600xbf16>
    %c0_1 = arith.constant 0 : index
    %c0_2 = arith.constant 0 : index
    %1 = vector.load %arg2[%c0_1, %c0_2] : memref<1600x384xbf16, #tpu.memory_space<vmem>>, vector<1600x384xbf16>
    %cst = arith.constant dense<0.000000e+00> : vector<8x384xf32>
    %2 = tpu.matmul %0, %1, %cst {dimension_numbers = #tpu.dot_dimension_numbers<[1], [0], [0], [1], [0, 0, 1, 1], [], []>} : vector<8x1600xbf16>, vector<1600x384xbf16>, vector<8x384xf32> -> vector<8x384xf32>
    %c0_3 = arith.constant 0 : index
    %c0_4 = arith.constant 0 : index
    %3 = vector.load %arg3[%c0_3, %c0_4] : memref<1x384xf32, #tpu.memory_space<vmem>>, vector<1x384xf32>
    %4 = vector.broadcast %3 : vector<1x384xf32> to vector<8x384xf32>
    %5 = arith.addf %2, %4 : vector<8x384xf32>
    %cst_5 = arith.constant 0.000000e+00 : f32
    %6 = vector.broadcast %cst_5 : f32 to vector<8x384xf32>
    %7 = arith.maximumf %5, %6 : vector<8x384xf32>
    %8 = arith.truncf %7 : vector<8x384xf32> to vector<8x384xbf16>
    %c0_6 = arith.constant 0 : index
    %c0_7 = arith.constant 0 : index
    %9 = vector.load %arg4[%c0_6, %c0_7] : memref<384x192xbf16, #tpu.memory_space<vmem>>, vector<384x192xbf16>
    %cst_8 = arith.constant dense<0.000000e+00> : vector<8x192xf32>
    %10 = tpu.matmul %8, %9, %cst_8 {dimension_numbers = #tpu.dot_dimension_numbers<[1], [0], [0], [1], [0, 0, 1, 1], [], []>} : vector<8x384xbf16>, vector<384x192xbf16>, vector<8x192xf32> -> vector<8x192xf32>
    %c0_9 = arith.constant 0 : index
    %c0_10 = arith.constant 0 : index
    %11 = vector.load %arg5[%c0_9, %c0_10] : memref<1x192xf32, #tpu.memory_space<vmem>>, vector<1x192xf32>
    %12 = vector.broadcast %11 : vector<1x192xf32> to vector<8x192xf32>
    %13 = arith.addf %10, %12 : vector<8x192xf32>
    %cst_11 = arith.constant 0.000000e+00 : f32
    %14 = vector.broadcast %cst_11 : f32 to vector<8x192xf32>
    %15 = arith.maximumf %13, %14 : vector<8x192xf32>
    %16 = arith.truncf %15 : vector<8x192xf32> to vector<8x192xbf16>
    %c0_12 = arith.constant 0 : index
    %c0_13 = arith.constant 0 : index
    %17 = vector.load %arg6[%c0_12, %c0_13] : memref<192x10xbf16, #tpu.memory_space<vmem>>, vector<192x10xbf16>
    %cst_14 = arith.constant dense<0.000000e+00> : vector<8x10xf32>
    %18 = tpu.matmul %16, %17, %cst_14 {dimension_numbers = #tpu.dot_dimension_numbers<[1], [0], [0], [1], [0, 0, 1, 1], [], []>} : vector<8x192xbf16>, vector<192x10xbf16>, vector<8x10xf32> -> vector<8x10xf32>
    %c0_15 = arith.constant 0 : index
    %c0_16 = arith.constant 0 : index
    %19 = vector.load %arg7[%c0_15, %c0_16] : memref<1x10xf32, #tpu.memory_space<vmem>>, vector<1x10xf32>
    %20 = vector.broadcast %19 : vector<1x10xf32> to vector<8x10xf32>
    %21 = arith.addf %18, %20 : vector<8x10xf32>
    %c0_17 = arith.constant 0 : index
    %c0_18 = arith.constant 0 : index
    %22 = vector.load %arg8[%c0_17, %c0_18] : memref<8x10xf32, #tpu.memory_space<vmem>>, vector<8x10xf32>
    tpu.vector_store %arg8[%c0_17, %c0_18], %21 {strides = array<i32>} : memref<8x10xf32, #tpu.memory_space<vmem>>, vector<8x10xf32>,
    %cst_19 = arith.constant dense<0xFF800000> : vector<8xf32>
    %23 = vector.multi_reduction <maximumf>, %21, %cst_19 [1] : vector<8x10xf32> to vector<8xf32>
    %24 = vector.shape_cast %23 : vector<8xf32> to vector<8x1xf32>
    %25 = vector.broadcast %24 : vector<8x1xf32> to vector<8x10xf32>
    %26 = arith.subf %21, %25 : vector<8x10xf32>
    %27 = math.exp %26 : vector<8x10xf32>
    %cst_20 = arith.constant dense<0.000000e+00> : vector<8xf32>
    %28 = vector.multi_reduction <add>, %27, %cst_20 [1] : vector<8x10xf32> to vector<8xf32>
    %29 = vector.shape_cast %28 : vector<8xf32> to vector<8x1xf32>
    %30 = vector.broadcast %29 : vector<8x1xf32> to vector<8x10xf32>
    %31 = arith.divf %27, %30 : vector<8x10xf32>
    %c0_21 = arith.constant 0 : index
    %c0_22 = arith.constant 0 : index
    %32 = vector.load %arg9[%c0_21, %c0_22] : memref<8x10xf32, #tpu.memory_space<vmem>>, vector<8x10xf32>
    tpu.vector_store %arg9[%c0_21, %c0_22], %31 {strides = array<i32>} : memref<8x10xf32, #tpu.memory_space<vmem>>, vector<8x10xf32>,
    return
  }
  func.func @transform_0(%arg0: i32) -> (i32, i32) {
    %c0_i32 = arith.constant 0 : i32
    %c0_i32_0 = arith.constant 0 : i32
    return %arg0, %c0_i32 : i32, i32
  }
  func.func @transform_1(%arg0: i32) -> (i32, i32) {
    %c0_i32 = arith.constant 0 : i32
    %c0_i32_0 = arith.constant 0 : i32
    %c0_i32_1 = arith.constant 0 : i32
    return %c0_i32, %c0_i32_0 : i32, i32
  }
  func.func @transform_2(%arg0: i32) -> (i32, i32) {
    %c0_i32 = arith.constant 0 : i32
    %c0_i32_0 = arith.constant 0 : i32
    %c0_i32_1 = arith.constant 0 : i32
    return %c0_i32, %c0_i32_0 : i32, i32
  }
  func.func @transform_3(%arg0: i32) -> (i32, i32) {
    %c0_i32 = arith.constant 0 : i32
    %c0_i32_0 = arith.constant 0 : i32
    %c0_i32_1 = arith.constant 0 : i32
    return %c0_i32, %c0_i32_0 : i32, i32
  }
  func.func @transform_4(%arg0: i32) -> (i32, i32) {
    %c0_i32 = arith.constant 0 : i32
    %c0_i32_0 = arith.constant 0 : i32
    %c0_i32_1 = arith.constant 0 : i32
    return %c0_i32, %c0_i32_0 : i32, i32
  }
  func.func @transform_5(%arg0: i32) -> (i32, i32) {
    %c0_i32 = arith.constant 0 : i32
    %c0_i32_0 = arith.constant 0 : i32
    %c0_i32_1 = arith.constant 0 : i32
    return %c0_i32, %c0_i32_0 : i32, i32
  }
  func.func @transform_6(%arg0: i32) -> (i32, i32) {
    %c0_i32 = arith.constant 0 : i32
    %c0_i32_0 = arith.constant 0 : i32
    %c0_i32_1 = arith.constant 0 : i32
    return %c0_i32, %c0_i32_0 : i32, i32
  }
  func.func @transform_7(%arg0: i32) -> (i32, i32) {
    %c0_i32 = arith.constant 0 : i32
    %c0_i32_0 = arith.constant 0 : i32
    return %arg0, %c0_i32 : i32, i32
  }
  func.func @transform_8(%arg0: i32) -> (i32, i32) {
    %c0_i32 = arith.constant 0 : i32
    %c0_i32_0 = arith.constant 0 : i32
    return %arg0, %c0_i32 : i32, i32
  }
}

</mosaic_0001>

<llo_original>
// kernel: lenet_forward.3
$region0: #{lenet_forward.3}
  #allocation0 [shape = 'u32[]', space=smem, size = 0x4, offset = 0x4, fixed_abs, tag = 'smem constant byte address 0x4 - core index']
  #allocation1 [shape = 'u32[72,128]{1,0:T(1,128)}', space=vmem, size = 0x9000, scoped, tag = 'internal scratch']
  %s0 = inlined_call_operand.vmem [shape: bf16[4,400,75], index: 0, kind: input, shape index: {}]
  %s1 = inlined_call_operand.vmem [shape: bf16[75,64], index: 1, kind: input, shape index: {}]
  %s2 = inlined_call_operand.vmem [shape: f32[1,64], index: 2, kind: input, shape index: {}]
  %s3 = inlined_call_operand.vmem [shape: bf16[400,64], index: 3, kind: output, shape index: {}]
  %s4 = sld [smem:[#allocation0]]
  $region86: #{lenet_forward.3} parent=0
    _
  %s6 = ssub.s32 1, %s4
  %s7 = scalar_select 0, %s6, %s4
  $region1: #{lenet_forward.3} parent=0
    #allocation2 [shape = 'u8[409600]{0}', space=vmem, size = 0x64000, scoped, tag = 'input window, operand 0']
    loop: start=0, step=1, limit=4
    $region2: #{lenet_forward.3} parent=1 // loop_pre_header
      _
    $region3: #{lenet_forward.3} parent=1 // loop_header
      %s9 = sphi 0, %s13
      %p10 = scmp.ge.s32.totalorder %s9, 4
      %s19 = sphi 0, %s21
      %s22 = sphi 0, %s19
      %s23 = sphi 0, %s22
      %s39 = sphi 0, %s23
      %s43 = sphi 0, %s43
      %s45 = sphi 0, %s43
      %s46 = sphi 0, %s45
      %s60 = sphi 0, %s46
      %s64 = sphi 0, %s64
      %s66 = sphi 0, %s64
      %s67 = sphi 0, %s66
      %s81 = sphi 0, %s67
      %s87 = sphi 0, %s89
      %s90 = sphi 0, %s87
      %s91 = sphi 0, %s90
      %s107 = sphi 0, %s91
    $region4: #{lenet_forward.3} parent=1 // loop_header_branch
      %12 = sbr.rel (%p10) target = $region8
    $region5: #{lenet_forward.3} parent=1 // loop_body
      %s14 = ssub.s32 %s9, 1
      %s15 = ssub.s32 %s9, 2
      %s16 = sadd.s32 %s9, 1
      %s17 = ssub.s32 %s9, %s16
      %p18 = scmp.eq.s32.totalorder %s17, 0
      %s20 = sadd.s32 %s19, 1
      %s21 = scalar_select %p18, %s19, %s20
      %p24 = pneg %p18
      %p25 = scmp.eq.s32.totalorder %s9, 1
      %p26 = por %p24, %p25
      %p27 = scmp.ne.s32.totalorder %s19, %s22
      %p28 = scmp.eq.s32.totalorder %s9, 0
      %p29 = por %p27, %p28
      %p30 = scmp.ne.s32.totalorder %s19, %s22
      %p31 = scmp.eq.s32.totalorder %s14, 1
      %p32 = por %p30, %p31
      %p33 = scmp.ne.s32.totalorder %s22, %s23
      %p34 = scmp.eq.s32.totalorder %s14, 0
      %p35 = por %p33, %p34
      %p36 = scmp.ne.s32.totalorder %s22, %s23
      %p37 = scmp.eq.s32.totalorder %s15, 1
      %p38 = por %p36, %p37
      %p40 = scmp.ne.s32.totalorder %s23, %s39
      %p41 = scmp.eq.s32.totalorder %s15, 0
      %p42 = por %p40, %p41
      %s44 = sadd.s32 %s43, 1
      %p47 = scmp.eq.s32.totalorder %s9, 1
      %p48 = scmp.ne.s32.totalorder %s43, %s45
      %p49 = scmp.eq.s32.totalorder %s9, 0
      %p50 = por %p48, %p49
      %p51 = scmp.ne.s32.totalorder %s43, %s45
      %p52 = scmp.eq.s32.totalorder %s14, 1
      %p53 = por %p51, %p52
      %p54 = scmp.ne.s32.totalorder %s45, %s46
      %p55 = scmp.eq.s32.totalorder %s14, 0
      %p56 = por %p54, %p55
      %p57 = scmp.ne.s32.totalorder %s45, %s46
      %p58 = scmp.eq.s32.totalorder %s15, 1
      %p59 = por %p57, %p58
      %p61 = scmp.ne.s32.totalorder %s46, %s60
      %p62 = scmp.eq.s32.totalorder %s15, 0
      %p63 = por %p61, %p62
      %s65 = sadd.s32 %s64, 1
      %p68 = scmp.eq.s32.totalorder %s9, 1
      %p69 = scmp.ne.s32.totalorder %s64, %s66
      %p70 = scmp.eq.s32.totalorder %s9, 0
      %p71 = por %p69, %p70
      %p72 = scmp.ne.s32.totalorder %s64, %s66
      %p73 = scmp.eq.s32.totalorder %s14, 1
      %p74 = por %p72, %p73
      %p75 = scmp.ne.s32.totalorder %s66, %s67
      %p76 = scmp.eq.s32.totalorder %s14, 0
      %p77 = por %p75, %p76
      %p78 = scmp.ne.s32.totalorder %s66, %s67
      %p79 = scmp.eq.s32.totalorder %s15, 1
      %p80 = por %p78, %p79
      %p82 = scmp.ne.s32.totalorder %s67, %s81
      %p83 = scmp.eq.s32.totalorder %s15, 0
      %p84 = por %p82, %p83
      %s85 = ssub.s32 %s9, %s16
      %p86 = scmp.eq.s32.totalorder %s85, 0
      %s88 = sadd.s32 %s87, 1
      %s89 = scalar_select %p86, %s87, %s88
      %p92 = pneg %p86
      %p93 = scmp.eq.s32.totalorder %s9, 1
      %p94 = por %p92, %p93
      %p95 = scmp.ne.s32.totalorder %s87, %s90
      %p96 = scmp.eq.s32.totalorder %s9, 0
      %p97 = por %p95, %p96
      %p98 = scmp.ne.s32.totalorder %s87, %s90
      %p99 = scmp.eq.s32.totalorder %s14, 1
      %p100 = por %p98, %p99
      %p101 = scmp.ne.s32.totalorder %s90, %s91
      %p102 = scmp.eq.s32.totalorder %s14, 0
      %p103 = por %p101, %p102
      %p104 = scmp.ne.s32.totalorder %s90, %s91
      %p105 = scmp.eq.s32.totalorder %s15, 1
      %p106 = por %p104, %p105
      %p108 = scmp.ne.s32.totalorder %s91, %s107
      %p109 = scmp.eq.s32.totalorder %s15, 0
      %p110 = por %p108, %p109
      %p111 = scmp.le.s32.totalorder 1, %s9
      %p112 = scmp.lt.s32.totalorder %s9, 3
      %p113 = pnand %p111, %p112
      %p114 = pneg %p113
      // Predicated region
      $region9: #{lenet_forward.3} parent=5 // pred_check
        _
      $region10: #{lenet_forward.3} parent=5 // pred_check_branch
        %116 = sbr.rel (%p113) target = $region12
      $region11: #{lenet_forward.3} parent=5 // pred_region
        %s117 = ssub.s32 %s9, 1
        // Predicated region
        $region13: #{lenet_forward.3} parent=11 // pred_check
          %p118 = pneg %p56
        $region14: #{lenet_forward.3} parent=11 // pred_check_branch
          %120 = sbr.rel (%p118) target = $region16
        $region15: #{lenet_forward.3} parent=11 // pred_region
          _
        $region16: #{lenet_forward.3} parent=11 // pred_fallthru
          _
        // Predicated region
        $region17: #{lenet_forward.3} parent=11 // pred_check
          %p121 = pneg %p77
        $region18: #{lenet_forward.3} parent=11 // pred_check_branch
          %123 = sbr.rel (%p121) target = $region20
        $region19: #{lenet_forward.3} parent=11 // pred_region
          _
        $region20: #{lenet_forward.3} parent=11 // pred_fallthru
          _
      $region12: #{lenet_forward.3} parent=5 // pred_fallthru
        _
      %p124 = scmp.lt.s32.totalorder %s9, 2
      // Predicated region
      $region21: #{lenet_forward.3} parent=5 // pred_check
        %p125 = pneg %p124
      $region22: #{lenet_forward.3} parent=5 // pred_check_branch
        %127 = sbr.rel (%p125) target = $region24
      $region23: #{lenet_forward.3} parent=5 // pred_region
        // Predicated region
        $region25: #{lenet_forward.3} parent=23 // pred_check
          %p128 = pneg %p29
        $region26: #{lenet_forward.3} parent=23 // pred_check_branch
          %130 = sbr.rel (%p128) target = $region28
        $region27: #{lenet_forward.3} parent=23 // pred_region
          %s131 = sand.u32 %s19, 1
          %s132 = sand.u32 %s19, 1
          %s133 = smul.addr %s132, 400
          %s134 = scalar_lea.vmem [#allocation2], %s133
          %s135 = smul.u32 25, %s9
          %s136 = smul.addr %s135, 4
          %s137 = scalar_lea.vmem %s0, %s136
          // Predicated region
          $region29: #{lenet_forward.3} parent=27 // pred_check
            _
          $region30: #{lenet_forward.3} parent=27 // pred_check_branch
            %139 = sbr.rel (0) target = $region32
          $region31: #{lenet_forward.3} parent=27 // pred_region
            // Predicated region
            $region33: #{lenet_forward.3} parent=31 // pred_check
              _
            $region34: #{lenet_forward.3} parent=31 // pred_check_branch
              %141 = sbr.rel target = $region36
            $region35: #{lenet_forward.3} parent=31 // pred_region
              // Predicated region
              $region48: #{lenet_forward.3} parent=35 // pred_check
                _
              $region49: #{lenet_forward.3} parent=35 // pred_check_branch
                %355 = sbr.rel (0) target = $region51
              $region50: #{lenet_forward.3} parent=35 // pred_region
                loop: start=0, step=1, limit=1
                $region52: #{lenet_forward.3} parent=50 // loop_pre_header
                  _
                $region53: #{lenet_forward.3} parent=50 // loop_header
                  %s357 = sphi 0, %s361
                  %p358 = scmp.ge.s32.totalorder %s357, 1
                  %s362 = sphi %s137, %s137
                  %s363 = sphi %s134, %s134
                $region54: #{lenet_forward.3} parent=50 // loop_header_branch
                  %360 = sbr.rel (%p358) target = $region58
                $region55: #{lenet_forward.3} parent=50 // loop_body
                  _
                $region56: #{lenet_forward.3} parent=50 // loop_footer
                  %s361 = sadd.s32 1, %s357
                $region57: #{lenet_forward.3} parent=50 // loop_footer_branch
                  %356 = sbr.rel target = $region53
                $region58: #{lenet_forward.3} parent=50 // loop_exit
                  _
                %s365 = ssub.s32 16, 1
                loop: start=0, step=1, limit=1
                $region59: #{lenet_forward.3} parent=50 // loop_pre_header
                  _
                $region60: #{lenet_forward.3} parent=50 // loop_header
                  %s367 = sphi 0, %s371
                  %p368 = scmp.ge.s32.totalorder %s367, 1
                  %s372 = sphi %s137, %s137
                  %s373 = sphi %s134, %s134
                $region61: #{lenet_forward.3} parent=50 // loop_header_branch
                  %370 = sbr.rel (%p368) target = $region65
                $region62: #{lenet_forward.3} parent=50 // loop_body
                  %v374 = vld [vmem:[%s372] sm:%s365]
                  %375 = vst [vmem:[%s373] sm:%s365] %v374
                  %v376 = vld [vmem:[%s372 + $0x4] sm:%s365]
                  %377 = vst [vmem:[%s373 + $0x4] sm:%s365] %v376
                  %v378 = vld [vmem:[%s372 + $0x8] sm:%s365]
                  %379 = vst [vmem:[%s373 + $0x8] sm:%s365] %v378
                  %v380 = vld [vmem:[%s372 + $0xc] sm:%s365]
                  %381 = vst [vmem:[%s373 + $0xc] sm:%s365] %v380
                  %v382 = vld [vmem:[%s372 + $0x10] sm:%s365]
                  %383 = vst [vmem:[%s373 + $0x10] sm:%s365] %v382
                  %v384 = vld [vmem:[%s372 + $0x14] sm:%s365]
                  %385 = vst [vmem:[%s373 + $0x14] sm:%s365] %v384
                  %v386 = vld [vmem:[%s372 + $0x18] sm:%s365]
                  %387 = vst [vmem:[%s373 + $0x18] sm:%s365] %v386
                  %v388 = vld [vmem:[%s372 + $0x1c] sm:%s365]
                  %389 = vst [vmem:[%s373 + $0x1c] sm:%s365] %v388
                  %v390 = vld [vmem:[%s372 + $0x20] sm:%s365]
                  %391 = vst [vmem:[%s373 + $0x20] sm:%s365] %v390
                  %v392 = vld [vmem:[%s372 + $0x24] sm:%s365]
                  %393 = vst [vmem:[%s373 + $0x24] sm:%s365] %v392
                  %v394 = vld [vmem:[%s372 + $0x28] sm:%s365]
                  %395 = vst [vmem:[%s373 + $0x28] sm:%s365] %v394
                  %v396 = vld [vmem:[%s372 + $0x2c] sm:%s365]
                  %397 = vst [vmem:[%s373 + $0x2c] sm:%s365] %v396
                  %v398 = vld [vmem:[%s372 + $0x30] sm:%s365]
                  %399 = vst [vmem:[%s373 + $0x30] sm:%s365] %v398
                  %v400 = vld [vmem:[%s372 + $0x34] sm:%s365]
                  %401 = vst [vmem:[%s373 + $0x34] sm:%s365] %v400
                  %v402 = vld [vmem:[%s372 + $0x38] sm:%s365]
                  %403 = vst [vmem:[%s373 + $0x38] sm:%s365] %v402
                  %v404 = vld [vmem:[%s372 + $0x3c] sm:%s365]
                  %405 = vst [vmem:[%s373 + $0x3c] sm:%s365] %v404
                  %v406 = vld [vmem:[%s372 + $0x40] sm:%s365]
                  %407 = vst [vmem:[%s373 + $0x40] sm:%s365] %v406
                  %v408 = vld [vmem:[%s372 + $0x44] sm:%s365]
                  %409 = vst [vmem:[%s373 + $0x44] sm:%s365] %v408
                  %v410 = vld [vmem:[%s372 + $0x48] sm:%s365]
                  %411 = vst [vmem:[%s373 + $0x48] sm:%s365] %v410
                  %v412 = vld [vmem:[%s372 + $0x4c] sm:%s365]
                  %413 = vst [vmem:[%s373 + $0x4c] sm:%s365] %v412
                  %v414 = vld [vmem:[%s372 + $0x50] sm:%s365]
                  %415 = vst [vmem:[%s373 + $0x50] sm:%s365] %v414
                  %v416 = vld [vmem:[%s372 + $0x54] sm:%s365]
                  %417 = vst [vmem:[%s373 + $0x54] sm:%s365] %v416
                  %v418 = vld [vmem:[%s372 + $0x58] sm:%s365]
                  %419 = vst [vmem:[%s373 + $0x58] sm:%s365] %v418
                  %v420 = vld [vmem:[%s372 + $0x5c] sm:%s365]
                  %421 = vst [vmem:[%s373 + $0x5c] sm:%s365] %v420
                  %v422 = vld [vmem:[%s372 + $0x60] sm:%s365]
                  %423 = vst [vmem:[%s373 + $0x60] sm:%s365] %v422
                  %v424 = vld [vmem:[%s372 + $0xc8] sm:%s365]
                  %425 = vst [vmem:[%s373 + $0x64] sm:%s365] %v424
                  %v426 = vld [vmem:[%s372 + $0xcc] sm:%s365]
                  %427 = vst [vmem:[%s373 + $0x68] sm:%s365] %v426
                  %v428 = vld [vmem:[%s372 + $0xd0] sm:%s365]
                  %429 = vst [vmem:[%s373 + $0x6c] sm:%s365] %v428
                  %v430 = vld [vmem:[%s372 + $0xd4] sm:%s365]
                  %431 = vst [vmem:[%s373 + $0x70] sm:%s365] %v430
                  %v432 = vld [vmem:[%s372 + $0xd8] sm:%s365]
                  %433 = vst [vmem:[%s373 + $0x74] sm:%s365] %v432
                  %v434 = vld [vmem:[%s372 + $0xdc] sm:%s365]
                  %435 = vst [vmem:[%s373 + $0x78] sm:%s365] %v434
                  %v436 = vld [vmem:[%s372 + $0xe0] sm:%s365]
                  %437 = vst [vmem:[%s373 + $0x7c] sm:%s365] %v436
                  %v438 = vld [vmem:[%s372 + $0xe4] sm:%s365]
                  %439 = vst [vmem:[%s373 + $0x80] sm:%s365] %v438
                  %v440 = vld [vmem:[%s372 + $0xe8] sm:%s365]
                  %441 = vst [vmem:[%s373 + $0x84] sm:%s365] %v440
                  %v442 = vld [vmem:[%s372 + $0xec] sm:%s365]
                  %443 = vst [vmem:[%s373 + $0x88] sm:%s365] %v442
                  %v444 = vld [vmem:[%s372 + $0xf0] sm:%s365]
                  %445 = vst [vmem:[%s373 + $0x8c] sm:%s365] %v444
                  %v446 = vld [vmem:[%s372 + $0xf4] sm:%s365]
                  %447 = vst [vmem:[%s373 + $0x90] sm:%s365] %v446
                  %v448 = vld [vmem:[%s372 + $0xf8] sm:%s365]
                  %449 = vst [vmem:[%s373 + $0x94] sm:%s365] %v448
                  %v450 = vld [vmem:[%s372 + $0xfc] sm:%s365]
                  %451 = vst [vmem:[%s373 + $0x98] sm:%s365] %v450
                  %v452 = vld [vmem:[%s372 + $0x100] sm:%s365]
                  %453 = vst [vmem:[%s373 + $0x9c] sm:%s365] %v452
                  %v454 = vld [vmem:[%s372 + $0x104] sm:%s365]
                  %455 = vst [vmem:[%s373 + $0xa0] sm:%s365] %v454
                  %v456 = vld [vmem:[%s372 + $0x108] sm:%s365]
                  %457 = vst [vmem:[%s373 + $0xa4] sm:%s365] %v456
                  %v458 = vld [vmem:[%s372 + $0x10c] sm:%s365]
                  %459 = vst [vmem:[%s373 + $0xa8] sm:%s365] %v458
                  %v460 = vld [vmem:[%s372 + $0x110] sm:%s365]
                  %461 = vst [vmem:[%s373 + $0xac] sm:%s365] %v460
                  %v462 = vld [vmem:[%s372 + $0x114] sm:%s365]
                  %463 = vst [vmem:[%s373 + $0xb0] sm:%s365] %v462
                  %v464 = vld [vmem:[%s372 + $0x118] sm:%s365]
                  %465 = vst [vmem:[%s373 + $0xb4] sm:%s365] %v464
                  %v466 = vld [vmem:[%s372 + $0x11c] sm:%s365]
                  %467 = vst [vmem:[%s373 + $0xb8] sm:%s365] %v466
                  %v468 = vld [vmem:[%s372 + $0x120] sm:%s365]
                  %469 = vst [vmem:[%s373 + $0xbc] sm:%s365] %v468
                  %v470 = vld [vmem:[%s372 + $0x124] sm:%s365]
                  %471 = vst [vmem:[%s373 + $0xc0] sm:%s365] %v470
                  %v472 = vld [vmem:[%s372 + $0x128] sm:%s365]
                  %473 = vst [vmem:[%s373 + $0xc4] sm:%s365] %v472
                  %v474 = vld [vmem:[%s372 + $0x190] sm:%s365]
                  %475 = vst [vmem:[%s373 + $0xc8] sm:%s365] %v474
                  %v476 = vld [vmem:[%s372 + $0x194] sm:%s365]
                  %477 = vst [vmem:[%s373 + $0xcc] sm:%s365] %v476
                  %v478 = vld [vmem:[%s372 + $0x198] sm:%s365]
                  %479 = vst [vmem:[%s373 + $0xd0] sm:%s365] %v478
                  %v480 = vld [vmem:[%s372 + $0x19c] sm:%s365]
                  %481 = vst [vmem:[%s373 + $0xd4] sm:%s365] %v480
                  %v482 = vld [vmem:[%s372 + $0x1a0] sm:%s365]
                  %483 = vst [vmem:[%s373 + $0xd8] sm:%s365] %v482
                  %v484 = vld [vmem:[%s372 + $0x1a4] sm:%s365]
                  %485 = vst [vmem:[%s373 + $0xdc] sm:%s365] %v484
                  %v486 = vld [vmem:[%s372 + $0x1a8] sm:%s365]
                  %487 = vst [vmem:[%s373 + $0xe0] sm:%s365] %v486
                  %v488 = vld [vmem:[%s372 + $0x1ac] sm:%s365]
                  %489 = vst [vmem:[%s373 + $0xe4] sm:%s365] %v488
                  %v490 = vld [vmem:[%s372 + $0x1b0] sm:%s365]
                  %491 = vst [vmem:[%s373 + $0xe8] sm:%s365] %v490
                  %v492 = vld [vmem:[%s372 + $0x1b4] sm:%s365]
                  %493 = vst [vmem:[%s373 + $0xec] sm:%s365] %v492
                  %v494 = vld [vmem:[%s372 + $0x1b8] sm:%s365]
                  %495 = vst [vmem:[%s373 + $0xf0] sm:%s365] %v494
                  %v496 = vld [vmem:[%s372 + $0x1bc] sm:%s365]
                  %497 = vst [vmem:[%s373 + $0xf4] sm:%s365] %v496
                  %v498 = vld [vmem:[%s372 + $0x1c0] sm:%s365]
                  %499 = vst [vmem:[%s373 + $0xf8] sm:%s365] %v498
                  %v500 = vld [vmem:[%s372 + $0x1c4] sm:%s365]
                  %501 = vst [vmem:[%s373 + $0xfc] sm:%s365] %v500
                  %v502 = vld [vmem:[%s372 + $0x1c8] sm:%s365]
                  %503 = vst [vmem:[%s373 + $0x100] sm:%s365] %v502
                  %v504 = vld [vmem:[%s372 + $0x1cc] sm:%s365]
                  %505 = vst [vmem:[%s373 + $0x104] sm:%s365] %v504
                  %v506 = vld [vmem:[%s372 + $0x1d0] sm:%s365]
                  %507 = vst [vmem:[%s373 + $0x108] sm:%s365] %v506
                  %v508 = vld [vmem:[%s372 + $0x1d4] sm:%s365]
                  %509 = vst [vmem:[%s373 + $0x10c] sm:%s365] %v508
                  %v510 = vld [vmem:[%s372 + $0x1d8] sm:%s365]
                  %511 = vst [vmem:[%s373 + $0x110] sm:%s365] %v510
                  %v512 = vld [vmem:[%s372 + $0x1dc] sm:%s365]
                  %513 = vst [vmem:[%s373 + $0x114] sm:%s365] %v512
                  %v514 = vld [vmem:[%s372 + $0x1e0] sm:%s365]
                  %515 = vst [vmem:[%s373 + $0x118] sm:%s365] %v514
                  %v516 = vld [vmem:[%s372 + $0x1e4] sm:%s365]
                  %517 = vst [vmem:[%s373 + $0x11c] sm:%s365] %v516
                  %v518 = vld [vmem:[%s372 + $0x1e8] sm:%s365]
                  %519 = vst [vmem:[%s373 + $0x120] sm:%s365] %v518
                  %v520 = vld [vmem:[%s372 + $0x1ec] sm:%s365]
                  %521 = vst [vmem:[%s373 + $0x124] sm:%s365] %v520
                  %v522 = vld [vmem:[%s372 + $0x1f0] sm:%s365]
                  %523 = vst [vmem:[%s373 + $0x128] sm:%s365] %v522
                  %v524 = vld [vmem:[%s372 + $0x258] sm:%s365]
                  %525 = vst [vmem:[%s373 + $0x12c] sm:%s365] %v524
                  %v526 = vld [vmem:[%s372 + $0x25c] sm:%s365]
                  %527 = vst [vmem:[%s373 + $0x130] sm:%s365] %v526
                  %v528 = vld [vmem:[%s372 + $0x260] sm:%s365]
                  %529 = vst [vmem:[%s373 + $0x134] sm:%s365] %v528
                  %v530 = vld [vmem:[%s372 + $0x264] sm:%s365]
                  %531 = vst [vmem:[%s373 + $0x138] sm:%s365] %v530
                  %v532 = vld [vmem:[%s372 + $0x268] sm:%s365]
                  %533 = vst [vmem:[%s373 + $0x13c] sm:%s365] %v532
                  %v534 = vld [vmem:[%s372 + $0x26c] sm:%s365]
                  %535 = vst [vmem:[%s373 + $0x140] sm:%s365] %v534
                  %v536 = vld [vmem:[%s372 + $0x270] sm:%s365]
                  %537 = vst [vmem:[%s373 + $0x144] sm:%s365] %v536
                  %v538 = vld [vmem:[%s372 + $0x274] sm:%s365]
                  %539 = vst [vmem:[%s373 + $0x148] sm:%s365] %v538
                  %v540 = vld [vmem:[%s372 + $0x278] sm:%s365]
                  %541 = vst [vmem:[%s373 + $0x14c] sm:%s365] %v540
                  %v542 = vld [vmem:[%s372 + $0x27c] sm:%s365]
                  %543 = vst [vmem:[%s373 + $0x150] sm:%s365] %v542
                  %v544 = vld [vmem:[%s372 + $0x280] sm:%s365]
                  %545 = vst [vmem:[%s373 + $0x154] sm:%s365] %v544
                  %v546 = vld [vmem:[%s372 + $0x284] sm:%s365]
                  %547 = vst [vmem:[%s373 + $0x158] sm:%s365] %v546
                  %v548 = vld [vmem:[%s372 + $0x288] sm:%s365]
                  %549 = vst [vmem:[%s373 + $0x15c] sm:%s365] %v548
                  %v550 = vld [vmem:[%s372 + $0x28c] sm:%s365]
                  %551 = vst [vmem:[%s373 + $0x160] sm:%s365] %v550
                  %v552 = vld [vmem:[%s372 + $0x290] sm:%s365]
                  %553 = vst [vmem:[%s373 + $0x164] sm:%s365] %v552
                  %v554 = vld [vmem:[%s372 + $0x294] sm:%s365]
                  %555 = vst [vmem:[%s373 + $0x168] sm:%s365] %v554
                  %v556 = vld [vmem:[%s372 + $0x298] sm:%s365]
                  %557 = vst [vmem:[%s373 + $0x16c] sm:%s365] %v556
                  %v558 = vld [vmem:[%s372 + $0x29c] sm:%s365]
                  %559 = vst [vmem:[%s373 + $0x170] sm:%s365] %v558
                  %v560 = vld [vmem:[%s372 + $0x2a0] sm:%s365]
                  %561 = vst [vmem:[%s373 + $0x174] sm:%s365] %v560
                  %v562 = vld [vmem:[%s372 + $0x2a4] sm:%s365]
                  %563 = vst [vmem:[%s373 + $0x178] sm:%s365] %v562
                  %v564 = vld [vmem:[%s372 + $0x2a8] sm:%s365]
                  %565 = vst [vmem:[%s373 + $0x17c] sm:%s365] %v564
                  %v566 = vld [vmem:[%s372 + $0x2ac] sm:%s365]
                  %567 = vst [vmem:[%s373 + $0x180] sm:%s365] %v566
                  %v568 = vld [vmem:[%s372 + $0x2b0] sm:%s365]
                  %569 = vst [vmem:[%s373 + $0x184] sm:%s365] %v568
                  %v570 = vld [vmem:[%s372 + $0x2b4] sm:%s365]
                  %571 = vst [vmem:[%s373 + $0x188] sm:%s365] %v570
                  %v572 = vld [vmem:[%s372 + $0x2b8] sm:%s365]
                  %573 = vst [vmem:[%s373 + $0x18c] sm:%s365] %v572
                $region63: #{lenet_forward.3} parent=50 // loop_footer
                  %s371 = sadd.s32 1, %s367
                $region64: #{lenet_forward.3} parent=50 // loop_footer_branch
                  %366 = sbr.rel target = $region60
                $region65: #{lenet_forward.3} parent=50 // loop_exit
                  _
              $region51: #{lenet_forward.3} parent=35 // pred_fallthru
                _
            $region36: #{lenet_forward.3} parent=31 // pred_fallthru
              _
            // Predicated region
            $region37: #{lenet_forward.3} parent=31 // pred_check
              _
            $region38: #{lenet_forward.3} parent=31 // pred_check_branch
              %143 = sbr.rel (0) target = $region40
            $region39: #{lenet_forward.3} parent=31 // pred_region
              %s145 = ssub.s32 16, 1
              loop: start=0, step=1, limit=1
              $region41: #{lenet_forward.3} parent=39 // loop_pre_header
                _
              $region42: #{lenet_forward.3} parent=39 // loop_header
                %s147 = sphi 0, %s151
                %p148 = scmp.ge.s32.totalorder %s147, 1
                %s152 = sphi %s137, %s137
                %s153 = sphi %s134, %s134
              $region43: #{lenet_forward.3} parent=39 // loop_header_branch
                %150 = sbr.rel (%p148) target = $region47
              $region44: #{lenet_forward.3} parent=39 // loop_body
                %v154 = vld [vmem:[%s152] sm:%s145]
                %155 = vst [vmem:[%s153] sm:%s145] %v154
                %v156 = vld [vmem:[%s152 + $0x4] sm:%s145]
                %157 = vst [vmem:[%s153 + $0x4] sm:%s145] %v156
                %v158 = vld [vmem:[%s152 + $0x8] sm:%s145]
                %159 = vst [vmem:[%s153 + $0x8] sm:%s145] %v158
                %v160 = vld [vmem:[%s152 + $0xc] sm:%s145]
                %161 = vst [vmem:[%s153 + $0xc] sm:%s145] %v160
                %v162 = vld [vmem:[%s152 + $0x10] sm:%s145]
                %163 = vst [vmem:[%s153 + $0x10] sm:%s145] %v162
                %v164 = vld [vmem:[%s152 + $0x14] sm:%s145]
                %165 = vst [vmem:[%s153 + $0x14] sm:%s145] %v164
                %v166 = vld [vmem:[%s152 + $0x18] sm:%s145]
                %167 = vst [vmem:[%s153 + $0x18] sm:%s145] %v166
                %v168 = vld [vmem:[%s152 + $0x1c] sm:%s145]
                %169 = vst [vmem:[%s153 + $0x1c] sm:%s145] %v168
                %v170 = vld [vmem:[%s152 + $0x20] sm:%s145]
                %171 = vst [vmem:[%s153 + $0x20] sm:%s145] %v170
                %v172 = vld [vmem:[%s152 + $0x24] sm:%s145]
                %173 = vst [vmem:[%s153 + $0x24] sm:%s145] %v172
                %v174 = vld [vmem:[%s152 + $0x28] sm:%s145]
                %175 = vst [vmem:[%s153 + $0x28] sm:%s145] %v174
                %v176 = vld [vmem:[%s152 + $0x2c] sm:%s145]
                %177 = vst [vmem:[%s153 + $0x2c] sm:%s145] %v176
                %v178 = vld [vmem:[%s152 + $0x30] sm:%s145]
                %179 = vst [vmem:[%s153 + $0x30] sm:%s145] %v178
                %v180 = vld [vmem:[%s152 + $0x34] sm:%s145]
                %181 = vst [vmem:[%s153 + $0x34] sm:%s145] %v180
                %v182 = vld [vmem:[%s152 + $0x38] sm:%s145]
                %183 = vst [vmem:[%s153 + $0x38] sm:%s145] %v182
                %v184 = vld [vmem:[%s152 + $0x3c] sm:%s145]
                %185 = vst [vmem:[%s153 + $0x3c] sm:%s145] %v184
                %v186 = vld [vmem:[%s152 + $0x40] sm:%s145]
                %187 = vst [vmem:[%s153 + $0x40] sm:%s145] %v186
                %v188 = vld [vmem:[%s152 + $0x44] sm:%s145]
                %189 = vst [vmem:[%s153 + $0x44] sm:%s145] %v188
                %v190 = vld [vmem:[%s152 + $0x48] sm:%s145]
                %191 = vst [vmem:[%s153 + $0x48] sm:%s145] %v190
                %v192 = vld [vmem:[%s152 + $0x4c] sm:%s145]
                %193 = vst [vmem:[%s153 + $0x4c] sm:%s145] %v192
                %v194 = vld [vmem:[%s152 + $0x50] sm:%s145]
                %195 = vst [vmem:[%s153 + $0x50] sm:%s145] %v194
                %v196 = vld [vmem:[%s152 + $0x54] sm:%s145]
                %197 = vst [vmem:[%s153 + $0x54] sm:%s145] %v196
                %v198 = vld [vmem:[%s152 + $0x58] sm:%s145]
                %199 = vst [vmem:[%s153 + $0x58] sm:%s145] %v198
                %v200 = vld [vmem:[%s152 + $0x5c] sm:%s145]
                %201 = vst [vmem:[%s153 + $0x5c] sm:%s145] %v200
                %v202 = vld [vmem:[%s152 + $0x60] sm:%s145]
                %203 = vst [vmem:[%s153 + $0x60] sm:%s145] %v202
                %v204 = vld [vmem:[%s152 + $0xc8] sm:%s145]
                %205 = vst [vmem:[%s153 + $0x64] sm:%s145] %v204
                %v206 = vld [vmem:[%s152 + $0xcc] sm:%s145]
                %207 = vst [vmem:[%s153 + $0x68] sm:%s145] %v206
                %v208 = vld [vmem:[%s152 + $0xd0] sm:%s145]
                %209 = vst [vmem:[%s153 + $0x6c] sm:%s145] %v208
                %v210 = vld [vmem:[%s152 + $0xd4] sm:%s145]
                %211 = vst [vmem:[%s153 + $0x70] sm:%s145] %v210
                %v212 = vld [vmem:[%s152 + $0xd8] sm:%s145]
                %213 = vst [vmem:[%s153 + $0x74] sm:%s145] %v212
                %v214 = vld [vmem:[%s152 + $0xdc] sm:%s145]
                %215 = vst [vmem:[%s153 + $0x78] sm:%s145] %v214
                %v216 = vld [vmem:[%s152 + $0xe0] sm:%s145]
                %217 = vst [vmem:[%s153 + $0x7c] sm:%s145] %v216
                %v218 = vld [vmem:[%s152 + $0xe4] sm:%s145]
                %219 = vst [vmem:[%s153 + $0x80] sm:%s145] %v218
                %v220 = vld [vmem:[%s152 + $0xe8] sm:%s145]
                %221 = vst [vmem:[%s153 + $0x84] sm:%s145] %v220
                %v222 = vld [vmem:[%s152 + $0xec] sm:%s145]
                %223 = vst [vmem:[%s153 + $0x88] sm:%s145] %v222
                %v224 = vld [vmem:[%s152 + $0xf0] sm:%s145]
                %225 = vst [vmem:[%s153 + $0x8c] sm:%s145] %v224
                %v226 = vld [vmem:[%s152 + $0xf4] sm:%s145]
                %227 = vst [vmem:[%s153 + $0x90] sm:%s145] %v226
                %v228 = vld [vmem:[%s152 + $0xf8] sm:%s145]
                %229 = vst [vmem:[%s153 + $0x94] sm:%s145] %v228
                %v230 = vld [vmem:[%s152 + $0xfc] sm:%s145]
                %231 = vst [vmem:[%s153 + $0x98] sm:%s145] %v230
                %v232 = vld [vmem:[%s152 + $0x100] sm:%s145]
                %233 = vst [vmem:[%s153 + $0x9c] sm:%s145] %v232
                %v234 = vld [vmem:[%s152 + $0x104] sm:%s145]
                %235 = vst [vmem:[%s153 + $0xa0] sm:%s145] %v234
                %v236 = vld [vmem:[%s152 + $0x108] sm:%s145]
                %237 = vst [vmem:[%s153 + $0xa4] sm:%s145] %v236
                %v238 = vld [vmem:[%s152 + $0x10c] sm:%s145]
                %239 = vst [vmem:[%s153 + $0xa8] sm:%s145] %v238
                %v240 = vld [vmem:[%s152 + $0x110] sm:%s145]
                %241 = vst [vmem:[%s153 + $0xac] sm:%s145] %v240
                %v242 = vld [vmem:[%s152 + $0x114] sm:%s145]
                %243 = vst [vmem:[%s153 + $0xb0] sm:%s145] %v242
                %v244 = vld [vmem:[%s152 + $0x118] sm:%s145]
                %245 = vst [vmem:[%s153 + $0xb4] sm:%s145] %v244
                %v246 = vld [vmem:[%s152 + $0x11c] sm:%s145]
                %247 = vst [vmem:[%s153 + $0xb8] sm:%s145] %v246
                %v248 = vld [vmem:[%s152 + $0x120] sm:%s145]
                %249 = vst [vmem:[%s153 + $0xbc] sm:%s145] %v248
                %v250 = vld [vmem:[%s152 + $0x124] sm:%s145]
                %251 = vst [vmem:[%s153 + $0xc0] sm:%s145] %v250
                %v252 = vld [vmem:[%s152 + $0x128] sm:%s145]
                %253 = vst [vmem:[%s153 + $0xc4] sm:%s145] %v252
                %v254 = vld [vmem:[%s152 + $0x190] sm:%s145]
                %255 = vst [vmem:[%s153 + $0xc8] sm:%s145] %v254
                %v256 = vld [vmem:[%s152 + $0x194] sm:%s145]
                %257 = vst [vmem:[%s153 + $0xcc] sm:%s145] %v256
                %v258 = vld [vmem:[%s152 + $0x198] sm:%s145]
                %259 = vst [vmem:[%s153 + $0xd0] sm:%s145] %v258
                %v260 = vld [vmem:[%s152 + $0x19c] sm:%s145]
                %261 = vst [vmem:[%s153 + $0xd4] sm:%s145] %v260
                %v262 = vld [vmem:[%s152 + $0x1a0] sm:%s145]
                %263 = vst [vmem:[%s153 + $0xd8] sm:%s145] %v262
                %v264 = vld [vmem:[%s152 + $0x1a4] sm:%s145]
                %265 = vst [vmem:[%s153 + $0xdc] sm:%s145] %v264
                %v266 = vld [vmem:[%s152 + $0x1a8] sm:%s145]
                %267 = vst [vmem:[%s153 + $0xe0] sm:%s145] %v266
                %v268 = vld [vmem:[%s152 + $0x1ac] sm:%s145]
                %269 = vst [vmem:[%s153 + $0xe4] sm:%s145] %v268
                %v270 = vld [vmem:[%s152 + $0x1b0] sm:%s145]
                %271 = vst [vmem:[%s153 + $0xe8] sm:%s145] %v270
                %v272 = vld [vmem:[%s152 + $0x1b4] sm:%s145]
                %273 = vst [vmem:[%s153 + $0xec] sm:%s145] %v272
                %v274 = vld [vmem:[%s152 + $0x1b8] sm:%s145]
                %275 = vst [vmem:[%s153 + $0xf0] sm:%s145] %v274
                %v276 = vld [vmem:[%s152 + $0x1bc] sm:%s145]
                %277 = vst [vmem:[%s153 + $0xf4] sm:%s145] %v276
                %v278 = vld [vmem:[%s152 + $0x1c0] sm:%s145]
                %279 = vst [vmem:[%s153 + $0xf8] sm:%s145] %v278
                %v280 = vld [vmem:[%s152 + $0x1c4] sm:%s145]
                %281 = vst [vmem:[%s153 + $0xfc] sm:%s145] %v280
                %v282 = vld [vmem:[%s152 + $0x1c8] sm:%s145]
                %283 = vst [vmem:[%s153 + $0x100] sm:%s145] %v282
                %v284 = vld [vmem:[%s152 + $0x1cc] sm:%s145]
                %285 = vst [vmem:[%s153 + $0x104] sm:%s145] %v284
                %v286 = vld [vmem:[%s152 + $0x1d0] sm:%s145]
                %287 = vst [vmem:[%s153 + $0x108] sm:%s145] %v286
                %v288 = vld [vmem:[%s152 + $0x1d4] sm:%s145]
                %289 = vst [vmem:[%s153 + $0x10c] sm:%s145] %v288
                %v290 = vld [vmem:[%s152 + $0x1d8] sm:%s145]
                %291 = vst [vmem:[%s153 + $0x110] sm:%s145] %v290
                %v292 = vld [vmem:[%s152 + $0x1dc] sm:%s145]
                %293 = vst [vmem:[%s153 + $0x114] sm:%s145] %v292
                %v294 = vld [vmem:[%s152 + $0x1e0] sm:%s145]
                %295 = vst [vmem:[%s153 + $0x118] sm:%s145] %v294
                %v296 = vld [vmem:[%s152 + $0x1e4] sm:%s145]
                %297 = vst [vmem:[%s153 + $0x11c] sm:%s145] %v296
                %v298 = vld [vmem:[%s152 + $0x1e8] sm:%s145]
                %299 = vst [vmem:[%s153 + $0x120] sm:%s145] %v298
                %v300 = vld [vmem:[%s152 + $0x1ec] sm:%s145]
                %301 = vst [vmem:[%s153 + $0x124] sm:%s145] %v300
                %v302 = vld [vmem:[%s152 + $0x1f0] sm:%s145]
                %303 = vst [vmem:[%s153 + $0x128] sm:%s145] %v302
                %v304 = vld [vmem:[%s152 + $0x258] sm:%s145]
                %305 = vst [vmem:[%s153 + $0x12c] sm:%s145] %v304
                %v306 = vld [vmem:[%s152 + $0x25c] sm:%s145]
                %307 = vst [vmem:[%s153 + $0x130] sm:%s145] %v306
                %v308 = vld [vmem:[%s152 + $0x260] sm:%s145]
                %309 = vst [vmem:[%s153 + $0x134] sm:%s145] %v308
                %v310 = vld [vmem:[%s152 + $0x264] sm:%s145]
                %311 = vst [vmem:[%s153 + $0x138] sm:%s145] %v310
                %v312 = vld [vmem:[%s152 + $0x268] sm:%s145]
                %313 = vst [vmem:[%s153 + $0x13c] sm:%s145] %v312
                %v314 = vld [vmem:[%s152 + $0x26c] sm:%s145]
                %315 = vst [vmem:[%s153 + $0x140] sm:%s145] %v314
                %v316 = vld [vmem:[%s152 + $0x270] sm:%s145]
                %317 = vst [vmem:[%s153 + $0x144] sm:%s145] %v316
                %v318 = vld [vmem:[%s152 + $0x274] sm:%s145]
                %319 = vst [vmem:[%s153 + $0x148] sm:%s145] %v318
                %v320 = vld [vmem:[%s152 + $0x278] sm:%s145]
                %321 = vst [vmem:[%s153 + $0x14c] sm:%s145] %v320
                %v322 = vld [vmem:[%s152 + $0x27c] sm:%s145]
                %323 = vst [vmem:[%s153 + $0x150] sm:%s145] %v322
                %v324 = vld [vmem:[%s152 + $0x280] sm:%s145]
                %325 = vst [vmem:[%s153 + $0x154] sm:%s145] %v324
                %v326 = vld [vmem:[%s152 + $0x284] sm:%s145]
                %327 = vst [vmem:[%s153 + $0x158] sm:%s145] %v326
                %v328 = vld [vmem:[%s152 + $0x288] sm:%s145]
                %329 = vst [vmem:[%s153 + $0x15c] sm:%s145] %v328
                %v330 = vld [vmem:[%s152 + $0x28c] sm:%s145]
                %331 = vst [vmem:[%s153 + $0x160] sm:%s145] %v330
                %v332 = vld [vmem:[%s152 + $0x290] sm:%s145]
                %333 = vst [vmem:[%s153 + $0x164] sm:%s145] %v332
                %v334 = vld [vmem:[%s152 + $0x294] sm:%s145]
                %335 = vst [vmem:[%s153 + $0x168] sm:%s145] %v334
                %v336 = vld [vmem:[%s152 + $0x298] sm:%s145]
                %337 = vst [vmem:[%s153 + $0x16c] sm:%s145] %v336
                %v338 = vld [vmem:[%s152 + $0x29c] sm:%s145]
                %339 = vst [vmem:[%s153 + $0x170] sm:%s145] %v338
                %v340 = vld [vmem:[%s152 + $0x2a0] sm:%s145]
                %341 = vst [vmem:[%s153 + $0x174] sm:%s145] %v340
                %v342 = vld [vmem:[%s152 + $0x2a4] sm:%s145]
                %343 = vst [vmem:[%s153 + $0x178] sm:%s145] %v342
                %v344 = vld [vmem:[%s152 + $0x2a8] sm:%s145]
                %345 = vst [vmem:[%s153 + $0x17c] sm:%s145] %v344
                %v346 = vld [vmem:[%s152 + $0x2ac] sm:%s145]
                %347 = vst [vmem:[%s153 + $0x180] sm:%s145] %v346
                %v348 = vld [vmem:[%s152 + $0x2b0] sm:%s145]
                %349 = vst [vmem:[%s153 + $0x184] sm:%s145] %v348
                %v350 = vld [vmem:[%s152 + $0x2b4] sm:%s145]
                %351 = vst [vmem:[%s153 + $0x188] sm:%s145] %v350
                %v352 = vld [vmem:[%s152 + $0x2b8] sm:%s145]
                %353 = vst [vmem:[%s153 + $0x18c] sm:%s145] %v352
              $region45: #{lenet_forward.3} parent=39 // loop_footer
                %s151 = sadd.s32 1, %s147
              $region46: #{lenet_forward.3} parent=39 // loop_footer_branch
                %146 = sbr.rel target = $region42
              $region47: #{lenet_forward.3} parent=39 // loop_exit
                _
            $region40: #{lenet_forward.3} parent=31 // pred_fallthru
              _
          $region32: #{lenet_forward.3} parent=27 // pred_fallthru
            _
          %574 = vnop
        $region28: #{lenet_forward.3} parent=23 // pred_fallthru
          _
      $region24: #{lenet_forward.3} parent=5 // pred_fallthru
        _
      %p575 = scmp.le.s32.totalorder 1, %s9
      %p576 = scmp.lt.s32.totalorder %s9, 3
      %p577 = pnand %p575, %p576
      %p578 = pneg %p577
      // Predicated region
      $region66: #{lenet_forward.3} parent=5 // pred_check
        _
      $region67: #{lenet_forward.3} parent=5 // pred_check_branch
        %580 = sbr.rel (%p577) target = $region69
      $region68: #{lenet_forward.3} parent=5 // pred_region
        %s581 = ssub.s32 %s9, 1
        %s582 = sand.u32 %s22, 1
        %s583 = sand.u32 %s22, 1
        %s584 = smul.addr %s583, 400
        %s585 = scalar_lea.vmem [#allocation2], %s584
        // Predicated region
        $region70: #{lenet_forward.3} parent=68 // pred_check
          %p586 = pneg %p35
        $region71: #{lenet_forward.3} parent=68 // pred_check_branch
          %588 = sbr.rel (%p586) target = $region73
        $region72: #{lenet_forward.3} parent=68 // pred_region
          _
        $region73: #{lenet_forward.3} parent=68 // pred_fallthru
          _
        %s589 = sand.u32 %s22, 1
        %s590 = sand.u32 %s22, 1
        %s591 = smul.addr %s590, 400
        %s592 = scalar_lea.vmem [#allocation2], %s591
        %p593 = pneg %p35
        %p594 = pneg %p32
        %p595 = pneg %p56
        %p596 = pneg %p53
        %p597 = pneg %p77
        %p598 = pneg %p74
        %p599 = pneg %p103
        %p600 = pneg %p100
        %s601 = smul.u32 25, %s14
        %p602 = scmp.lt.s32.totalorder %s601, 49
        %s603 = scalar_select %p602, %s601, 49
        %s604 = smul.addr %s603, 4
        %s605 = scalar_lea.vmem %s3, %s604
        %s606 = smul.u32 25, %s14
        %s607 = smul.u32 25, %s14
        %p608 = scmp.lt.s32.totalorder %s607, 49
        %s609 = scalar_select %p608, %s607, 49
        %s610 = smul.addr %s609, 4
        %s611 = scalar_lea.vmem %s3, %s610
        %s612 = smul.u32 25, %s14
        %v614 = vld [vmem:[%s1] sm:$0xf]
        %v615 = vld [vmem:[%s1 + $0x4] sm:$0xf]
        %v616 = vld [vmem:[%s1 + $0x8] sm:$0xf]
        %v617 = vld [vmem:[%s1 + $0xc] sm:$0xf]
        %v618 = vld [vmem:[%s1 + $0x10] sm:$0xf]
        %v619 = vld [vmem:[%s1 + $0x14] sm:$0xf]
        %v620 = vld [vmem:[%s1 + $0x18] sm:$0xf]
        %v621 = vld [vmem:[%s1 + $0x1c] sm:$0xf]
        %v622 = vld [vmem:[%s1 + $0x20] sm:$0xf]
        %v623 = vld [vmem:[%s1 + $0x24] sm:$0x3]
        %v624 = vld [vmem:[%s585] sm:$0xf]
        %v625 = vld [vmem:[%s585 + $0x4] sm:$0xf]
        %v626 = vld [vmem:[%s585 + $0x8] sm:$0xf]
        %v627 = vld [vmem:[%s585 + $0xc] sm:$0xf]
        %v628 = vld [vmem:[%s585 + $0x10] sm:$0xf]
        %v629 = vld [vmem:[%s585 + $0x14] sm:$0xf]
        %v630 = vld [vmem:[%s585 + $0x18] sm:$0xf]
        %v631 = vld [vmem:[%s585 + $0x1c] sm:$0xf]
        %v632 = vld [vmem:[%s585 + $0x20] sm:$0xf]
        %v633 = vld [vmem:[%s585 + $0x24] sm:$0xf]
        %v634 = vld [vmem:[%s585 + $0x28] sm:$0xf]
        %v635 = vld [vmem:[%s585 + $0x2c] sm:$0xf]
        %v636 = vld [vmem:[%s585 + $0x30] sm:$0xf]
        %v637 = vld [vmem:[%s585 + $0x34] sm:$0xf]
        %v638 = vld [vmem:[%s585 + $0x38] sm:$0xf]
        %v639 = vld [vmem:[%s585 + $0x3c] sm:$0xf]
        %v640 = vld [vmem:[%s585 + $0x40] sm:$0xf]
        %v641 = vld [vmem:[%s585 + $0x44] sm:$0xf]
        %v642 = vld [vmem:[%s585 + $0x48] sm:$0xf]
        %v643 = vld [vmem:[%s585 + $0x4c] sm:$0xf]
        %v644 = vld [vmem:[%s585 + $0x50] sm:$0xf]
        %v645 = vld [vmem:[%s585 + $0x54] sm:$0xf]
        %v646 = vld [vmem:[%s585 + $0x58] sm:$0xf]
        %v647 = vld [vmem:[%s585 + $0x5c] sm:$0xf]
        %v648 = vld [vmem:[%s585 + $0x60] sm:$0xf]
        %v674 = vunpack.c.l.b16 %v624
        %v675 = vunpack.c.l.b16 %v625
        %v676 = vunpack.c.l.b16 %v626
        %v677 = vunpack.c.l.b16 %v627
        %v678 = vunpack.c.l.b16 %v628
        %v679 = vunpack.c.l.b16 %v629
        %v680 = vunpack.c.l.b16 %v630
        %v681 = vunpack.c.l.b16 %v631
        %v682 = vunpack.c.l.b16 %v632
        %v683 = vunpack.c.l.b16 %v633
        %v684 = vunpack.c.l.b16 %v634
        %v685 = vunpack.c.l.b16 %v635
        %v686 = vunpack.c.l.b16 %v636
        %v687 = vunpack.c.l.b16 %v637
        %v688 = vunpack.c.l.b16 %v638
        %v689 = vunpack.c.l.b16 %v639
        %v690 = vunpack.c.l.b16 %v640
        %v691 = vunpack.c.l.b16 %v641
        %v692 = vunpack.c.l.b16 %v642
        %v693 = vunpack.c.l.b16 %v643
        %v694 = vunpack.c.l.b16 %v644
        %v695 = vunpack.c.l.b16 %v645
        %v696 = vunpack.c.l.b16 %v646
        %v697 = vunpack.c.l.b16 %v647
        %v698 = vunpack.c.l.b16 %v648
        %v699 = vpack.c.b16 %v675, %v674
        %v700 = vpack.c.b16 %v677, %v676
        %v701 = vpack.c.b16 %v679, %v678
        %v702 = vpack.c.b16 %v681, %v680
        %v703 = vpack.c.b16 %v683, %v682
        %v704 = vpack.c.b16 %v685, %v684
        %v705 = vpack.c.b16 %v687, %v686
        %v706 = vpack.c.b16 %v689, %v688
        %v707 = vpack.c.b16 %v691, %v690
        %v708 = vpack.c.b16 %v693, %v692
        %v709 = vpack.c.b16 %v695, %v694
        %v710 = vpack.c.b16 %v697, %v696
        %v711 = vpack.c.b16 %v698, %v698
        %v722 = vunpack.c.l.b16 %v614
        %v723 = vunpack.c.l.b16 %v615
        %v724 = vunpack.c.l.b16 %v616
        %v725 = vunpack.c.l.b16 %v617
        %v726 = vunpack.c.l.b16 %v618
        %v727 = vunpack.c.l.b16 %v619
        %v728 = vunpack.c.l.b16 %v620
        %v729 = vunpack.c.l.b16 %v621
        %v730 = vunpack.c.l.b16 %v622
        %v731 = vunpack.c.l.b16 %v623
        %v732 = vpack.c.b16 %v723, %v722
        %v733 = vpack.c.b16 %v725, %v724
        %v734 = vpack.c.b16 %v727, %v726
        %v735 = vpack.c.b16 %v729, %v728
        %v736 = vpack.c.b16 %v731, %v730
        %vm741 = vcmask 613376
        %v743 = vsel %vm741, %v699, 0
        %v746 = vsel %vm741, %v700, 0
        %v749 = vsel %vm741, %v701, 0
        %v752 = vsel %vm741, %v702, 0
        %v755 = vsel %vm741, %v703, 0
        %v758 = vsel %vm741, %v704, 0
        %v761 = vsel %vm741, %v705, 0
        %v764 = vsel %vm741, %v706, 0
        %v767 = vsel %vm741, %v707, 0
        %v770 = vsel %vm741, %v708, 0
        %v773 = vsel %vm741, %v709, 0
        %v776 = vsel %vm741, %v710, 0
        %v779 = vsel %vm741, %v711, 0
        %vm781 = vcmask 1044480
        %vm782 = vcmask 1045504
        %v783 = vsel %vm781, 4294967295, 65535
        %v784 = vsel %vm782, %v783, 0
        %v786 = vand.u32 %v736, %v784
        %788 = vmatpush.bf16.msra.mxu0 0
        %789 = vmatpush.bf16.msra.mxu0 0
        %790 = vmatpush.bf16.msra.mxu0 0
        %791 = vmatpush.bf16.msra.mxu0 %v786
        %792 = vmatpush.bf16.msra.mxu0 %v735
        %793 = vmatpush.bf16.msra.mxu0 %v734
        %794 = vmatpush.bf16.msra.mxu0 %v733
        %795 = vmatpush.bf16.msra.mxu0 %v732
        %796 = vmatmul.bf16.gmra.mxu0 %v743
        %v797 = vpop.f32.mrf.mxu0
        %v798 = vadd.f32 0.0, %v797
        %v799 = vpop.f32.mrf.mxu0
        %v800 = vadd.f32 0.0, %v799
        %801 = vmatmul.bf16.gmra.mxu0 %v746
        %v802 = vpop.f32.mrf.mxu0
        %v803 = vadd.f32 0.0, %v802
        %v804 = vpop.f32.mrf.mxu0
        %v805 = vadd.f32 0.0, %v804
        %806 = vmatmul.bf16.gmra.mxu0 %v749
        %v807 = vpop.f32.mrf.mxu0
        %v808 = vadd.f32 0.0, %v807
        %v809 = vpop.f32.mrf.mxu0
        %v810 = vadd.f32 0.0, %v809
        %811 = vmatmul.bf16.gmra.mxu0 %v752
        %v812 = vpop.f32.mrf.mxu0
        %v813 = vadd.f32 0.0, %v812
        %v814 = vpop.f32.mrf.mxu0
        %v815 = vadd.f32 0.0, %v814
        %816 = vmatmul.bf16.gmra.mxu0 %v755
        %v817 = vpop.f32.mrf.mxu0
        %v818 = vadd.f32 0.0, %v817
        %v819 = vpop.f32.mrf.mxu0
        %v820 = vadd.f32 0.0, %v819
        %821 = vmatmul.bf16.gmra.mxu0 %v758
        %v822 = vpop.f32.mrf.mxu0
        %v823 = vadd.f32 0.0, %v822
        %v824 = vpop.f32.mrf.mxu0
        %v825 = vadd.f32 0.0, %v824
        %826 = vmatmul.bf16.gmra.mxu0 %v761
        %v827 = vpop.f32.mrf.mxu0
        %v828 = vadd.f32 0.0, %v827
        %v829 = vpop.f32.mrf.mxu0
        %v830 = vadd.f32 0.0, %v829
        %831 = vmatmul.bf16.gmra.mxu0 %v764
        %v832 = vpop.f32.mrf.mxu0
        %v833 = vadd.f32 0.0, %v832
        %v834 = vpop.f32.mrf.mxu0
        %v835 = vadd.f32 0.0, %v834
        %836 = vmatmul.bf16.gmra.mxu0 %v767
        %v837 = vpop.f32.mrf.mxu0
        %v838 = vadd.f32 0.0, %v837
        %v839 = vpop.f32.mrf.mxu0
        %v840 = vadd.f32 0.0, %v839
        %841 = vmatmul.bf16.gmra.mxu0 %v770
        %v842 = vpop.f32.mrf.mxu0
        %v843 = vadd.f32 0.0, %v842
        %v844 = vpop.f32.mrf.mxu0
        %v845 = vadd.f32 0.0, %v844
        %846 = vmatmul.bf16.gmra.mxu0 %v773
        %v847 = vpop.f32.mrf.mxu0
        %v848 = vadd.f32 0.0, %v847
        %v849 = vpop.f32.mrf.mxu0
        %v850 = vadd.f32 0.0, %v849
        %851 = vmatmul.bf16.gmra.mxu0 %v776
        %v852 = vpop.f32.mrf.mxu0
        %v853 = vadd.f32 0.0, %v852
        %v854 = vpop.f32.mrf.mxu0
        %v855 = vadd.f32 0.0, %v854
        %856 = vmatmul.bf16.gmra.mxu0 %v779
        %v857 = vpop.f32.mrf.mxu0
        %v858 = vadd.f32 0.0, %v857
        %v859 = vpop.f32.mrf.mxu0
        %860 = vdwg.mxu0
        %s861 = scalar_lea.vmem %s585, 100 [#allocation2]
        %v862 = vld [vmem:[%s861] sm:$0xf]
        %v863 = vld [vmem:[%s861 + $0x4] sm:$0xf]
        %v864 = vld [vmem:[%s861 + $0x8] sm:$0xf]
        %v865 = vld [vmem:[%s861 + $0xc] sm:$0xf]
        %v866 = vld [vmem:[%s861 + $0x10] sm:$0xf]
        %v867 = vld [vmem:[%s861 + $0x14] sm:$0xf]
        %v868 = vld [vmem:[%s861 + $0x18] sm:$0xf]
        %v869 = vld [vmem:[%s861 + $0x1c] sm:$0xf]
        %v870 = vld [vmem:[%s861 + $0x20] sm:$0xf]
        %v871 = vld [vmem:[%s861 + $0x24] sm:$0xf]
        %v872 = vld [vmem:[%s861 + $0x28] sm:$0xf]
        %v873 = vld [vmem:[%s861 + $0x2c] sm:$0xf]
        %v874 = vld [vmem:[%s861 + $0x30] sm:$0xf]
        %v875 = vld [vmem:[%s861 + $0x34] sm:$0xf]
        %v876 = vld [vmem:[%s861 + $0x38] sm:$0xf]
        %v877 = vld [vmem:[%s861 + $0x3c] sm:$0xf]
        %v878 = vld [vmem:[%s861 + $0x40] sm:$0xf]
        %v879 = vld [vmem:[%s861 + $0x44] sm:$0xf]
        %v880 = vld [vmem:[%s861 + $0x48] sm:$0xf]
        %v881 = vld [vmem:[%s861 + $0x4c] sm:$0xf]
        %v882 = vld [vmem:[%s861 + $0x50] sm:$0xf]
        %v883 = vld [vmem:[%s861 + $0x54] sm:$0xf]
        %v884 = vld [vmem:[%s861 + $0x58] sm:$0xf]
        %v885 = vld [vmem:[%s861 + $0x5c] sm:$0xf]
        %v886 = vld [vmem:[%s861 + $0x60] sm:$0xf]
        %v912 = vunpack.c.l.b16 %v862
        %v913 = vunpack.c.l.b16 %v863
        %v914 = vunpack.c.l.b16 %v864
        %v915 = vunpack.c.l.b16 %v865
        %v916 = vunpack.c.l.b16 %v866
        %v917 = vunpack.c.l.b16 %v867
        %v918 = vunpack.c.l.b16 %v868
        %v919 = vunpack.c.l.b16 %v869
        %v920 = vunpack.c.l.b16 %v870
        %v921 = vunpack.c.l.b16 %v871
        %v922 = vunpack.c.l.b16 %v872
        %v923 = vunpack.c.l.b16 %v873
        %v924 = vunpack.c.l.b16 %v874
        %v925 = vunpack.c.l.b16 %v875
        %v926 = vunpack.c.l.b16 %v876
        %v927 = vunpack.c.l.b16 %v877
        %v928 = vunpack.c.l.b16 %v878
        %v929 = vunpack.c.l.b16 %v879
        %v930 = vunpack.c.l.b16 %v880
        %v931 = vunpack.c.l.b16 %v881
        %v932 = vunpack.c.l.b16 %v882
        %v933 = vunpack.c.l.b16 %v883
        %v934 = vunpack.c.l.b16 %v884
        %v935 = vunpack.c.l.b16 %v885
        %v936 = vunpack.c.l.b16 %v886
        %v937 = vpack.c.b16 %v913, %v912
        %v938 = vpack.c.b16 %v915, %v914
        %v939 = vpack.c.b16 %v917, %v916
        %v940 = vpack.c.b16 %v919, %v918
        %v941 = vpack.c.b16 %v921, %v920
        %v942 = vpack.c.b16 %v923, %v922
        %v943 = vpack.c.b16 %v925, %v924
        %v944 = vpack.c.b16 %v927, %v926
        %v945 = vpack.c.b16 %v929, %v928
        %v946 = vpack.c.b16 %v931, %v930
        %v947 = vpack.c.b16 %v933, %v932
        %v948 = vpack.c.b16 %v935, %v934
        %v949 = vpack.c.b16 %v936, %v936
        %v951 = vsel %vm741, %v937, 0
        %v954 = vsel %vm741, %v938, 0
        %v957 = vsel %vm741, %v939, 0
        %v960 = vsel %vm741, %v940, 0
        %v963 = vsel %vm741, %v941, 0
        %v966 = vsel %vm741, %v942, 0
        %v969 = vsel %vm741, %v943, 0
        %v972 = vsel %vm741, %v944, 0
        %v975 = vsel %vm741, %v945, 0
        %v978 = vsel %vm741, %v946, 0
        %v981 = vsel %vm741, %v947, 0
        %v984 = vsel %vm741, %v948, 0
        %v987 = vsel %vm741, %v949, 0
        %989 = vmatpush.bf16.msra.mxu0 0
        %990 = vmatpush.bf16.msra.mxu0 0
        %991 = vmatpush.bf16.msra.mxu0 0
        %992 = vmatpush.bf16.msra.mxu0 %v786
        %993 = vmatpush.bf16.msra.mxu0 %v735
        %994 = vmatpush.bf16.msra.mxu0 %v734
        %995 = vmatpush.bf16.msra.mxu0 %v733
        %996 = vmatpush.bf16.msra.mxu0 %v732
        %997 = vmatmul.bf16.gmra.mxu0 %v951
        %v998 = vpop.f32.mrf.mxu0
        %v999 = vadd.f32 0.0, %v998
        %v1000 = vpop.f32.mrf.mxu0
        %v1001 = vadd.f32 0.0, %v1000
        %1002 = vmatmul.bf16.gmra.mxu0 %v954
        %v1003 = vpop.f32.mrf.mxu0
        %v1004 = vadd.f32 0.0, %v1003
        %v1005 = vpop.f32.mrf.mxu0
        %v1006 = vadd.f32 0.0, %v1005
        %1007 = vmatmul.bf16.gmra.mxu0 %v957
        %v1008 = vpop.f32.mrf.mxu0
        %v1009 = vadd.f32 0.0, %v1008
        %v1010 = vpop.f32.mrf.mxu0
        %v1011 = vadd.f32 0.0, %v1010
        %1012 = vmatmul.bf16.gmra.mxu0 %v960
        %v1013 = vpop.f32.mrf.mxu0
        %v1014 = vadd.f32 0.0, %v1013
        %v1015 = vpop.f32.mrf.mxu0
        %v1016 = vadd.f32 0.0, %v1015
        %1017 = vmatmul.bf16.gmra.mxu0 %v963
        %v1018 = vpop.f32.mrf.mxu0
        %v1019 = vadd.f32 0.0, %v1018
        %v1020 = vpop.f32.mrf.mxu0
        %v1021 = vadd.f32 0.0, %v1020
        %1022 = vmatmul.bf16.gmra.mxu0 %v966
        %v1023 = vpop.f32.mrf.mxu0
        %v1024 = vadd.f32 0.0, %v1023
        %v1025 = vpop.f32.mrf.mxu0
        %v1026 = vadd.f32 0.0, %v1025
        %1027 = vmatmul.bf16.gmra.mxu0 %v969
        %v1028 = vpop.f32.mrf.mxu0
        %v1029 = vadd.f32 0.0, %v1028
        %v1030 = vpop.f32.mrf.mxu0
        %v1031 = vadd.f32 0.0, %v1030
        %1032 = vmatmul.bf16.gmra.mxu0 %v972
        %v1033 = vpop.f32.mrf.mxu0
        %v1034 = vadd.f32 0.0, %v1033
        %v1035 = vpop.f32.mrf.mxu0
        %v1036 = vadd.f32 0.0, %v1035
        %1037 = vmatmul.bf16.gmra.mxu0 %v975
        %v1038 = vpop.f32.mrf.mxu0
        %v1039 = vadd.f32 0.0, %v1038
        %v1040 = vpop.f32.mrf.mxu0
        %v1041 = vadd.f32 0.0, %v1040
        %1042 = vmatmul.bf16.gmra.mxu0 %v978
        %v1043 = vpop.f32.mrf.mxu0
        %v1044 = vadd.f32 0.0, %v1043
        %v1045 = vpop.f32.mrf.mxu0
        %v1046 = vadd.f32 0.0, %v1045
        %1047 = vmatmul.bf16.gmra.mxu0 %v981
        %v1048 = vpop.f32.mrf.mxu0
        %v1049 = vadd.f32 0.0, %v1048
        %v1050 = vpop.f32.mrf.mxu0
        %v1051 = vadd.f32 0.0, %v1050
        %1052 = vmatmul.bf16.gmra.mxu0 %v984
        %v1053 = vpop.f32.mrf.mxu0
        %v1054 = vadd.f32 0.0, %v1053
        %v1055 = vpop.f32.mrf.mxu0
        %v1056 = vadd.f32 0.0, %v1055
        %1057 = vmatmul.bf16.gmra.mxu0 %v987
        %v1058 = vpop.f32.mrf.mxu0
        %v1059 = vadd.f32 0.0, %v1058
        %v1060 = vpop.f32.mrf.mxu0
        %1061 = vdwg.mxu0
        %v1062 = vmax.f32 %v798, %v999
        %v1063 = vmax.f32 %v800, %v1001
        %v1064 = vmax.f32 %v803, %v1004
        %v1065 = vmax.f32 %v805, %v1006
        %v1066 = vmax.f32 %v808, %v1009
        %v1067 = vmax.f32 %v810, %v1011
        %v1068 = vmax.f32 %v813, %v1014
        %v1069 = vmax.f32 %v815, %v1016
        %v1070 = vmax.f32 %v818, %v1019
        %v1071 = vmax.f32 %v820, %v1021
        %v1072 = vmax.f32 %v823, %v1024
        %v1073 = vmax.f32 %v825, %v1026
        %v1074 = vmax.f32 %v828, %v1029
        %v1075 = vmax.f32 %v830, %v1031
        %v1076 = vmax.f32 %v833, %v1034
        %v1077 = vmax.f32 %v835, %v1036
        %v1078 = vmax.f32 %v838, %v1039
        %v1079 = vmax.f32 %v840, %v1041
        %v1080 = vmax.f32 %v843, %v1044
        %v1081 = vmax.f32 %v845, %v1046
        %v1082 = vmax.f32 %v848, %v1049
        %v1083 = vmax.f32 %v850, %v1051
        %v1084 = vmax.f32 %v853, %v1054
        %v1085 = vmax.f32 %v855, %v1056
        %v1086 = vmax.f32 %v858, %v1059
        %s1087 = scalar_lea.vmem %s585, 200 [#allocation2]
        %v1088 = vld [vmem:[%s1087] sm:$0xf]
        %v1089 = vld [vmem:[%s1087 + $0x4] sm:$0xf]
        %v1090 = vld [vmem:[%s1087 + $0x8] sm:$0xf]
        %v1091 = vld [vmem:[%s1087 + $0xc] sm:$0xf]
        %v1092 = vld [vmem:[%s1087 + $0x10] sm:$0xf]
        %v1093 = vld [vmem:[%s1087 + $0x14] sm:$0xf]
        %v1094 = vld [vmem:[%s1087 + $0x18] sm:$0xf]
        %v1095 = vld [vmem:[%s1087 + $0x1c] sm:$0xf]
        %v1096 = vld [vmem:[%s1087 + $0x20] sm:$0xf]
        %v1097 = vld [vmem:[%s1087 + $0x24] sm:$0xf]
        %v1098 = vld [vmem:[%s1087 + $0x28] sm:$0xf]
        %v1099 = vld [vmem:[%s1087 + $0x2c] sm:$0xf]
        %v1100 = vld [vmem:[%s1087 + $0x30] sm:$0xf]
        %v1101 = vld [vmem:[%s1087 + $0x34] sm:$0xf]
        %v1102 = vld [vmem:[%s1087 + $0x38] sm:$0xf]
        %v1103 = vld [vmem:[%s1087 + $0x3c] sm:$0xf]
        %v1104 = vld [vmem:[%s1087 + $0x40] sm:$0xf]
        %v1105 = vld [vmem:[%s1087 + $0x44] sm:$0xf]
        %v1106 = vld [vmem:[%s1087 + $0x48] sm:$0xf]
        %v1107 = vld [vmem:[%s1087 + $0x4c] sm:$0xf]
        %v1108 = vld [vmem:[%s1087 + $0x50] sm:$0xf]
        %v1109 = vld [vmem:[%s1087 + $0x54] sm:$0xf]
        %v1110 = vld [vmem:[%s1087 + $0x58] sm:$0xf]
        %v1111 = vld [vmem:[%s1087 + $0x5c] sm:$0xf]
        %v1112 = vld [vmem:[%s1087 + $0x60] sm:$0xf]
        %v1138 = vunpack.c.l.b16 %v1088
        %v1139 = vunpack.c.l.b16 %v1089
        %v1140 = vunpack.c.l.b16 %v1090
        %v1141 = vunpack.c.l.b16 %v1091
        %v1142 = vunpack.c.l.b16 %v1092
        %v1143 = vunpack.c.l.b16 %v1093
        %v1144 = vunpack.c.l.b16 %v1094
        %v1145 = vunpack.c.l.b16 %v1095
        %v1146 = vunpack.c.l.b16 %v1096
        %v1147 = vunpack.c.l.b16 %v1097
        %v1148 = vunpack.c.l.b16 %v1098
        %v1149 = vunpack.c.l.b16 %v1099
        %v1150 = vunpack.c.l.b16 %v1100
        %v1151 = vunpack.c.l.b16 %v1101
        %v1152 = vunpack.c.l.b16 %v1102
        %v1153 = vunpack.c.l.b16 %v1103
        %v1154 = vunpack.c.l.b16 %v1104
        %v1155 = vunpack.c.l.b16 %v1105
        %v1156 = vunpack.c.l.b16 %v1106
        %v1157 = vunpack.c.l.b16 %v1107
        %v1158 = vunpack.c.l.b16 %v1108
        %v1159 = vunpack.c.l.b16 %v1109
        %v1160 = vunpack.c.l.b16 %v1110
        %v1161 = vunpack.c.l.b16 %v1111
        %v1162 = vunpack.c.l.b16 %v1112
        %v1163 = vpack.c.b16 %v1139, %v1138
        %v1164 = vpack.c.b16 %v1141, %v1140
        %v1165 = vpack.c.b16 %v1143, %v1142
        %v1166 = vpack.c.b16 %v1145, %v1144
        %v1167 = vpack.c.b16 %v1147, %v1146
        %v1168 = vpack.c.b16 %v1149, %v1148
        %v1169 = vpack.c.b16 %v1151, %v1150
        %v1170 = vpack.c.b16 %v1153, %v1152
        %v1171 = vpack.c.b16 %v1155, %v1154
        %v1172 = vpack.c.b16 %v1157, %v1156
        %v1173 = vpack.c.b16 %v1159, %v1158
        %v1174 = vpack.c.b16 %v1161, %v1160
        %v1175 = vpack.c.b16 %v1162, %v1162
        %v1177 = vsel %vm741, %v1163, 0
        %v1180 = vsel %vm741, %v1164, 0
        %v1183 = vsel %vm741, %v1165, 0
        %v1186 = vsel %vm741, %v1166, 0
        %v1189 = vsel %vm741, %v1167, 0
        %v1192 = vsel %vm741, %v1168, 0
        %v1195 = vsel %vm741, %v1169, 0
        %v1198 = vsel %vm741, %v1170, 0
        %v1201 = vsel %vm741, %v1171, 0
        %v1204 = vsel %vm741, %v1172, 0
        %v1207 = vsel %vm741, %v1173, 0
        %v1210 = vsel %vm741, %v1174, 0
        %v1213 = vsel %vm741, %v1175, 0
        %1215 = vmatpush.bf16.msra.mxu0 0
        %1216 = vmatpush.bf16.msra.mxu0 0
        %1217 = vmatpush.bf16.msra.mxu0 0
        %1218 = vmatpush.bf16.msra.mxu0 %v786
        %1219 = vmatpush.bf16.msra.mxu0 %v735
        %1220 = vmatpush.bf16.msra.mxu0 %v734
        %1221 = vmatpush.bf16.msra.mxu0 %v733
        %1222 = vmatpush.bf16.msra.mxu0 %v732
        %1223 = vmatmul.bf16.gmra.mxu0 %v1177
        %v1224 = vpop.f32.mrf.mxu0
        %v1225 = vadd.f32 0.0, %v1224
        %v1226 = vpop.f32.mrf.mxu0
        %v1227 = vadd.f32 0.0, %v1226
        %1228 = vmatmul.bf16.gmra.mxu0 %v1180
        %v1229 = vpop.f32.mrf.mxu0
        %v1230 = vadd.f32 0.0, %v1229
        %v1231 = vpop.f32.mrf.mxu0
        %v1232 = vadd.f32 0.0, %v1231
        %1233 = vmatmul.bf16.gmra.mxu0 %v1183
        %v1234 = vpop.f32.mrf.mxu0
        %v1235 = vadd.f32 0.0, %v1234
        %v1236 = vpop.f32.mrf.mxu0
        %v1237 = vadd.f32 0.0, %v1236
        %1238 = vmatmul.bf16.gmra.mxu0 %v1186
        %v1239 = vpop.f32.mrf.mxu0
        %v1240 = vadd.f32 0.0, %v1239
        %v1241 = vpop.f32.mrf.mxu0
        %v1242 = vadd.f32 0.0, %v1241
        %1243 = vmatmul.bf16.gmra.mxu0 %v1189
        %v1244 = vpop.f32.mrf.mxu0
        %v1245 = vadd.f32 0.0, %v1244
        %v1246 = vpop.f32.mrf.mxu0
        %v1247 = vadd.f32 0.0, %v1246
        %1248 = vmatmul.bf16.gmra.mxu0 %v1192
        %v1249 = vpop.f32.mrf.mxu0
        %v1250 = vadd.f32 0.0, %v1249
        %v1251 = vpop.f32.mrf.mxu0
        %v1252 = vadd.f32 0.0, %v1251
        %1253 = vmatmul.bf16.gmra.mxu0 %v1195
        %v1254 = vpop.f32.mrf.mxu0
        %v1255 = vadd.f32 0.0, %v1254
        %v1256 = vpop.f32.mrf.mxu0
        %v1257 = vadd.f32 0.0, %v1256
        %1258 = vmatmul.bf16.gmra.mxu0 %v1198
        %v1259 = vpop.f32.mrf.mxu0
        %v1260 = vadd.f32 0.0, %v1259
        %v1261 = vpop.f32.mrf.mxu0
        %v1262 = vadd.f32 0.0, %v1261
        %1263 = vmatmul.bf16.gmra.mxu0 %v1201
        %v1264 = vpop.f32.mrf.mxu0
        %v1265 = vadd.f32 0.0, %v1264
        %v1266 = vpop.f32.mrf.mxu0
        %v1267 = vadd.f32 0.0, %v1266
        %1268 = vmatmul.bf16.gmra.mxu0 %v1204
        %v1269 = vpop.f32.mrf.mxu0
        %v1270 = vadd.f32 0.0, %v1269
        %v1271 = vpop.f32.mrf.mxu0
        %v1272 = vadd.f32 0.0, %v1271
        %1273 = vmatmul.bf16.gmra.mxu0 %v1207
        %v1274 = vpop.f32.mrf.mxu0
        %v1275 = vadd.f32 0.0, %v1274
        %v1276 = vpop.f32.mrf.mxu0
        %v1277 = vadd.f32 0.0, %v1276
        %1278 = vmatmul.bf16.gmra.mxu0 %v1210
        %v1279 = vpop.f32.mrf.mxu0
        %v1280 = vadd.f32 0.0, %v1279
        %v1281 = vpop.f32.mrf.mxu0
        %v1282 = vadd.f32 0.0, %v1281
        %1283 = vmatmul.bf16.gmra.mxu0 %v1213
        %v1284 = vpop.f32.mrf.mxu0
        %v1285 = vadd.f32 0.0, %v1284
        %v1286 = vpop.f32.mrf.mxu0
        %1287 = vdwg.mxu0
        %v1288 = vmax.f32 %v1062, %v1225
        %v1289 = vmax.f32 %v1063, %v1227
        %v1290 = vmax.f32 %v1064, %v1230
        %v1291 = vmax.f32 %v1065, %v1232
        %v1292 = vmax.f32 %v1066, %v1235
        %v1293 = vmax.f32 %v1067, %v1237
        %v1294 = vmax.f32 %v1068, %v1240
        %v1295 = vmax.f32 %v1069, %v1242
        %v1296 = vmax.f32 %v1070, %v1245
        %v1297 = vmax.f32 %v1071, %v1247
        %v1298 = vmax.f32 %v1072, %v1250
        %v1299 = vmax.f32 %v1073, %v1252
        %v1300 = vmax.f32 %v1074, %v1255
        %v1301 = vmax.f32 %v1075, %v1257
        %v1302 = vmax.f32 %v1076, %v1260
        %v1303 = vmax.f32 %v1077, %v1262
        %v1304 = vmax.f32 %v1078, %v1265
        %v1305 = vmax.f32 %v1079, %v1267
        %v1306 = vmax.f32 %v1080, %v1270
        %v1307 = vmax.f32 %v1081, %v1272
        %v1308 = vmax.f32 %v1082, %v1275
        %v1309 = vmax.f32 %v1083, %v1277
        %v1310 = vmax.f32 %v1084, %v1280
        %v1311 = vmax.f32 %v1085, %v1282
        %v1312 = vmax.f32 %v1086, %v1285
        %s1313 = scalar_lea.vmem %s585, 300 [#allocation2]
        %v1314 = vld [vmem:[%s1313] sm:$0xf]
        %v1315 = vld [vmem:[%s1313 + $0x4] sm:$0xf]
        %v1316 = vld [vmem:[%s1313 + $0x8] sm:$0xf]
        %v1317 = vld [vmem:[%s1313 + $0xc] sm:$0xf]
        %v1318 = vld [vmem:[%s1313 + $0x10] sm:$0xf]
        %v1319 = vld [vmem:[%s1313 + $0x14] sm:$0xf]
        %v1320 = vld [vmem:[%s1313 + $0x18] sm:$0xf]
        %v1321 = vld [vmem:[%s1313 + $0x1c] sm:$0xf]
        %v1322 = vld [vmem:[%s1313 + $0x20] sm:$0xf]
        %v1323 = vld [vmem:[%s1313 + $0x24] sm:$0xf]
        %v1324 = vld [vmem:[%s1313 + $0x28] sm:$0xf]
        %v1325 = vld [vmem:[%s1313 + $0x2c] sm:$0xf]
        %v1326 = vld [vmem:[%s1313 + $0x30] sm:$0xf]
        %v1327 = vld [vmem:[%s1313 + $0x34] sm:$0xf]
        %v1328 = vld [vmem:[%s1313 + $0x38] sm:$0xf]
        %v1329 = vld [vmem:[%s1313 + $0x3c] sm:$0xf]
        %v1330 = vld [vmem:[%s1313 + $0x40] sm:$0xf]
        %v1331 = vld [vmem:[%s1313 + $0x44] sm:$0xf]
        %v1332 = vld [vmem:[%s1313 + $0x48] sm:$0xf]
        %v1333 = vld [vmem:[%s1313 + $0x4c] sm:$0xf]
        %v1334 = vld [vmem:[%s1313 + $0x50] sm:$0xf]
        %v1335 = vld [vmem:[%s1313 + $0x54] sm:$0xf]
        %v1336 = vld [vmem:[%s1313 + $0x58] sm:$0xf]
        %v1337 = vld [vmem:[%s1313 + $0x5c] sm:$0xf]
        %v1338 = vld [vmem:[%s1313 + $0x60] sm:$0xf]
        %v1364 = vunpack.c.l.b16 %v1314
        %v1365 = vunpack.c.l.b16 %v1315
        %v1366 = vunpack.c.l.b16 %v1316
        %v1367 = vunpack.c.l.b16 %v1317
        %v1368 = vunpack.c.l.b16 %v1318
        %v1369 = vunpack.c.l.b16 %v1319
        %v1370 = vunpack.c.l.b16 %v1320
        %v1371 = vunpack.c.l.b16 %v1321
        %v1372 = vunpack.c.l.b16 %v1322
        %v1373 = vunpack.c.l.b16 %v1323
        %v1374 = vunpack.c.l.b16 %v1324
        %v1375 = vunpack.c.l.b16 %v1325
        %v1376 = vunpack.c.l.b16 %v1326
        %v1377 = vunpack.c.l.b16 %v1327
        %v1378 = vunpack.c.l.b16 %v1328
        %v1379 = vunpack.c.l.b16 %v1329
        %v1380 = vunpack.c.l.b16 %v1330
        %v1381 = vunpack.c.l.b16 %v1331
        %v1382 = vunpack.c.l.b16 %v1332
        %v1383 = vunpack.c.l.b16 %v1333
        %v1384 = vunpack.c.l.b16 %v1334
        %v1385 = vunpack.c.l.b16 %v1335
        %v1386 = vunpack.c.l.b16 %v1336
        %v1387 = vunpack.c.l.b16 %v1337
        %v1388 = vunpack.c.l.b16 %v1338
        %v1389 = vpack.c.b16 %v1365, %v1364
        %v1390 = vpack.c.b16 %v1367, %v1366
        %v1391 = vpack.c.b16 %v1369, %v1368
        %v1392 = vpack.c.b16 %v1371, %v1370
        %v1393 = vpack.c.b16 %v1373, %v1372
        %v1394 = vpack.c.b16 %v1375, %v1374
        %v1395 = vpack.c.b16 %v1377, %v1376
        %v1396 = vpack.c.b16 %v1379, %v1378
        %v1397 = vpack.c.b16 %v1381, %v1380
        %v1398 = vpack.c.b16 %v1383, %v1382
        %v1399 = vpack.c.b16 %v1385, %v1384
        %v1400 = vpack.c.b16 %v1387, %v1386
        %v1401 = vpack.c.b16 %v1388, %v1388
        %v1403 = vsel %vm741, %v1389, 0
        %v1406 = vsel %vm741, %v1390, 0
        %v1409 = vsel %vm741, %v1391, 0
        %v1412 = vsel %vm741, %v1392, 0
        %v1415 = vsel %vm741, %v1393, 0
        %v1418 = vsel %vm741, %v1394, 0
        %v1421 = vsel %vm741, %v1395, 0
        %v1424 = vsel %vm741, %v1396, 0
        %v1427 = vsel %vm741, %v1397, 0
        %v1430 = vsel %vm741, %v1398, 0
        %v1433 = vsel %vm741, %v1399, 0
        %v1436 = vsel %vm741, %v1400, 0
        %v1439 = vsel %vm741, %v1401, 0
        %1441 = vmatpush.bf16.msra.mxu0 0
        %1442 = vmatpush.bf16.msra.mxu0 0
        %1443 = vmatpush.bf16.msra.mxu0 0
        %1444 = vmatpush.bf16.msra.mxu0 %v786
        %1445 = vmatpush.bf16.msra.mxu0 %v735
        %1446 = vmatpush.bf16.msra.mxu0 %v734
        %1447 = vmatpush.bf16.msra.mxu0 %v733
        %1448 = vmatpush.bf16.msra.mxu0 %v732
        %1449 = vmatmul.bf16.gmra.mxu0 %v1403
        %v1450 = vpop.f32.mrf.mxu0
        %v1451 = vadd.f32 0.0, %v1450
        %v1452 = vpop.f32.mrf.mxu0
        %v1453 = vadd.f32 0.0, %v1452
        %1454 = vmatmul.bf16.gmra.mxu0 %v1406
        %v1455 = vpop.f32.mrf.mxu0
        %v1456 = vadd.f32 0.0, %v1455
        %v1457 = vpop.f32.mrf.mxu0
        %v1458 = vadd.f32 0.0, %v1457
        %1459 = vmatmul.bf16.gmra.mxu0 %v1409
        %v1460 = vpop.f32.mrf.mxu0
        %v1461 = vadd.f32 0.0, %v1460
        %v1462 = vpop.f32.mrf.mxu0
        %v1463 = vadd.f32 0.0, %v1462
        %1464 = vmatmul.bf16.gmra.mxu0 %v1412
        %v1465 = vpop.f32.mrf.mxu0
        %v1466 = vadd.f32 0.0, %v1465
        %v1467 = vpop.f32.mrf.mxu0
        %v1468 = vadd.f32 0.0, %v1467
        %1469 = vmatmul.bf16.gmra.mxu0 %v1415
        %v1470 = vpop.f32.mrf.mxu0
        %v1471 = vadd.f32 0.0, %v1470
        %v1472 = vpop.f32.mrf.mxu0
        %v1473 = vadd.f32 0.0, %v1472
        %1474 = vmatmul.bf16.gmra.mxu0 %v1418
        %v1475 = vpop.f32.mrf.mxu0
        %v1476 = vadd.f32 0.0, %v1475
        %v1477 = vpop.f32.mrf.mxu0
        %v1478 = vadd.f32 0.0, %v1477
        %1479 = vmatmul.bf16.gmra.mxu0 %v1421
        %v1480 = vpop.f32.mrf.mxu0
        %v1481 = vadd.f32 0.0, %v1480
        %v1482 = vpop.f32.mrf.mxu0
        %v1483 = vadd.f32 0.0, %v1482
        %1484 = vmatmul.bf16.gmra.mxu0 %v1424
        %v1485 = vpop.f32.mrf.mxu0
        %v1486 = vadd.f32 0.0, %v1485
        %v1487 = vpop.f32.mrf.mxu0
        %v1488 = vadd.f32 0.0, %v1487
        %1489 = vmatmul.bf16.gmra.mxu0 %v1427
        %v1490 = vpop.f32.mrf.mxu0
        %v1491 = vadd.f32 0.0, %v1490
        %v1492 = vpop.f32.mrf.mxu0
        %v1493 = vadd.f32 0.0, %v1492
        %1494 = vmatmul.bf16.gmra.mxu0 %v1430
        %v1495 = vpop.f32.mrf.mxu0
        %v1496 = vadd.f32 0.0, %v1495
        %v1497 = vpop.f32.mrf.mxu0
        %v1498 = vadd.f32 0.0, %v1497
        %1499 = vmatmul.bf16.gmra.mxu0 %v1433
        %v1500 = vpop.f32.mrf.mxu0
        %v1501 = vadd.f32 0.0, %v1500
        %v1502 = vpop.f32.mrf.mxu0
        %v1503 = vadd.f32 0.0, %v1502
        %1504 = vmatmul.bf16.gmra.mxu0 %v1436
        %v1505 = vpop.f32.mrf.mxu0
        %v1506 = vadd.f32 0.0, %v1505
        %v1507 = vpop.f32.mrf.mxu0
        %v1508 = vadd.f32 0.0, %v1507
        %1509 = vmatmul.bf16.gmra.mxu0 %v1439
        %v1510 = vpop.f32.mrf.mxu0
        %v1511 = vadd.f32 0.0, %v1510
        %v1512 = vpop.f32.mrf.mxu0
        %1513 = vdwg.mxu0
        %v1514 = vmax.f32 %v1288, %v1451
        %v1515 = vmax.f32 %v1289, %v1453
        %v1516 = vmax.f32 %v1290, %v1456
        %v1517 = vmax.f32 %v1291, %v1458
        %v1518 = vmax.f32 %v1292, %v1461
        %v1519 = vmax.f32 %v1293, %v1463
        %v1520 = vmax.f32 %v1294, %v1466
        %v1521 = vmax.f32 %v1295, %v1468
        %v1522 = vmax.f32 %v1296, %v1471
        %v1523 = vmax.f32 %v1297, %v1473
        %v1524 = vmax.f32 %v1298, %v1476
        %v1525 = vmax.f32 %v1299, %v1478
        %v1526 = vmax.f32 %v1300, %v1481
        %v1527 = vmax.f32 %v1301, %v1483
        %v1528 = vmax.f32 %v1302, %v1486
        %v1529 = vmax.f32 %v1303, %v1488
        %v1530 = vmax.f32 %v1304, %v1491
        %v1531 = vmax.f32 %v1305, %v1493
        %v1532 = vmax.f32 %v1306, %v1496
        %v1533 = vmax.f32 %v1307, %v1498
        %v1534 = vmax.f32 %v1308, %v1501
        %v1535 = vmax.f32 %v1309, %v1503
        %v1536 = vmax.f32 %v1310, %v1506
        %v1537 = vmax.f32 %v1311, %v1508
        %v1538 = vmax.f32 %v1312, %v1511
        %v1539 = vld [vmem:[%s2] sm:$0x1]
        %v1541 = vperm.slane %v1539, 0
        %v1543 = vadd.f32 %v1514, %v1541
        %v1544 = vadd.f32 %v1515, %v1541
        %v1545 = vadd.f32 %v1516, %v1541
        %v1546 = vadd.f32 %v1517, %v1541
        %v1547 = vadd.f32 %v1518, %v1541
        %v1548 = vadd.f32 %v1519, %v1541
        %v1549 = vadd.f32 %v1520, %v1541
        %v1550 = vadd.f32 %v1521, %v1541
        %v1551 = vadd.f32 %v1522, %v1541
        %v1552 = vadd.f32 %v1523, %v1541
        %v1553 = vadd.f32 %v1524, %v1541
        %v1554 = vadd.f32 %v1525, %v1541
        %v1555 = vadd.f32 %v1526, %v1541
        %v1556 = vadd.f32 %v1527, %v1541
        %v1557 = vadd.f32 %v1528, %v1541
        %v1558 = vadd.f32 %v1529, %v1541
        %v1559 = vadd.f32 %v1530, %v1541
        %v1560 = vadd.f32 %v1531, %v1541
        %v1561 = vadd.f32 %v1532, %v1541
        %v1562 = vadd.f32 %v1533, %v1541
        %v1563 = vadd.f32 %v1534, %v1541
        %v1564 = vadd.f32 %v1535, %v1541
        %v1565 = vadd.f32 %v1536, %v1541
        %v1566 = vadd.f32 %v1537, %v1541
        %v1567 = vadd.f32 %v1538, %v1541
        %v1568 = vmax.f32 %v1543, 0.0
        %v1569 = vmax.f32 %v1544, 0.0
        %v1570 = vmax.f32 %v1545, 0.0
        %v1571 = vmax.f32 %v1546, 0.0
        %v1572 = vmax.f32 %v1547, 0.0
        %v1573 = vmax.f32 %v1548, 0.0
        %v1574 = vmax.f32 %v1549, 0.0
        %v1575 = vmax.f32 %v1550, 0.0
        %v1576 = vmax.f32 %v1551, 0.0
        %v1577 = vmax.f32 %v1552, 0.0
        %v1578 = vmax.f32 %v1553, 0.0
        %v1579 = vmax.f32 %v1554, 0.0
        %v1580 = vmax.f32 %v1555, 0.0
        %v1581 = vmax.f32 %v1556, 0.0
        %v1582 = vmax.f32 %v1557, 0.0
        %v1583 = vmax.f32 %v1558, 0.0
        %v1584 = vmax.f32 %v1559, 0.0
        %v1585 = vmax.f32 %v1560, 0.0
        %v1586 = vmax.f32 %v1561, 0.0
        %v1587 = vmax.f32 %v1562, 0.0
        %v1588 = vmax.f32 %v1563, 0.0
        %v1589 = vmax.f32 %v1564, 0.0
        %v1590 = vmax.f32 %v1565, 0.0
        %v1591 = vmax.f32 %v1566, 0.0
        %v1592 = vmax.f32 %v1567, 0.0
        %v1593 = vpack.c.bf16 %v1568, %v1568
        %v1594 = vpack.c.bf16 %v1569, %v1569
        %v1595 = vpack.c.bf16 %v1570, %v1570
        %v1596 = vpack.c.bf16 %v1571, %v1571
        %v1597 = vpack.c.bf16 %v1572, %v1572
        %v1598 = vpack.c.bf16 %v1573, %v1573
        %v1599 = vpack.c.bf16 %v1574, %v1574
        %v1600 = vpack.c.bf16 %v1575, %v1575
        %v1601 = vpack.c.bf16 %v1576, %v1576
        %v1602 = vpack.c.bf16 %v1577, %v1577
        %v1603 = vpack.c.bf16 %v1578, %v1578
        %v1604 = vpack.c.bf16 %v1579, %v1579
        %v1605 = vpack.c.bf16 %v1580, %v1580
        %v1606 = vpack.c.bf16 %v1581, %v1581
        %v1607 = vpack.c.bf16 %v1582, %v1582
        %v1608 = vpack.c.bf16 %v1583, %v1583
        %v1609 = vpack.c.bf16 %v1584, %v1584
        %v1610 = vpack.c.bf16 %v1585, %v1585
        %v1611 = vpack.c.bf16 %v1586, %v1586
        %v1612 = vpack.c.bf16 %v1587, %v1587
        %v1613 = vpack.c.bf16 %v1588, %v1588
        %v1614 = vpack.c.bf16 %v1589, %v1589
        %v1615 = vpack.c.bf16 %v1590, %v1590
        %v1616 = vpack.c.bf16 %v1591, %v1591
        %v1617 = vpack.c.bf16 %v1592, %v1592
        %vm1618 = vcmask 519168
        %1619 = vst.msk [vmem:[%s611] sm:$0xf] %vm1618, %v1593
        %1620 = vst.msk [vmem:[%s611 + $0x4] sm:$0xf] %vm1618, %v1594
        %1621 = vst.msk [vmem:[%s611 + $0x8] sm:$0xf] %vm1618, %v1595
        %1622 = vst.msk [vmem:[%s611 + $0xc] sm:$0xf] %vm1618, %v1596
        %1623 = vst.msk [vmem:[%s611 + $0x10] sm:$0xf] %vm1618, %v1597
        %1624 = vst.msk [vmem:[%s611 + $0x14] sm:$0xf] %vm1618, %v1598
        %1625 = vst.msk [vmem:[%s611 + $0x18] sm:$0xf] %vm1618, %v1599
        %1626 = vst.msk [vmem:[%s611 + $0x1c] sm:$0xf] %vm1618, %v1600
        %1627 = vst.msk [vmem:[%s611 + $0x20] sm:$0xf] %vm1618, %v1601
        %1628 = vst.msk [vmem:[%s611 + $0x24] sm:$0xf] %vm1618, %v1602
        %1629 = vst.msk [vmem:[%s611 + $0x28] sm:$0xf] %vm1618, %v1603
        %1630 = vst.msk [vmem:[%s611 + $0x2c] sm:$0xf] %vm1618, %v1604
        %1631 = vst.msk [vmem:[%s611 + $0x30] sm:$0xf] %vm1618, %v1605
        %1632 = vst.msk [vmem:[%s611 + $0x34] sm:$0xf] %vm1618, %v1606
        %1633 = vst.msk [vmem:[%s611 + $0x38] sm:$0xf] %vm1618, %v1607
        %1634 = vst.msk [vmem:[%s611 + $0x3c] sm:$0xf] %vm1618, %v1608
        %1635 = vst.msk [vmem:[%s611 + $0x40] sm:$0xf] %vm1618, %v1609
        %1636 = vst.msk [vmem:[%s611 + $0x44] sm:$0xf] %vm1618, %v1610
        %1637 = vst.msk [vmem:[%s611 + $0x48] sm:$0xf] %vm1618, %v1611
        %1638 = vst.msk [vmem:[%s611 + $0x4c] sm:$0xf] %vm1618, %v1612
        %1639 = vst.msk [vmem:[%s611 + $0x50] sm:$0xf] %vm1618, %v1613
        %1640 = vst.msk [vmem:[%s611 + $0x54] sm:$0xf] %vm1618, %v1614
        %1641 = vst.msk [vmem:[%s611 + $0x58] sm:$0xf] %vm1618, %v1615
        %1642 = vst.msk [vmem:[%s611 + $0x5c] sm:$0xf] %vm1618, %v1616
        %1643 = vst.msk [vmem:[%s611 + $0x60] sm:$0xf] %vm1618, %v1617
        %s1644 = smul.u32 25, %s14
        %p1645 = scmp.lt.s32.totalorder %s1644, 49
        %s1646 = scalar_select %p1645, %s1644, 49
        %s1647 = smul.addr %s1646, 4
        %s1648 = scalar_lea.vmem %s3, %s1647
        // Predicated region
        $region74: #{lenet_forward.3} parent=68 // pred_check
          %p1649 = pneg %p100
        $region75: #{lenet_forward.3} parent=68 // pred_check_branch
          %1651 = sbr.rel (%p1649) target = $region77
        $region76: #{lenet_forward.3} parent=68 // pred_region
          %s1652 = smul.u32 25, %s14
        $region77: #{lenet_forward.3} parent=68 // pred_fallthru
          _
      $region69: #{lenet_forward.3} parent=5 // pred_fallthru
        _
      %p1653 = scmp.le.s32.totalorder 2, %s9
      // Predicated region
      $region78: #{lenet_forward.3} parent=5 // pred_check
        %p1654 = pneg %p1653
      $region79: #{lenet_forward.3} parent=5 // pred_check_branch
        %1656 = sbr.rel (%p1654) target = $region81
      $region80: #{lenet_forward.3} parent=5 // pred_region
        %s1657 = ssub.s32 %s9, 2
        // Predicated region
        $region82: #{lenet_forward.3} parent=80 // pred_check
          %p1658 = pneg %p106
        $region83: #{lenet_forward.3} parent=80 // pred_check_branch
          %1660 = sbr.rel (%p1658) target = $region85
        $region84: #{lenet_forward.3} parent=80 // pred_region
          %s1661 = smul.u32 25, %s15
          %p1662 = scmp.lt.s32.totalorder %s1661, 49
          %s1663 = scalar_select %p1662, %s1661, 49
          %s1664 = smul.addr %s1663, 4
          %s1665 = scalar_lea.vmem %s3, %s1664
        $region85: #{lenet_forward.3} parent=80 // pred_fallthru
          _
      $region81: #{lenet_forward.3} parent=5 // pred_fallthru
        _
    $region6: #{lenet_forward.3} parent=1 // loop_footer
      %s13 = sadd.s32 1, %s9
    $region7: #{lenet_forward.3} parent=1 // loop_footer_branch
      %8 = sbr.rel target = $region3
    $region8: #{lenet_forward.3} parent=1 // loop_exit
      _

// kernel: lenet_forward.4
$region0: #{lenet_forward.4}
  #allocation0 [shape = 'u32[]', space=smem, size = 0x4, offset = 0x4, fixed_abs, tag = 'smem constant byte address 0x4 - core index']
  #allocation1 [shape = 'u32[72,128]{1,0:T(1,128)}', space=vmem, size = 0x9000, scoped, tag = 'internal scratch']
  %s0 = inlined_call_operand.vmem [shape: bf16[4,64,1600], index: 0, kind: input, shape index: {}]
  %s1 = inlined_call_operand.vmem [shape: bf16[1600,64], index: 1, kind: input, shape index: {}]
  %s2 = inlined_call_operand.vmem [shape: f32[1,64], index: 2, kind: input, shape index: {}]
  %s3 = inlined_call_operand.vmem [shape: bf16[64,64], index: 3, kind: output, shape index: {}]
  %s4 = sld [smem:[#allocation0]]
  $region71: #{lenet_forward.4} parent=0
    _
  %s6 = ssub.s32 1, %s4
  %s7 = scalar_select 0, %s6, %s4
  $region1: #{lenet_forward.4} parent=0
    #allocation2 [shape = 'u8[851968]{0}', space=vmem, size = 0xd0000, scoped, tag = 'input window, operand 0']
    loop: start=0, step=1, limit=4
    $region2: #{lenet_forward.4} parent=1 // loop_pre_header
      _
    $region3: #{lenet_forward.4} parent=1 // loop_header
      %s9 = sphi 0, %s13
      %p10 = scmp.ge.s32.totalorder %s9, 4
      %s19 = sphi 0, %s21
      %s22 = sphi 0, %s19
      %s23 = sphi 0, %s22
      %s39 = sphi 0, %s23
      %s43 = sphi 0, %s43
      %s45 = sphi 0, %s43
      %s46 = sphi 0, %s45
      %s60 = sphi 0, %s46
      %s64 = sphi 0, %s64
      %s66 = sphi 0, %s64
      %s67 = sphi 0, %s66
      %s81 = sphi 0, %s67
      %s87 = sphi 0, %s89
      %s90 = sphi 0, %s87
      %s91 = sphi 0, %s90
      %s107 = sphi 0, %s91
    $region4: #{lenet_forward.4} parent=1 // loop_header_branch
      %12 = sbr.rel (%p10) target = $region8
    $region5: #{lenet_forward.4} parent=1 // loop_body
      %s14 = ssub.s32 %s9, 1
      %s15 = ssub.s32 %s9, 2
      %s16 = sadd.s32 %s9, 1
      %s17 = ssub.s32 %s9, %s16
      %p18 = scmp.eq.s32.totalorder %s17, 0
      %s20 = sadd.s32 %s19, 1
      %s21 = scalar_select %p18, %s19, %s20
      %p24 = pneg %p18
      %p25 = scmp.eq.s32.totalorder %s9, 1
      %p26 = por %p24, %p25
      %p27 = scmp.ne.s32.totalorder %s19, %s22
      %p28 = scmp.eq.s32.totalorder %s9, 0
      %p29 = por %p27, %p28
      %p30 = scmp.ne.s32.totalorder %s19, %s22
      %p31 = scmp.eq.s32.totalorder %s14, 1
      %p32 = por %p30, %p31
      %p33 = scmp.ne.s32.totalorder %s22, %s23
      %p34 = scmp.eq.s32.totalorder %s14, 0
      %p35 = por %p33, %p34
      %p36 = scmp.ne.s32.totalorder %s22, %s23
      %p37 = scmp.eq.s32.totalorder %s15, 1
      %p38 = por %p36, %p37
      %p40 = scmp.ne.s32.totalorder %s23, %s39
      %p41 = scmp.eq.s32.totalorder %s15, 0
      %p42 = por %p40, %p41
      %s44 = sadd.s32 %s43, 1
      %p47 = scmp.eq.s32.totalorder %s9, 1
      %p48 = scmp.ne.s32.totalorder %s43, %s45
      %p49 = scmp.eq.s32.totalorder %s9, 0
      %p50 = por %p48, %p49
      %p51 = scmp.ne.s32.totalorder %s43, %s45
      %p52 = scmp.eq.s32.totalorder %s14, 1
      %p53 = por %p51, %p52
      %p54 = scmp.ne.s32.totalorder %s45, %s46
      %p55 = scmp.eq.s32.totalorder %s14, 0
      %p56 = por %p54, %p55
      %p57 = scmp.ne.s32.totalorder %s45, %s46
      %p58 = scmp.eq.s32.totalorder %s15, 1
      %p59 = por %p57, %p58
      %p61 = scmp.ne.s32.totalorder %s46, %s60
      %p62 = scmp.eq.s32.totalorder %s15, 0
      %p63 = por %p61, %p62
      %s65 = sadd.s32 %s64, 1
      %p68 = scmp.eq.s32.totalorder %s9, 1
      %p69 = scmp.ne.s32.totalorder %s64, %s66
      %p70 = scmp.eq.s32.totalorder %s9, 0
      %p71 = por %p69, %p70
      %p72 = scmp.ne.s32.totalorder %s64, %s66
      %p73 = scmp.eq.s32.totalorder %s14, 1
      %p74 = por %p72, %p73
      %p75 = scmp.ne.s32.totalorder %s66, %s67
      %p76 = scmp.eq.s32.totalorder %s14, 0
      %p77 = por %p75, %p76
      %p78 = scmp.ne.s32.totalorder %s66, %s67
      %p79 = scmp.eq.s32.totalorder %s15, 1
      %p80 = por %p78, %p79
      %p82 = scmp.ne.s32.totalorder %s67, %s81
      %p83 = scmp.eq.s32.totalorder %s15, 0
      %p84 = por %p82, %p83
      %s85 = ssub.s32 %s9, %s16
      %p86 = scmp.eq.s32.totalorder %s85, 0
      %s88 = sadd.s32 %s87, 1
      %s89 = scalar_select %p86, %s87, %s88
      %p92 = pneg %p86
      %p93 = scmp.eq.s32.totalorder %s9, 1
      %p94 = por %p92, %p93
      %p95 = scmp.ne.s32.totalorder %s87, %s90
      %p96 = scmp.eq.s32.totalorder %s9, 0
      %p97 = por %p95, %p96
      %p98 = scmp.ne.s32.totalorder %s87, %s90
      %p99 = scmp.eq.s32.totalorder %s14, 1
      %p100 = por %p98, %p99
      %p101 = scmp.ne.s32.totalorder %s90, %s91
      %p102 = scmp.eq.s32.totalorder %s14, 0
      %p103 = por %p101, %p102
      %p104 = scmp.ne.s32.totalorder %s90, %s91
      %p105 = scmp.eq.s32.totalorder %s15, 1
      %p106 = por %p104, %p105
      %p108 = scmp.ne.s32.totalorder %s91, %s107
      %p109 = scmp.eq.s32.totalorder %s15, 0
      %p110 = por %p108, %p109
      %p111 = scmp.le.s32.totalorder 1, %s9
      %p112 = scmp.lt.s32.totalorder %s9, 3
      %p113 = pnand %p111, %p112
      %p114 = pneg %p113
      // Predicated region
      $region9: #{lenet_forward.4} parent=5 // pred_check
        _
      $region10: #{lenet_forward.4} parent=5 // pred_check_branch
        %116 = sbr.rel (%p113) target = $region12
      $region11: #{lenet_forward.4} parent=5 // pred_region
        %s117 = ssub.s32 %s9, 1
        // Predicated region
        $region13: #{lenet_forward.4} parent=11 // pred_check
          %p118 = pneg %p56
        $region14: #{lenet_forward.4} parent=11 // pred_check_branch
          %120 = sbr.rel (%p118) target = $region16
        $region15: #{lenet_forward.4} parent=11 // pred_region
          _
        $region16: #{lenet_forward.4} parent=11 // pred_fallthru
          _
        // Predicated region
        $region17: #{lenet_forward.4} parent=11 // pred_check
          %p121 = pneg %p77
        $region18: #{lenet_forward.4} parent=11 // pred_check_branch
          %123 = sbr.rel (%p121) target = $region20
        $region19: #{lenet_forward.4} parent=11 // pred_region
          _
        $region20: #{lenet_forward.4} parent=11 // pred_fallthru
          _
      $region12: #{lenet_forward.4} parent=5 // pred_fallthru
        _
      %p124 = scmp.lt.s32.totalorder %s9, 2
      // Predicated region
      $region21: #{lenet_forward.4} parent=5 // pred_check
        %p125 = pneg %p124
      $region22: #{lenet_forward.4} parent=5 // pred_check_branch
        %127 = sbr.rel (%p125) target = $region24
      $region23: #{lenet_forward.4} parent=5 // pred_region
        // Predicated region
        $region25: #{lenet_forward.4} parent=23 // pred_check
          %p128 = pneg %p29
        $region26: #{lenet_forward.4} parent=23 // pred_check_branch
          %130 = sbr.rel (%p128) target = $region28
        $region27: #{lenet_forward.4} parent=23 // pred_region
          %s131 = sand.u32 %s19, 1
          %s132 = sand.u32 %s19, 1
          %s133 = smul.addr %s132, 832
          %s134 = scalar_lea.vmem [#allocation2], %s133
          %s135 = smul.u32 4, %s9
          %s136 = smul.addr %s135, 13
          %s137 = smul.addr %s136, 4
          %s138 = scalar_lea.vmem %s0, %s137
          // Predicated region
          $region29: #{lenet_forward.4} parent=27 // pred_check
            _
          $region30: #{lenet_forward.4} parent=27 // pred_check_branch
            %140 = sbr.rel (0) target = $region32
          $region31: #{lenet_forward.4} parent=27 // pred_region
            // Predicated region
            $region33: #{lenet_forward.4} parent=31 // pred_check
              _
            $region34: #{lenet_forward.4} parent=31 // pred_check_branch
              %142 = sbr.rel (0) target = $region36
            $region35: #{lenet_forward.4} parent=31 // pred_region
              %s143 = scalar_lea.vmem %s138, 48
              %s144 = scalar_lea.vmem %s134, 48 [#allocation2]
              loop: start=0, step=1, limit=1
              $region37: #{lenet_forward.4} parent=35 // loop_pre_header
                _
              $region38: #{lenet_forward.4} parent=35 // loop_header
                %s146 = sphi 0, %s150
                %p147 = scmp.ge.s32.totalorder %s146, 1
                %s151 = sphi %s138, %s138
                %s152 = sphi %s134, %s134
              $region39: #{lenet_forward.4} parent=35 // loop_header_branch
                %149 = sbr.rel (%p147) target = $region43
              $region40: #{lenet_forward.4} parent=35 // loop_body
                %v153 = vld [vmem:[%s151] sm:$0xff]
                %154 = vst [vmem:[%s152] sm:$0xff] %v153
                %v155 = vld [vmem:[%s151 + $0x8] sm:$0xff]
                %156 = vst [vmem:[%s152 + $0x8] sm:$0xff] %v155
                %v157 = vld [vmem:[%s151 + $0x10] sm:$0xff]
                %158 = vst [vmem:[%s152 + $0x10] sm:$0xff] %v157
                %v159 = vld [vmem:[%s151 + $0x18] sm:$0xff]
                %160 = vst [vmem:[%s152 + $0x18] sm:$0xff] %v159
                %v161 = vld [vmem:[%s151 + $0x20] sm:$0xff]
                %162 = vst [vmem:[%s152 + $0x20] sm:$0xff] %v161
                %v163 = vld [vmem:[%s151 + $0x28] sm:$0xff]
                %164 = vst [vmem:[%s152 + $0x28] sm:$0xff] %v163
                %v165 = vld [vmem:[%s151 + $0x34] sm:$0xff]
                %166 = vst [vmem:[%s152 + $0x34] sm:$0xff] %v165
                %v167 = vld [vmem:[%s151 + $0x3c] sm:$0xff]
                %168 = vst [vmem:[%s152 + $0x3c] sm:$0xff] %v167
                %v169 = vld [vmem:[%s151 + $0x44] sm:$0xff]
                %170 = vst [vmem:[%s152 + $0x44] sm:$0xff] %v169
                %v171 = vld [vmem:[%s151 + $0x4c] sm:$0xff]
                %172 = vst [vmem:[%s152 + $0x4c] sm:$0xff] %v171
                %v173 = vld [vmem:[%s151 + $0x54] sm:$0xff]
                %174 = vst [vmem:[%s152 + $0x54] sm:$0xff] %v173
                %v175 = vld [vmem:[%s151 + $0x5c] sm:$0xff]
                %176 = vst [vmem:[%s152 + $0x5c] sm:$0xff] %v175
                %v177 = vld [vmem:[%s151 + $0x68] sm:$0xff]
                %178 = vst [vmem:[%s152 + $0x68] sm:$0xff] %v177
                %v179 = vld [vmem:[%s151 + $0x70] sm:$0xff]
                %180 = vst [vmem:[%s152 + $0x70] sm:$0xff] %v179
                %v181 = vld [vmem:[%s151 + $0x78] sm:$0xff]
                %182 = vst [vmem:[%s152 + $0x78] sm:$0xff] %v181
                %v183 = vld [vmem:[%s151 + $0x80] sm:$0xff]
                %184 = vst [vmem:[%s152 + $0x80] sm:$0xff] %v183
                %v185 = vld [vmem:[%s151 + $0x88] sm:$0xff]
                %186 = vst [vmem:[%s152 + $0x88] sm:$0xff] %v185
                %v187 = vld [vmem:[%s151 + $0x90] sm:$0xff]
                %188 = vst [vmem:[%s152 + $0x90] sm:$0xff] %v187
                %v189 = vld [vmem:[%s151 + $0x9c] sm:$0xff]
                %190 = vst [vmem:[%s152 + $0x9c] sm:$0xff] %v189
                %v191 = vld [vmem:[%s151 + $0xa4] sm:$0xff]
                %192 = vst [vmem:[%s152 + $0xa4] sm:$0xff] %v191
                %v193 = vld [vmem:[%s151 + $0xac] sm:$0xff]
                %194 = vst [vmem:[%s152 + $0xac] sm:$0xff] %v193
                %v195 = vld [vmem:[%s151 + $0xb4] sm:$0xff]
                %196 = vst [vmem:[%s152 + $0xb4] sm:$0xff] %v195
                %v197 = vld [vmem:[%s151 + $0xbc] sm:$0xff]
                %198 = vst [vmem:[%s152 + $0xbc] sm:$0xff] %v197
                %v199 = vld [vmem:[%s151 + $0xc4] sm:$0xff]
                %200 = vst [vmem:[%s152 + $0xc4] sm:$0xff] %v199
                %v201 = vld [vmem:[%s151 + $0x1a0] sm:$0xff]
                %202 = vst [vmem:[%s152 + $0xd0] sm:$0xff] %v201
                %v203 = vld [vmem:[%s151 + $0x1a8] sm:$0xff]
                %204 = vst [vmem:[%s152 + $0xd8] sm:$0xff] %v203
                %v205 = vld [vmem:[%s151 + $0x1b0] sm:$0xff]
                %206 = vst [vmem:[%s152 + $0xe0] sm:$0xff] %v205
                %v207 = vld [vmem:[%s151 + $0x1b8] sm:$0xff]
                %208 = vst [vmem:[%s152 + $0xe8] sm:$0xff] %v207
                %v209 = vld [vmem:[%s151 + $0x1c0] sm:$0xff]
                %210 = vst [vmem:[%s152 + $0xf0] sm:$0xff] %v209
                %v211 = vld [vmem:[%s151 + $0x1c8] sm:$0xff]
                %212 = vst [vmem:[%s152 + $0xf8] sm:$0xff] %v211
                %v213 = vld [vmem:[%s151 + $0x1d4] sm:$0xff]
                %214 = vst [vmem:[%s152 + $0x104] sm:$0xff] %v213
                %v215 = vld [vmem:[%s151 + $0x1dc] sm:$0xff]
                %216 = vst [vmem:[%s152 + $0x10c] sm:$0xff] %v215
                %v217 = vld [vmem:[%s151 + $0x1e4] sm:$0xff]
                %218 = vst [vmem:[%s152 + $0x114] sm:$0xff] %v217
                %v219 = vld [vmem:[%s151 + $0x1ec] sm:$0xff]
                %220 = vst [vmem:[%s152 + $0x11c] sm:$0xff] %v219
                %v221 = vld [vmem:[%s151 + $0x1f4] sm:$0xff]
                %222 = vst [vmem:[%s152 + $0x124] sm:$0xff] %v221
                %v223 = vld [vmem:[%s151 + $0x1fc] sm:$0xff]
                %224 = vst [vmem:[%s152 + $0x12c] sm:$0xff] %v223
                %v225 = vld [vmem:[%s151 + $0x208] sm:$0xff]
                %226 = vst [vmem:[%s152 + $0x138] sm:$0xff] %v225
                %v227 = vld [vmem:[%s151 + $0x210] sm:$0xff]
                %228 = vst [vmem:[%s152 + $0x140] sm:$0xff] %v227
                %v229 = vld [vmem:[%s151 + $0x218] sm:$0xff]
                %230 = vst [vmem:[%s152 + $0x148] sm:$0xff] %v229
                %v231 = vld [vmem:[%s151 + $0x220] sm:$0xff]
                %232 = vst [vmem:[%s152 + $0x150] sm:$0xff] %v231
                %v233 = vld [vmem:[%s151 + $0x228] sm:$0xff]
                %234 = vst [vmem:[%s152 + $0x158] sm:$0xff] %v233
                %v235 = vld [vmem:[%s151 + $0x230] sm:$0xff]
                %236 = vst [vmem:[%s152 + $0x160] sm:$0xff] %v235
                %v237 = vld [vmem:[%s151 + $0x23c] sm:$0xff]
                %238 = vst [vmem:[%s152 + $0x16c] sm:$0xff] %v237
                %v239 = vld [vmem:[%s151 + $0x244] sm:$0xff]
                %240 = vst [vmem:[%s152 + $0x174] sm:$0xff] %v239
                %v241 = vld [vmem:[%s151 + $0x24c] sm:$0xff]
                %242 = vst [vmem:[%s152 + $0x17c] sm:$0xff] %v241
                %v243 = vld [vmem:[%s151 + $0x254] sm:$0xff]
                %244 = vst [vmem:[%s152 + $0x184] sm:$0xff] %v243
                %v245 = vld [vmem:[%s151 + $0x25c] sm:$0xff]
                %246 = vst [vmem:[%s152 + $0x18c] sm:$0xff] %v245
                %v247 = vld [vmem:[%s151 + $0x264] sm:$0xff]
                %248 = vst [vmem:[%s152 + $0x194] sm:$0xff] %v247
                %v249 = vld [vmem:[%s151 + $0x340] sm:$0xff]
                %250 = vst [vmem:[%s152 + $0x1a0] sm:$0xff] %v249
                %v251 = vld [vmem:[%s151 + $0x348] sm:$0xff]
                %252 = vst [vmem:[%s152 + $0x1a8] sm:$0xff] %v251
                %v253 = vld [vmem:[%s151 + $0x350] sm:$0xff]
                %254 = vst [vmem:[%s152 + $0x1b0] sm:$0xff] %v253
                %v255 = vld [vmem:[%s151 + $0x358] sm:$0xff]
                %256 = vst [vmem:[%s152 + $0x1b8] sm:$0xff] %v255
                %v257 = vld [vmem:[%s151 + $0x360] sm:$0xff]
                %258 = vst [vmem:[%s152 + $0x1c0] sm:$0xff] %v257
                %v259 = vld [vmem:[%s151 + $0x368] sm:$0xff]
                %260 = vst [vmem:[%s152 + $0x1c8] sm:$0xff] %v259
                %v261 = vld [vmem:[%s151 + $0x374] sm:$0xff]
                %262 = vst [vmem:[%s152 + $0x1d4] sm:$0xff] %v261
                %v263 = vld [vmem:[%s151 + $0x37c] sm:$0xff]
                %264 = vst [vmem:[%s152 + $0x1dc] sm:$0xff] %v263
                %v265 = vld [vmem:[%s151 + $0x384] sm:$0xff]
                %266 = vst [vmem:[%s152 + $0x1e4] sm:$0xff] %v265
                %v267 = vld [vmem:[%s151 + $0x38c] sm:$0xff]
                %268 = vst [vmem:[%s152 + $0x1ec] sm:$0xff] %v267
                %v269 = vld [vmem:[%s151 + $0x394] sm:$0xff]
                %270 = vst [vmem:[%s152 + $0x1f4] sm:$0xff] %v269
                %v271 = vld [vmem:[%s151 + $0x39c] sm:$0xff]
                %272 = vst [vmem:[%s152 + $0x1fc] sm:$0xff] %v271
                %v273 = vld [vmem:[%s151 + $0x3a8] sm:$0xff]
                %274 = vst [vmem:[%s152 + $0x208] sm:$0xff] %v273
                %v275 = vld [vmem:[%s151 + $0x3b0] sm:$0xff]
                %276 = vst [vmem:[%s152 + $0x210] sm:$0xff] %v275
                %v277 = vld [vmem:[%s151 + $0x3b8] sm:$0xff]
                %278 = vst [vmem:[%s152 + $0x218] sm:$0xff] %v277
                %v279 = vld [vmem:[%s151 + $0x3c0] sm:$0xff]
                %280 = vst [vmem:[%s152 + $0x220] sm:$0xff] %v279
                %v281 = vld [vmem:[%s151 + $0x3c8] sm:$0xff]
                %282 = vst [vmem:[%s152 + $0x228] sm:$0xff] %v281
                %v283 = vld [vmem:[%s151 + $0x3d0] sm:$0xff]
                %284 = vst [vmem:[%s152 + $0x230] sm:$0xff] %v283
                %v285 = vld [vmem:[%s151 + $0x3dc] sm:$0xff]
                %286 = vst [vmem:[%s152 + $0x23c] sm:$0xff] %v285
                %v287 = vld [vmem:[%s151 + $0x3e4] sm:$0xff]
                %288 = vst [vmem:[%s152 + $0x244] sm:$0xff] %v287
                %v289 = vld [vmem:[%s151 + $0x3ec] sm:$0xff]
                %290 = vst [vmem:[%s152 + $0x24c] sm:$0xff] %v289
                %v291 = vld [vmem:[%s151 + $0x3f4] sm:$0xff]
                %292 = vst [vmem:[%s152 + $0x254] sm:$0xff] %v291
                %v293 = vld [vmem:[%s151 + $0x3fc] sm:$0xff]
                %294 = vst [vmem:[%s152 + $0x25c] sm:$0xff] %v293
                %v295 = vld [vmem:[%s151 + $0x404] sm:$0xff]
                %296 = vst [vmem:[%s152 + $0x264] sm:$0xff] %v295
                %v297 = vld [vmem:[%s151 + $0x4e0] sm:$0xff]
                %298 = vst [vmem:[%s152 + $0x270] sm:$0xff] %v297
                %v299 = vld [vmem:[%s151 + $0x4e8] sm:$0xff]
                %300 = vst [vmem:[%s152 + $0x278] sm:$0xff] %v299
                %v301 = vld [vmem:[%s151 + $0x4f0] sm:$0xff]
                %302 = vst [vmem:[%s152 + $0x280] sm:$0xff] %v301
                %v303 = vld [vmem:[%s151 + $0x4f8] sm:$0xff]
                %304 = vst [vmem:[%s152 + $0x288] sm:$0xff] %v303
                %v305 = vld [vmem:[%s151 + $0x500] sm:$0xff]
                %306 = vst [vmem:[%s152 + $0x290] sm:$0xff] %v305
                %v307 = vld [vmem:[%s151 + $0x508] sm:$0xff]
                %308 = vst [vmem:[%s152 + $0x298] sm:$0xff] %v307
                %v309 = vld [vmem:[%s151 + $0x514] sm:$0xff]
                %310 = vst [vmem:[%s152 + $0x2a4] sm:$0xff] %v309
                %v311 = vld [vmem:[%s151 + $0x51c] sm:$0xff]
                %312 = vst [vmem:[%s152 + $0x2ac] sm:$0xff] %v311
                %v313 = vld [vmem:[%s151 + $0x524] sm:$0xff]
                %314 = vst [vmem:[%s152 + $0x2b4] sm:$0xff] %v313
                %v315 = vld [vmem:[%s151 + $0x52c] sm:$0xff]
                %316 = vst [vmem:[%s152 + $0x2bc] sm:$0xff] %v315
                %v317 = vld [vmem:[%s151 + $0x534] sm:$0xff]
                %318 = vst [vmem:[%s152 + $0x2c4] sm:$0xff] %v317
                %v319 = vld [vmem:[%s151 + $0x53c] sm:$0xff]
                %320 = vst [vmem:[%s152 + $0x2cc] sm:$0xff] %v319
                %v321 = vld [vmem:[%s151 + $0x548] sm:$0xff]
                %322 = vst [vmem:[%s152 + $0x2d8] sm:$0xff] %v321
                %v323 = vld [vmem:[%s151 + $0x550] sm:$0xff]
                %324 = vst [vmem:[%s152 + $0x2e0] sm:$0xff] %v323
                %v325 = vld [vmem:[%s151 + $0x558] sm:$0xff]
                %326 = vst [vmem:[%s152 + $0x2e8] sm:$0xff] %v325
                %v327 = vld [vmem:[%s151 + $0x560] sm:$0xff]
                %328 = vst [vmem:[%s152 + $0x2f0] sm:$0xff] %v327
                %v329 = vld [vmem:[%s151 + $0x568] sm:$0xff]
                %330 = vst [vmem:[%s152 + $0x2f8] sm:$0xff] %v329
                %v331 = vld [vmem:[%s151 + $0x570] sm:$0xff]
                %332 = vst [vmem:[%s152 + $0x300] sm:$0xff] %v331
                %v333 = vld [vmem:[%s151 + $0x57c] sm:$0xff]
                %334 = vst [vmem:[%s152 + $0x30c] sm:$0xff] %v333
                %v335 = vld [vmem:[%s151 + $0x584] sm:$0xff]
                %336 = vst [vmem:[%s152 + $0x314] sm:$0xff] %v335
                %v337 = vld [vmem:[%s151 + $0x58c] sm:$0xff]
                %338 = vst [vmem:[%s152 + $0x31c] sm:$0xff] %v337
                %v339 = vld [vmem:[%s151 + $0x594] sm:$0xff]
                %340 = vst [vmem:[%s152 + $0x324] sm:$0xff] %v339
                %v341 = vld [vmem:[%s151 + $0x59c] sm:$0xff]
                %342 = vst [vmem:[%s152 + $0x32c] sm:$0xff] %v341
                %v343 = vld [vmem:[%s151 + $0x5a4] sm:$0xff]
                %344 = vst [vmem:[%s152 + $0x334] sm:$0xff] %v343
              $region41: #{lenet_forward.4} parent=35 // loop_footer
                %s150 = sadd.s32 1, %s146
              $region42: #{lenet_forward.4} parent=35 // loop_footer_branch
                %145 = sbr.rel target = $region38
              $region43: #{lenet_forward.4} parent=35 // loop_exit
                _
              %s346 = ssub.s32 16, 1
              loop: start=0, step=1, limit=1
              $region44: #{lenet_forward.4} parent=35 // loop_pre_header
                _
              $region45: #{lenet_forward.4} parent=35 // loop_header
                %s348 = sphi 0, %s352
                %p349 = scmp.ge.s32.totalorder %s348, 1
                %s353 = sphi %s143, %s143
                %s354 = sphi %s144, %s144
              $region46: #{lenet_forward.4} parent=35 // loop_header_branch
                %351 = sbr.rel (%p349) target = $region50
              $region47: #{lenet_forward.4} parent=35 // loop_body
                %v355 = vld [vmem:[%s353] sm:%s346]
                %356 = vst [vmem:[%s354] sm:%s346] %v355
                %v357 = vld [vmem:[%s353 + $0x34] sm:%s346]
                %358 = vst [vmem:[%s354 + $0x34] sm:%s346] %v357
                %v359 = vld [vmem:[%s353 + $0x68] sm:%s346]
                %360 = vst [vmem:[%s354 + $0x68] sm:%s346] %v359
                %v361 = vld [vmem:[%s353 + $0x9c] sm:%s346]
                %362 = vst [vmem:[%s354 + $0x9c] sm:%s346] %v361
                %v363 = vld [vmem:[%s353 + $0x1a0] sm:%s346]
                %364 = vst [vmem:[%s354 + $0xd0] sm:%s346] %v363
                %v365 = vld [vmem:[%s353 + $0x1d4] sm:%s346]
                %366 = vst [vmem:[%s354 + $0x104] sm:%s346] %v365
                %v367 = vld [vmem:[%s353 + $0x208] sm:%s346]
                %368 = vst [vmem:[%s354 + $0x138] sm:%s346] %v367
                %v369 = vld [vmem:[%s353 + $0x23c] sm:%s346]
                %370 = vst [vmem:[%s354 + $0x16c] sm:%s346] %v369
                %v371 = vld [vmem:[%s353 + $0x340] sm:%s346]
                %372 = vst [vmem:[%s354 + $0x1a0] sm:%s346] %v371
                %v373 = vld [vmem:[%s353 + $0x374] sm:%s346]
                %374 = vst [vmem:[%s354 + $0x1d4] sm:%s346] %v373
                %v375 = vld [vmem:[%s353 + $0x3a8] sm:%s346]
                %376 = vst [vmem:[%s354 + $0x208] sm:%s346] %v375
                %v377 = vld [vmem:[%s353 + $0x3dc] sm:%s346]
                %378 = vst [vmem:[%s354 + $0x23c] sm:%s346] %v377
                %v379 = vld [vmem:[%s353 + $0x4e0] sm:%s346]
                %380 = vst [vmem:[%s354 + $0x270] sm:%s346] %v379
                %v381 = vld [vmem:[%s353 + $0x514] sm:%s346]
                %382 = vst [vmem:[%s354 + $0x2a4] sm:%s346] %v381
                %v383 = vld [vmem:[%s353 + $0x548] sm:%s346]
                %384 = vst [vmem:[%s354 + $0x2d8] sm:%s346] %v383
                %v385 = vld [vmem:[%s353 + $0x57c] sm:%s346]
                %386 = vst [vmem:[%s354 + $0x30c] sm:%s346] %v385
              $region48: #{lenet_forward.4} parent=35 // loop_footer
                %s352 = sadd.s32 1, %s348
              $region49: #{lenet_forward.4} parent=35 // loop_footer_branch
                %347 = sbr.rel target = $region45
              $region50: #{lenet_forward.4} parent=35 // loop_exit
                _
            $region36: #{lenet_forward.4} parent=31 // pred_fallthru
              _
          $region32: #{lenet_forward.4} parent=27 // pred_fallthru
            _
          %387 = vnop
        $region28: #{lenet_forward.4} parent=23 // pred_fallthru
          _
      $region24: #{lenet_forward.4} parent=5 // pred_fallthru
        _
      %p388 = scmp.le.s32.totalorder 1, %s9
      %p389 = scmp.lt.s32.totalorder %s9, 3
      %p390 = pnand %p388, %p389
      %p391 = pneg %p390
      // Predicated region
      $region51: #{lenet_forward.4} parent=5 // pred_check
        _
      $region52: #{lenet_forward.4} parent=5 // pred_check_branch
        %393 = sbr.rel (%p390) target = $region54
      $region53: #{lenet_forward.4} parent=5 // pred_region
        %s394 = ssub.s32 %s9, 1
        %s395 = sand.u32 %s22, 1
        %s396 = sand.u32 %s22, 1
        %s397 = smul.addr %s396, 832
        %s398 = scalar_lea.vmem [#allocation2], %s397
        // Predicated region
        $region55: #{lenet_forward.4} parent=53 // pred_check
          %p399 = pneg %p35
        $region56: #{lenet_forward.4} parent=53 // pred_check_branch
          %401 = sbr.rel (%p399) target = $region58
        $region57: #{lenet_forward.4} parent=53 // pred_region
          _
        $region58: #{lenet_forward.4} parent=53 // pred_fallthru
          _
        %s402 = sand.u32 %s22, 1
        %s403 = sand.u32 %s22, 1
        %s404 = smul.addr %s403, 832
        %s405 = scalar_lea.vmem [#allocation2], %s404
        %p406 = pneg %p35
        %p407 = pneg %p32
        %p408 = pneg %p56
        %p409 = pneg %p53
        %p410 = pneg %p77
        %p411 = pneg %p74
        %p412 = pneg %p103
        %p413 = pneg %p100
        %s414 = smul.u32 4, %s14
        %p415 = scmp.lt.s32.totalorder %s414, 7
        %s416 = scalar_select %p415, %s414, 7
        %s417 = smul.addr %s416, 4
        %s418 = scalar_lea.vmem %s3, %s417
        %s419 = smul.u32 4, %s14
        %s420 = smul.u32 4, %s14
        %p421 = scmp.lt.s32.totalorder %s420, 7
        %s422 = scalar_select %p421, %s420, 7
        %s423 = smul.addr %s422, 4
        %s424 = scalar_lea.vmem %s3, %s423
        %s425 = smul.u32 4, %s14
        %v427 = vld [vmem:[%s1] sm:$0xf]
        %v428 = vld [vmem:[%s1 + $0x4] sm:$0xf]
        %v429 = vld [vmem:[%s1 + $0x8] sm:$0xf]
        %v430 = vld [vmem:[%s1 + $0xc] sm:$0xf]
        %v431 = vld [vmem:[%s1 + $0x10] sm:$0xf]
        %v432 = vld [vmem:[%s1 + $0x14] sm:$0xf]
        %v433 = vld [vmem:[%s1 + $0x18] sm:$0xf]
        %v434 = vld [vmem:[%s1 + $0x1c] sm:$0xf]
        %v435 = vld [vmem:[%s1 + $0x20] sm:$0xf]
        %v436 = vld [vmem:[%s1 + $0x24] sm:$0xf]
        %v437 = vld [vmem:[%s1 + $0x28] sm:$0xf]
        %v438 = vld [vmem:[%s1 + $0x2c] sm:$0xf]
        %v439 = vld [vmem:[%s1 + $0x30] sm:$0xf]
        %v440 = vld [vmem:[%s1 + $0x34] sm:$0xf]
        %v441 = vld [vmem:[%s1 + $0x38] sm:$0xf]
        %v442 = vld [vmem:[%s1 + $0x3c] sm:$0xf]
        %v443 = vld [vmem:[%s1 + $0x40] sm:$0xf]
        %v444 = vld [vmem:[%s1 + $0x44] sm:$0xf]
        %v445 = vld [vmem:[%s1 + $0x48] sm:$0xf]
        %v446 = vld [vmem:[%s1 + $0x4c] sm:$0xf]
        %v447 = vld [vmem:[%s1 + $0x50] sm:$0xf]
        %v448 = vld [vmem:[%s1 + $0x54] sm:$0xf]
        %v449 = vld [vmem:[%s1 + $0x58] sm:$0xf]
        %v450 = vld [vmem:[%s1 + $0x5c] sm:$0xf]
        %v451 = vld [vmem:[%s1 + $0x60] sm:$0xf]
        %v452 = vld [vmem:[%s1 + $0x64] sm:$0xf]
        %v453 = vld [vmem:[%s1 + $0x68] sm:$0xf]
        %v454 = vld [vmem:[%s1 + $0x6c] sm:$0xf]
        %v455 = vld [vmem:[%s1 + $0x70] sm:$0xf]
        %v456 = vld [vmem:[%s1 + $0x74] sm:$0xf]
        %v457 = vld [vmem:[%s1 + $0x78] sm:$0xf]
        %v458 = vld [vmem:[%s1 + $0x7c] sm:$0xf]
        %v459 = vld [vmem:[%s1 + $0x80] sm:$0xf]
        %v460 = vld [vmem:[%s1 + $0x84] sm:$0xf]
        %v461 = vld [vmem:[%s1 + $0x88] sm:$0xf]
        %v462 = vld [vmem:[%s1 + $0x8c] sm:$0xf]
        %v463 = vld [vmem:[%s1 + $0x90] sm:$0xf]
        %v464 = vld [vmem:[%s1 + $0x94] sm:$0xf]
        %v465 = vld [vmem:[%s1 + $0x98] sm:$0xf]
        %v466 = vld [vmem:[%s1 + $0x9c] sm:$0xf]
        %v467 = vld [vmem:[%s1 + $0xa0] sm:$0xf]
        %v468 = vld [vmem:[%s1 + $0xa4] sm:$0xf]
        %v469 = vld [vmem:[%s1 + $0xa8] sm:$0xf]
        %v470 = vld [vmem:[%s1 + $0xac] sm:$0xf]
        %v471 = vld [vmem:[%s1 + $0xb0] sm:$0xf]
        %v472 = vld [vmem:[%s1 + $0xb4] sm:$0xf]
        %v473 = vld [vmem:[%s1 + $0xb8] sm:$0xf]
        %v474 = vld [vmem:[%s1 + $0xbc] sm:$0xf]
        %v475 = vld [vmem:[%s1 + $0xc0] sm:$0xf]
        %v476 = vld [vmem:[%s1 + $0xc4] sm:$0xf]
        %v477 = vld [vmem:[%s1 + $0xc8] sm:$0xf]
        %v478 = vld [vmem:[%s1 + $0xcc] sm:$0xf]
        %v479 = vld [vmem:[%s1 + $0xd0] sm:$0xf]
        %v480 = vld [vmem:[%s1 + $0xd4] sm:$0xf]
        %v481 = vld [vmem:[%s1 + $0xd8] sm:$0xf]
        %v482 = vld [vmem:[%s1 + $0xdc] sm:$0xf]
        %v483 = vld [vmem:[%s1 + $0xe0] sm:$0xf]
        %v484 = vld [vmem:[%s1 + $0xe4] sm:$0xf]
        %v485 = vld [vmem:[%s1 + $0xe8] sm:$0xf]
        %v486 = vld [vmem:[%s1 + $0xec] sm:$0xf]
        %v487 = vld [vmem:[%s1 + $0xf0] sm:$0xf]
        %v488 = vld [vmem:[%s1 + $0xf4] sm:$0xf]
        %v489 = vld [vmem:[%s1 + $0xf8] sm:$0xf]
        %v490 = vld [vmem:[%s1 + $0xfc] sm:$0xf]
        %v491 = vld [vmem:[%s1 + $0x100] sm:$0xf]
        %v492 = vld [vmem:[%s1 + $0x104] sm:$0xf]
        %v493 = vld [vmem:[%s1 + $0x108] sm:$0xf]
        %v494 = vld [vmem:[%s1 + $0x10c] sm:$0xf]
        %v495 = vld [vmem:[%s1 + $0x110] sm:$0xf]
        %v496 = vld [vmem:[%s1 + $0x114] sm:$0xf]
        %v497 = vld [vmem:[%s1 + $0x118] sm:$0xf]
        %v498 = vld [vmem:[%s1 + $0x11c] sm:$0xf]
        %v499 = vld [vmem:[%s1 + $0x120] sm:$0xf]
        %v500 = vld [vmem:[%s1 + $0x124] sm:$0xf]
        %v501 = vld [vmem:[%s1 + $0x128] sm:$0xf]
        %v502 = vld [vmem:[%s1 + $0x12c] sm:$0xf]
        %v503 = vld [vmem:[%s1 + $0x130] sm:$0xf]
        %v504 = vld [vmem:[%s1 + $0x134] sm:$0xf]
        %v505 = vld [vmem:[%s1 + $0x138] sm:$0xf]
        %v506 = vld [vmem:[%s1 + $0x13c] sm:$0xf]
        %v507 = vld [vmem:[%s1 + $0x140] sm:$0xf]
        %v508 = vld [vmem:[%s1 + $0x144] sm:$0xf]
        %v509 = vld [vmem:[%s1 + $0x148] sm:$0xf]
        %v510 = vld [vmem:[%s1 + $0x14c] sm:$0xf]
        %v511 = vld [vmem:[%s1 + $0x150] sm:$0xf]
        %v512 = vld [vmem:[%s1 + $0x154] sm:$0xf]
        %v513 = vld [vmem:[%s1 + $0x158] sm:$0xf]
        %v514 = vld [vmem:[%s1 + $0x15c] sm:$0xf]
        %v515 = vld [vmem:[%s1 + $0x160] sm:$0xf]
        %v516 = vld [vmem:[%s1 + $0x164] sm:$0xf]
        %v517 = vld [vmem:[%s1 + $0x168] sm:$0xf]
        %v518 = vld [vmem:[%s1 + $0x16c] sm:$0xf]
        %v519 = vld [vmem:[%s1 + $0x170] sm:$0xf]
        %v520 = vld [vmem:[%s1 + $0x174] sm:$0xf]
        %v521 = vld [vmem:[%s1 + $0x178] sm:$0xf]
        %v522 = vld [vmem:[%s1 + $0x17c] sm:$0xf]
        %v523 = vld [vmem:[%s1 + $0x180] sm:$0xf]
        %v524 = vld [vmem:[%s1 + $0x184] sm:$0xf]
        %v525 = vld [vmem:[%s1 + $0x188] sm:$0xf]
        %v526 = vld [vmem:[%s1 + $0x18c] sm:$0xf]
        %v527 = vld [vmem:[%s1 + $0x190] sm:$0xf]
        %v528 = vld [vmem:[%s1 + $0x194] sm:$0xf]
        %v529 = vld [vmem:[%s1 + $0x198] sm:$0xf]
        %v530 = vld [vmem:[%s1 + $0x19c] sm:$0xf]
        %v531 = vld [vmem:[%s1 + $0x1a0] sm:$0xf]
        %v532 = vld [vmem:[%s1 + $0x1a4] sm:$0xf]
        %v533 = vld [vmem:[%s1 + $0x1a8] sm:$0xf]
        %v534 = vld [vmem:[%s1 + $0x1ac] sm:$0xf]
        %v535 = vld [vmem:[%s1 + $0x1b0] sm:$0xf]
        %v536 = vld [vmem:[%s1 + $0x1b4] sm:$0xf]
        %v537 = vld [vmem:[%s1 + $0x1b8] sm:$0xf]
        %v538 = vld [vmem:[%s1 + $0x1bc] sm:$0xf]
        %v539 = vld [vmem:[%s1 + $0x1c0] sm:$0xf]
        %v540 = vld [vmem:[%s1 + $0x1c4] sm:$0xf]
        %v541 = vld [vmem:[%s1 + $0x1c8] sm:$0xf]
        %v542 = vld [vmem:[%s1 + $0x1cc] sm:$0xf]
        %v543 = vld [vmem:[%s1 + $0x1d0] sm:$0xf]
        %v544 = vld [vmem:[%s1 + $0x1d4] sm:$0xf]
        %v545 = vld [vmem:[%s1 + $0x1d8] sm:$0xf]
        %v546 = vld [vmem:[%s1 + $0x1dc] sm:$0xf]
        %v547 = vld [vmem:[%s1 + $0x1e0] sm:$0xf]
        %v548 = vld [vmem:[%s1 + $0x1e4] sm:$0xf]
        %v549 = vld [vmem:[%s1 + $0x1e8] sm:$0xf]
        %v550 = vld [vmem:[%s1 + $0x1ec] sm:$0xf]
        %v551 = vld [vmem:[%s1 + $0x1f0] sm:$0xf]
        %v552 = vld [vmem:[%s1 + $0x1f4] sm:$0xf]
        %v553 = vld [vmem:[%s1 + $0x1f8] sm:$0xf]
        %v554 = vld [vmem:[%s1 + $0x1fc] sm:$0xf]
        %v555 = vld [vmem:[%s1 + $0x200] sm:$0xf]
        %v556 = vld [vmem:[%s1 + $0x204] sm:$0xf]
        %v557 = vld [vmem:[%s1 + $0x208] sm:$0xf]
        %v558 = vld [vmem:[%s1 + $0x20c] sm:$0xf]
        %v559 = vld [vmem:[%s1 + $0x210] sm:$0xf]
        %v560 = vld [vmem:[%s1 + $0x214] sm:$0xf]
        %v561 = vld [vmem:[%s1 + $0x218] sm:$0xf]
        %v562 = vld [vmem:[%s1 + $0x21c] sm:$0xf]
        %v563 = vld [vmem:[%s1 + $0x220] sm:$0xf]
        %v564 = vld [vmem:[%s1 + $0x224] sm:$0xf]
        %v565 = vld [vmem:[%s1 + $0x228] sm:$0xf]
        %v566 = vld [vmem:[%s1 + $0x22c] sm:$0xf]
        %v567 = vld [vmem:[%s1 + $0x230] sm:$0xf]
        %v568 = vld [vmem:[%s1 + $0x234] sm:$0xf]
        %v569 = vld [vmem:[%s1 + $0x238] sm:$0xf]
        %v570 = vld [vmem:[%s1 + $0x23c] sm:$0xf]
        %v571 = vld [vmem:[%s1 + $0x240] sm:$0xf]
        %v572 = vld [vmem:[%s1 + $0x244] sm:$0xf]
        %v573 = vld [vmem:[%s1 + $0x248] sm:$0xf]
        %v574 = vld [vmem:[%s1 + $0x24c] sm:$0xf]
        %v575 = vld [vmem:[%s1 + $0x250] sm:$0xf]
        %v576 = vld [vmem:[%s1 + $0x254] sm:$0xf]
        %v577 = vld [vmem:[%s1 + $0x258] sm:$0xf]
        %v578 = vld [vmem:[%s1 + $0x25c] sm:$0xf]
        %v579 = vld [vmem:[%s1 + $0x260] sm:$0xf]
        %v580 = vld [vmem:[%s1 + $0x264] sm:$0xf]
        %v581 = vld [vmem:[%s1 + $0x268] sm:$0xf]
        %v582 = vld [vmem:[%s1 + $0x26c] sm:$0xf]
        %v583 = vld [vmem:[%s1 + $0x270] sm:$0xf]
        %v584 = vld [vmem:[%s1 + $0x274] sm:$0xf]
        %v585 = vld [vmem:[%s1 + $0x278] sm:$0xf]
        %v586 = vld [vmem:[%s1 + $0x27c] sm:$0xf]
        %v587 = vld [vmem:[%s1 + $0x280] sm:$0xf]
        %v588 = vld [vmem:[%s1 + $0x284] sm:$0xf]
        %v589 = vld [vmem:[%s1 + $0x288] sm:$0xf]
        %v590 = vld [vmem:[%s1 + $0x28c] sm:$0xf]
        %v591 = vld [vmem:[%s1 + $0x290] sm:$0xf]
        %v592 = vld [vmem:[%s1 + $0x294] sm:$0xf]
        %v593 = vld [vmem:[%s1 + $0x298] sm:$0xf]
        %v594 = vld [vmem:[%s1 + $0x29c] sm:$0xf]
        %v595 = vld [vmem:[%s1 + $0x2a0] sm:$0xf]
        %v596 = vld [vmem:[%s1 + $0x2a4] sm:$0xf]
        %v597 = vld [vmem:[%s1 + $0x2a8] sm:$0xf]
        %v598 = vld [vmem:[%s1 + $0x2ac] sm:$0xf]
        %v599 = vld [vmem:[%s1 + $0x2b0] sm:$0xf]
        %v600 = vld [vmem:[%s1 + $0x2b4] sm:$0xf]
        %v601 = vld [vmem:[%s1 + $0x2b8] sm:$0xf]
        %v602 = vld [vmem:[%s1 + $0x2bc] sm:$0xf]
        %v603 = vld [vmem:[%s1 + $0x2c0] sm:$0xf]
        %v604 = vld [vmem:[%s1 + $0x2c4] sm:$0xf]
        %v605 = vld [vmem:[%s1 + $0x2c8] sm:$0xf]
        %v606 = vld [vmem:[%s1 + $0x2cc] sm:$0xf]
        %v607 = vld [vmem:[%s1 + $0x2d0] sm:$0xf]
        %v608 = vld [vmem:[%s1 + $0x2d4] sm:$0xf]
        %v609 = vld [vmem:[%s1 + $0x2d8] sm:$0xf]
        %v610 = vld [vmem:[%s1 + $0x2dc] sm:$0xf]
        %v611 = vld [vmem:[%s1 + $0x2e0] sm:$0xf]
        %v612 = vld [vmem:[%s1 + $0x2e4] sm:$0xf]
        %v613 = vld [vmem:[%s1 + $0x2e8] sm:$0xf]
        %v614 = vld [vmem:[%s1 + $0x2ec] sm:$0xf]
        %v615 = vld [vmem:[%s1 + $0x2f0] sm:$0xf]
        %v616 = vld [vmem:[%s1 + $0x2f4] sm:$0xf]
        %v617 = vld [vmem:[%s1 + $0x2f8] sm:$0xf]
        %v618 = vld [vmem:[%s1 + $0x2fc] sm:$0xf]
        %v619 = vld [vmem:[%s1 + $0x300] sm:$0xf]
        %v620 = vld [vmem:[%s1 + $0x304] sm:$0xf]
        %v621 = vld [vmem:[%s1 + $0x308] sm:$0xf]
        %v622 = vld [vmem:[%s1 + $0x30c] sm:$0xf]
        %v623 = vld [vmem:[%s1 + $0x310] sm:$0xf]
        %v624 = vld [vmem:[%s1 + $0x314] sm:$0xf]
        %v625 = vld [vmem:[%s1 + $0x318] sm:$0xf]
        %v626 = vld [vmem:[%s1 + $0x31c] sm:$0xf]
        %v627 = vld [vmem:[%s398] sm:$0xff]
        %v628 = vld [vmem:[%s398 + $0x8] sm:$0xff]
        %v629 = vld [vmem:[%s398 + $0x10] sm:$0xff]
        %v630 = vld [vmem:[%s398 + $0x18] sm:$0xff]
        %v631 = vld [vmem:[%s398 + $0x20] sm:$0xff]
        %v632 = vld [vmem:[%s398 + $0x28] sm:$0xff]
        %v633 = vld [vmem:[%s398 + $0x30] sm:$0xf]
        %v634 = vld [vmem:[%s398 + $0x34] sm:$0xff]
        %v635 = vld [vmem:[%s398 + $0x3c] sm:$0xff]
        %v636 = vld [vmem:[%s398 + $0x44] sm:$0xff]
        %v637 = vld [vmem:[%s398 + $0x4c] sm:$0xff]
        %v638 = vld [vmem:[%s398 + $0x54] sm:$0xff]
        %v639 = vld [vmem:[%s398 + $0x5c] sm:$0xff]
        %v640 = vld [vmem:[%s398 + $0x64] sm:$0xf]
        %v641 = vld [vmem:[%s398 + $0x68] sm:$0xff]
        %v642 = vld [vmem:[%s398 + $0x70] sm:$0xff]
        %v643 = vld [vmem:[%s398 + $0x78] sm:$0xff]
        %v644 = vld [vmem:[%s398 + $0x80] sm:$0xff]
        %v645 = vld [vmem:[%s398 + $0x88] sm:$0xff]
        %v646 = vld [vmem:[%s398 + $0x90] sm:$0xff]
        %v647 = vld [vmem:[%s398 + $0x98] sm:$0xf]
        %v648 = vld [vmem:[%s398 + $0x9c] sm:$0xff]
        %v649 = vld [vmem:[%s398 + $0xa4] sm:$0xff]
        %v650 = vld [vmem:[%s398 + $0xac] sm:$0xff]
        %v651 = vld [vmem:[%s398 + $0xb4] sm:$0xff]
        %v652 = vld [vmem:[%s398 + $0xbc] sm:$0xff]
        %v653 = vld [vmem:[%s398 + $0xc4] sm:$0xff]
        %v654 = vld [vmem:[%s398 + $0xcc] sm:$0xf]
        %v683 = vunpack.c.l.b16 %v627
        %v684 = vunpack.c.h.b16 %v627
        %v685 = vunpack.c.l.b16 %v628
        %v686 = vunpack.c.h.b16 %v628
        %v687 = vunpack.c.l.b16 %v629
        %v688 = vunpack.c.h.b16 %v629
        %v689 = vunpack.c.l.b16 %v630
        %v690 = vunpack.c.h.b16 %v630
        %v691 = vunpack.c.l.b16 %v631
        %v692 = vunpack.c.h.b16 %v631
        %v693 = vunpack.c.l.b16 %v632
        %v694 = vunpack.c.h.b16 %v632
        %v695 = vunpack.c.l.b16 %v633
        %v696 = vunpack.c.l.b16 %v634
        %v697 = vunpack.c.h.b16 %v634
        %v698 = vunpack.c.l.b16 %v635
        %v699 = vunpack.c.h.b16 %v635
        %v700 = vunpack.c.l.b16 %v636
        %v701 = vunpack.c.h.b16 %v636
        %v702 = vunpack.c.l.b16 %v637
        %v703 = vunpack.c.h.b16 %v637
        %v704 = vunpack.c.l.b16 %v638
        %v705 = vunpack.c.h.b16 %v638
        %v706 = vunpack.c.l.b16 %v639
        %v707 = vunpack.c.h.b16 %v639
        %v708 = vunpack.c.l.b16 %v640
        %v709 = vunpack.c.l.b16 %v641
        %v710 = vunpack.c.h.b16 %v641
        %v711 = vunpack.c.l.b16 %v642
        %v712 = vunpack.c.h.b16 %v642
        %v713 = vunpack.c.l.b16 %v643
        %v714 = vunpack.c.h.b16 %v643
        %v715 = vunpack.c.l.b16 %v644
        %v716 = vunpack.c.h.b16 %v644
        %v717 = vunpack.c.l.b16 %v645
        %v718 = vunpack.c.h.b16 %v645
        %v719 = vunpack.c.l.b16 %v646
        %v720 = vunpack.c.h.b16 %v646
        %v721 = vunpack.c.l.b16 %v647
        %v722 = vunpack.c.l.b16 %v648
        %v723 = vunpack.c.h.b16 %v648
        %v724 = vunpack.c.l.b16 %v649
        %v725 = vunpack.c.h.b16 %v649
        %v726 = vunpack.c.l.b16 %v650
        %v727 = vunpack.c.h.b16 %v650
        %v728 = vunpack.c.l.b16 %v651
        %v729 = vunpack.c.h.b16 %v651
        %v730 = vunpack.c.l.b16 %v652
        %v731 = vunpack.c.h.b16 %v652
        %v732 = vunpack.c.l.b16 %v653
        %v733 = vunpack.c.h.b16 %v653
        %v734 = vunpack.c.l.b16 %v654
        %v735 = vpack.c.b16 %v696, %v683
        %v736 = vpack.c.b16 %v697, %v684
        %v737 = vpack.c.b16 %v698, %v685
        %v738 = vpack.c.b16 %v699, %v686
        %v739 = vpack.c.b16 %v700, %v687
        %v740 = vpack.c.b16 %v701, %v688
        %v741 = vpack.c.b16 %v702, %v689
        %v742 = vpack.c.b16 %v703, %v690
        %v743 = vpack.c.b16 %v704, %v691
        %v744 = vpack.c.b16 %v705, %v692
        %v745 = vpack.c.b16 %v706, %v693
        %v746 = vpack.c.b16 %v707, %v694
        %v747 = vpack.c.b16 %v708, %v695
        %v748 = vpack.c.b16 %v722, %v709
        %v749 = vpack.c.b16 %v723, %v710
        %v750 = vpack.c.b16 %v724, %v711
        %v751 = vpack.c.b16 %v725, %v712
        %v752 = vpack.c.b16 %v726, %v713
        %v753 = vpack.c.b16 %v727, %v714
        %v754 = vpack.c.b16 %v728, %v715
        %v755 = vpack.c.b16 %v729, %v716
        %v756 = vpack.c.b16 %v730, %v717
        %v757 = vpack.c.b16 %v731, %v718
        %v758 = vpack.c.b16 %v732, %v719
        %v759 = vpack.c.b16 %v733, %v720
        %v760 = vpack.c.b16 %v734, %v721
        %v985 = vunpack.c.l.b16 %v427
        %v986 = vunpack.c.l.b16 %v428
        %v987 = vunpack.c.l.b16 %v429
        %v988 = vunpack.c.l.b16 %v430
        %v989 = vunpack.c.l.b16 %v431
        %v990 = vunpack.c.l.b16 %v432
        %v991 = vunpack.c.l.b16 %v433
        %v992 = vunpack.c.l.b16 %v434
        %v993 = vunpack.c.l.b16 %v435
        %v994 = vunpack.c.l.b16 %v436
        %v995 = vunpack.c.l.b16 %v437
        %v996 = vunpack.c.l.b16 %v438
        %v997 = vunpack.c.l.b16 %v439
        %v998 = vunpack.c.l.b16 %v440
        %v999 = vunpack.c.l.b16 %v441
        %v1000 = vunpack.c.l.b16 %v442
        %v1001 = vunpack.c.l.b16 %v443
        %v1002 = vunpack.c.l.b16 %v444
        %v1003 = vunpack.c.l.b16 %v445
        %v1004 = vunpack.c.l.b16 %v446
        %v1005 = vunpack.c.l.b16 %v447
        %v1006 = vunpack.c.l.b16 %v448
        %v1007 = vunpack.c.l.b16 %v449
        %v1008 = vunpack.c.l.b16 %v450
        %v1009 = vunpack.c.l.b16 %v451
        %v1010 = vunpack.c.l.b16 %v452
        %v1011 = vunpack.c.l.b16 %v453
        %v1012 = vunpack.c.l.b16 %v454
        %v1013 = vunpack.c.l.b16 %v455
        %v1014 = vunpack.c.l.b16 %v456
        %v1015 = vunpack.c.l.b16 %v457
        %v1016 = vunpack.c.l.b16 %v458
        %v1017 = vunpack.c.l.b16 %v459
        %v1018 = vunpack.c.l.b16 %v460
        %v1019 = vunpack.c.l.b16 %v461
        %v1020 = vunpack.c.l.b16 %v462
        %v1021 = vunpack.c.l.b16 %v463
        %v1022 = vunpack.c.l.b16 %v464
        %v1023 = vunpack.c.l.b16 %v465
        %v1024 = vunpack.c.l.b16 %v466
        %v1025 = vunpack.c.l.b16 %v467
        %v1026 = vunpack.c.l.b16 %v468
        %v1027 = vunpack.c.l.b16 %v469
        %v1028 = vunpack.c.l.b16 %v470
        %v1029 = vunpack.c.l.b16 %v471
        %v1030 = vunpack.c.l.b16 %v472
        %v1031 = vunpack.c.l.b16 %v473
        %v1032 = vunpack.c.l.b16 %v474
        %v1033 = vunpack.c.l.b16 %v475
        %v1034 = vunpack.c.l.b16 %v476
        %v1035 = vunpack.c.l.b16 %v477
        %v1036 = vunpack.c.l.b16 %v478
        %v1037 = vunpack.c.l.b16 %v479
        %v1038 = vunpack.c.l.b16 %v480
        %v1039 = vunpack.c.l.b16 %v481
        %v1040 = vunpack.c.l.b16 %v482
        %v1041 = vunpack.c.l.b16 %v483
        %v1042 = vunpack.c.l.b16 %v484
        %v1043 = vunpack.c.l.b16 %v485
        %v1044 = vunpack.c.l.b16 %v486
        %v1045 = vunpack.c.l.b16 %v487
        %v1046 = vunpack.c.l.b16 %v488
        %v1047 = vunpack.c.l.b16 %v489
        %v1048 = vunpack.c.l.b16 %v490
        %v1049 = vunpack.c.l.b16 %v491
        %v1050 = vunpack.c.l.b16 %v492
        %v1051 = vunpack.c.l.b16 %v493
        %v1052 = vunpack.c.l.b16 %v494
        %v1053 = vunpack.c.l.b16 %v495
        %v1054 = vunpack.c.l.b16 %v496
        %v1055 = vunpack.c.l.b16 %v497
        %v1056 = vunpack.c.l.b16 %v498
        %v1057 = vunpack.c.l.b16 %v499
        %v1058 = vunpack.c.l.b16 %v500
        %v1059 = vunpack.c.l.b16 %v501
        %v1060 = vunpack.c.l.b16 %v502
        %v1061 = vunpack.c.l.b16 %v503
        %v1062 = vunpack.c.l.b16 %v504
        %v1063 = vunpack.c.l.b16 %v505
        %v1064 = vunpack.c.l.b16 %v506
        %v1065 = vunpack.c.l.b16 %v507
        %v1066 = vunpack.c.l.b16 %v508
        %v1067 = vunpack.c.l.b16 %v509
        %v1068 = vunpack.c.l.b16 %v510
        %v1069 = vunpack.c.l.b16 %v511
        %v1070 = vunpack.c.l.b16 %v512
        %v1071 = vunpack.c.l.b16 %v513
        %v1072 = vunpack.c.l.b16 %v514
        %v1073 = vunpack.c.l.b16 %v515
        %v1074 = vunpack.c.l.b16 %v516
        %v1075 = vunpack.c.l.b16 %v517
        %v1076 = vunpack.c.l.b16 %v518
        %v1077 = vunpack.c.l.b16 %v519
        %v1078 = vunpack.c.l.b16 %v520
        %v1079 = vunpack.c.l.b16 %v521
        %v1080 = vunpack.c.l.b16 %v522
        %v1081 = vunpack.c.l.b16 %v523
        %v1082 = vunpack.c.l.b16 %v524
        %v1083 = vunpack.c.l.b16 %v525
        %v1084 = vunpack.c.l.b16 %v526
        %v1085 = vunpack.c.l.b16 %v527
        %v1086 = vunpack.c.l.b16 %v528
        %v1087 = vunpack.c.l.b16 %v529
        %v1088 = vunpack.c.l.b16 %v530
        %v1089 = vunpack.c.l.b16 %v531
        %v1090 = vunpack.c.l.b16 %v532
        %v1091 = vunpack.c.l.b16 %v533
        %v1092 = vunpack.c.l.b16 %v534
        %v1093 = vunpack.c.l.b16 %v535
        %v1094 = vunpack.c.l.b16 %v536
        %v1095 = vunpack.c.l.b16 %v537
        %v1096 = vunpack.c.l.b16 %v538
        %v1097 = vunpack.c.l.b16 %v539
        %v1098 = vunpack.c.l.b16 %v540
        %v1099 = vunpack.c.l.b16 %v541
        %v1100 = vunpack.c.l.b16 %v542
        %v1101 = vunpack.c.l.b16 %v543
        %v1102 = vunpack.c.l.b16 %v544
        %v1103 = vunpack.c.l.b16 %v545
        %v1104 = vunpack.c.l.b16 %v546
        %v1105 = vunpack.c.l.b16 %v547
        %v1106 = vunpack.c.l.b16 %v548
        %v1107 = vunpack.c.l.b16 %v549
        %v1108 = vunpack.c.l.b16 %v550
        %v1109 = vunpack.c.l.b16 %v551
        %v1110 = vunpack.c.l.b16 %v552
        %v1111 = vunpack.c.l.b16 %v553
        %v1112 = vunpack.c.l.b16 %v554
        %v1113 = vunpack.c.l.b16 %v555
        %v1114 = vunpack.c.l.b16 %v556
        %v1115 = vunpack.c.l.b16 %v557
        %v1116 = vunpack.c.l.b16 %v558
        %v1117 = vunpack.c.l.b16 %v559
        %v1118 = vunpack.c.l.b16 %v560
        %v1119 = vunpack.c.l.b16 %v561
        %v1120 = vunpack.c.l.b16 %v562
        %v1121 = vunpack.c.l.b16 %v563
        %v1122 = vunpack.c.l.b16 %v564
        %v1123 = vunpack.c.l.b16 %v565
        %v1124 = vunpack.c.l.b16 %v566
        %v1125 = vunpack.c.l.b16 %v567
        %v1126 = vunpack.c.l.b16 %v568
        %v1127 = vunpack.c.l.b16 %v569
        %v1128 = vunpack.c.l.b16 %v570
        %v1129 = vunpack.c.l.b16 %v571
        %v1130 = vunpack.c.l.b16 %v572
        %v1131 = vunpack.c.l.b16 %v573
        %v1132 = vunpack.c.l.b16 %v574
        %v1133 = vunpack.c.l.b16 %v575
        %v1134 = vunpack.c.l.b16 %v576
        %v1135 = vunpack.c.l.b16 %v577
        %v1136 = vunpack.c.l.b16 %v578
        %v1137 = vunpack.c.l.b16 %v579
        %v1138 = vunpack.c.l.b16 %v580
        %v1139 = vunpack.c.l.b16 %v581
        %v1140 = vunpack.c.l.b16 %v582
        %v1141 = vunpack.c.l.b16 %v583
        %v1142 = vunpack.c.l.b16 %v584
        %v1143 = vunpack.c.l.b16 %v585
        %v1144 = vunpack.c.l.b16 %v586
        %v1145 = vunpack.c.l.b16 %v587
        %v1146 = vunpack.c.l.b16 %v588
        %v1147 = vunpack.c.l.b16 %v589
        %v1148 = vunpack.c.l.b16 %v590
        %v1149 = vunpack.c.l.b16 %v591
        %v1150 = vunpack.c.l.b16 %v592
        %v1151 = vunpack.c.l.b16 %v593
        %v1152 = vunpack.c.l.b16 %v594
        %v1153 = vunpack.c.l.b16 %v595
        %v1154 = vunpack.c.l.b16 %v596
        %v1155 = vunpack.c.l.b16 %v597
        %v1156 = vunpack.c.l.b16 %v598
        %v1157 = vunpack.c.l.b16 %v599
        %v1158 = vunpack.c.l.b16 %v600
        %v1159 = vunpack.c.l.b16 %v601
        %v1160 = vunpack.c.l.b16 %v602
        %v1161 = vunpack.c.l.b16 %v603
        %v1162 = vunpack.c.l.b16 %v604
        %v1163 = vunpack.c.l.b16 %v605
        %v1164 = vunpack.c.l.b16 %v606
        %v1165 = vunpack.c.l.b16 %v607
        %v1166 = vunpack.c.l.b16 %v608
        %v1167 = vunpack.c.l.b16 %v609
        %v1168 = vunpack.c.l.b16 %v610
        %v1169 = vunpack.c.l.b16 %v611
        %v1170 = vunpack.c.l.b16 %v612
        %v1171 = vunpack.c.l.b16 %v613
        %v1172 = vunpack.c.l.b16 %v614
        %v1173 = vunpack.c.l.b16 %v615
        %v1174 = vunpack.c.l.b16 %v616
        %v1175 = vunpack.c.l.b16 %v617
        %v1176 = vunpack.c.l.b16 %v618
        %v1177 = vunpack.c.l.b16 %v619
        %v1178 = vunpack.c.l.b16 %v620
        %v1179 = vunpack.c.l.b16 %v621
        %v1180 = vunpack.c.l.b16 %v622
        %v1181 = vunpack.c.l.b16 %v623
        %v1182 = vunpack.c.l.b16 %v624
        %v1183 = vunpack.c.l.b16 %v625
        %v1184 = vunpack.c.l.b16 %v626
        %v1185 = vpack.c.b16 %v986, %v985
        %v1186 = vpack.c.b16 %v988, %v987
        %v1187 = vpack.c.b16 %v990, %v989
        %v1188 = vpack.c.b16 %v992, %v991
        %v1189 = vpack.c.b16 %v994, %v993
        %v1190 = vpack.c.b16 %v996, %v995
        %v1191 = vpack.c.b16 %v998, %v997
        %v1192 = vpack.c.b16 %v1000, %v999
        %v1193 = vpack.c.b16 %v1002, %v1001
        %v1194 = vpack.c.b16 %v1004, %v1003
        %v1195 = vpack.c.b16 %v1006, %v1005
        %v1196 = vpack.c.b16 %v1008, %v1007
        %v1197 = vpack.c.b16 %v1010, %v1009
        %v1198 = vpack.c.b16 %v1012, %v1011
        %v1199 = vpack.c.b16 %v1014, %v1013
        %v1200 = vpack.c.b16 %v1016, %v1015
        %v1201 = vpack.c.b16 %v1018, %v1017
        %v1202 = vpack.c.b16 %v1020, %v1019
        %v1203 = vpack.c.b16 %v1022, %v1021
        %v1204 = vpack.c.b16 %v1024, %v1023
        %v1205 = vpack.c.b16 %v1026, %v1025
        %v1206 = vpack.c.b16 %v1028, %v1027
        %v1207 = vpack.c.b16 %v1030, %v1029
        %v1208 = vpack.c.b16 %v1032, %v1031
        %v1209 = vpack.c.b16 %v1034, %v1033
        %v1210 = vpack.c.b16 %v1036, %v1035
        %v1211 = vpack.c.b16 %v1038, %v1037
        %v1212 = vpack.c.b16 %v1040, %v1039
        %v1213 = vpack.c.b16 %v1042, %v1041
        %v1214 = vpack.c.b16 %v1044, %v1043
        %v1215 = vpack.c.b16 %v1046, %v1045
        %v1216 = vpack.c.b16 %v1048, %v1047
        %v1217 = vpack.c.b16 %v1050, %v1049
        %v1218 = vpack.c.b16 %v1052, %v1051
        %v1219 = vpack.c.b16 %v1054, %v1053
        %v1220 = vpack.c.b16 %v1056, %v1055
        %v1221 = vpack.c.b16 %v1058, %v1057
        %v1222 = vpack.c.b16 %v1060, %v1059
        %v1223 = vpack.c.b16 %v1062, %v1061
        %v1224 = vpack.c.b16 %v1064, %v1063
        %v1225 = vpack.c.b16 %v1066, %v1065
        %v1226 = vpack.c.b16 %v1068, %v1067
        %v1227 = vpack.c.b16 %v1070, %v1069
        %v1228 = vpack.c.b16 %v1072, %v1071
        %v1229 = vpack.c.b16 %v1074, %v1073
        %v1230 = vpack.c.b16 %v1076, %v1075
        %v1231 = vpack.c.b16 %v1078, %v1077
        %v1232 = vpack.c.b16 %v1080, %v1079
        %v1233 = vpack.c.b16 %v1082, %v1081
        %v1234 = vpack.c.b16 %v1084, %v1083
        %v1235 = vpack.c.b16 %v1086, %v1085
        %v1236 = vpack.c.b16 %v1088, %v1087
        %v1237 = vpack.c.b16 %v1090, %v1089
        %v1238 = vpack.c.b16 %v1092, %v1091
        %v1239 = vpack.c.b16 %v1094, %v1093
        %v1240 = vpack.c.b16 %v1096, %v1095
        %v1241 = vpack.c.b16 %v1098, %v1097
        %v1242 = vpack.c.b16 %v1100, %v1099
        %v1243 = vpack.c.b16 %v1102, %v1101
        %v1244 = vpack.c.b16 %v1104, %v1103
        %v1245 = vpack.c.b16 %v1106, %v1105
        %v1246 = vpack.c.b16 %v1108, %v1107
        %v1247 = vpack.c.b16 %v1110, %v1109
        %v1248 = vpack.c.b16 %v1112, %v1111
        %v1249 = vpack.c.b16 %v1114, %v1113
        %v1250 = vpack.c.b16 %v1116, %v1115
        %v1251 = vpack.c.b16 %v1118, %v1117
        %v1252 = vpack.c.b16 %v1120, %v1119
        %v1253 = vpack.c.b16 %v1122, %v1121
        %v1254 = vpack.c.b16 %v1124, %v1123
        %v1255 = vpack.c.b16 %v1126, %v1125
        %v1256 = vpack.c.b16 %v1128, %v1127
        %v1257 = vpack.c.b16 %v1130, %v1129
        %v1258 = vpack.c.b16 %v1132, %v1131
        %v1259 = vpack.c.b16 %v1134, %v1133
        %v1260 = vpack.c.b16 %v1136, %v1135
        %v1261 = vpack.c.b16 %v1138, %v1137
        %v1262 = vpack.c.b16 %v1140, %v1139
        %v1263 = vpack.c.b16 %v1142, %v1141
        %v1264 = vpack.c.b16 %v1144, %v1143
        %v1265 = vpack.c.b16 %v1146, %v1145
        %v1266 = vpack.c.b16 %v1148, %v1147
        %v1267 = vpack.c.b16 %v1150, %v1149
        %v1268 = vpack.c.b16 %v1152, %v1151
        %v1269 = vpack.c.b16 %v1154, %v1153
        %v1270 = vpack.c.b16 %v1156, %v1155
        %v1271 = vpack.c.b16 %v1158, %v1157
        %v1272 = vpack.c.b16 %v1160, %v1159
        %v1273 = vpack.c.b16 %v1162, %v1161
        %v1274 = vpack.c.b16 %v1164, %v1163
        %v1275 = vpack.c.b16 %v1166, %v1165
        %v1276 = vpack.c.b16 %v1168, %v1167
        %v1277 = vpack.c.b16 %v1170, %v1169
        %v1278 = vpack.c.b16 %v1172, %v1171
        %v1279 = vpack.c.b16 %v1174, %v1173
        %v1280 = vpack.c.b16 %v1176, %v1175
        %v1281 = vpack.c.b16 %v1178, %v1177
        %v1282 = vpack.c.b16 %v1180, %v1179
        %v1283 = vpack.c.b16 %v1182, %v1181
        %v1284 = vpack.c.b16 %v1184, %v1183
        %vm1385 = vcmask 523264
        %v1387 = vsel %vm1385, %v747, 0
        %v1390 = vsel %vm1385, %v760, 0
        %1392 = vmatpush.bf16.msra.mxu0 %v1192
        %1393 = vmatpush.bf16.msra.mxu0 %v1191
        %1394 = vmatpush.bf16.msra.mxu0 %v1190
        %1395 = vmatpush.bf16.msra.mxu0 %v1189
        %1396 = vmatpush.bf16.msra.mxu0 %v1188
        %1397 = vmatpush.bf16.msra.mxu0 %v1187
        %1398 = vmatpush.bf16.msra.mxu0 %v1186
        %1399 = vmatpush.bf16.msra.mxu0 %v1185
        %1400 = vmatmul.bf16.gmra.mxu0 %v735
        %v1401 = vpop.f32.mrf.mxu0
        %v1402 = vadd.f32 0.0, %v1401
        %v1403 = vpop.f32.mrf.mxu0
        %v1404 = vadd.f32 0.0, %v1403
        %1405 = vmatmul.bf16.gmra.mxu0 %v748
        %v1406 = vpop.f32.mrf.mxu0
        %v1407 = vadd.f32 0.0, %v1406
        %v1408 = vpop.f32.mrf.mxu0
        %v1409 = vadd.f32 0.0, %v1408
        %1410 = vdwg.mxu0
        %1411 = vmatpush.bf16.msra.mxu0 %v1200
        %1412 = vmatpush.bf16.msra.mxu0 %v1199
        %1413 = vmatpush.bf16.msra.mxu0 %v1198
        %1414 = vmatpush.bf16.msra.mxu0 %v1197
        %1415 = vmatpush.bf16.msra.mxu0 %v1196
        %1416 = vmatpush.bf16.msra.mxu0 %v1195
        %1417 = vmatpush.bf16.msra.mxu0 %v1194
        %1418 = vmatpush.bf16.msra.mxu0 %v1193
        %1419 = vmatmul.bf16.gmra.mxu0 %v736
        %v1420 = vpop.f32.mrf.mxu0
        %v1421 = vadd.f32 %v1402, %v1420
        %v1422 = vpop.f32.mrf.mxu0
        %v1423 = vadd.f32 %v1404, %v1422
        %1424 = vmatmul.bf16.gmra.mxu0 %v749
        %v1425 = vpop.f32.mrf.mxu0
        %v1426 = vadd.f32 %v1407, %v1425
        %v1427 = vpop.f32.mrf.mxu0
        %v1428 = vadd.f32 %v1409, %v1427
        %1429 = vdwg.mxu0
        %1430 = vmatpush.bf16.msra.mxu0 %v1208
        %1431 = vmatpush.bf16.msra.mxu0 %v1207
        %1432 = vmatpush.bf16.msra.mxu0 %v1206
        %1433 = vmatpush.bf16.msra.mxu0 %v1205
        %1434 = vmatpush.bf16.msra.mxu0 %v1204
        %1435 = vmatpush.bf16.msra.mxu0 %v1203
        %1436 = vmatpush.bf16.msra.mxu0 %v1202
        %1437 = vmatpush.bf16.msra.mxu0 %v1201
        %1438 = vmatmul.bf16.gmra.mxu0 %v737
        %v1439 = vpop.f32.mrf.mxu0
        %v1440 = vadd.f32 %v1421, %v1439
        %v1441 = vpop.f32.mrf.mxu0
        %v1442 = vadd.f32 %v1423, %v1441
        %1443 = vmatmul.bf16.gmra.mxu0 %v750
        %v1444 = vpop.f32.mrf.mxu0
        %v1445 = vadd.f32 %v1426, %v1444
        %v1446 = vpop.f32.mrf.mxu0
        %v1447 = vadd.f32 %v1428, %v1446
        %1448 = vdwg.mxu0
        %1449 = vmatpush.bf16.msra.mxu0 %v1216
        %1450 = vmatpush.bf16.msra.mxu0 %v1215
        %1451 = vmatpush.bf16.msra.mxu0 %v1214
        %1452 = vmatpush.bf16.msra.mxu0 %v1213
        %1453 = vmatpush.bf16.msra.mxu0 %v1212
        %1454 = vmatpush.bf16.msra.mxu0 %v1211
        %1455 = vmatpush.bf16.msra.mxu0 %v1210
        %1456 = vmatpush.bf16.msra.mxu0 %v1209
        %1457 = vmatmul.bf16.gmra.mxu0 %v738
        %v1458 = vpop.f32.mrf.mxu0
        %v1459 = vadd.f32 %v1440, %v1458
        %v1460 = vpop.f32.mrf.mxu0
        %v1461 = vadd.f32 %v1442, %v1460
        %1462 = vmatmul.bf16.gmra.mxu0 %v751
        %v1463 = vpop.f32.mrf.mxu0
        %v1464 = vadd.f32 %v1445, %v1463
        %v1465 = vpop.f32.mrf.mxu0
        %v1466 = vadd.f32 %v1447, %v1465
        %1467 = vdwg.mxu0
        %1468 = vmatpush.bf16.msra.mxu0 %v1224
        %1469 = vmatpush.bf16.msra.mxu0 %v1223
        %1470 = vmatpush.bf16.msra.mxu0 %v1222
        %1471 = vmatpush.bf16.msra.mxu0 %v1221
        %1472 = vmatpush.bf16.msra.mxu0 %v1220
        %1473 = vmatpush.bf16.msra.mxu0 %v1219
        %1474 = vmatpush.bf16.msra.mxu0 %v1218
        %1475 = vmatpush.bf16.msra.mxu0 %v1217
        %1476 = vmatmul.bf16.gmra.mxu0 %v739
        %v1477 = vpop.f32.mrf.mxu0
        %v1478 = vadd.f32 %v1459, %v1477
        %v1479 = vpop.f32.mrf.mxu0
        %v1480 = vadd.f32 %v1461, %v1479
        %1481 = vmatmul.bf16.gmra.mxu0 %v752
        %v1482 = vpop.f32.mrf.mxu0
        %v1483 = vadd.f32 %v1464, %v1482
        %v1484 = vpop.f32.mrf.mxu0
        %v1485 = vadd.f32 %v1466, %v1484
        %1486 = vdwg.mxu0
        %1487 = vmatpush.bf16.msra.mxu0 %v1232
        %1488 = vmatpush.bf16.msra.mxu0 %v1231
        %1489 = vmatpush.bf16.msra.mxu0 %v1230
        %1490 = vmatpush.bf16.msra.mxu0 %v1229
        %1491 = vmatpush.bf16.msra.mxu0 %v1228
        %1492 = vmatpush.bf16.msra.mxu0 %v1227
        %1493 = vmatpush.bf16.msra.mxu0 %v1226
        %1494 = vmatpush.bf16.msra.mxu0 %v1225
        %1495 = vmatmul.bf16.gmra.mxu0 %v740
        %v1496 = vpop.f32.mrf.mxu0
        %v1497 = vadd.f32 %v1478, %v1496
        %v1498 = vpop.f32.mrf.mxu0
        %v1499 = vadd.f32 %v1480, %v1498
        %1500 = vmatmul.bf16.gmra.mxu0 %v753
        %v1501 = vpop.f32.mrf.mxu0
        %v1502 = vadd.f32 %v1483, %v1501
        %v1503 = vpop.f32.mrf.mxu0
        %v1504 = vadd.f32 %v1485, %v1503
        %1505 = vdwg.mxu0
        %1506 = vmatpush.bf16.msra.mxu0 %v1240
        %1507 = vmatpush.bf16.msra.mxu0 %v1239
        %1508 = vmatpush.bf16.msra.mxu0 %v1238
        %1509 = vmatpush.bf16.msra.mxu0 %v1237
        %1510 = vmatpush.bf16.msra.mxu0 %v1236
        %1511 = vmatpush.bf16.msra.mxu0 %v1235
        %1512 = vmatpush.bf16.msra.mxu0 %v1234
        %1513 = vmatpush.bf16.msra.mxu0 %v1233
        %1514 = vmatmul.bf16.gmra.mxu0 %v741
        %v1515 = vpop.f32.mrf.mxu0
        %v1516 = vadd.f32 %v1497, %v1515
        %v1517 = vpop.f32.mrf.mxu0
        %v1518 = vadd.f32 %v1499, %v1517
        %1519 = vmatmul.bf16.gmra.mxu0 %v754
        %v1520 = vpop.f32.mrf.mxu0
        %v1521 = vadd.f32 %v1502, %v1520
        %v1522 = vpop.f32.mrf.mxu0
        %v1523 = vadd.f32 %v1504, %v1522
        %1524 = vdwg.mxu0
        %1525 = vmatpush.bf16.msra.mxu0 %v1248
        %1526 = vmatpush.bf16.msra.mxu0 %v1247
        %1527 = vmatpush.bf16.msra.mxu0 %v1246
        %1528 = vmatpush.bf16.msra.mxu0 %v1245
        %1529 = vmatpush.bf16.msra.mxu0 %v1244
        %1530 = vmatpush.bf16.msra.mxu0 %v1243
        %1531 = vmatpush.bf16.msra.mxu0 %v1242
        %1532 = vmatpush.bf16.msra.mxu0 %v1241
        %1533 = vmatmul.bf16.gmra.mxu0 %v742
        %v1534 = vpop.f32.mrf.mxu0
        %v1535 = vadd.f32 %v1516, %v1534
        %v1536 = vpop.f32.mrf.mxu0
        %v1537 = vadd.f32 %v1518, %v1536
        %1538 = vmatmul.bf16.gmra.mxu0 %v755
        %v1539 = vpop.f32.mrf.mxu0
        %v1540 = vadd.f32 %v1521, %v1539
        %v1541 = vpop.f32.mrf.mxu0
        %v1542 = vadd.f32 %v1523, %v1541
        %1543 = vdwg.mxu0
        %1544 = vmatpush.bf16.msra.mxu0 %v1256
        %1545 = vmatpush.bf16.msra.mxu0 %v1255
        %1546 = vmatpush.bf16.msra.mxu0 %v1254
        %1547 = vmatpush.bf16.msra.mxu0 %v1253
        %1548 = vmatpush.bf16.msra.mxu0 %v1252
        %1549 = vmatpush.bf16.msra.mxu0 %v1251
        %1550 = vmatpush.bf16.msra.mxu0 %v1250
        %1551 = vmatpush.bf16.msra.mxu0 %v1249
        %1552 = vmatmul.bf16.gmra.mxu0 %v743
        %v1553 = vpop.f32.mrf.mxu0
        %v1554 = vadd.f32 %v1535, %v1553
        %v1555 = vpop.f32.mrf.mxu0
        %v1556 = vadd.f32 %v1537, %v1555
        %1557 = vmatmul.bf16.gmra.mxu0 %v756
        %v1558 = vpop.f32.mrf.mxu0
        %v1559 = vadd.f32 %v1540, %v1558
        %v1560 = vpop.f32.mrf.mxu0
        %v1561 = vadd.f32 %v1542, %v1560
        %1562 = vdwg.mxu0
        %1563 = vmatpush.bf16.msra.mxu0 %v1264
        %1564 = vmatpush.bf16.msra.mxu0 %v1263
        %1565 = vmatpush.bf16.msra.mxu0 %v1262
        %1566 = vmatpush.bf16.msra.mxu0 %v1261
        %1567 = vmatpush.bf16.msra.mxu0 %v1260
        %1568 = vmatpush.bf16.msra.mxu0 %v1259
        %1569 = vmatpush.bf16.msra.mxu0 %v1258
        %1570 = vmatpush.bf16.msra.mxu0 %v1257
        %1571 = vmatmul.bf16.gmra.mxu0 %v744
        %v1572 = vpop.f32.mrf.mxu0
        %v1573 = vadd.f32 %v1554, %v1572
        %v1574 = vpop.f32.mrf.mxu0
        %v1575 = vadd.f32 %v1556, %v1574
        %1576 = vmatmul.bf16.gmra.mxu0 %v757
        %v1577 = vpop.f32.mrf.mxu0
        %v1578 = vadd.f32 %v1559, %v1577
        %v1579 = vpop.f32.mrf.mxu0
        %v1580 = vadd.f32 %v1561, %v1579
        %1581 = vdwg.mxu0
        %1582 = vmatpush.bf16.msra.mxu0 %v1272
        %1583 = vmatpush.bf16.msra.mxu0 %v1271
        %1584 = vmatpush.bf16.msra.mxu0 %v1270
        %1585 = vmatpush.bf16.msra.mxu0 %v1269
        %1586 = vmatpush.bf16.msra.mxu0 %v1268
        %1587 = vmatpush.bf16.msra.mxu0 %v1267
        %1588 = vmatpush.bf16.msra.mxu0 %v1266
        %1589 = vmatpush.bf16.msra.mxu0 %v1265
        %1590 = vmatmul.bf16.gmra.mxu0 %v745
        %v1591 = vpop.f32.mrf.mxu0
        %v1592 = vadd.f32 %v1573, %v1591
        %v1593 = vpop.f32.mrf.mxu0
        %v1594 = vadd.f32 %v1575, %v1593
        %1595 = vmatmul.bf16.gmra.mxu0 %v758
        %v1596 = vpop.f32.mrf.mxu0
        %v1597 = vadd.f32 %v1578, %v1596
        %v1598 = vpop.f32.mrf.mxu0
        %v1599 = vadd.f32 %v1580, %v1598
        %1600 = vdwg.mxu0
        %1601 = vmatpush.bf16.msra.mxu0 %v1280
        %1602 = vmatpush.bf16.msra.mxu0 %v1279
        %1603 = vmatpush.bf16.msra.mxu0 %v1278
        %1604 = vmatpush.bf16.msra.mxu0 %v1277
        %1605 = vmatpush.bf16.msra.mxu0 %v1276
        %1606 = vmatpush.bf16.msra.mxu0 %v1275
        %1607 = vmatpush.bf16.msra.mxu0 %v1274
        %1608 = vmatpush.bf16.msra.mxu0 %v1273
        %1609 = vmatmul.bf16.gmra.mxu0 %v746
        %v1610 = vpop.f32.mrf.mxu0
        %v1611 = vadd.f32 %v1592, %v1610
        %v1612 = vpop.f32.mrf.mxu0
        %v1613 = vadd.f32 %v1594, %v1612
        %1614 = vmatmul.bf16.gmra.mxu0 %v759
        %v1615 = vpop.f32.mrf.mxu0
        %v1616 = vadd.f32 %v1597, %v1615
        %v1617 = vpop.f32.mrf.mxu0
        %v1618 = vadd.f32 %v1599, %v1617
        %1619 = vdwg.mxu0
        %1620 = vmatpush.bf16.msra.mxu0 0
        %1621 = vmatpush.bf16.msra.mxu0 0
        %1622 = vmatpush.bf16.msra.mxu0 0
        %1623 = vmatpush.bf16.msra.mxu0 0
        %1624 = vmatpush.bf16.msra.mxu0 %v1284
        %1625 = vmatpush.bf16.msra.mxu0 %v1283
        %1626 = vmatpush.bf16.msra.mxu0 %v1282
        %1627 = vmatpush.bf16.msra.mxu0 %v1281
        %1628 = vmatmul.bf16.gmra.mxu0 %v1387
        %v1629 = vpop.f32.mrf.mxu0
        %v1630 = vadd.f32 %v1611, %v1629
        %v1631 = vpop.f32.mrf.mxu0
        %v1632 = vadd.f32 %v1613, %v1631
        %1633 = vmatmul.bf16.gmra.mxu0 %v1390
        %v1634 = vpop.f32.mrf.mxu0
        %v1635 = vadd.f32 %v1616, %v1634
        %v1636 = vpop.f32.mrf.mxu0
        %v1637 = vadd.f32 %v1618, %v1636
        %1638 = vdwg.mxu0
        %s1639 = scalar_lea.vmem %s398, 208 [#allocation2]
        %v1640 = vld [vmem:[%s1639] sm:$0xff]
        %v1641 = vld [vmem:[%s1639 + $0x8] sm:$0xff]
        %v1642 = vld [vmem:[%s1639 + $0x10] sm:$0xff]
        %v1643 = vld [vmem:[%s1639 + $0x18] sm:$0xff]
        %v1644 = vld [vmem:[%s1639 + $0x20] sm:$0xff]
        %v1645 = vld [vmem:[%s1639 + $0x28] sm:$0xff]
        %v1646 = vld [vmem:[%s1639 + $0x30] sm:$0xf]
        %v1647 = vld [vmem:[%s1639 + $0x34] sm:$0xff]
        %v1648 = vld [vmem:[%s1639 + $0x3c] sm:$0xff]
        %v1649 = vld [vmem:[%s1639 + $0x44] sm:$0xff]
        %v1650 = vld [vmem:[%s1639 + $0x4c] sm:$0xff]
        %v1651 = vld [vmem:[%s1639 + $0x54] sm:$0xff]
        %v1652 = vld [vmem:[%s1639 + $0x5c] sm:$0xff]
        %v1653 = vld [vmem:[%s1639 + $0x64] sm:$0xf]
        %v1654 = vld [vmem:[%s1639 + $0x68] sm:$0xff]
        %v1655 = vld [vmem:[%s1639 + $0x70] sm:$0xff]
        %v1656 = vld [vmem:[%s1639 + $0x78] sm:$0xff]
        %v1657 = vld [vmem:[%s1639 + $0x80] sm:$0xff]
        %v1658 = vld [vmem:[%s1639 + $0x88] sm:$0xff]
        %v1659 = vld [vmem:[%s1639 + $0x90] sm:$0xff]
        %v1660 = vld [vmem:[%s1639 + $0x98] sm:$0xf]
        %v1661 = vld [vmem:[%s1639 + $0x9c] sm:$0xff]
        %v1662 = vld [vmem:[%s1639 + $0xa4] sm:$0xff]
        %v1663 = vld [vmem:[%s1639 + $0xac] sm:$0xff]
        %v1664 = vld [vmem:[%s1639 + $0xb4] sm:$0xff]
        %v1665 = vld [vmem:[%s1639 + $0xbc] sm:$0xff]
        %v1666 = vld [vmem:[%s1639 + $0xc4] sm:$0xff]
        %v1667 = vld [vmem:[%s1639 + $0xcc] sm:$0xf]
        %v1696 = vunpack.c.l.b16 %v1640
        %v1697 = vunpack.c.h.b16 %v1640
        %v1698 = vunpack.c.l.b16 %v1641
        %v1699 = vunpack.c.h.b16 %v1641
        %v1700 = vunpack.c.l.b16 %v1642
        %v1701 = vunpack.c.h.b16 %v1642
        %v1702 = vunpack.c.l.b16 %v1643
        %v1703 = vunpack.c.h.b16 %v1643
        %v1704 = vunpack.c.l.b16 %v1644
        %v1705 = vunpack.c.h.b16 %v1644
        %v1706 = vunpack.c.l.b16 %v1645
        %v1707 = vunpack.c.h.b16 %v1645
        %v1708 = vunpack.c.l.b16 %v1646
        %v1709 = vunpack.c.l.b16 %v1647
        %v1710 = vunpack.c.h.b16 %v1647
        %v1711 = vunpack.c.l.b16 %v1648
        %v1712 = vunpack.c.h.b16 %v1648
        %v1713 = vunpack.c.l.b16 %v1649
        %v1714 = vunpack.c.h.b16 %v1649
        %v1715 = vunpack.c.l.b16 %v1650
        %v1716 = vunpack.c.h.b16 %v1650
        %v1717 = vunpack.c.l.b16 %v1651
        %v1718 = vunpack.c.h.b16 %v1651
        %v1719 = vunpack.c.l.b16 %v1652
        %v1720 = vunpack.c.h.b16 %v1652
        %v1721 = vunpack.c.l.b16 %v1653
        %v1722 = vunpack.c.l.b16 %v1654
        %v1723 = vunpack.c.h.b16 %v1654
        %v1724 = vunpack.c.l.b16 %v1655
        %v1725 = vunpack.c.h.b16 %v1655
        %v1726 = vunpack.c.l.b16 %v1656
        %v1727 = vunpack.c.h.b16 %v1656
        %v1728 = vunpack.c.l.b16 %v1657
        %v1729 = vunpack.c.h.b16 %v1657
        %v1730 = vunpack.c.l.b16 %v1658
        %v1731 = vunpack.c.h.b16 %v1658
        %v1732 = vunpack.c.l.b16 %v1659
        %v1733 = vunpack.c.h.b16 %v1659
        %v1734 = vunpack.c.l.b16 %v1660
        %v1735 = vunpack.c.l.b16 %v1661
        %v1736 = vunpack.c.h.b16 %v1661
        %v1737 = vunpack.c.l.b16 %v1662
        %v1738 = vunpack.c.h.b16 %v1662
        %v1739 = vunpack.c.l.b16 %v1663
        %v1740 = vunpack.c.h.b16 %v1663
        %v1741 = vunpack.c.l.b16 %v1664
        %v1742 = vunpack.c.h.b16 %v1664
        %v1743 = vunpack.c.l.b16 %v1665
        %v1744 = vunpack.c.h.b16 %v1665
        %v1745 = vunpack.c.l.b16 %v1666
        %v1746 = vunpack.c.h.b16 %v1666
        %v1747 = vunpack.c.l.b16 %v1667
        %v1748 = vpack.c.b16 %v1709, %v1696
        %v1749 = vpack.c.b16 %v1710, %v1697
        %v1750 = vpack.c.b16 %v1711, %v1698
        %v1751 = vpack.c.b16 %v1712, %v1699
        %v1752 = vpack.c.b16 %v1713, %v1700
        %v1753 = vpack.c.b16 %v1714, %v1701
        %v1754 = vpack.c.b16 %v1715, %v1702
        %v1755 = vpack.c.b16 %v1716, %v1703
        %v1756 = vpack.c.b16 %v1717, %v1704
        %v1757 = vpack.c.b16 %v1718, %v1705
        %v1758 = vpack.c.b16 %v1719, %v1706
        %v1759 = vpack.c.b16 %v1720, %v1707
        %v1760 = vpack.c.b16 %v1721, %v1708
        %v1761 = vpack.c.b16 %v1735, %v1722
        %v1762 = vpack.c.b16 %v1736, %v1723
        %v1763 = vpack.c.b16 %v1737, %v1724
        %v1764 = vpack.c.b16 %v1738, %v1725
        %v1765 = vpack.c.b16 %v1739, %v1726
        %v1766 = vpack.c.b16 %v1740, %v1727
        %v1767 = vpack.c.b16 %v1741, %v1728
        %v1768 = vpack.c.b16 %v1742, %v1729
        %v1769 = vpack.c.b16 %v1743, %v1730
        %v1770 = vpack.c.b16 %v1744, %v1731
        %v1771 = vpack.c.b16 %v1745, %v1732
        %v1772 = vpack.c.b16 %v1746, %v1733
        %v1773 = vpack.c.b16 %v1747, %v1734
        %v1799 = vsel %vm1385, %v1760, 0
        %v1802 = vsel %vm1385, %v1773, 0
        %1804 = vmatpush.bf16.msra.mxu0 %v1192
        %1805 = vmatpush.bf16.msra.mxu0 %v1191
        %1806 = vmatpush.bf16.msra.mxu0 %v1190
        %1807 = vmatpush.bf16.msra.mxu0 %v1189
        %1808 = vmatpush.bf16.msra.mxu0 %v1188
        %1809 = vmatpush.bf16.msra.mxu0 %v1187
        %1810 = vmatpush.bf16.msra.mxu0 %v1186
        %1811 = vmatpush.bf16.msra.mxu0 %v1185
        %1812 = vmatmul.bf16.gmra.mxu0 %v1748
        %v1813 = vpop.f32.mrf.mxu0
        %v1814 = vadd.f32 0.0, %v1813
        %v1815 = vpop.f32.mrf.mxu0
        %v1816 = vadd.f32 0.0, %v1815
        %1817 = vmatmul.bf16.gmra.mxu0 %v1761
        %v1818 = vpop.f32.mrf.mxu0
        %v1819 = vadd.f32 0.0, %v1818
        %v1820 = vpop.f32.mrf.mxu0
        %v1821 = vadd.f32 0.0, %v1820
        %1822 = vdwg.mxu0
        %1823 = vmatpush.bf16.msra.mxu0 %v1200
        %1824 = vmatpush.bf16.msra.mxu0 %v1199
        %1825 = vmatpush.bf16.msra.mxu0 %v1198
        %1826 = vmatpush.bf16.msra.mxu0 %v1197
        %1827 = vmatpush.bf16.msra.mxu0 %v1196
        %1828 = vmatpush.bf16.msra.mxu0 %v1195
        %1829 = vmatpush.bf16.msra.mxu0 %v1194
        %1830 = vmatpush.bf16.msra.mxu0 %v1193
        %1831 = vmatmul.bf16.gmra.mxu0 %v1749
        %v1832 = vpop.f32.mrf.mxu0
        %v1833 = vadd.f32 %v1814, %v1832
        %v1834 = vpop.f32.mrf.mxu0
        %v1835 = vadd.f32 %v1816, %v1834
        %1836 = vmatmul.bf16.gmra.mxu0 %v1762
        %v1837 = vpop.f32.mrf.mxu0
        %v1838 = vadd.f32 %v1819, %v1837
        %v1839 = vpop.f32.mrf.mxu0
        %v1840 = vadd.f32 %v1821, %v1839
        %1841 = vdwg.mxu0
        %1842 = vmatpush.bf16.msra.mxu0 %v1208
        %1843 = vmatpush.bf16.msra.mxu0 %v1207
        %1844 = vmatpush.bf16.msra.mxu0 %v1206
        %1845 = vmatpush.bf16.msra.mxu0 %v1205
        %1846 = vmatpush.bf16.msra.mxu0 %v1204
        %1847 = vmatpush.bf16.msra.mxu0 %v1203
        %1848 = vmatpush.bf16.msra.mxu0 %v1202
        %1849 = vmatpush.bf16.msra.mxu0 %v1201
        %1850 = vmatmul.bf16.gmra.mxu0 %v1750
        %v1851 = vpop.f32.mrf.mxu0
        %v1852 = vadd.f32 %v1833, %v1851
        %v1853 = vpop.f32.mrf.mxu0
        %v1854 = vadd.f32 %v1835, %v1853
        %1855 = vmatmul.bf16.gmra.mxu0 %v1763
        %v1856 = vpop.f32.mrf.mxu0
        %v1857 = vadd.f32 %v1838, %v1856
        %v1858 = vpop.f32.mrf.mxu0
        %v1859 = vadd.f32 %v1840, %v1858
        %1860 = vdwg.mxu0
        %1861 = vmatpush.bf16.msra.mxu0 %v1216
        %1862 = vmatpush.bf16.msra.mxu0 %v1215
        %1863 = vmatpush.bf16.msra.mxu0 %v1214
        %1864 = vmatpush.bf16.msra.mxu0 %v1213
        %1865 = vmatpush.bf16.msra.mxu0 %v1212
        %1866 = vmatpush.bf16.msra.mxu0 %v1211
        %1867 = vmatpush.bf16.msra.mxu0 %v1210
        %1868 = vmatpush.bf16.msra.mxu0 %v1209
        %1869 = vmatmul.bf16.gmra.mxu0 %v1751
        %v1870 = vpop.f32.mrf.mxu0
        %v1871 = vadd.f32 %v1852, %v1870
        %v1872 = vpop.f32.mrf.mxu0
        %v1873 = vadd.f32 %v1854, %v1872
        %1874 = vmatmul.bf16.gmra.mxu0 %v1764
        %v1875 = vpop.f32.mrf.mxu0
        %v1876 = vadd.f32 %v1857, %v1875
        %v1877 = vpop.f32.mrf.mxu0
        %v1878 = vadd.f32 %v1859, %v1877
        %1879 = vdwg.mxu0
        %1880 = vmatpush.bf16.msra.mxu0 %v1224
        %1881 = vmatpush.bf16.msra.mxu0 %v1223
        %1882 = vmatpush.bf16.msra.mxu0 %v1222
        %1883 = vmatpush.bf16.msra.mxu0 %v1221
        %1884 = vmatpush.bf16.msra.mxu0 %v1220
        %1885 = vmatpush.bf16.msra.mxu0 %v1219
        %1886 = vmatpush.bf16.msra.mxu0 %v1218
        %1887 = vmatpush.bf16.msra.mxu0 %v1217
        %1888 = vmatmul.bf16.gmra.mxu0 %v1752
        %v1889 = vpop.f32.mrf.mxu0
        %v1890 = vadd.f32 %v1871, %v1889
        %v1891 = vpop.f32.mrf.mxu0
        %v1892 = vadd.f32 %v1873, %v1891
        %1893 = vmatmul.bf16.gmra.mxu0 %v1765
        %v1894 = vpop.f32.mrf.mxu0
        %v1895 = vadd.f32 %v1876, %v1894
        %v1896 = vpop.f32.mrf.mxu0
        %v1897 = vadd.f32 %v1878, %v1896
        %1898 = vdwg.mxu0
        %1899 = vmatpush.bf16.msra.mxu0 %v1232
        %1900 = vmatpush.bf16.msra.mxu0 %v1231
        %1901 = vmatpush.bf16.msra.mxu0 %v1230
        %1902 = vmatpush.bf16.msra.mxu0 %v1229
        %1903 = vmatpush.bf16.msra.mxu0 %v1228
        %1904 = vmatpush.bf16.msra.mxu0 %v1227
        %1905 = vmatpush.bf16.msra.mxu0 %v1226
        %1906 = vmatpush.bf16.msra.mxu0 %v1225
        %1907 = vmatmul.bf16.gmra.mxu0 %v1753
        %v1908 = vpop.f32.mrf.mxu0
        %v1909 = vadd.f32 %v1890, %v1908
        %v1910 = vpop.f32.mrf.mxu0
        %v1911 = vadd.f32 %v1892, %v1910
        %1912 = vmatmul.bf16.gmra.mxu0 %v1766
        %v1913 = vpop.f32.mrf.mxu0
        %v1914 = vadd.f32 %v1895, %v1913
        %v1915 = vpop.f32.mrf.mxu0
        %v1916 = vadd.f32 %v1897, %v1915
        %1917 = vdwg.mxu0
        %1918 = vmatpush.bf16.msra.mxu0 %v1240
        %1919 = vmatpush.bf16.msra.mxu0 %v1239
        %1920 = vmatpush.bf16.msra.mxu0 %v1238
        %1921 = vmatpush.bf16.msra.mxu0 %v1237
        %1922 = vmatpush.bf16.msra.mxu0 %v1236
        %1923 = vmatpush.bf16.msra.mxu0 %v1235
        %1924 = vmatpush.bf16.msra.mxu0 %v1234
        %1925 = vmatpush.bf16.msra.mxu0 %v1233
        %1926 = vmatmul.bf16.gmra.mxu0 %v1754
        %v1927 = vpop.f32.mrf.mxu0
        %v1928 = vadd.f32 %v1909, %v1927
        %v1929 = vpop.f32.mrf.mxu0
        %v1930 = vadd.f32 %v1911, %v1929
        %1931 = vmatmul.bf16.gmra.mxu0 %v1767
        %v1932 = vpop.f32.mrf.mxu0
        %v1933 = vadd.f32 %v1914, %v1932
        %v1934 = vpop.f32.mrf.mxu0
        %v1935 = vadd.f32 %v1916, %v1934
        %1936 = vdwg.mxu0
        %1937 = vmatpush.bf16.msra.mxu0 %v1248
        %1938 = vmatpush.bf16.msra.mxu0 %v1247
        %1939 = vmatpush.bf16.msra.mxu0 %v1246
        %1940 = vmatpush.bf16.msra.mxu0 %v1245
        %1941 = vmatpush.bf16.msra.mxu0 %v1244
        %1942 = vmatpush.bf16.msra.mxu0 %v1243
        %1943 = vmatpush.bf16.msra.mxu0 %v1242
        %1944 = vmatpush.bf16.msra.mxu0 %v1241
        %1945 = vmatmul.bf16.gmra.mxu0 %v1755
        %v1946 = vpop.f32.mrf.mxu0
        %v1947 = vadd.f32 %v1928, %v1946
        %v1948 = vpop.f32.mrf.mxu0
        %v1949 = vadd.f32 %v1930, %v1948
        %1950 = vmatmul.bf16.gmra.mxu0 %v1768
        %v1951 = vpop.f32.mrf.mxu0
        %v1952 = vadd.f32 %v1933, %v1951
        %v1953 = vpop.f32.mrf.mxu0
        %v1954 = vadd.f32 %v1935, %v1953
        %1955 = vdwg.mxu0
        %1956 = vmatpush.bf16.msra.mxu0 %v1256
        %1957 = vmatpush.bf16.msra.mxu0 %v1255
        %1958 = vmatpush.bf16.msra.mxu0 %v1254
        %1959 = vmatpush.bf16.msra.mxu0 %v1253
        %1960 = vmatpush.bf16.msra.mxu0 %v1252
        %1961 = vmatpush.bf16.msra.mxu0 %v1251
        %1962 = vmatpush.bf16.msra.mxu0 %v1250
        %1963 = vmatpush.bf16.msra.mxu0 %v1249
        %1964 = vmatmul.bf16.gmra.mxu0 %v1756
        %v1965 = vpop.f32.mrf.mxu0
        %v1966 = vadd.f32 %v1947, %v1965
        %v1967 = vpop.f32.mrf.mxu0
        %v1968 = vadd.f32 %v1949, %v1967
        %1969 = vmatmul.bf16.gmra.mxu0 %v1769
        %v1970 = vpop.f32.mrf.mxu0
        %v1971 = vadd.f32 %v1952, %v1970
        %v1972 = vpop.f32.mrf.mxu0
        %v1973 = vadd.f32 %v1954, %v1972
        %1974 = vdwg.mxu0
        %1975 = vmatpush.bf16.msra.mxu0 %v1264
        %1976 = vmatpush.bf16.msra.mxu0 %v1263
        %1977 = vmatpush.bf16.msra.mxu0 %v1262
        %1978 = vmatpush.bf16.msra.mxu0 %v1261
        %1979 = vmatpush.bf16.msra.mxu0 %v1260
        %1980 = vmatpush.bf16.msra.mxu0 %v1259
        %1981 = vmatpush.bf16.msra.mxu0 %v1258
        %1982 = vmatpush.bf16.msra.mxu0 %v1257
        %1983 = vmatmul.bf16.gmra.mxu0 %v1757
        %v1984 = vpop.f32.mrf.mxu0
        %v1985 = vadd.f32 %v1966, %v1984
        %v1986 = vpop.f32.mrf.mxu0
        %v1987 = vadd.f32 %v1968, %v1986
        %1988 = vmatmul.bf16.gmra.mxu0 %v1770
        %v1989 = vpop.f32.mrf.mxu0
        %v1990 = vadd.f32 %v1971, %v1989
        %v1991 = vpop.f32.mrf.mxu0
        %v1992 = vadd.f32 %v1973, %v1991
        %1993 = vdwg.mxu0
        %1994 = vmatpush.bf16.msra.mxu0 %v1272
        %1995 = vmatpush.bf16.msra.mxu0 %v1271
        %1996 = vmatpush.bf16.msra.mxu0 %v1270
        %1997 = vmatpush.bf16.msra.mxu0 %v1269
        %1998 = vmatpush.bf16.msra.mxu0 %v1268
        %1999 = vmatpush.bf16.msra.mxu0 %v1267
        %2000 = vmatpush.bf16.msra.mxu0 %v1266
        %2001 = vmatpush.bf16.msra.mxu0 %v1265
        %2002 = vmatmul.bf16.gmra.mxu0 %v1758
        %v2003 = vpop.f32.mrf.mxu0
        %v2004 = vadd.f32 %v1985, %v2003
        %v2005 = vpop.f32.mrf.mxu0
        %v2006 = vadd.f32 %v1987, %v2005
        %2007 = vmatmul.bf16.gmra.mxu0 %v1771
        %v2008 = vpop.f32.mrf.mxu0
        %v2009 = vadd.f32 %v1990, %v2008
        %v2010 = vpop.f32.mrf.mxu0
        %v2011 = vadd.f32 %v1992, %v2010
        %2012 = vdwg.mxu0
        %2013 = vmatpush.bf16.msra.mxu0 %v1280
        %2014 = vmatpush.bf16.msra.mxu0 %v1279
        %2015 = vmatpush.bf16.msra.mxu0 %v1278
        %2016 = vmatpush.bf16.msra.mxu0 %v1277
        %2017 = vmatpush.bf16.msra.mxu0 %v1276
        %2018 = vmatpush.bf16.msra.mxu0 %v1275
        %2019 = vmatpush.bf16.msra.mxu0 %v1274
        %2020 = vmatpush.bf16.msra.mxu0 %v1273
        %2021 = vmatmul.bf16.gmra.mxu0 %v1759
        %v2022 = vpop.f32.mrf.mxu0
        %v2023 = vadd.f32 %v2004, %v2022
        %v2024 = vpop.f32.mrf.mxu0
        %v2025 = vadd.f32 %v2006, %v2024
        %2026 = vmatmul.bf16.gmra.mxu0 %v1772
        %v2027 = vpop.f32.mrf.mxu0
        %v2028 = vadd.f32 %v2009, %v2027
        %v2029 = vpop.f32.mrf.mxu0
        %v2030 = vadd.f32 %v2011, %v2029
        %2031 = vdwg.mxu0
        %2032 = vmatpush.bf16.msra.mxu0 0
        %2033 = vmatpush.bf16.msra.mxu0 0
        %2034 = vmatpush.bf16.msra.mxu0 0
        %2035 = vmatpush.bf16.msra.mxu0 0
        %2036 = vmatpush.bf16.msra.mxu0 %v1284
        %2037 = vmatpush.bf16.msra.mxu0 %v1283
        %2038 = vmatpush.bf16.msra.mxu0 %v1282
        %2039 = vmatpush.bf16.msra.mxu0 %v1281
        %2040 = vmatmul.bf16.gmra.mxu0 %v1799
        %v2041 = vpop.f32.mrf.mxu0
        %v2042 = vadd.f32 %v2023, %v2041
        %v2043 = vpop.f32.mrf.mxu0
        %v2044 = vadd.f32 %v2025, %v2043
        %2045 = vmatmul.bf16.gmra.mxu0 %v1802
        %v2046 = vpop.f32.mrf.mxu0
        %v2047 = vadd.f32 %v2028, %v2046
        %v2048 = vpop.f32.mrf.mxu0
        %v2049 = vadd.f32 %v2030, %v2048
        %2050 = vdwg.mxu0
        %v2051 = vmax.f32 %v1630, %v2042
        %v2052 = vmax.f32 %v1632, %v2044
        %v2053 = vmax.f32 %v1635, %v2047
        %v2054 = vmax.f32 %v1637, %v2049
        %s2055 = scalar_lea.vmem %s398, 416 [#allocation2]
        %v2056 = vld [vmem:[%s2055] sm:$0xff]
        %v2057 = vld [vmem:[%s2055 + $0x8] sm:$0xff]
        %v2058 = vld [vmem:[%s2055 + $0x10] sm:$0xff]
        %v2059 = vld [vmem:[%s2055 + $0x18] sm:$0xff]
        %v2060 = vld [vmem:[%s2055 + $0x20] sm:$0xff]
        %v2061 = vld [vmem:[%s2055 + $0x28] sm:$0xff]
        %v2062 = vld [vmem:[%s2055 + $0x30] sm:$0xf]
        %v2063 = vld [vmem:[%s2055 + $0x34] sm:$0xff]
        %v2064 = vld [vmem:[%s2055 + $0x3c] sm:$0xff]
        %v2065 = vld [vmem:[%s2055 + $0x44] sm:$0xff]
        %v2066 = vld [vmem:[%s2055 + $0x4c] sm:$0xff]
        %v2067 = vld [vmem:[%s2055 + $0x54] sm:$0xff]
        %v2068 = vld [vmem:[%s2055 + $0x5c] sm:$0xff]
        %v2069 = vld [vmem:[%s2055 + $0x64] sm:$0xf]
        %v2070 = vld [vmem:[%s2055 + $0x68] sm:$0xff]
        %v2071 = vld [vmem:[%s2055 + $0x70] sm:$0xff]
        %v2072 = vld [vmem:[%s2055 + $0x78] sm:$0xff]
        %v2073 = vld [vmem:[%s2055 + $0x80] sm:$0xff]
        %v2074 = vld [vmem:[%s2055 + $0x88] sm:$0xff]
        %v2075 = vld [vmem:[%s2055 + $0x90] sm:$0xff]
        %v2076 = vld [vmem:[%s2055 + $0x98] sm:$0xf]
        %v2077 = vld [vmem:[%s2055 + $0x9c] sm:$0xff]
        %v2078 = vld [vmem:[%s2055 + $0xa4] sm:$0xff]
        %v2079 = vld [vmem:[%s2055 + $0xac] sm:$0xff]
        %v2080 = vld [vmem:[%s2055 + $0xb4] sm:$0xff]
        %v2081 = vld [vmem:[%s2055 + $0xbc] sm:$0xff]
        %v2082 = vld [vmem:[%s2055 + $0xc4] sm:$0xff]
        %v2083 = vld [vmem:[%s2055 + $0xcc] sm:$0xf]
        %v2112 = vunpack.c.l.b16 %v2056
        %v2113 = vunpack.c.h.b16 %v2056
        %v2114 = vunpack.c.l.b16 %v2057
        %v2115 = vunpack.c.h.b16 %v2057
        %v2116 = vunpack.c.l.b16 %v2058
        %v2117 = vunpack.c.h.b16 %v2058
        %v2118 = vunpack.c.l.b16 %v2059
        %v2119 = vunpack.c.h.b16 %v2059
        %v2120 = vunpack.c.l.b16 %v2060
        %v2121 = vunpack.c.h.b16 %v2060
        %v2122 = vunpack.c.l.b16 %v2061
        %v2123 = vunpack.c.h.b16 %v2061
        %v2124 = vunpack.c.l.b16 %v2062
        %v2125 = vunpack.c.l.b16 %v2063
        %v2126 = vunpack.c.h.b16 %v2063
        %v2127 = vunpack.c.l.b16 %v2064
        %v2128 = vunpack.c.h.b16 %v2064
        %v2129 = vunpack.c.l.b16 %v2065
        %v2130 = vunpack.c.h.b16 %v2065
        %v2131 = vunpack.c.l.b16 %v2066
        %v2132 = vunpack.c.h.b16 %v2066
        %v2133 = vunpack.c.l.b16 %v2067
        %v2134 = vunpack.c.h.b16 %v2067
        %v2135 = vunpack.c.l.b16 %v2068
        %v2136 = vunpack.c.h.b16 %v2068
        %v2137 = vunpack.c.l.b16 %v2069
        %v2138 = vunpack.c.l.b16 %v2070
        %v2139 = vunpack.c.h.b16 %v2070
        %v2140 = vunpack.c.l.b16 %v2071
        %v2141 = vunpack.c.h.b16 %v2071
        %v2142 = vunpack.c.l.b16 %v2072
        %v2143 = vunpack.c.h.b16 %v2072
        %v2144 = vunpack.c.l.b16 %v2073
        %v2145 = vunpack.c.h.b16 %v2073
        %v2146 = vunpack.c.l.b16 %v2074
        %v2147 = vunpack.c.h.b16 %v2074
        %v2148 = vunpack.c.l.b16 %v2075
        %v2149 = vunpack.c.h.b16 %v2075
        %v2150 = vunpack.c.l.b16 %v2076
        %v2151 = vunpack.c.l.b16 %v2077
        %v2152 = vunpack.c.h.b16 %v2077
        %v2153 = vunpack.c.l.b16 %v2078
        %v2154 = vunpack.c.h.b16 %v2078
        %v2155 = vunpack.c.l.b16 %v2079
        %v2156 = vunpack.c.h.b16 %v2079
        %v2157 = vunpack.c.l.b16 %v2080
        %v2158 = vunpack.c.h.b16 %v2080
        %v2159 = vunpack.c.l.b16 %v2081
        %v2160 = vunpack.c.h.b16 %v2081
        %v2161 = vunpack.c.l.b16 %v2082
        %v2162 = vunpack.c.h.b16 %v2082
        %v2163 = vunpack.c.l.b16 %v2083
        %v2164 = vpack.c.b16 %v2125, %v2112
        %v2165 = vpack.c.b16 %v2126, %v2113
        %v2166 = vpack.c.b16 %v2127, %v2114
        %v2167 = vpack.c.b16 %v2128, %v2115
        %v2168 = vpack.c.b16 %v2129, %v2116
        %v2169 = vpack.c.b16 %v2130, %v2117
        %v2170 = vpack.c.b16 %v2131, %v2118
        %v2171 = vpack.c.b16 %v2132, %v2119
        %v2172 = vpack.c.b16 %v2133, %v2120
        %v2173 = vpack.c.b16 %v2134, %v2121
        %v2174 = vpack.c.b16 %v2135, %v2122
        %v2175 = vpack.c.b16 %v2136, %v2123
        %v2176 = vpack.c.b16 %v2137, %v2124
        %v2177 = vpack.c.b16 %v2151, %v2138
        %v2178 = vpack.c.b16 %v2152, %v2139
        %v2179 = vpack.c.b16 %v2153, %v2140
        %v2180 = vpack.c.b16 %v2154, %v2141
        %v2181 = vpack.c.b16 %v2155, %v2142
        %v2182 = vpack.c.b16 %v2156, %v2143
        %v2183 = vpack.c.b16 %v2157, %v2144
        %v2184 = vpack.c.b16 %v2158, %v2145
        %v2185 = vpack.c.b16 %v2159, %v2146
        %v2186 = vpack.c.b16 %v2160, %v2147
        %v2187 = vpack.c.b16 %v2161, %v2148
        %v2188 = vpack.c.b16 %v2162, %v2149
        %v2189 = vpack.c.b16 %v2163, %v2150
        %v2215 = vsel %vm1385, %v2176, 0
        %v2218 = vsel %vm1385, %v2189, 0
        %2220 = vmatpush.bf16.msra.mxu0 %v1192
        %2221 = vmatpush.bf16.msra.mxu0 %v1191
        %2222 = vmatpush.bf16.msra.mxu0 %v1190
        %2223 = vmatpush.bf16.msra.mxu0 %v1189
        %2224 = vmatpush.bf16.msra.mxu0 %v1188
        %2225 = vmatpush.bf16.msra.mxu0 %v1187
        %2226 = vmatpush.bf16.msra.mxu0 %v1186
        %2227 = vmatpush.bf16.msra.mxu0 %v1185
        %2228 = vmatmul.bf16.gmra.mxu0 %v2164
        %v2229 = vpop.f32.mrf.mxu0
        %v2230 = vadd.f32 0.0, %v2229
        %v2231 = vpop.f32.mrf.mxu0
        %v2232 = vadd.f32 0.0, %v2231
        %2233 = vmatmul.bf16.gmra.mxu0 %v2177
        %v2234 = vpop.f32.mrf.mxu0
        %v2235 = vadd.f32 0.0, %v2234
        %v2236 = vpop.f32.mrf.mxu0
        %v2237 = vadd.f32 0.0, %v2236
        %2238 = vdwg.mxu0
        %2239 = vmatpush.bf16.msra.mxu0 %v1200
        %2240 = vmatpush.bf16.msra.mxu0 %v1199
        %2241 = vmatpush.bf16.msra.mxu0 %v1198
        %2242 = vmatpush.bf16.msra.mxu0 %v1197
        %2243 = vmatpush.bf16.msra.mxu0 %v1196
        %2244 = vmatpush.bf16.msra.mxu0 %v1195
        %2245 = vmatpush.bf16.msra.mxu0 %v1194
        %2246 = vmatpush.bf16.msra.mxu0 %v1193
        %2247 = vmatmul.bf16.gmra.mxu0 %v2165
        %v2248 = vpop.f32.mrf.mxu0
        %v2249 = vadd.f32 %v2230, %v2248
        %v2250 = vpop.f32.mrf.mxu0
        %v2251 = vadd.f32 %v2232, %v2250
        %2252 = vmatmul.bf16.gmra.mxu0 %v2178
        %v2253 = vpop.f32.mrf.mxu0
        %v2254 = vadd.f32 %v2235, %v2253
        %v2255 = vpop.f32.mrf.mxu0
        %v2256 = vadd.f32 %v2237, %v2255
        %2257 = vdwg.mxu0
        %2258 = vmatpush.bf16.msra.mxu0 %v1208
        %2259 = vmatpush.bf16.msra.mxu0 %v1207
        %2260 = vmatpush.bf16.msra.mxu0 %v1206
        %2261 = vmatpush.bf16.msra.mxu0 %v1205
        %2262 = vmatpush.bf16.msra.mxu0 %v1204
        %2263 = vmatpush.bf16.msra.mxu0 %v1203
        %2264 = vmatpush.bf16.msra.mxu0 %v1202
        %2265 = vmatpush.bf16.msra.mxu0 %v1201
        %2266 = vmatmul.bf16.gmra.mxu0 %v2166
        %v2267 = vpop.f32.mrf.mxu0
        %v2268 = vadd.f32 %v2249, %v2267
        %v2269 = vpop.f32.mrf.mxu0
        %v2270 = vadd.f32 %v2251, %v2269
        %2271 = vmatmul.bf16.gmra.mxu0 %v2179
        %v2272 = vpop.f32.mrf.mxu0
        %v2273 = vadd.f32 %v2254, %v2272
        %v2274 = vpop.f32.mrf.mxu0
        %v2275 = vadd.f32 %v2256, %v2274
        %2276 = vdwg.mxu0
        %2277 = vmatpush.bf16.msra.mxu0 %v1216
        %2278 = vmatpush.bf16.msra.mxu0 %v1215
        %2279 = vmatpush.bf16.msra.mxu0 %v1214
        %2280 = vmatpush.bf16.msra.mxu0 %v1213
        %2281 = vmatpush.bf16.msra.mxu0 %v1212
        %2282 = vmatpush.bf16.msra.mxu0 %v1211
        %2283 = vmatpush.bf16.msra.mxu0 %v1210
        %2284 = vmatpush.bf16.msra.mxu0 %v1209
        %2285 = vmatmul.bf16.gmra.mxu0 %v2167
        %v2286 = vpop.f32.mrf.mxu0
        %v2287 = vadd.f32 %v2268, %v2286
        %v2288 = vpop.f32.mrf.mxu0
        %v2289 = vadd.f32 %v2270, %v2288
        %2290 = vmatmul.bf16.gmra.mxu0 %v2180
        %v2291 = vpop.f32.mrf.mxu0
        %v2292 = vadd.f32 %v2273, %v2291
        %v2293 = vpop.f32.mrf.mxu0
        %v2294 = vadd.f32 %v2275, %v2293
        %2295 = vdwg.mxu0
        %2296 = vmatpush.bf16.msra.mxu0 %v1224
        %2297 = vmatpush.bf16.msra.mxu0 %v1223
        %2298 = vmatpush.bf16.msra.mxu0 %v1222
        %2299 = vmatpush.bf16.msra.mxu0 %v1221
        %2300 = vmatpush.bf16.msra.mxu0 %v1220
        %2301 = vmatpush.bf16.msra.mxu0 %v1219
        %2302 = vmatpush.bf16.msra.mxu0 %v1218
        %2303 = vmatpush.bf16.msra.mxu0 %v1217
        %2304 = vmatmul.bf16.gmra.mxu0 %v2168
        %v2305 = vpop.f32.mrf.mxu0
        %v2306 = vadd.f32 %v2287, %v2305
        %v2307 = vpop.f32.mrf.mxu0
        %v2308 = vadd.f32 %v2289, %v2307
        %2309 = vmatmul.bf16.gmra.mxu0 %v2181
        %v2310 = vpop.f32.mrf.mxu0
        %v2311 = vadd.f32 %v2292, %v2310
        %v2312 = vpop.f32.mrf.mxu0
        %v2313 = vadd.f32 %v2294, %v2312
        %2314 = vdwg.mxu0
        %2315 = vmatpush.bf16.msra.mxu0 %v1232
        %2316 = vmatpush.bf16.msra.mxu0 %v1231
        %2317 = vmatpush.bf16.msra.mxu0 %v1230
        %2318 = vmatpush.bf16.msra.mxu0 %v1229
        %2319 = vmatpush.bf16.msra.mxu0 %v1228
        %2320 = vmatpush.bf16.msra.mxu0 %v1227
        %2321 = vmatpush.bf16.msra.mxu0 %v1226
        %2322 = vmatpush.bf16.msra.mxu0 %v1225
        %2323 = vmatmul.bf16.gmra.mxu0 %v2169
        %v2324 = vpop.f32.mrf.mxu0
        %v2325 = vadd.f32 %v2306, %v2324
        %v2326 = vpop.f32.mrf.mxu0
        %v2327 = vadd.f32 %v2308, %v2326
        %2328 = vmatmul.bf16.gmra.mxu0 %v2182
        %v2329 = vpop.f32.mrf.mxu0
        %v2330 = vadd.f32 %v2311, %v2329
        %v2331 = vpop.f32.mrf.mxu0
        %v2332 = vadd.f32 %v2313, %v2331
        %2333 = vdwg.mxu0
        %2334 = vmatpush.bf16.msra.mxu0 %v1240
        %2335 = vmatpush.bf16.msra.mxu0 %v1239
        %2336 = vmatpush.bf16.msra.mxu0 %v1238
        %2337 = vmatpush.bf16.msra.mxu0 %v1237
        %2338 = vmatpush.bf16.msra.mxu0 %v1236
        %2339 = vmatpush.bf16.msra.mxu0 %v1235
        %2340 = vmatpush.bf16.msra.mxu0 %v1234
        %2341 = vmatpush.bf16.msra.mxu0 %v1233
        %2342 = vmatmul.bf16.gmra.mxu0 %v2170
        %v2343 = vpop.f32.mrf.mxu0
        %v2344 = vadd.f32 %v2325, %v2343
        %v2345 = vpop.f32.mrf.mxu0
        %v2346 = vadd.f32 %v2327, %v2345
        %2347 = vmatmul.bf16.gmra.mxu0 %v2183
        %v2348 = vpop.f32.mrf.mxu0
        %v2349 = vadd.f32 %v2330, %v2348
        %v2350 = vpop.f32.mrf.mxu0
        %v2351 = vadd.f32 %v2332, %v2350
        %2352 = vdwg.mxu0
        %2353 = vmatpush.bf16.msra.mxu0 %v1248
        %2354 = vmatpush.bf16.msra.mxu0 %v1247
        %2355 = vmatpush.bf16.msra.mxu0 %v1246
        %2356 = vmatpush.bf16.msra.mxu0 %v1245
        %2357 = vmatpush.bf16.msra.mxu0 %v1244
        %2358 = vmatpush.bf16.msra.mxu0 %v1243
        %2359 = vmatpush.bf16.msra.mxu0 %v1242
        %2360 = vmatpush.bf16.msra.mxu0 %v1241
        %2361 = vmatmul.bf16.gmra.mxu0 %v2171
        %v2362 = vpop.f32.mrf.mxu0
        %v2363 = vadd.f32 %v2344, %v2362
        %v2364 = vpop.f32.mrf.mxu0
        %v2365 = vadd.f32 %v2346, %v2364
        %2366 = vmatmul.bf16.gmra.mxu0 %v2184
        %v2367 = vpop.f32.mrf.mxu0
        %v2368 = vadd.f32 %v2349, %v2367
        %v2369 = vpop.f32.mrf.mxu0
        %v2370 = vadd.f32 %v2351, %v2369
        %2371 = vdwg.mxu0
        %2372 = vmatpush.bf16.msra.mxu0 %v1256
        %2373 = vmatpush.bf16.msra.mxu0 %v1255
        %2374 = vmatpush.bf16.msra.mxu0 %v1254
        %2375 = vmatpush.bf16.msra.mxu0 %v1253
        %2376 = vmatpush.bf16.msra.mxu0 %v1252
        %2377 = vmatpush.bf16.msra.mxu0 %v1251
        %2378 = vmatpush.bf16.msra.mxu0 %v1250
        %2379 = vmatpush.bf16.msra.mxu0 %v1249
        %2380 = vmatmul.bf16.gmra.mxu0 %v2172
        %v2381 = vpop.f32.mrf.mxu0
        %v2382 = vadd.f32 %v2363, %v2381
        %v2383 = vpop.f32.mrf.mxu0
        %v2384 = vadd.f32 %v2365, %v2383
        %2385 = vmatmul.bf16.gmra.mxu0 %v2185
        %v2386 = vpop.f32.mrf.mxu0
        %v2387 = vadd.f32 %v2368, %v2386
        %v2388 = vpop.f32.mrf.mxu0
        %v2389 = vadd.f32 %v2370, %v2388
        %2390 = vdwg.mxu0
        %2391 = vmatpush.bf16.msra.mxu0 %v1264
        %2392 = vmatpush.bf16.msra.mxu0 %v1263
        %2393 = vmatpush.bf16.msra.mxu0 %v1262
        %2394 = vmatpush.bf16.msra.mxu0 %v1261
        %2395 = vmatpush.bf16.msra.mxu0 %v1260
        %2396 = vmatpush.bf16.msra.mxu0 %v1259
        %2397 = vmatpush.bf16.msra.mxu0 %v1258
        %2398 = vmatpush.bf16.msra.mxu0 %v1257
        %2399 = vmatmul.bf16.gmra.mxu0 %v2173
        %v2400 = vpop.f32.mrf.mxu0
        %v2401 = vadd.f32 %v2382, %v2400
        %v2402 = vpop.f32.mrf.mxu0
        %v2403 = vadd.f32 %v2384, %v2402
        %2404 = vmatmul.bf16.gmra.mxu0 %v2186
        %v2405 = vpop.f32.mrf.mxu0
        %v2406 = vadd.f32 %v2387, %v2405
        %v2407 = vpop.f32.mrf.mxu0
        %v2408 = vadd.f32 %v2389, %v2407
        %2409 = vdwg.mxu0
        %2410 = vmatpush.bf16.msra.mxu0 %v1272
        %2411 = vmatpush.bf16.msra.mxu0 %v1271
        %2412 = vmatpush.bf16.msra.mxu0 %v1270
        %2413 = vmatpush.bf16.msra.mxu0 %v1269
        %2414 = vmatpush.bf16.msra.mxu0 %v1268
        %2415 = vmatpush.bf16.msra.mxu0 %v1267
        %2416 = vmatpush.bf16.msra.mxu0 %v1266
        %2417 = vmatpush.bf16.msra.mxu0 %v1265
        %2418 = vmatmul.bf16.gmra.mxu0 %v2174
        %v2419 = vpop.f32.mrf.mxu0
        %v2420 = vadd.f32 %v2401, %v2419
        %v2421 = vpop.f32.mrf.mxu0
        %v2422 = vadd.f32 %v2403, %v2421
        %2423 = vmatmul.bf16.gmra.mxu0 %v2187
        %v2424 = vpop.f32.mrf.mxu0
        %v2425 = vadd.f32 %v2406, %v2424
        %v2426 = vpop.f32.mrf.mxu0
        %v2427 = vadd.f32 %v2408, %v2426
        %2428 = vdwg.mxu0
        %2429 = vmatpush.bf16.msra.mxu0 %v1280
        %2430 = vmatpush.bf16.msra.mxu0 %v1279
        %2431 = vmatpush.bf16.msra.mxu0 %v1278
        %2432 = vmatpush.bf16.msra.mxu0 %v1277
        %2433 = vmatpush.bf16.msra.mxu0 %v1276
        %2434 = vmatpush.bf16.msra.mxu0 %v1275
        %2435 = vmatpush.bf16.msra.mxu0 %v1274
        %2436 = vmatpush.bf16.msra.mxu0 %v1273
        %2437 = vmatmul.bf16.gmra.mxu0 %v2175
        %v2438 = vpop.f32.mrf.mxu0
        %v2439 = vadd.f32 %v2420, %v2438
        %v2440 = vpop.f32.mrf.mxu0
        %v2441 = vadd.f32 %v2422, %v2440
        %2442 = vmatmul.bf16.gmra.mxu0 %v2188
        %v2443 = vpop.f32.mrf.mxu0
        %v2444 = vadd.f32 %v2425, %v2443
        %v2445 = vpop.f32.mrf.mxu0
        %v2446 = vadd.f32 %v2427, %v2445
        %2447 = vdwg.mxu0
        %2448 = vmatpush.bf16.msra.mxu0 0
        %2449 = vmatpush.bf16.msra.mxu0 0
        %2450 = vmatpush.bf16.msra.mxu0 0
        %2451 = vmatpush.bf16.msra.mxu0 0
        %2452 = vmatpush.bf16.msra.mxu0 %v1284
        %2453 = vmatpush.bf16.msra.mxu0 %v1283
        %2454 = vmatpush.bf16.msra.mxu0 %v1282
        %2455 = vmatpush.bf16.msra.mxu0 %v1281
        %2456 = vmatmul.bf16.gmra.mxu0 %v2215
        %v2457 = vpop.f32.mrf.mxu0
        %v2458 = vadd.f32 %v2439, %v2457
        %v2459 = vpop.f32.mrf.mxu0
        %v2460 = vadd.f32 %v2441, %v2459
        %2461 = vmatmul.bf16.gmra.mxu0 %v2218
        %v2462 = vpop.f32.mrf.mxu0
        %v2463 = vadd.f32 %v2444, %v2462
        %v2464 = vpop.f32.mrf.mxu0
        %v2465 = vadd.f32 %v2446, %v2464
        %2466 = vdwg.mxu0
        %v2467 = vmax.f32 %v2051, %v2458
        %v2468 = vmax.f32 %v2052, %v2460
        %v2469 = vmax.f32 %v2053, %v2463
        %v2470 = vmax.f32 %v2054, %v2465
        %s2471 = scalar_lea.vmem %s398, 624 [#allocation2]
        %v2472 = vld [vmem:[%s2471] sm:$0xff]
        %v2473 = vld [vmem:[%s2471 + $0x8] sm:$0xff]
        %v2474 = vld [vmem:[%s2471 + $0x10] sm:$0xff]
        %v2475 = vld [vmem:[%s2471 + $0x18] sm:$0xff]
        %v2476 = vld [vmem:[%s2471 + $0x20] sm:$0xff]
        %v2477 = vld [vmem:[%s2471 + $0x28] sm:$0xff]
        %v2478 = vld [vmem:[%s2471 + $0x30] sm:$0xf]
        %v2479 = vld [vmem:[%s2471 + $0x34] sm:$0xff]
        %v2480 = vld [vmem:[%s2471 + $0x3c] sm:$0xff]
        %v2481 = vld [vmem:[%s2471 + $0x44] sm:$0xff]
        %v2482 = vld [vmem:[%s2471 + $0x4c] sm:$0xff]
        %v2483 = vld [vmem:[%s2471 + $0x54] sm:$0xff]
        %v2484 = vld [vmem:[%s2471 + $0x5c] sm:$0xff]
        %v2485 = vld [vmem:[%s2471 + $0x64] sm:$0xf]
        %v2486 = vld [vmem:[%s2471 + $0x68] sm:$0xff]
        %v2487 = vld [vmem:[%s2471 + $0x70] sm:$0xff]
        %v2488 = vld [vmem:[%s2471 + $0x78] sm:$0xff]
        %v2489 = vld [vmem:[%s2471 + $0x80] sm:$0xff]
        %v2490 = vld [vmem:[%s2471 + $0x88] sm:$0xff]
        %v2491 = vld [vmem:[%s2471 + $0x90] sm:$0xff]
        %v2492 = vld [vmem:[%s2471 + $0x98] sm:$0xf]
        %v2493 = vld [vmem:[%s2471 + $0x9c] sm:$0xff]
        %v2494 = vld [vmem:[%s2471 + $0xa4] sm:$0xff]
        %v2495 = vld [vmem:[%s2471 + $0xac] sm:$0xff]
        %v2496 = vld [vmem:[%s2471 + $0xb4] sm:$0xff]
        %v2497 = vld [vmem:[%s2471 + $0xbc] sm:$0xff]
        %v2498 = vld [vmem:[%s2471 + $0xc4] sm:$0xff]
        %v2499 = vld [vmem:[%s2471 + $0xcc] sm:$0xf]
        %v2528 = vunpack.c.l.b16 %v2472
        %v2529 = vunpack.c.h.b16 %v2472
        %v2530 = vunpack.c.l.b16 %v2473
        %v2531 = vunpack.c.h.b16 %v2473
        %v2532 = vunpack.c.l.b16 %v2474
        %v2533 = vunpack.c.h.b16 %v2474
        %v2534 = vunpack.c.l.b16 %v2475
        %v2535 = vunpack.c.h.b16 %v2475
        %v2536 = vunpack.c.l.b16 %v2476
        %v2537 = vunpack.c.h.b16 %v2476
        %v2538 = vunpack.c.l.b16 %v2477
        %v2539 = vunpack.c.h.b16 %v2477
        %v2540 = vunpack.c.l.b16 %v2478
        %v2541 = vunpack.c.l.b16 %v2479
        %v2542 = vunpack.c.h.b16 %v2479
        %v2543 = vunpack.c.l.b16 %v2480
        %v2544 = vunpack.c.h.b16 %v2480
        %v2545 = vunpack.c.l.b16 %v2481
        %v2546 = vunpack.c.h.b16 %v2481
        %v2547 = vunpack.c.l.b16 %v2482
        %v2548 = vunpack.c.h.b16 %v2482
        %v2549 = vunpack.c.l.b16 %v2483
        %v2550 = vunpack.c.h.b16 %v2483
        %v2551 = vunpack.c.l.b16 %v2484
        %v2552 = vunpack.c.h.b16 %v2484
        %v2553 = vunpack.c.l.b16 %v2485
        %v2554 = vunpack.c.l.b16 %v2486
        %v2555 = vunpack.c.h.b16 %v2486
        %v2556 = vunpack.c.l.b16 %v2487
        %v2557 = vunpack.c.h.b16 %v2487
        %v2558 = vunpack.c.l.b16 %v2488
        %v2559 = vunpack.c.h.b16 %v2488
        %v2560 = vunpack.c.l.b16 %v2489
        %v2561 = vunpack.c.h.b16 %v2489
        %v2562 = vunpack.c.l.b16 %v2490
        %v2563 = vunpack.c.h.b16 %v2490
        %v2564 = vunpack.c.l.b16 %v2491
        %v2565 = vunpack.c.h.b16 %v2491
        %v2566 = vunpack.c.l.b16 %v2492
        %v2567 = vunpack.c.l.b16 %v2493
        %v2568 = vunpack.c.h.b16 %v2493
        %v2569 = vunpack.c.l.b16 %v2494
        %v2570 = vunpack.c.h.b16 %v2494
        %v2571 = vunpack.c.l.b16 %v2495
        %v2572 = vunpack.c.h.b16 %v2495
        %v2573 = vunpack.c.l.b16 %v2496
        %v2574 = vunpack.c.h.b16 %v2496
        %v2575 = vunpack.c.l.b16 %v2497
        %v2576 = vunpack.c.h.b16 %v2497
        %v2577 = vunpack.c.l.b16 %v2498
        %v2578 = vunpack.c.h.b16 %v2498
        %v2579 = vunpack.c.l.b16 %v2499
        %v2580 = vpack.c.b16 %v2541, %v2528
        %v2581 = vpack.c.b16 %v2542, %v2529
        %v2582 = vpack.c.b16 %v2543, %v2530
        %v2583 = vpack.c.b16 %v2544, %v2531
        %v2584 = vpack.c.b16 %v2545, %v2532
        %v2585 = vpack.c.b16 %v2546, %v2533
        %v2586 = vpack.c.b16 %v2547, %v2534
        %v2587 = vpack.c.b16 %v2548, %v2535
        %v2588 = vpack.c.b16 %v2549, %v2536
        %v2589 = vpack.c.b16 %v2550, %v2537
        %v2590 = vpack.c.b16 %v2551, %v2538
        %v2591 = vpack.c.b16 %v2552, %v2539
        %v2592 = vpack.c.b16 %v2553, %v2540
        %v2593 = vpack.c.b16 %v2567, %v2554
        %v2594 = vpack.c.b16 %v2568, %v2555
        %v2595 = vpack.c.b16 %v2569, %v2556
        %v2596 = vpack.c.b16 %v2570, %v2557
        %v2597 = vpack.c.b16 %v2571, %v2558
        %v2598 = vpack.c.b16 %v2572, %v2559
        %v2599 = vpack.c.b16 %v2573, %v2560
        %v2600 = vpack.c.b16 %v2574, %v2561
        %v2601 = vpack.c.b16 %v2575, %v2562
        %v2602 = vpack.c.b16 %v2576, %v2563
        %v2603 = vpack.c.b16 %v2577, %v2564
        %v2604 = vpack.c.b16 %v2578, %v2565
        %v2605 = vpack.c.b16 %v2579, %v2566
        %v2631 = vsel %vm1385, %v2592, 0
        %v2634 = vsel %vm1385, %v2605, 0
        %2636 = vmatpush.bf16.msra.mxu0 %v1192
        %2637 = vmatpush.bf16.msra.mxu0 %v1191
        %2638 = vmatpush.bf16.msra.mxu0 %v1190
        %2639 = vmatpush.bf16.msra.mxu0 %v1189
        %2640 = vmatpush.bf16.msra.mxu0 %v1188
        %2641 = vmatpush.bf16.msra.mxu0 %v1187
        %2642 = vmatpush.bf16.msra.mxu0 %v1186
        %2643 = vmatpush.bf16.msra.mxu0 %v1185
        %2644 = vmatmul.bf16.gmra.mxu0 %v2580
        %v2645 = vpop.f32.mrf.mxu0
        %v2646 = vadd.f32 0.0, %v2645
        %v2647 = vpop.f32.mrf.mxu0
        %v2648 = vadd.f32 0.0, %v2647
        %2649 = vmatmul.bf16.gmra.mxu0 %v2593
        %v2650 = vpop.f32.mrf.mxu0
        %v2651 = vadd.f32 0.0, %v2650
        %v2652 = vpop.f32.mrf.mxu0
        %v2653 = vadd.f32 0.0, %v2652
        %2654 = vdwg.mxu0
        %2655 = vmatpush.bf16.msra.mxu0 %v1200
        %2656 = vmatpush.bf16.msra.mxu0 %v1199
        %2657 = vmatpush.bf16.msra.mxu0 %v1198
        %2658 = vmatpush.bf16.msra.mxu0 %v1197
        %2659 = vmatpush.bf16.msra.mxu0 %v1196
        %2660 = vmatpush.bf16.msra.mxu0 %v1195
        %2661 = vmatpush.bf16.msra.mxu0 %v1194
        %2662 = vmatpush.bf16.msra.mxu0 %v1193
        %2663 = vmatmul.bf16.gmra.mxu0 %v2581
        %v2664 = vpop.f32.mrf.mxu0
        %v2665 = vadd.f32 %v2646, %v2664
        %v2666 = vpop.f32.mrf.mxu0
        %v2667 = vadd.f32 %v2648, %v2666
        %2668 = vmatmul.bf16.gmra.mxu0 %v2594
        %v2669 = vpop.f32.mrf.mxu0
        %v2670 = vadd.f32 %v2651, %v2669
        %v2671 = vpop.f32.mrf.mxu0
        %v2672 = vadd.f32 %v2653, %v2671
        %2673 = vdwg.mxu0
        %2674 = vmatpush.bf16.msra.mxu0 %v1208
        %2675 = vmatpush.bf16.msra.mxu0 %v1207
        %2676 = vmatpush.bf16.msra.mxu0 %v1206
        %2677 = vmatpush.bf16.msra.mxu0 %v1205
        %2678 = vmatpush.bf16.msra.mxu0 %v1204
        %2679 = vmatpush.bf16.msra.mxu0 %v1203
        %2680 = vmatpush.bf16.msra.mxu0 %v1202
        %2681 = vmatpush.bf16.msra.mxu0 %v1201
        %2682 = vmatmul.bf16.gmra.mxu0 %v2582
        %v2683 = vpop.f32.mrf.mxu0
        %v2684 = vadd.f32 %v2665, %v2683
        %v2685 = vpop.f32.mrf.mxu0
        %v2686 = vadd.f32 %v2667, %v2685
        %2687 = vmatmul.bf16.gmra.mxu0 %v2595
        %v2688 = vpop.f32.mrf.mxu0
        %v2689 = vadd.f32 %v2670, %v2688
        %v2690 = vpop.f32.mrf.mxu0
        %v2691 = vadd.f32 %v2672, %v2690
        %2692 = vdwg.mxu0
        %2693 = vmatpush.bf16.msra.mxu0 %v1216
        %2694 = vmatpush.bf16.msra.mxu0 %v1215
        %2695 = vmatpush.bf16.msra.mxu0 %v1214
        %2696 = vmatpush.bf16.msra.mxu0 %v1213
        %2697 = vmatpush.bf16.msra.mxu0 %v1212
        %2698 = vmatpush.bf16.msra.mxu0 %v1211
        %2699 = vmatpush.bf16.msra.mxu0 %v1210
        %2700 = vmatpush.bf16.msra.mxu0 %v1209
        %2701 = vmatmul.bf16.gmra.mxu0 %v2583
        %v2702 = vpop.f32.mrf.mxu0
        %v2703 = vadd.f32 %v2684, %v2702
        %v2704 = vpop.f32.mrf.mxu0
        %v2705 = vadd.f32 %v2686, %v2704
        %2706 = vmatmul.bf16.gmra.mxu0 %v2596
        %v2707 = vpop.f32.mrf.mxu0
        %v2708 = vadd.f32 %v2689, %v2707
        %v2709 = vpop.f32.mrf.mxu0
        %v2710 = vadd.f32 %v2691, %v2709
        %2711 = vdwg.mxu0
        %2712 = vmatpush.bf16.msra.mxu0 %v1224
        %2713 = vmatpush.bf16.msra.mxu0 %v1223
        %2714 = vmatpush.bf16.msra.mxu0 %v1222
        %2715 = vmatpush.bf16.msra.mxu0 %v1221
        %2716 = vmatpush.bf16.msra.mxu0 %v1220
        %2717 = vmatpush.bf16.msra.mxu0 %v1219
        %2718 = vmatpush.bf16.msra.mxu0 %v1218
        %2719 = vmatpush.bf16.msra.mxu0 %v1217
        %2720 = vmatmul.bf16.gmra.mxu0 %v2584
        %v2721 = vpop.f32.mrf.mxu0
        %v2722 = vadd.f32 %v2703, %v2721
        %v2723 = vpop.f32.mrf.mxu0
        %v2724 = vadd.f32 %v2705, %v2723
        %2725 = vmatmul.bf16.gmra.mxu0 %v2597
        %v2726 = vpop.f32.mrf.mxu0
        %v2727 = vadd.f32 %v2708, %v2726
        %v2728 = vpop.f32.mrf.mxu0
        %v2729 = vadd.f32 %v2710, %v2728
        %2730 = vdwg.mxu0
        %2731 = vmatpush.bf16.msra.mxu0 %v1232
        %2732 = vmatpush.bf16.msra.mxu0 %v1231
        %2733 = vmatpush.bf16.msra.mxu0 %v1230
        %2734 = vmatpush.bf16.msra.mxu0 %v1229
        %2735 = vmatpush.bf16.msra.mxu0 %v1228
        %2736 = vmatpush.bf16.msra.mxu0 %v1227
        %2737 = vmatpush.bf16.msra.mxu0 %v1226
        %2738 = vmatpush.bf16.msra.mxu0 %v1225
        %2739 = vmatmul.bf16.gmra.mxu0 %v2585
        %v2740 = vpop.f32.mrf.mxu0
        %v2741 = vadd.f32 %v2722, %v2740
        %v2742 = vpop.f32.mrf.mxu0
        %v2743 = vadd.f32 %v2724, %v2742
        %2744 = vmatmul.bf16.gmra.mxu0 %v2598
        %v2745 = vpop.f32.mrf.mxu0
        %v2746 = vadd.f32 %v2727, %v2745
        %v2747 = vpop.f32.mrf.mxu0
        %v2748 = vadd.f32 %v2729, %v2747
        %2749 = vdwg.mxu0
        %2750 = vmatpush.bf16.msra.mxu0 %v1240
        %2751 = vmatpush.bf16.msra.mxu0 %v1239
        %2752 = vmatpush.bf16.msra.mxu0 %v1238
        %2753 = vmatpush.bf16.msra.mxu0 %v1237
        %2754 = vmatpush.bf16.msra.mxu0 %v1236
        %2755 = vmatpush.bf16.msra.mxu0 %v1235
        %2756 = vmatpush.bf16.msra.mxu0 %v1234
        %2757 = vmatpush.bf16.msra.mxu0 %v1233
        %2758 = vmatmul.bf16.gmra.mxu0 %v2586
        %v2759 = vpop.f32.mrf.mxu0
        %v2760 = vadd.f32 %v2741, %v2759
        %v2761 = vpop.f32.mrf.mxu0
        %v2762 = vadd.f32 %v2743, %v2761
        %2763 = vmatmul.bf16.gmra.mxu0 %v2599
        %v2764 = vpop.f32.mrf.mxu0
        %v2765 = vadd.f32 %v2746, %v2764
        %v2766 = vpop.f32.mrf.mxu0
        %v2767 = vadd.f32 %v2748, %v2766
        %2768 = vdwg.mxu0
        %2769 = vmatpush.bf16.msra.mxu0 %v1248
        %2770 = vmatpush.bf16.msra.mxu0 %v1247
        %2771 = vmatpush.bf16.msra.mxu0 %v1246
        %2772 = vmatpush.bf16.msra.mxu0 %v1245
        %2773 = vmatpush.bf16.msra.mxu0 %v1244
        %2774 = vmatpush.bf16.msra.mxu0 %v1243
        %2775 = vmatpush.bf16.msra.mxu0 %v1242
        %2776 = vmatpush.bf16.msra.mxu0 %v1241
        %2777 = vmatmul.bf16.gmra.mxu0 %v2587
        %v2778 = vpop.f32.mrf.mxu0
        %v2779 = vadd.f32 %v2760, %v2778
        %v2780 = vpop.f32.mrf.mxu0
        %v2781 = vadd.f32 %v2762, %v2780
        %2782 = vmatmul.bf16.gmra.mxu0 %v2600
        %v2783 = vpop.f32.mrf.mxu0
        %v2784 = vadd.f32 %v2765, %v2783
        %v2785 = vpop.f32.mrf.mxu0
        %v2786 = vadd.f32 %v2767, %v2785
        %2787 = vdwg.mxu0
        %2788 = vmatpush.bf16.msra.mxu0 %v1256
        %2789 = vmatpush.bf16.msra.mxu0 %v1255
        %2790 = vmatpush.bf16.msra.mxu0 %v1254
        %2791 = vmatpush.bf16.msra.mxu0 %v1253
        %2792 = vmatpush.bf16.msra.mxu0 %v1252
        %2793 = vmatpush.bf16.msra.mxu0 %v1251
        %2794 = vmatpush.bf16.msra.mxu0 %v1250
        %2795 = vmatpush.bf16.msra.mxu0 %v1249
        %2796 = vmatmul.bf16.gmra.mxu0 %v2588
        %v2797 = vpop.f32.mrf.mxu0
        %v2798 = vadd.f32 %v2779, %v2797
        %v2799 = vpop.f32.mrf.mxu0
        %v2800 = vadd.f32 %v2781, %v2799
        %2801 = vmatmul.bf16.gmra.mxu0 %v2601
        %v2802 = vpop.f32.mrf.mxu0
        %v2803 = vadd.f32 %v2784, %v2802
        %v2804 = vpop.f32.mrf.mxu0
        %v2805 = vadd.f32 %v2786, %v2804
        %2806 = vdwg.mxu0
        %2807 = vmatpush.bf16.msra.mxu0 %v1264
        %2808 = vmatpush.bf16.msra.mxu0 %v1263
        %2809 = vmatpush.bf16.msra.mxu0 %v1262
        %2810 = vmatpush.bf16.msra.mxu0 %v1261
        %2811 = vmatpush.bf16.msra.mxu0 %v1260
        %2812 = vmatpush.bf16.msra.mxu0 %v1259
        %2813 = vmatpush.bf16.msra.mxu0 %v1258
        %2814 = vmatpush.bf16.msra.mxu0 %v1257
        %2815 = vmatmul.bf16.gmra.mxu0 %v2589
        %v2816 = vpop.f32.mrf.mxu0
        %v2817 = vadd.f32 %v2798, %v2816
        %v2818 = vpop.f32.mrf.mxu0
        %v2819 = vadd.f32 %v2800, %v2818
        %2820 = vmatmul.bf16.gmra.mxu0 %v2602
        %v2821 = vpop.f32.mrf.mxu0
        %v2822 = vadd.f32 %v2803, %v2821
        %v2823 = vpop.f32.mrf.mxu0
        %v2824 = vadd.f32 %v2805, %v2823
        %2825 = vdwg.mxu0
        %2826 = vmatpush.bf16.msra.mxu0 %v1272
        %2827 = vmatpush.bf16.msra.mxu0 %v1271
        %2828 = vmatpush.bf16.msra.mxu0 %v1270
        %2829 = vmatpush.bf16.msra.mxu0 %v1269
        %2830 = vmatpush.bf16.msra.mxu0 %v1268
        %2831 = vmatpush.bf16.msra.mxu0 %v1267
        %2832 = vmatpush.bf16.msra.mxu0 %v1266
        %2833 = vmatpush.bf16.msra.mxu0 %v1265
        %2834 = vmatmul.bf16.gmra.mxu0 %v2590
        %v2835 = vpop.f32.mrf.mxu0
        %v2836 = vadd.f32 %v2817, %v2835
        %v2837 = vpop.f32.mrf.mxu0
        %v2838 = vadd.f32 %v2819, %v2837
        %2839 = vmatmul.bf16.gmra.mxu0 %v2603
        %v2840 = vpop.f32.mrf.mxu0
        %v2841 = vadd.f32 %v2822, %v2840
        %v2842 = vpop.f32.mrf.mxu0
        %v2843 = vadd.f32 %v2824, %v2842
        %2844 = vdwg.mxu0
        %2845 = vmatpush.bf16.msra.mxu0 %v1280
        %2846 = vmatpush.bf16.msra.mxu0 %v1279
        %2847 = vmatpush.bf16.msra.mxu0 %v1278
        %2848 = vmatpush.bf16.msra.mxu0 %v1277
        %2849 = vmatpush.bf16.msra.mxu0 %v1276
        %2850 = vmatpush.bf16.msra.mxu0 %v1275
        %2851 = vmatpush.bf16.msra.mxu0 %v1274
        %2852 = vmatpush.bf16.msra.mxu0 %v1273
        %2853 = vmatmul.bf16.gmra.mxu0 %v2591
        %v2854 = vpop.f32.mrf.mxu0
        %v2855 = vadd.f32 %v2836, %v2854
        %v2856 = vpop.f32.mrf.mxu0
        %v2857 = vadd.f32 %v2838, %v2856
        %2858 = vmatmul.bf16.gmra.mxu0 %v2604
        %v2859 = vpop.f32.mrf.mxu0
        %v2860 = vadd.f32 %v2841, %v2859
        %v2861 = vpop.f32.mrf.mxu0
        %v2862 = vadd.f32 %v2843, %v2861
        %2863 = vdwg.mxu0
        %2864 = vmatpush.bf16.msra.mxu0 0
        %2865 = vmatpush.bf16.msra.mxu0 0
        %2866 = vmatpush.bf16.msra.mxu0 0
        %2867 = vmatpush.bf16.msra.mxu0 0
        %2868 = vmatpush.bf16.msra.mxu0 %v1284
        %2869 = vmatpush.bf16.msra.mxu0 %v1283
        %2870 = vmatpush.bf16.msra.mxu0 %v1282
        %2871 = vmatpush.bf16.msra.mxu0 %v1281
        %2872 = vmatmul.bf16.gmra.mxu0 %v2631
        %v2873 = vpop.f32.mrf.mxu0
        %v2874 = vadd.f32 %v2855, %v2873
        %v2875 = vpop.f32.mrf.mxu0
        %v2876 = vadd.f32 %v2857, %v2875
        %2877 = vmatmul.bf16.gmra.mxu0 %v2634
        %v2878 = vpop.f32.mrf.mxu0
        %v2879 = vadd.f32 %v2860, %v2878
        %v2880 = vpop.f32.mrf.mxu0
        %v2881 = vadd.f32 %v2862, %v2880
        %2882 = vdwg.mxu0
        %v2883 = vmax.f32 %v2467, %v2874
        %v2884 = vmax.f32 %v2468, %v2876
        %v2885 = vmax.f32 %v2469, %v2879
        %v2886 = vmax.f32 %v2470, %v2881
        %v2887 = vld [vmem:[%s2] sm:$0x1]
        %v2889 = vperm.slane %v2887, 0
        %v2891 = vadd.f32 %v2883, %v2889
        %v2892 = vadd.f32 %v2884, %v2889
        %v2893 = vadd.f32 %v2885, %v2889
        %v2894 = vadd.f32 %v2886, %v2889
        %v2895 = vmax.f32 %v2891, 0.0
        %v2896 = vmax.f32 %v2892, 0.0
        %v2897 = vmax.f32 %v2893, 0.0
        %v2898 = vmax.f32 %v2894, 0.0
        %v2899 = vpack.c.bf16 %v2895, %v2895
        %v2900 = vpack.c.bf16 %v2896, %v2896
        %v2901 = vpack.c.bf16 %v2897, %v2897
        %v2902 = vpack.c.bf16 %v2898, %v2898
        %vm2903 = vcmask 519168
        %2904 = vst.msk [vmem:[%s424] sm:$0xf] %vm2903, %v2899
        %2905 = vst.msk [vmem:[%s424 + $0x4] sm:$0xf] %vm2903, %v2900
        %2906 = vst.msk [vmem:[%s424 + $0x8] sm:$0xf] %vm2903, %v2901
        %2907 = vst.msk [vmem:[%s424 + $0xc] sm:$0xf] %vm2903, %v2902
        %s2908 = smul.u32 4, %s14
        %p2909 = scmp.lt.s32.totalorder %s2908, 7
        %s2910 = scalar_select %p2909, %s2908, 7
        %s2911 = smul.addr %s2910, 4
        %s2912 = scalar_lea.vmem %s3, %s2911
        // Predicated region
        $region59: #{lenet_forward.4} parent=53 // pred_check
          %p2913 = pneg %p100
        $region60: #{lenet_forward.4} parent=53 // pred_check_branch
          %2915 = sbr.rel (%p2913) target = $region62
        $region61: #{lenet_forward.4} parent=53 // pred_region
          %s2916 = smul.u32 4, %s14
        $region62: #{lenet_forward.4} parent=53 // pred_fallthru
          _
      $region54: #{lenet_forward.4} parent=5 // pred_fallthru
        _
      %p2917 = scmp.le.s32.totalorder 2, %s9
      // Predicated region
      $region63: #{lenet_forward.4} parent=5 // pred_check
        %p2918 = pneg %p2917
      $region64: #{lenet_forward.4} parent=5 // pred_check_branch
        %2920 = sbr.rel (%p2918) target = $region66
      $region65: #{lenet_forward.4} parent=5 // pred_region
        %s2921 = ssub.s32 %s9, 2
        // Predicated region
        $region67: #{lenet_forward.4} parent=65 // pred_check
          %p2922 = pneg %p106
        $region68: #{lenet_forward.4} parent=65 // pred_check_branch
          %2924 = sbr.rel (%p2922) target = $region70
        $region69: #{lenet_forward.4} parent=65 // pred_region
          %s2925 = smul.u32 4, %s15
          %p2926 = scmp.lt.s32.totalorder %s2925, 7
          %s2927 = scalar_select %p2926, %s2925, 7
          %s2928 = smul.addr %s2927, 4
          %s2929 = scalar_lea.vmem %s3, %s2928
        $region70: #{lenet_forward.4} parent=65 // pred_fallthru
          _
      $region66: #{lenet_forward.4} parent=5 // pred_fallthru
        _
    $region6: #{lenet_forward.4} parent=1 // loop_footer
      %s13 = sadd.s32 1, %s9
    $region7: #{lenet_forward.4} parent=1 // loop_footer_branch
      %8 = sbr.rel target = $region3
    $region8: #{lenet_forward.4} parent=1 // loop_exit
      _

// kernel: lenet_forward.5
$region0: #{lenet_forward.5}
  #allocation0 [shape = 'u32[]', space=smem, size = 0x4, offset = 0x4, fixed_abs, tag = 'smem constant byte address 0x4 - core index']
  #allocation1 [shape = 'u32[72,128]{1,0:T(1,128)}', space=vmem, size = 0x9000, scoped, tag = 'internal scratch']
  %s0 = inlined_call_operand.vmem [shape: bf16[8,1600], index: 0, kind: input, shape index: {}]
  %s1 = inlined_call_operand.vmem [shape: bf16[1600,384], index: 1, kind: input, shape index: {}]
  %s2 = inlined_call_operand.vmem [shape: f32[1,384], index: 2, kind: input, shape index: {}]
  %s3 = inlined_call_operand.vmem [shape: bf16[384,192], index: 3, kind: input, shape index: {}]
  %s4 = inlined_call_operand.vmem [shape: f32[1,192], index: 4, kind: input, shape index: {}]
  %s5 = inlined_call_operand.vmem [shape: bf16[192,10], index: 5, kind: input, shape index: {}]
  %s6 = inlined_call_operand.vmem [shape: f32[1,10], index: 6, kind: input, shape index: {}]
  %s7 = inlined_call_operand.vmem [shape: f32[8,10], index: 7, kind: output, shape index: {0}]
  %s8 = inlined_call_operand.vmem [shape: f32[8,10], index: 8, kind: output, shape index: {1}]
  %9 = xla_tuple %s7, %s8
  %s10 = sld [smem:[#allocation0]]
  $region46: #{lenet_forward.5} parent=0
    _
  %s12 = ssub.s32 1, %s10
  %s13 = scalar_select 0, %s12, %s10
  // Predicated region
  $region2: #{lenet_forward.5} parent=0 // pred_check
    _
  $region3: #{lenet_forward.5} parent=0 // pred_check_branch
    %15 = sbr.rel (0) target = $region5
  $region4: #{lenet_forward.5} parent=0 // pred_region
    _
  $region5: #{lenet_forward.5} parent=0 // pred_fallthru
    _
  // Predicated region
  $region6: #{lenet_forward.5} parent=0 // pred_check
    _
  $region7: #{lenet_forward.5} parent=0 // pred_check_branch
    %17 = sbr.rel (0) target = $region9
  $region8: #{lenet_forward.5} parent=0 // pred_region
    _
  $region9: #{lenet_forward.5} parent=0 // pred_fallthru
    _
  // Predicated region
  $region10: #{lenet_forward.5} parent=0 // pred_check
    _
  $region11: #{lenet_forward.5} parent=0 // pred_check_branch
    %19 = sbr.rel (0) target = $region13
  $region12: #{lenet_forward.5} parent=0 // pred_region
    _
  $region13: #{lenet_forward.5} parent=0 // pred_fallthru
    _
  // Predicated region
  $region14: #{lenet_forward.5} parent=0 // pred_check
    _
  $region15: #{lenet_forward.5} parent=0 // pred_check_branch
    %21 = sbr.rel (0) target = $region17
  $region16: #{lenet_forward.5} parent=0 // pred_region
    _
  $region17: #{lenet_forward.5} parent=0 // pred_fallthru
    _
  // Predicated region
  $region18: #{lenet_forward.5} parent=0 // pred_check
    _
  $region19: #{lenet_forward.5} parent=0 // pred_check_branch
    %23 = sbr.rel (0) target = $region21
  $region20: #{lenet_forward.5} parent=0 // pred_region
    _
  $region21: #{lenet_forward.5} parent=0 // pred_fallthru
    _
  // Predicated region
  $region22: #{lenet_forward.5} parent=0 // pred_check
    _
  $region23: #{lenet_forward.5} parent=0 // pred_check_branch
    %25 = sbr.rel (0) target = $region25
  $region24: #{lenet_forward.5} parent=0 // pred_region
    _
  $region25: #{lenet_forward.5} parent=0 // pred_fallthru
    _
  // Predicated region
  $region26: #{lenet_forward.5} parent=0 // pred_check
    _
  $region27: #{lenet_forward.5} parent=0 // pred_check_branch
    %27 = sbr.rel (0) target = $region29
  $region28: #{lenet_forward.5} parent=0 // pred_region
    _
  $region29: #{lenet_forward.5} parent=0 // pred_fallthru
    _
  %v29 = vld [vmem:[%s0] sm:$0xff]
  %v30 = vld [vmem:[%s0 + $0x8] sm:$0xff]
  %v31 = vld [vmem:[%s0 + $0x10] sm:$0xff]
  %v32 = vld [vmem:[%s0 + $0x18] sm:$0xff]
  %v33 = vld [vmem:[%s0 + $0x20] sm:$0xff]
  %v34 = vld [vmem:[%s0 + $0x28] sm:$0xff]
  %v35 = vld [vmem:[%s0 + $0x30] sm:$0xf]
  %v36 = vld [vmem:[%s1] sm:$0xff]
  %v37 = vld [vmem:[%s1 + $0x8] sm:$0xf]
  %v38 = vld [vmem:[%s1 + $0xc] sm:$0xff]
  %v39 = vld [vmem:[%s1 + $0x14] sm:$0xf]
  %v40 = vld [vmem:[%s1 + $0x18] sm:$0xff]
  %v41 = vld [vmem:[%s1 + $0x20] sm:$0xf]
  %v42 = vld [vmem:[%s1 + $0x24] sm:$0xff]
  %v43 = vld [vmem:[%s1 + $0x2c] sm:$0xf]
  %v44 = vld [vmem:[%s1 + $0x30] sm:$0xff]
  %v45 = vld [vmem:[%s1 + $0x38] sm:$0xf]
  %v46 = vld [vmem:[%s1 + $0x3c] sm:$0xff]
  %v47 = vld [vmem:[%s1 + $0x44] sm:$0xf]
  %v48 = vld [vmem:[%s1 + $0x48] sm:$0xff]
  %v49 = vld [vmem:[%s1 + $0x50] sm:$0xf]
  %v50 = vld [vmem:[%s1 + $0x54] sm:$0xff]
  %v51 = vld [vmem:[%s1 + $0x5c] sm:$0xf]
  %v52 = vld [vmem:[%s1 + $0x60] sm:$0xff]
  %v53 = vld [vmem:[%s1 + $0x68] sm:$0xf]
  %v54 = vld [vmem:[%s1 + $0x6c] sm:$0xff]
  %v55 = vld [vmem:[%s1 + $0x74] sm:$0xf]
  %v56 = vld [vmem:[%s1 + $0x78] sm:$0xff]
  %v57 = vld [vmem:[%s1 + $0x80] sm:$0xf]
  %v58 = vld [vmem:[%s1 + $0x84] sm:$0xff]
  %v59 = vld [vmem:[%s1 + $0x8c] sm:$0xf]
  %v60 = vld [vmem:[%s1 + $0x90] sm:$0xff]
  %v61 = vld [vmem:[%s1 + $0x98] sm:$0xf]
  %v62 = vld [vmem:[%s1 + $0x9c] sm:$0xff]
  %v63 = vld [vmem:[%s1 + $0xa4] sm:$0xf]
  %v64 = vld [vmem:[%s1 + $0xa8] sm:$0xff]
  %v65 = vld [vmem:[%s1 + $0xb0] sm:$0xf]
  %v66 = vld [vmem:[%s1 + $0xb4] sm:$0xff]
  %v67 = vld [vmem:[%s1 + $0xbc] sm:$0xf]
  %v68 = vld [vmem:[%s1 + $0xc0] sm:$0xff]
  %v69 = vld [vmem:[%s1 + $0xc8] sm:$0xf]
  %v70 = vld [vmem:[%s1 + $0xcc] sm:$0xff]
  %v71 = vld [vmem:[%s1 + $0xd4] sm:$0xf]
  %v72 = vld [vmem:[%s1 + $0xd8] sm:$0xff]
  %v73 = vld [vmem:[%s1 + $0xe0] sm:$0xf]
  %v74 = vld [vmem:[%s1 + $0xe4] sm:$0xff]
  %v75 = vld [vmem:[%s1 + $0xec] sm:$0xf]
  %v76 = vld [vmem:[%s1 + $0xf0] sm:$0xff]
  %v77 = vld [vmem:[%s1 + $0xf8] sm:$0xf]
  %v78 = vld [vmem:[%s1 + $0xfc] sm:$0xff]
  %v79 = vld [vmem:[%s1 + $0x104] sm:$0xf]
  %v80 = vld [vmem:[%s1 + $0x108] sm:$0xff]
  %v81 = vld [vmem:[%s1 + $0x110] sm:$0xf]
  %v82 = vld [vmem:[%s1 + $0x114] sm:$0xff]
  %v83 = vld [vmem:[%s1 + $0x11c] sm:$0xf]
  %v84 = vld [vmem:[%s1 + $0x120] sm:$0xff]
  %v85 = vld [vmem:[%s1 + $0x128] sm:$0xf]
  %v86 = vld [vmem:[%s1 + $0x12c] sm:$0xff]
  %v87 = vld [vmem:[%s1 + $0x134] sm:$0xf]
  %v88 = vld [vmem:[%s1 + $0x138] sm:$0xff]
  %v89 = vld [vmem:[%s1 + $0x140] sm:$0xf]
  %v90 = vld [vmem:[%s1 + $0x144] sm:$0xff]
  %v91 = vld [vmem:[%s1 + $0x14c] sm:$0xf]
  %v92 = vld [vmem:[%s1 + $0x150] sm:$0xff]
  %v93 = vld [vmem:[%s1 + $0x158] sm:$0xf]
  %v94 = vld [vmem:[%s1 + $0x15c] sm:$0xff]
  %v95 = vld [vmem:[%s1 + $0x164] sm:$0xf]
  %v96 = vld [vmem:[%s1 + $0x168] sm:$0xff]
  %v97 = vld [vmem:[%s1 + $0x170] sm:$0xf]
  %v98 = vld [vmem:[%s1 + $0x174] sm:$0xff]
  %v99 = vld [vmem:[%s1 + $0x17c] sm:$0xf]
  %v100 = vld [vmem:[%s1 + $0x180] sm:$0xff]
  %v101 = vld [vmem:[%s1 + $0x188] sm:$0xf]
  %v102 = vld [vmem:[%s1 + $0x18c] sm:$0xff]
  %v103 = vld [vmem:[%s1 + $0x194] sm:$0xf]
  %v104 = vld [vmem:[%s1 + $0x198] sm:$0xff]
  %v105 = vld [vmem:[%s1 + $0x1a0] sm:$0xf]
  %v106 = vld [vmem:[%s1 + $0x1a4] sm:$0xff]
  %v107 = vld [vmem:[%s1 + $0x1ac] sm:$0xf]
  %v108 = vld [vmem:[%s1 + $0x1b0] sm:$0xff]
  %v109 = vld [vmem:[%s1 + $0x1b8] sm:$0xf]
  %v110 = vld [vmem:[%s1 + $0x1bc] sm:$0xff]
  %v111 = vld [vmem:[%s1 + $0x1c4] sm:$0xf]
  %v112 = vld [vmem:[%s1 + $0x1c8] sm:$0xff]
  %v113 = vld [vmem:[%s1 + $0x1d0] sm:$0xf]
  %v114 = vld [vmem:[%s1 + $0x1d4] sm:$0xff]
  %v115 = vld [vmem:[%s1 + $0x1dc] sm:$0xf]
  %v116 = vld [vmem:[%s1 + $0x1e0] sm:$0xff]
  %v117 = vld [vmem:[%s1 + $0x1e8] sm:$0xf]
  %v118 = vld [vmem:[%s1 + $0x1ec] sm:$0xff]
  %v119 = vld [vmem:[%s1 + $0x1f4] sm:$0xf]
  %v120 = vld [vmem:[%s1 + $0x1f8] sm:$0xff]
  %v121 = vld [vmem:[%s1 + $0x200] sm:$0xf]
  %v122 = vld [vmem:[%s1 + $0x204] sm:$0xff]
  %v123 = vld [vmem:[%s1 + $0x20c] sm:$0xf]
  %v124 = vld [vmem:[%s1 + $0x210] sm:$0xff]
  %v125 = vld [vmem:[%s1 + $0x218] sm:$0xf]
  %v126 = vld [vmem:[%s1 + $0x21c] sm:$0xff]
  %v127 = vld [vmem:[%s1 + $0x224] sm:$0xf]
  %v128 = vld [vmem:[%s1 + $0x228] sm:$0xff]
  %v129 = vld [vmem:[%s1 + $0x230] sm:$0xf]
  %v130 = vld [vmem:[%s1 + $0x234] sm:$0xff]
  %v131 = vld [vmem:[%s1 + $0x23c] sm:$0xf]
  %v132 = vld [vmem:[%s1 + $0x240] sm:$0xff]
  %v133 = vld [vmem:[%s1 + $0x248] sm:$0xf]
  %v134 = vld [vmem:[%s1 + $0x24c] sm:$0xff]
  %v135 = vld [vmem:[%s1 + $0x254] sm:$0xf]
  %v136 = vld [vmem:[%s1 + $0x258] sm:$0xff]
  %v137 = vld [vmem:[%s1 + $0x260] sm:$0xf]
  %v138 = vld [vmem:[%s1 + $0x264] sm:$0xff]
  %v139 = vld [vmem:[%s1 + $0x26c] sm:$0xf]
  %v140 = vld [vmem:[%s1 + $0x270] sm:$0xff]
  %v141 = vld [vmem:[%s1 + $0x278] sm:$0xf]
  %v142 = vld [vmem:[%s1 + $0x27c] sm:$0xff]
  %v143 = vld [vmem:[%s1 + $0x284] sm:$0xf]
  %v144 = vld [vmem:[%s1 + $0x288] sm:$0xff]
  %v145 = vld [vmem:[%s1 + $0x290] sm:$0xf]
  %v146 = vld [vmem:[%s1 + $0x294] sm:$0xff]
  %v147 = vld [vmem:[%s1 + $0x29c] sm:$0xf]
  %v148 = vld [vmem:[%s1 + $0x2a0] sm:$0xff]
  %v149 = vld [vmem:[%s1 + $0x2a8] sm:$0xf]
  %v150 = vld [vmem:[%s1 + $0x2ac] sm:$0xff]
  %v151 = vld [vmem:[%s1 + $0x2b4] sm:$0xf]
  %v152 = vld [vmem:[%s1 + $0x2b8] sm:$0xff]
  %v153 = vld [vmem:[%s1 + $0x2c0] sm:$0xf]
  %v154 = vld [vmem:[%s1 + $0x2c4] sm:$0xff]
  %v155 = vld [vmem:[%s1 + $0x2cc] sm:$0xf]
  %v156 = vld [vmem:[%s1 + $0x2d0] sm:$0xff]
  %v157 = vld [vmem:[%s1 + $0x2d8] sm:$0xf]
  %v158 = vld [vmem:[%s1 + $0x2dc] sm:$0xff]
  %v159 = vld [vmem:[%s1 + $0x2e4] sm:$0xf]
  %v160 = vld [vmem:[%s1 + $0x2e8] sm:$0xff]
  %v161 = vld [vmem:[%s1 + $0x2f0] sm:$0xf]
  %v162 = vld [vmem:[%s1 + $0x2f4] sm:$0xff]
  %v163 = vld [vmem:[%s1 + $0x2fc] sm:$0xf]
  %v164 = vld [vmem:[%s1 + $0x300] sm:$0xff]
  %v165 = vld [vmem:[%s1 + $0x308] sm:$0xf]
  %v166 = vld [vmem:[%s1 + $0x30c] sm:$0xff]
  %v167 = vld [vmem:[%s1 + $0x314] sm:$0xf]
  %v168 = vld [vmem:[%s1 + $0x318] sm:$0xff]
  %v169 = vld [vmem:[%s1 + $0x320] sm:$0xf]
  %v170 = vld [vmem:[%s1 + $0x324] sm:$0xff]
  %v171 = vld [vmem:[%s1 + $0x32c] sm:$0xf]
  %v172 = vld [vmem:[%s1 + $0x330] sm:$0xff]
  %v173 = vld [vmem:[%s1 + $0x338] sm:$0xf]
  %v174 = vld [vmem:[%s1 + $0x33c] sm:$0xff]
  %v175 = vld [vmem:[%s1 + $0x344] sm:$0xf]
  %v176 = vld [vmem:[%s1 + $0x348] sm:$0xff]
  %v177 = vld [vmem:[%s1 + $0x350] sm:$0xf]
  %v178 = vld [vmem:[%s1 + $0x354] sm:$0xff]
  %v179 = vld [vmem:[%s1 + $0x35c] sm:$0xf]
  %v180 = vld [vmem:[%s1 + $0x360] sm:$0xff]
  %v181 = vld [vmem:[%s1 + $0x368] sm:$0xf]
  %v182 = vld [vmem:[%s1 + $0x36c] sm:$0xff]
  %v183 = vld [vmem:[%s1 + $0x374] sm:$0xf]
  %v184 = vld [vmem:[%s1 + $0x378] sm:$0xff]
  %v185 = vld [vmem:[%s1 + $0x380] sm:$0xf]
  %v186 = vld [vmem:[%s1 + $0x384] sm:$0xff]
  %v187 = vld [vmem:[%s1 + $0x38c] sm:$0xf]
  %v188 = vld [vmem:[%s1 + $0x390] sm:$0xff]
  %v189 = vld [vmem:[%s1 + $0x398] sm:$0xf]
  %v190 = vld [vmem:[%s1 + $0x39c] sm:$0xff]
  %v191 = vld [vmem:[%s1 + $0x3a4] sm:$0xf]
  %v192 = vld [vmem:[%s1 + $0x3a8] sm:$0xff]
  %v193 = vld [vmem:[%s1 + $0x3b0] sm:$0xf]
  %v194 = vld [vmem:[%s1 + $0x3b4] sm:$0xff]
  %v195 = vld [vmem:[%s1 + $0x3bc] sm:$0xf]
  %v196 = vld [vmem:[%s1 + $0x3c0] sm:$0xff]
  %v197 = vld [vmem:[%s1 + $0x3c8] sm:$0xf]
  %v198 = vld [vmem:[%s1 + $0x3cc] sm:$0xff]
  %v199 = vld [vmem:[%s1 + $0x3d4] sm:$0xf]
  %v200 = vld [vmem:[%s1 + $0x3d8] sm:$0xff]
  %v201 = vld [vmem:[%s1 + $0x3e0] sm:$0xf]
  %v202 = vld [vmem:[%s1 + $0x3e4] sm:$0xff]
  %v203 = vld [vmem:[%s1 + $0x3ec] sm:$0xf]
  %v204 = vld [vmem:[%s1 + $0x3f0] sm:$0xff]
  %v205 = vld [vmem:[%s1 + $0x3f8] sm:$0xf]
  %v206 = vld [vmem:[%s1 + $0x3fc] sm:$0xff]
  %v207 = vld [vmem:[%s1 + $0x404] sm:$0xf]
  %v208 = vld [vmem:[%s1 + $0x408] sm:$0xff]
  %v209 = vld [vmem:[%s1 + $0x410] sm:$0xf]
  %v210 = vld [vmem:[%s1 + $0x414] sm:$0xff]
  %v211 = vld [vmem:[%s1 + $0x41c] sm:$0xf]
  %v212 = vld [vmem:[%s1 + $0x420] sm:$0xff]
  %v213 = vld [vmem:[%s1 + $0x428] sm:$0xf]
  %v214 = vld [vmem:[%s1 + $0x42c] sm:$0xff]
  %v215 = vld [vmem:[%s1 + $0x434] sm:$0xf]
  %v216 = vld [vmem:[%s1 + $0x438] sm:$0xff]
  %v217 = vld [vmem:[%s1 + $0x440] sm:$0xf]
  %v218 = vld [vmem:[%s1 + $0x444] sm:$0xff]
  %v219 = vld [vmem:[%s1 + $0x44c] sm:$0xf]
  %v220 = vld [vmem:[%s1 + $0x450] sm:$0xff]
  %v221 = vld [vmem:[%s1 + $0x458] sm:$0xf]
  %v222 = vld [vmem:[%s1 + $0x45c] sm:$0xff]
  %v223 = vld [vmem:[%s1 + $0x464] sm:$0xf]
  %v224 = vld [vmem:[%s1 + $0x468] sm:$0xff]
  %v225 = vld [vmem:[%s1 + $0x470] sm:$0xf]
  %v226 = vld [vmem:[%s1 + $0x474] sm:$0xff]
  %v227 = vld [vmem:[%s1 + $0x47c] sm:$0xf]
  %v228 = vld [vmem:[%s1 + $0x480] sm:$0xff]
  %v229 = vld [vmem:[%s1 + $0x488] sm:$0xf]
  %v230 = vld [vmem:[%s1 + $0x48c] sm:$0xff]
  %v231 = vld [vmem:[%s1 + $0x494] sm:$0xf]
  %v232 = vld [vmem:[%s1 + $0x498] sm:$0xff]
  %v233 = vld [vmem:[%s1 + $0x4a0] sm:$0xf]
  %v234 = vld [vmem:[%s1 + $0x4a4] sm:$0xff]
  %v235 = vld [vmem:[%s1 + $0x4ac] sm:$0xf]
  %v236 = vld [vmem:[%s1 + $0x4b0] sm:$0xff]
  %v237 = vld [vmem:[%s1 + $0x4b8] sm:$0xf]
  %v238 = vld [vmem:[%s1 + $0x4bc] sm:$0xff]
  %v239 = vld [vmem:[%s1 + $0x4c4] sm:$0xf]
  %v240 = vld [vmem:[%s1 + $0x4c8] sm:$0xff]
  %v241 = vld [vmem:[%s1 + $0x4d0] sm:$0xf]
  %v242 = vld [vmem:[%s1 + $0x4d4] sm:$0xff]
  %v243 = vld [vmem:[%s1 + $0x4dc] sm:$0xf]
  %v244 = vld [vmem:[%s1 + $0x4e0] sm:$0xff]
  %v245 = vld [vmem:[%s1 + $0x4e8] sm:$0xf]
  %v246 = vld [vmem:[%s1 + $0x4ec] sm:$0xff]
  %v247 = vld [vmem:[%s1 + $0x4f4] sm:$0xf]
  %v248 = vld [vmem:[%s1 + $0x4f8] sm:$0xff]
  %v249 = vld [vmem:[%s1 + $0x500] sm:$0xf]
  %v250 = vld [vmem:[%s1 + $0x504] sm:$0xff]
  %v251 = vld [vmem:[%s1 + $0x50c] sm:$0xf]
  %v252 = vld [vmem:[%s1 + $0x510] sm:$0xff]
  %v253 = vld [vmem:[%s1 + $0x518] sm:$0xf]
  %v254 = vld [vmem:[%s1 + $0x51c] sm:$0xff]
  %v255 = vld [vmem:[%s1 + $0x524] sm:$0xf]
  %v256 = vld [vmem:[%s1 + $0x528] sm:$0xff]
  %v257 = vld [vmem:[%s1 + $0x530] sm:$0xf]
  %v258 = vld [vmem:[%s1 + $0x534] sm:$0xff]
  %v259 = vld [vmem:[%s1 + $0x53c] sm:$0xf]
  %v260 = vld [vmem:[%s1 + $0x540] sm:$0xff]
  %v261 = vld [vmem:[%s1 + $0x548] sm:$0xf]
  %v262 = vld [vmem:[%s1 + $0x54c] sm:$0xff]
  %v263 = vld [vmem:[%s1 + $0x554] sm:$0xf]
  %v264 = vld [vmem:[%s1 + $0x558] sm:$0xff]
  %v265 = vld [vmem:[%s1 + $0x560] sm:$0xf]
  %v266 = vld [vmem:[%s1 + $0x564] sm:$0xff]
  %v267 = vld [vmem:[%s1 + $0x56c] sm:$0xf]
  %v268 = vld [vmem:[%s1 + $0x570] sm:$0xff]
  %v269 = vld [vmem:[%s1 + $0x578] sm:$0xf]
  %v270 = vld [vmem:[%s1 + $0x57c] sm:$0xff]
  %v271 = vld [vmem:[%s1 + $0x584] sm:$0xf]
  %v272 = vld [vmem:[%s1 + $0x588] sm:$0xff]
  %v273 = vld [vmem:[%s1 + $0x590] sm:$0xf]
  %v274 = vld [vmem:[%s1 + $0x594] sm:$0xff]
  %v275 = vld [vmem:[%s1 + $0x59c] sm:$0xf]
  %v276 = vld [vmem:[%s1 + $0x5a0] sm:$0xff]
  %v277 = vld [vmem:[%s1 + $0x5a8] sm:$0xf]
  %v278 = vld [vmem:[%s1 + $0x5ac] sm:$0xff]
  %v279 = vld [vmem:[%s1 + $0x5b4] sm:$0xf]
  %v280 = vld [vmem:[%s1 + $0x5b8] sm:$0xff]
  %v281 = vld [vmem:[%s1 + $0x5c0] sm:$0xf]
  %v282 = vld [vmem:[%s1 + $0x5c4] sm:$0xff]
  %v283 = vld [vmem:[%s1 + $0x5cc] sm:$0xf]
  %v284 = vld [vmem:[%s1 + $0x5d0] sm:$0xff]
  %v285 = vld [vmem:[%s1 + $0x5d8] sm:$0xf]
  %v286 = vld [vmem:[%s1 + $0x5dc] sm:$0xff]
  %v287 = vld [vmem:[%s1 + $0x5e4] sm:$0xf]
  %v288 = vld [vmem:[%s1 + $0x5e8] sm:$0xff]
  %v289 = vld [vmem:[%s1 + $0x5f0] sm:$0xf]
  %v290 = vld [vmem:[%s1 + $0x5f4] sm:$0xff]
  %v291 = vld [vmem:[%s1 + $0x5fc] sm:$0xf]
  %v292 = vld [vmem:[%s1 + $0x600] sm:$0xff]
  %v293 = vld [vmem:[%s1 + $0x608] sm:$0xf]
  %v294 = vld [vmem:[%s1 + $0x60c] sm:$0xff]
  %v295 = vld [vmem:[%s1 + $0x614] sm:$0xf]
  %v296 = vld [vmem:[%s1 + $0x618] sm:$0xff]
  %v297 = vld [vmem:[%s1 + $0x620] sm:$0xf]
  %v298 = vld [vmem:[%s1 + $0x624] sm:$0xff]
  %v299 = vld [vmem:[%s1 + $0x62c] sm:$0xf]
  %v300 = vld [vmem:[%s1 + $0x630] sm:$0xff]
  %v301 = vld [vmem:[%s1 + $0x638] sm:$0xf]
  %v302 = vld [vmem:[%s1 + $0x63c] sm:$0xff]
  %v303 = vld [vmem:[%s1 + $0x644] sm:$0xf]
  %v304 = vld [vmem:[%s1 + $0x648] sm:$0xff]
  %v305 = vld [vmem:[%s1 + $0x650] sm:$0xf]
  %v306 = vld [vmem:[%s1 + $0x654] sm:$0xff]
  %v307 = vld [vmem:[%s1 + $0x65c] sm:$0xf]
  %v308 = vld [vmem:[%s1 + $0x660] sm:$0xff]
  %v309 = vld [vmem:[%s1 + $0x668] sm:$0xf]
  %v310 = vld [vmem:[%s1 + $0x66c] sm:$0xff]
  %v311 = vld [vmem:[%s1 + $0x674] sm:$0xf]
  %v312 = vld [vmem:[%s1 + $0x678] sm:$0xff]
  %v313 = vld [vmem:[%s1 + $0x680] sm:$0xf]
  %v314 = vld [vmem:[%s1 + $0x684] sm:$0xff]
  %v315 = vld [vmem:[%s1 + $0x68c] sm:$0xf]
  %v316 = vld [vmem:[%s1 + $0x690] sm:$0xff]
  %v317 = vld [vmem:[%s1 + $0x698] sm:$0xf]
  %v318 = vld [vmem:[%s1 + $0x69c] sm:$0xff]
  %v319 = vld [vmem:[%s1 + $0x6a4] sm:$0xf]
  %v320 = vld [vmem:[%s1 + $0x6a8] sm:$0xff]
  %v321 = vld [vmem:[%s1 + $0x6b0] sm:$0xf]
  %v322 = vld [vmem:[%s1 + $0x6b4] sm:$0xff]
  %v323 = vld [vmem:[%s1 + $0x6bc] sm:$0xf]
  %v324 = vld [vmem:[%s1 + $0x6c0] sm:$0xff]
  %v325 = vld [vmem:[%s1 + $0x6c8] sm:$0xf]
  %v326 = vld [vmem:[%s1 + $0x6cc] sm:$0xff]
  %v327 = vld [vmem:[%s1 + $0x6d4] sm:$0xf]
  %v328 = vld [vmem:[%s1 + $0x6d8] sm:$0xff]
  %v329 = vld [vmem:[%s1 + $0x6e0] sm:$0xf]
  %v330 = vld [vmem:[%s1 + $0x6e4] sm:$0xff]
  %v331 = vld [vmem:[%s1 + $0x6ec] sm:$0xf]
  %v332 = vld [vmem:[%s1 + $0x6f0] sm:$0xff]
  %v333 = vld [vmem:[%s1 + $0x6f8] sm:$0xf]
  %v334 = vld [vmem:[%s1 + $0x6fc] sm:$0xff]
  %v335 = vld [vmem:[%s1 + $0x704] sm:$0xf]
  %v336 = vld [vmem:[%s1 + $0x708] sm:$0xff]
  %v337 = vld [vmem:[%s1 + $0x710] sm:$0xf]
  %v338 = vld [vmem:[%s1 + $0x714] sm:$0xff]
  %v339 = vld [vmem:[%s1 + $0x71c] sm:$0xf]
  %v340 = vld [vmem:[%s1 + $0x720] sm:$0xff]
  %v341 = vld [vmem:[%s1 + $0x728] sm:$0xf]
  %v342 = vld [vmem:[%s1 + $0x72c] sm:$0xff]
  %v343 = vld [vmem:[%s1 + $0x734] sm:$0xf]
  %v344 = vld [vmem:[%s1 + $0x738] sm:$0xff]
  %v345 = vld [vmem:[%s1 + $0x740] sm:$0xf]
  %v346 = vld [vmem:[%s1 + $0x744] sm:$0xff]
  %v347 = vld [vmem:[%s1 + $0x74c] sm:$0xf]
  %v348 = vld [vmem:[%s1 + $0x750] sm:$0xff]
  %v349 = vld [vmem:[%s1 + $0x758] sm:$0xf]
  %v350 = vld [vmem:[%s1 + $0x75c] sm:$0xff]
  %v351 = vld [vmem:[%s1 + $0x764] sm:$0xf]
  %v352 = vld [vmem:[%s1 + $0x768] sm:$0xff]
  %v353 = vld [vmem:[%s1 + $0x770] sm:$0xf]
  %v354 = vld [vmem:[%s1 + $0x774] sm:$0xff]
  %v355 = vld [vmem:[%s1 + $0x77c] sm:$0xf]
  %v356 = vld [vmem:[%s1 + $0x780] sm:$0xff]
  %v357 = vld [vmem:[%s1 + $0x788] sm:$0xf]
  %v358 = vld [vmem:[%s1 + $0x78c] sm:$0xff]
  %v359 = vld [vmem:[%s1 + $0x794] sm:$0xf]
  %v360 = vld [vmem:[%s1 + $0x798] sm:$0xff]
  %v361 = vld [vmem:[%s1 + $0x7a0] sm:$0xf]
  %v362 = vld [vmem:[%s1 + $0x7a4] sm:$0xff]
  %v363 = vld [vmem:[%s1 + $0x7ac] sm:$0xf]
  %v364 = vld [vmem:[%s1 + $0x7b0] sm:$0xff]
  %v365 = vld [vmem:[%s1 + $0x7b8] sm:$0xf]
  %v366 = vld [vmem:[%s1 + $0x7bc] sm:$0xff]
  %v367 = vld [vmem:[%s1 + $0x7c4] sm:$0xf]
  %v368 = vld [vmem:[%s1 + $0x7c8] sm:$0xff]
  %v369 = vld [vmem:[%s1 + $0x7d0] sm:$0xf]
  %v370 = vld [vmem:[%s1 + $0x7d4] sm:$0xff]
  %v371 = vld [vmem:[%s1 + $0x7dc] sm:$0xf]
  %v372 = vld [vmem:[%s1 + $0x7e0] sm:$0xff]
  %v373 = vld [vmem:[%s1 + $0x7e8] sm:$0xf]
  %v374 = vld [vmem:[%s1 + $0x7ec] sm:$0xff]
  %v375 = vld [vmem:[%s1 + $0x7f4] sm:$0xf]
  %v376 = vld [vmem:[%s1 + $0x7f8] sm:$0xff]
  %v377 = vld [vmem:[%s1 + $0x800] sm:$0xf]
  %v378 = vld [vmem:[%s1 + $0x804] sm:$0xff]
  %v379 = vld [vmem:[%s1 + $0x80c] sm:$0xf]
  %v380 = vld [vmem:[%s1 + $0x810] sm:$0xff]
  %v381 = vld [vmem:[%s1 + $0x818] sm:$0xf]
  %v382 = vld [vmem:[%s1 + $0x81c] sm:$0xff]
  %v383 = vld [vmem:[%s1 + $0x824] sm:$0xf]
  %v384 = vld [vmem:[%s1 + $0x828] sm:$0xff]
  %v385 = vld [vmem:[%s1 + $0x830] sm:$0xf]
  %v386 = vld [vmem:[%s1 + $0x834] sm:$0xff]
  %v387 = vld [vmem:[%s1 + $0x83c] sm:$0xf]
  %v388 = vld [vmem:[%s1 + $0x840] sm:$0xff]
  %v389 = vld [vmem:[%s1 + $0x848] sm:$0xf]
  %v390 = vld [vmem:[%s1 + $0x84c] sm:$0xff]
  %v391 = vld [vmem:[%s1 + $0x854] sm:$0xf]
  %v392 = vld [vmem:[%s1 + $0x858] sm:$0xff]
  %v393 = vld [vmem:[%s1 + $0x860] sm:$0xf]
  %v394 = vld [vmem:[%s1 + $0x864] sm:$0xff]
  %v395 = vld [vmem:[%s1 + $0x86c] sm:$0xf]
  %v396 = vld [vmem:[%s1 + $0x870] sm:$0xff]
  %v397 = vld [vmem:[%s1 + $0x878] sm:$0xf]
  %v398 = vld [vmem:[%s1 + $0x87c] sm:$0xff]
  %v399 = vld [vmem:[%s1 + $0x884] sm:$0xf]
  %v400 = vld [vmem:[%s1 + $0x888] sm:$0xff]
  %v401 = vld [vmem:[%s1 + $0x890] sm:$0xf]
  %v402 = vld [vmem:[%s1 + $0x894] sm:$0xff]
  %v403 = vld [vmem:[%s1 + $0x89c] sm:$0xf]
  %v404 = vld [vmem:[%s1 + $0x8a0] sm:$0xff]
  %v405 = vld [vmem:[%s1 + $0x8a8] sm:$0xf]
  %v406 = vld [vmem:[%s1 + $0x8ac] sm:$0xff]
  %v407 = vld [vmem:[%s1 + $0x8b4] sm:$0xf]
  %v408 = vld [vmem:[%s1 + $0x8b8] sm:$0xff]
  %v409 = vld [vmem:[%s1 + $0x8c0] sm:$0xf]
  %v410 = vld [vmem:[%s1 + $0x8c4] sm:$0xff]
  %v411 = vld [vmem:[%s1 + $0x8cc] sm:$0xf]
  %v412 = vld [vmem:[%s1 + $0x8d0] sm:$0xff]
  %v413 = vld [vmem:[%s1 + $0x8d8] sm:$0xf]
  %v414 = vld [vmem:[%s1 + $0x8dc] sm:$0xff]
  %v415 = vld [vmem:[%s1 + $0x8e4] sm:$0xf]
  %v416 = vld [vmem:[%s1 + $0x8e8] sm:$0xff]
  %v417 = vld [vmem:[%s1 + $0x8f0] sm:$0xf]
  %v418 = vld [vmem:[%s1 + $0x8f4] sm:$0xff]
  %v419 = vld [vmem:[%s1 + $0x8fc] sm:$0xf]
  %v420 = vld [vmem:[%s1 + $0x900] sm:$0xff]
  %v421 = vld [vmem:[%s1 + $0x908] sm:$0xf]
  %v422 = vld [vmem:[%s1 + $0x90c] sm:$0xff]
  %v423 = vld [vmem:[%s1 + $0x914] sm:$0xf]
  %v424 = vld [vmem:[%s1 + $0x918] sm:$0xff]
  %v425 = vld [vmem:[%s1 + $0x920] sm:$0xf]
  %v426 = vld [vmem:[%s1 + $0x924] sm:$0xff]
  %v427 = vld [vmem:[%s1 + $0x92c] sm:$0xf]
  %v428 = vld [vmem:[%s1 + $0x930] sm:$0xff]
  %v429 = vld [vmem:[%s1 + $0x938] sm:$0xf]
  %v430 = vld [vmem:[%s1 + $0x93c] sm:$0xff]
  %v431 = vld [vmem:[%s1 + $0x944] sm:$0xf]
  %v432 = vld [vmem:[%s1 + $0x948] sm:$0xff]
  %v433 = vld [vmem:[%s1 + $0x950] sm:$0xf]
  %v434 = vld [vmem:[%s1 + $0x954] sm:$0xff]
  %v435 = vld [vmem:[%s1 + $0x95c] sm:$0xf]
  %v436 = vld [vmem:[%s2] sm:$0x7]
  %v438 = vperm.slane %v436, 0
  %v439 = vperm.slane %v436, 1
  %v440 = vperm.slane %v436, 2
  %v451 = vunpack.c.l.b16 %v29
  %v452 = vunpack.c.h.b16 %v29
  %v453 = vunpack.c.l.b16 %v30
  %v454 = vunpack.c.h.b16 %v30
  %v455 = vunpack.c.l.b16 %v31
  %v456 = vunpack.c.h.b16 %v31
  %v457 = vunpack.c.l.b16 %v32
  %v458 = vunpack.c.h.b16 %v32
  %v459 = vunpack.c.l.b16 %v33
  %v460 = vunpack.c.h.b16 %v33
  %v461 = vunpack.c.l.b16 %v34
  %v462 = vunpack.c.h.b16 %v34
  %v463 = vunpack.c.l.b16 %v35
  %v464 = vpack.c.b16 %v451, %v451
  %v465 = vpack.c.b16 %v452, %v452
  %v466 = vpack.c.b16 %v453, %v453
  %v467 = vpack.c.b16 %v454, %v454
  %v468 = vpack.c.b16 %v455, %v455
  %v469 = vpack.c.b16 %v456, %v456
  %v470 = vpack.c.b16 %v457, %v457
  %v471 = vpack.c.b16 %v458, %v458
  %v472 = vpack.c.b16 %v459, %v459
  %v473 = vpack.c.b16 %v460, %v460
  %v474 = vpack.c.b16 %v461, %v461
  %v475 = vpack.c.b16 %v462, %v462
  %v476 = vpack.c.b16 %v463, %v463
  %v889 = vunpack.c.l.b16 %v36
  %v890 = vunpack.c.h.b16 %v36
  %v891 = vunpack.c.l.b16 %v37
  %v892 = vunpack.c.l.b16 %v38
  %v893 = vunpack.c.h.b16 %v38
  %v894 = vunpack.c.l.b16 %v39
  %v895 = vunpack.c.l.b16 %v40
  %v896 = vunpack.c.h.b16 %v40
  %v897 = vunpack.c.l.b16 %v41
  %v898 = vunpack.c.l.b16 %v42
  %v899 = vunpack.c.h.b16 %v42
  %v900 = vunpack.c.l.b16 %v43
  %v901 = vunpack.c.l.b16 %v44
  %v902 = vunpack.c.h.b16 %v44
  %v903 = vunpack.c.l.b16 %v45
  %v904 = vunpack.c.l.b16 %v46
  %v905 = vunpack.c.h.b16 %v46
  %v906 = vunpack.c.l.b16 %v47
  %v907 = vunpack.c.l.b16 %v48
  %v908 = vunpack.c.h.b16 %v48
  %v909 = vunpack.c.l.b16 %v49
  %v910 = vunpack.c.l.b16 %v50
  %v911 = vunpack.c.h.b16 %v50
  %v912 = vunpack.c.l.b16 %v51
  %v913 = vunpack.c.l.b16 %v52
  %v914 = vunpack.c.h.b16 %v52
  %v915 = vunpack.c.l.b16 %v53
  %v916 = vunpack.c.l.b16 %v54
  %v917 = vunpack.c.h.b16 %v54
  %v918 = vunpack.c.l.b16 %v55
  %v919 = vunpack.c.l.b16 %v56
  %v920 = vunpack.c.h.b16 %v56
  %v921 = vunpack.c.l.b16 %v57
  %v922 = vunpack.c.l.b16 %v58
  %v923 = vunpack.c.h.b16 %v58
  %v924 = vunpack.c.l.b16 %v59
  %v925 = vunpack.c.l.b16 %v60
  %v926 = vunpack.c.h.b16 %v60
  %v927 = vunpack.c.l.b16 %v61
  %v928 = vunpack.c.l.b16 %v62
  %v929 = vunpack.c.h.b16 %v62
  %v930 = vunpack.c.l.b16 %v63
  %v931 = vunpack.c.l.b16 %v64
  %v932 = vunpack.c.h.b16 %v64
  %v933 = vunpack.c.l.b16 %v65
  %v934 = vunpack.c.l.b16 %v66
  %v935 = vunpack.c.h.b16 %v66
  %v936 = vunpack.c.l.b16 %v67
  %v937 = vunpack.c.l.b16 %v68
  %v938 = vunpack.c.h.b16 %v68
  %v939 = vunpack.c.l.b16 %v69
  %v940 = vunpack.c.l.b16 %v70
  %v941 = vunpack.c.h.b16 %v70
  %v942 = vunpack.c.l.b16 %v71
  %v943 = vunpack.c.l.b16 %v72
  %v944 = vunpack.c.h.b16 %v72
  %v945 = vunpack.c.l.b16 %v73
  %v946 = vunpack.c.l.b16 %v74
  %v947 = vunpack.c.h.b16 %v74
  %v948 = vunpack.c.l.b16 %v75
  %v949 = vunpack.c.l.b16 %v76
  %v950 = vunpack.c.h.b16 %v76
  %v951 = vunpack.c.l.b16 %v77
  %v952 = vunpack.c.l.b16 %v78
  %v953 = vunpack.c.h.b16 %v78
  %v954 = vunpack.c.l.b16 %v79
  %v955 = vunpack.c.l.b16 %v80
  %v956 = vunpack.c.h.b16 %v80
  %v957 = vunpack.c.l.b16 %v81
  %v958 = vunpack.c.l.b16 %v82
  %v959 = vunpack.c.h.b16 %v82
  %v960 = vunpack.c.l.b16 %v83
  %v961 = vunpack.c.l.b16 %v84
  %v962 = vunpack.c.h.b16 %v84
  %v963 = vunpack.c.l.b16 %v85
  %v964 = vunpack.c.l.b16 %v86
  %v965 = vunpack.c.h.b16 %v86
  %v966 = vunpack.c.l.b16 %v87
  %v967 = vunpack.c.l.b16 %v88
  %v968 = vunpack.c.h.b16 %v88
  %v969 = vunpack.c.l.b16 %v89
  %v970 = vunpack.c.l.b16 %v90
  %v971 = vunpack.c.h.b16 %v90
  %v972 = vunpack.c.l.b16 %v91
  %v973 = vunpack.c.l.b16 %v92
  %v974 = vunpack.c.h.b16 %v92
  %v975 = vunpack.c.l.b16 %v93
  %v976 = vunpack.c.l.b16 %v94
  %v977 = vunpack.c.h.b16 %v94
  %v978 = vunpack.c.l.b16 %v95
  %v979 = vunpack.c.l.b16 %v96
  %v980 = vunpack.c.h.b16 %v96
  %v981 = vunpack.c.l.b16 %v97
  %v982 = vunpack.c.l.b16 %v98
  %v983 = vunpack.c.h.b16 %v98
  %v984 = vunpack.c.l.b16 %v99
  %v985 = vunpack.c.l.b16 %v100
  %v986 = vunpack.c.h.b16 %v100
  %v987 = vunpack.c.l.b16 %v101
  %v988 = vunpack.c.l.b16 %v102
  %v989 = vunpack.c.h.b16 %v102
  %v990 = vunpack.c.l.b16 %v103
  %v991 = vunpack.c.l.b16 %v104
  %v992 = vunpack.c.h.b16 %v104
  %v993 = vunpack.c.l.b16 %v105
  %v994 = vunpack.c.l.b16 %v106
  %v995 = vunpack.c.h.b16 %v106
  %v996 = vunpack.c.l.b16 %v107
  %v997 = vunpack.c.l.b16 %v108
  %v998 = vunpack.c.h.b16 %v108
  %v999 = vunpack.c.l.b16 %v109
  %v1000 = vunpack.c.l.b16 %v110
  %v1001 = vunpack.c.h.b16 %v110
  %v1002 = vunpack.c.l.b16 %v111
  %v1003 = vunpack.c.l.b16 %v112
  %v1004 = vunpack.c.h.b16 %v112
  %v1005 = vunpack.c.l.b16 %v113
  %v1006 = vunpack.c.l.b16 %v114
  %v1007 = vunpack.c.h.b16 %v114
  %v1008 = vunpack.c.l.b16 %v115
  %v1009 = vunpack.c.l.b16 %v116
  %v1010 = vunpack.c.h.b16 %v116
  %v1011 = vunpack.c.l.b16 %v117
  %v1012 = vunpack.c.l.b16 %v118
  %v1013 = vunpack.c.h.b16 %v118
  %v1014 = vunpack.c.l.b16 %v119
  %v1015 = vunpack.c.l.b16 %v120
  %v1016 = vunpack.c.h.b16 %v120
  %v1017 = vunpack.c.l.b16 %v121
  %v1018 = vunpack.c.l.b16 %v122
  %v1019 = vunpack.c.h.b16 %v122
  %v1020 = vunpack.c.l.b16 %v123
  %v1021 = vunpack.c.l.b16 %v124
  %v1022 = vunpack.c.h.b16 %v124
  %v1023 = vunpack.c.l.b16 %v125
  %v1024 = vunpack.c.l.b16 %v126
  %v1025 = vunpack.c.h.b16 %v126
  %v1026 = vunpack.c.l.b16 %v127
  %v1027 = vunpack.c.l.b16 %v128
  %v1028 = vunpack.c.h.b16 %v128
  %v1029 = vunpack.c.l.b16 %v129
  %v1030 = vunpack.c.l.b16 %v130
  %v1031 = vunpack.c.h.b16 %v130
  %v1032 = vunpack.c.l.b16 %v131
  %v1033 = vunpack.c.l.b16 %v132
  %v1034 = vunpack.c.h.b16 %v132
  %v1035 = vunpack.c.l.b16 %v133
  %v1036 = vunpack.c.l.b16 %v134
  %v1037 = vunpack.c.h.b16 %v134
  %v1038 = vunpack.c.l.b16 %v135
  %v1039 = vunpack.c.l.b16 %v136
  %v1040 = vunpack.c.h.b16 %v136
  %v1041 = vunpack.c.l.b16 %v137
  %v1042 = vunpack.c.l.b16 %v138
  %v1043 = vunpack.c.h.b16 %v138
  %v1044 = vunpack.c.l.b16 %v139
  %v1045 = vunpack.c.l.b16 %v140
  %v1046 = vunpack.c.h.b16 %v140
  %v1047 = vunpack.c.l.b16 %v141
  %v1048 = vunpack.c.l.b16 %v142
  %v1049 = vunpack.c.h.b16 %v142
  %v1050 = vunpack.c.l.b16 %v143
  %v1051 = vunpack.c.l.b16 %v144
  %v1052 = vunpack.c.h.b16 %v144
  %v1053 = vunpack.c.l.b16 %v145
  %v1054 = vunpack.c.l.b16 %v146
  %v1055 = vunpack.c.h.b16 %v146
  %v1056 = vunpack.c.l.b16 %v147
  %v1057 = vunpack.c.l.b16 %v148
  %v1058 = vunpack.c.h.b16 %v148
  %v1059 = vunpack.c.l.b16 %v149
  %v1060 = vunpack.c.l.b16 %v150
  %v1061 = vunpack.c.h.b16 %v150
  %v1062 = vunpack.c.l.b16 %v151
  %v1063 = vunpack.c.l.b16 %v152
  %v1064 = vunpack.c.h.b16 %v152
  %v1065 = vunpack.c.l.b16 %v153
  %v1066 = vunpack.c.l.b16 %v154
  %v1067 = vunpack.c.h.b16 %v154
  %v1068 = vunpack.c.l.b16 %v155
  %v1069 = vunpack.c.l.b16 %v156
  %v1070 = vunpack.c.h.b16 %v156
  %v1071 = vunpack.c.l.b16 %v157
  %v1072 = vunpack.c.l.b16 %v158
  %v1073 = vunpack.c.h.b16 %v158
  %v1074 = vunpack.c.l.b16 %v159
  %v1075 = vunpack.c.l.b16 %v160
  %v1076 = vunpack.c.h.b16 %v160
  %v1077 = vunpack.c.l.b16 %v161
  %v1078 = vunpack.c.l.b16 %v162
  %v1079 = vunpack.c.h.b16 %v162
  %v1080 = vunpack.c.l.b16 %v163
  %v1081 = vunpack.c.l.b16 %v164
  %v1082 = vunpack.c.h.b16 %v164
  %v1083 = vunpack.c.l.b16 %v165
  %v1084 = vunpack.c.l.b16 %v166
  %v1085 = vunpack.c.h.b16 %v166
  %v1086 = vunpack.c.l.b16 %v167
  %v1087 = vunpack.c.l.b16 %v168
  %v1088 = vunpack.c.h.b16 %v168
  %v1089 = vunpack.c.l.b16 %v169
  %v1090 = vunpack.c.l.b16 %v170
  %v1091 = vunpack.c.h.b16 %v170
  %v1092 = vunpack.c.l.b16 %v171
  %v1093 = vunpack.c.l.b16 %v172
  %v1094 = vunpack.c.h.b16 %v172
  %v1095 = vunpack.c.l.b16 %v173
  %v1096 = vunpack.c.l.b16 %v174
  %v1097 = vunpack.c.h.b16 %v174
  %v1098 = vunpack.c.l.b16 %v175
  %v1099 = vunpack.c.l.b16 %v176
  %v1100 = vunpack.c.h.b16 %v176
  %v1101 = vunpack.c.l.b16 %v177
  %v1102 = vunpack.c.l.b16 %v178
  %v1103 = vunpack.c.h.b16 %v178
  %v1104 = vunpack.c.l.b16 %v179
  %v1105 = vunpack.c.l.b16 %v180
  %v1106 = vunpack.c.h.b16 %v180
  %v1107 = vunpack.c.l.b16 %v181
  %v1108 = vunpack.c.l.b16 %v182
  %v1109 = vunpack.c.h.b16 %v182
  %v1110 = vunpack.c.l.b16 %v183
  %v1111 = vunpack.c.l.b16 %v184
  %v1112 = vunpack.c.h.b16 %v184
  %v1113 = vunpack.c.l.b16 %v185
  %v1114 = vunpack.c.l.b16 %v186
  %v1115 = vunpack.c.h.b16 %v186
  %v1116 = vunpack.c.l.b16 %v187
  %v1117 = vunpack.c.l.b16 %v188
  %v1118 = vunpack.c.h.b16 %v188
  %v1119 = vunpack.c.l.b16 %v189
  %v1120 = vunpack.c.l.b16 %v190
  %v1121 = vunpack.c.h.b16 %v190
  %v1122 = vunpack.c.l.b16 %v191
  %v1123 = vunpack.c.l.b16 %v192
  %v1124 = vunpack.c.h.b16 %v192
  %v1125 = vunpack.c.l.b16 %v193
  %v1126 = vunpack.c.l.b16 %v194
  %v1127 = vunpack.c.h.b16 %v194
  %v1128 = vunpack.c.l.b16 %v195
  %v1129 = vunpack.c.l.b16 %v196
  %v1130 = vunpack.c.h.b16 %v196
  %v1131 = vunpack.c.l.b16 %v197
  %v1132 = vunpack.c.l.b16 %v198
  %v1133 = vunpack.c.h.b16 %v198
  %v1134 = vunpack.c.l.b16 %v199
  %v1135 = vunpack.c.l.b16 %v200
  %v1136 = vunpack.c.h.b16 %v200
  %v1137 = vunpack.c.l.b16 %v201
  %v1138 = vunpack.c.l.b16 %v202
  %v1139 = vunpack.c.h.b16 %v202
  %v1140 = vunpack.c.l.b16 %v203
  %v1141 = vunpack.c.l.b16 %v204
  %v1142 = vunpack.c.h.b16 %v204
  %v1143 = vunpack.c.l.b16 %v205
  %v1144 = vunpack.c.l.b16 %v206
  %v1145 = vunpack.c.h.b16 %v206
  %v1146 = vunpack.c.l.b16 %v207
  %v1147 = vunpack.c.l.b16 %v208
  %v1148 = vunpack.c.h.b16 %v208
  %v1149 = vunpack.c.l.b16 %v209
  %v1150 = vunpack.c.l.b16 %v210
  %v1151 = vunpack.c.h.b16 %v210
  %v1152 = vunpack.c.l.b16 %v211
  %v1153 = vunpack.c.l.b16 %v212
  %v1154 = vunpack.c.h.b16 %v212
  %v1155 = vunpack.c.l.b16 %v213
  %v1156 = vunpack.c.l.b16 %v214
  %v1157 = vunpack.c.h.b16 %v214
  %v1158 = vunpack.c.l.b16 %v215
  %v1159 = vunpack.c.l.b16 %v216
  %v1160 = vunpack.c.h.b16 %v216
  %v1161 = vunpack.c.l.b16 %v217
  %v1162 = vunpack.c.l.b16 %v218
  %v1163 = vunpack.c.h.b16 %v218
  %v1164 = vunpack.c.l.b16 %v219
  %v1165 = vunpack.c.l.b16 %v220
  %v1166 = vunpack.c.h.b16 %v220
  %v1167 = vunpack.c.l.b16 %v221
  %v1168 = vunpack.c.l.b16 %v222
  %v1169 = vunpack.c.h.b16 %v222
  %v1170 = vunpack.c.l.b16 %v223
  %v1171 = vunpack.c.l.b16 %v224
  %v1172 = vunpack.c.h.b16 %v224
  %v1173 = vunpack.c.l.b16 %v225
  %v1174 = vunpack.c.l.b16 %v226
  %v1175 = vunpack.c.h.b16 %v226
  %v1176 = vunpack.c.l.b16 %v227
  %v1177 = vunpack.c.l.b16 %v228
  %v1178 = vunpack.c.h.b16 %v228
  %v1179 = vunpack.c.l.b16 %v229
  %v1180 = vunpack.c.l.b16 %v230
  %v1181 = vunpack.c.h.b16 %v230
  %v1182 = vunpack.c.l.b16 %v231
  %v1183 = vunpack.c.l.b16 %v232
  %v1184 = vunpack.c.h.b16 %v232
  %v1185 = vunpack.c.l.b16 %v233
  %v1186 = vunpack.c.l.b16 %v234
  %v1187 = vunpack.c.h.b16 %v234
  %v1188 = vunpack.c.l.b16 %v235
  %v1189 = vunpack.c.l.b16 %v236
  %v1190 = vunpack.c.h.b16 %v236
  %v1191 = vunpack.c.l.b16 %v237
  %v1192 = vunpack.c.l.b16 %v238
  %v1193 = vunpack.c.h.b16 %v238
  %v1194 = vunpack.c.l.b16 %v239
  %v1195 = vunpack.c.l.b16 %v240
  %v1196 = vunpack.c.h.b16 %v240
  %v1197 = vunpack.c.l.b16 %v241
  %v1198 = vunpack.c.l.b16 %v242
  %v1199 = vunpack.c.h.b16 %v242
  %v1200 = vunpack.c.l.b16 %v243
  %v1201 = vunpack.c.l.b16 %v244
  %v1202 = vunpack.c.h.b16 %v244
  %v1203 = vunpack.c.l.b16 %v245
  %v1204 = vunpack.c.l.b16 %v246
  %v1205 = vunpack.c.h.b16 %v246
  %v1206 = vunpack.c.l.b16 %v247
  %v1207 = vunpack.c.l.b16 %v248
  %v1208 = vunpack.c.h.b16 %v248
  %v1209 = vunpack.c.l.b16 %v249
  %v1210 = vunpack.c.l.b16 %v250
  %v1211 = vunpack.c.h.b16 %v250
  %v1212 = vunpack.c.l.b16 %v251
  %v1213 = vunpack.c.l.b16 %v252
  %v1214 = vunpack.c.h.b16 %v252
  %v1215 = vunpack.c.l.b16 %v253
  %v1216 = vunpack.c.l.b16 %v254
  %v1217 = vunpack.c.h.b16 %v254
  %v1218 = vunpack.c.l.b16 %v255
  %v1219 = vunpack.c.l.b16 %v256
  %v1220 = vunpack.c.h.b16 %v256
  %v1221 = vunpack.c.l.b16 %v257
  %v1222 = vunpack.c.l.b16 %v258
  %v1223 = vunpack.c.h.b16 %v258
  %v1224 = vunpack.c.l.b16 %v259
  %v1225 = vunpack.c.l.b16 %v260
  %v1226 = vunpack.c.h.b16 %v260
  %v1227 = vunpack.c.l.b16 %v261
  %v1228 = vunpack.c.l.b16 %v262
  %v1229 = vunpack.c.h.b16 %v262
  %v1230 = vunpack.c.l.b16 %v263
  %v1231 = vunpack.c.l.b16 %v264
  %v1232 = vunpack.c.h.b16 %v264
  %v1233 = vunpack.c.l.b16 %v265
  %v1234 = vunpack.c.l.b16 %v266
  %v1235 = vunpack.c.h.b16 %v266
  %v1236 = vunpack.c.l.b16 %v267
  %v1237 = vunpack.c.l.b16 %v268
  %v1238 = vunpack.c.h.b16 %v268
  %v1239 = vunpack.c.l.b16 %v269
  %v1240 = vunpack.c.l.b16 %v270
  %v1241 = vunpack.c.h.b16 %v270
  %v1242 = vunpack.c.l.b16 %v271
  %v1243 = vunpack.c.l.b16 %v272
  %v1244 = vunpack.c.h.b16 %v272
  %v1245 = vunpack.c.l.b16 %v273
  %v1246 = vunpack.c.l.b16 %v274
  %v1247 = vunpack.c.h.b16 %v274
  %v1248 = vunpack.c.l.b16 %v275
  %v1249 = vunpack.c.l.b16 %v276
  %v1250 = vunpack.c.h.b16 %v276
  %v1251 = vunpack.c.l.b16 %v277
  %v1252 = vunpack.c.l.b16 %v278
  %v1253 = vunpack.c.h.b16 %v278
  %v1254 = vunpack.c.l.b16 %v279
  %v1255 = vunpack.c.l.b16 %v280
  %v1256 = vunpack.c.h.b16 %v280
  %v1257 = vunpack.c.l.b16 %v281
  %v1258 = vunpack.c.l.b16 %v282
  %v1259 = vunpack.c.h.b16 %v282
  %v1260 = vunpack.c.l.b16 %v283
  %v1261 = vunpack.c.l.b16 %v284
  %v1262 = vunpack.c.h.b16 %v284
  %v1263 = vunpack.c.l.b16 %v285
  %v1264 = vunpack.c.l.b16 %v286
  %v1265 = vunpack.c.h.b16 %v286
  %v1266 = vunpack.c.l.b16 %v287
  %v1267 = vunpack.c.l.b16 %v288
  %v1268 = vunpack.c.h.b16 %v288
  %v1269 = vunpack.c.l.b16 %v289
  %v1270 = vunpack.c.l.b16 %v290
  %v1271 = vunpack.c.h.b16 %v290
  %v1272 = vunpack.c.l.b16 %v291
  %v1273 = vunpack.c.l.b16 %v292
  %v1274 = vunpack.c.h.b16 %v292
  %v1275 = vunpack.c.l.b16 %v293
  %v1276 = vunpack.c.l.b16 %v294
  %v1277 = vunpack.c.h.b16 %v294
  %v1278 = vunpack.c.l.b16 %v295
  %v1279 = vunpack.c.l.b16 %v296
  %v1280 = vunpack.c.h.b16 %v296
  %v1281 = vunpack.c.l.b16 %v297
  %v1282 = vunpack.c.l.b16 %v298
  %v1283 = vunpack.c.h.b16 %v298
  %v1284 = vunpack.c.l.b16 %v299
  %v1285 = vunpack.c.l.b16 %v300
  %v1286 = vunpack.c.h.b16 %v300
  %v1287 = vunpack.c.l.b16 %v301
  %v1288 = vunpack.c.l.b16 %v302
  %v1289 = vunpack.c.h.b16 %v302
  %v1290 = vunpack.c.l.b16 %v303
  %v1291 = vunpack.c.l.b16 %v304
  %v1292 = vunpack.c.h.b16 %v304
  %v1293 = vunpack.c.l.b16 %v305
  %v1294 = vunpack.c.l.b16 %v306
  %v1295 = vunpack.c.h.b16 %v306
  %v1296 = vunpack.c.l.b16 %v307
  %v1297 = vunpack.c.l.b16 %v308
  %v1298 = vunpack.c.h.b16 %v308
  %v1299 = vunpack.c.l.b16 %v309
  %v1300 = vunpack.c.l.b16 %v310
  %v1301 = vunpack.c.h.b16 %v310
  %v1302 = vunpack.c.l.b16 %v311
  %v1303 = vunpack.c.l.b16 %v312
  %v1304 = vunpack.c.h.b16 %v312
  %v1305 = vunpack.c.l.b16 %v313
  %v1306 = vunpack.c.l.b16 %v314
  %v1307 = vunpack.c.h.b16 %v314
  %v1308 = vunpack.c.l.b16 %v315
  %v1309 = vunpack.c.l.b16 %v316
  %v1310 = vunpack.c.h.b16 %v316
  %v1311 = vunpack.c.l.b16 %v317
  %v1312 = vunpack.c.l.b16 %v318
  %v1313 = vunpack.c.h.b16 %v318
  %v1314 = vunpack.c.l.b16 %v319
  %v1315 = vunpack.c.l.b16 %v320
  %v1316 = vunpack.c.h.b16 %v320
  %v1317 = vunpack.c.l.b16 %v321
  %v1318 = vunpack.c.l.b16 %v322
  %v1319 = vunpack.c.h.b16 %v322
  %v1320 = vunpack.c.l.b16 %v323
  %v1321 = vunpack.c.l.b16 %v324
  %v1322 = vunpack.c.h.b16 %v324
  %v1323 = vunpack.c.l.b16 %v325
  %v1324 = vunpack.c.l.b16 %v326
  %v1325 = vunpack.c.h.b16 %v326
  %v1326 = vunpack.c.l.b16 %v327
  %v1327 = vunpack.c.l.b16 %v328
  %v1328 = vunpack.c.h.b16 %v328
  %v1329 = vunpack.c.l.b16 %v329
  %v1330 = vunpack.c.l.b16 %v330
  %v1331 = vunpack.c.h.b16 %v330
  %v1332 = vunpack.c.l.b16 %v331
  %v1333 = vunpack.c.l.b16 %v332
  %v1334 = vunpack.c.h.b16 %v332
  %v1335 = vunpack.c.l.b16 %v333
  %v1336 = vunpack.c.l.b16 %v334
  %v1337 = vunpack.c.h.b16 %v334
  %v1338 = vunpack.c.l.b16 %v335
  %v1339 = vunpack.c.l.b16 %v336
  %v1340 = vunpack.c.h.b16 %v336
  %v1341 = vunpack.c.l.b16 %v337
  %v1342 = vunpack.c.l.b16 %v338
  %v1343 = vunpack.c.h.b16 %v338
  %v1344 = vunpack.c.l.b16 %v339
  %v1345 = vunpack.c.l.b16 %v340
  %v1346 = vunpack.c.h.b16 %v340
  %v1347 = vunpack.c.l.b16 %v341
  %v1348 = vunpack.c.l.b16 %v342
  %v1349 = vunpack.c.h.b16 %v342
  %v1350 = vunpack.c.l.b16 %v343
  %v1351 = vunpack.c.l.b16 %v344
  %v1352 = vunpack.c.h.b16 %v344
  %v1353 = vunpack.c.l.b16 %v345
  %v1354 = vunpack.c.l.b16 %v346
  %v1355 = vunpack.c.h.b16 %v346
  %v1356 = vunpack.c.l.b16 %v347
  %v1357 = vunpack.c.l.b16 %v348
  %v1358 = vunpack.c.h.b16 %v348
  %v1359 = vunpack.c.l.b16 %v349
  %v1360 = vunpack.c.l.b16 %v350
  %v1361 = vunpack.c.h.b16 %v350
  %v1362 = vunpack.c.l.b16 %v351
  %v1363 = vunpack.c.l.b16 %v352
  %v1364 = vunpack.c.h.b16 %v352
  %v1365 = vunpack.c.l.b16 %v353
  %v1366 = vunpack.c.l.b16 %v354
  %v1367 = vunpack.c.h.b16 %v354
  %v1368 = vunpack.c.l.b16 %v355
  %v1369 = vunpack.c.l.b16 %v356
  %v1370 = vunpack.c.h.b16 %v356
  %v1371 = vunpack.c.l.b16 %v357
  %v1372 = vunpack.c.l.b16 %v358
  %v1373 = vunpack.c.h.b16 %v358
  %v1374 = vunpack.c.l.b16 %v359
  %v1375 = vunpack.c.l.b16 %v360
  %v1376 = vunpack.c.h.b16 %v360
  %v1377 = vunpack.c.l.b16 %v361
  %v1378 = vunpack.c.l.b16 %v362
  %v1379 = vunpack.c.h.b16 %v362
  %v1380 = vunpack.c.l.b16 %v363
  %v1381 = vunpack.c.l.b16 %v364
  %v1382 = vunpack.c.h.b16 %v364
  %v1383 = vunpack.c.l.b16 %v365
  %v1384 = vunpack.c.l.b16 %v366
  %v1385 = vunpack.c.h.b16 %v366
  %v1386 = vunpack.c.l.b16 %v367
  %v1387 = vunpack.c.l.b16 %v368
  %v1388 = vunpack.c.h.b16 %v368
  %v1389 = vunpack.c.l.b16 %v369
  %v1390 = vunpack.c.l.b16 %v370
  %v1391 = vunpack.c.h.b16 %v370
  %v1392 = vunpack.c.l.b16 %v371
  %v1393 = vunpack.c.l.b16 %v372
  %v1394 = vunpack.c.h.b16 %v372
  %v1395 = vunpack.c.l.b16 %v373
  %v1396 = vunpack.c.l.b16 %v374
  %v1397 = vunpack.c.h.b16 %v374
  %v1398 = vunpack.c.l.b16 %v375
  %v1399 = vunpack.c.l.b16 %v376
  %v1400 = vunpack.c.h.b16 %v376
  %v1401 = vunpack.c.l.b16 %v377
  %v1402 = vunpack.c.l.b16 %v378
  %v1403 = vunpack.c.h.b16 %v378
  %v1404 = vunpack.c.l.b16 %v379
  %v1405 = vunpack.c.l.b16 %v380
  %v1406 = vunpack.c.h.b16 %v380
  %v1407 = vunpack.c.l.b16 %v381
  %v1408 = vunpack.c.l.b16 %v382
  %v1409 = vunpack.c.h.b16 %v382
  %v1410 = vunpack.c.l.b16 %v383
  %v1411 = vunpack.c.l.b16 %v384
  %v1412 = vunpack.c.h.b16 %v384
  %v1413 = vunpack.c.l.b16 %v385
  %v1414 = vunpack.c.l.b16 %v386
  %v1415 = vunpack.c.h.b16 %v386
  %v1416 = vunpack.c.l.b16 %v387
  %v1417 = vunpack.c.l.b16 %v388
  %v1418 = vunpack.c.h.b16 %v388
  %v1419 = vunpack.c.l.b16 %v389
  %v1420 = vunpack.c.l.b16 %v390
  %v1421 = vunpack.c.h.b16 %v390
  %v1422 = vunpack.c.l.b16 %v391
  %v1423 = vunpack.c.l.b16 %v392
  %v1424 = vunpack.c.h.b16 %v392
  %v1425 = vunpack.c.l.b16 %v393
  %v1426 = vunpack.c.l.b16 %v394
  %v1427 = vunpack.c.h.b16 %v394
  %v1428 = vunpack.c.l.b16 %v395
  %v1429 = vunpack.c.l.b16 %v396
  %v1430 = vunpack.c.h.b16 %v396
  %v1431 = vunpack.c.l.b16 %v397
  %v1432 = vunpack.c.l.b16 %v398
  %v1433 = vunpack.c.h.b16 %v398
  %v1434 = vunpack.c.l.b16 %v399
  %v1435 = vunpack.c.l.b16 %v400
  %v1436 = vunpack.c.h.b16 %v400
  %v1437 = vunpack.c.l.b16 %v401
  %v1438 = vunpack.c.l.b16 %v402
  %v1439 = vunpack.c.h.b16 %v402
  %v1440 = vunpack.c.l.b16 %v403
  %v1441 = vunpack.c.l.b16 %v404
  %v1442 = vunpack.c.h.b16 %v404
  %v1443 = vunpack.c.l.b16 %v405
  %v1444 = vunpack.c.l.b16 %v406
  %v1445 = vunpack.c.h.b16 %v406
  %v1446 = vunpack.c.l.b16 %v407
  %v1447 = vunpack.c.l.b16 %v408
  %v1448 = vunpack.c.h.b16 %v408
  %v1449 = vunpack.c.l.b16 %v409
  %v1450 = vunpack.c.l.b16 %v410
  %v1451 = vunpack.c.h.b16 %v410
  %v1452 = vunpack.c.l.b16 %v411
  %v1453 = vunpack.c.l.b16 %v412
  %v1454 = vunpack.c.h.b16 %v412
  %v1455 = vunpack.c.l.b16 %v413
  %v1456 = vunpack.c.l.b16 %v414
  %v1457 = vunpack.c.h.b16 %v414
  %v1458 = vunpack.c.l.b16 %v415
  %v1459 = vunpack.c.l.b16 %v416
  %v1460 = vunpack.c.h.b16 %v416
  %v1461 = vunpack.c.l.b16 %v417
  %v1462 = vunpack.c.l.b16 %v418
  %v1463 = vunpack.c.h.b16 %v418
  %v1464 = vunpack.c.l.b16 %v419
  %v1465 = vunpack.c.l.b16 %v420
  %v1466 = vunpack.c.h.b16 %v420
  %v1467 = vunpack.c.l.b16 %v421
  %v1468 = vunpack.c.l.b16 %v422
  %v1469 = vunpack.c.h.b16 %v422
  %v1470 = vunpack.c.l.b16 %v423
  %v1471 = vunpack.c.l.b16 %v424
  %v1472 = vunpack.c.h.b16 %v424
  %v1473 = vunpack.c.l.b16 %v425
  %v1474 = vunpack.c.l.b16 %v426
  %v1475 = vunpack.c.h.b16 %v426
  %v1476 = vunpack.c.l.b16 %v427
  %v1477 = vunpack.c.l.b16 %v428
  %v1478 = vunpack.c.h.b16 %v428
  %v1479 = vunpack.c.l.b16 %v429
  %v1480 = vunpack.c.l.b16 %v430
  %v1481 = vunpack.c.h.b16 %v430
  %v1482 = vunpack.c.l.b16 %v431
  %v1483 = vunpack.c.l.b16 %v432
  %v1484 = vunpack.c.h.b16 %v432
  %v1485 = vunpack.c.l.b16 %v433
  %v1486 = vunpack.c.l.b16 %v434
  %v1487 = vunpack.c.h.b16 %v434
  %v1488 = vunpack.c.l.b16 %v435
  %v1489 = vpack.c.b16 %v892, %v889
  %v1490 = vpack.c.b16 %v893, %v890
  %v1491 = vpack.c.b16 %v894, %v891
  %v1492 = vpack.c.b16 %v898, %v895
  %v1493 = vpack.c.b16 %v899, %v896
  %v1494 = vpack.c.b16 %v900, %v897
  %v1495 = vpack.c.b16 %v904, %v901
  %v1496 = vpack.c.b16 %v905, %v902
  %v1497 = vpack.c.b16 %v906, %v903
  %v1498 = vpack.c.b16 %v910, %v907
  %v1499 = vpack.c.b16 %v911, %v908
  %v1500 = vpack.c.b16 %v912, %v909
  %v1501 = vpack.c.b16 %v916, %v913
  %v1502 = vpack.c.b16 %v917, %v914
  %v1503 = vpack.c.b16 %v918, %v915
  %v1504 = vpack.c.b16 %v922, %v919
  %v1505 = vpack.c.b16 %v923, %v920
  %v1506 = vpack.c.b16 %v924, %v921
  %v1507 = vpack.c.b16 %v928, %v925
  %v1508 = vpack.c.b16 %v929, %v926
  %v1509 = vpack.c.b16 %v930, %v927
  %v1510 = vpack.c.b16 %v934, %v931
  %v1511 = vpack.c.b16 %v935, %v932
  %v1512 = vpack.c.b16 %v936, %v933
  %v1513 = vpack.c.b16 %v940, %v937
  %v1514 = vpack.c.b16 %v941, %v938
  %v1515 = vpack.c.b16 %v942, %v939
  %v1516 = vpack.c.b16 %v946, %v943
  %v1517 = vpack.c.b16 %v947, %v944
  %v1518 = vpack.c.b16 %v948, %v945
  %v1519 = vpack.c.b16 %v952, %v949
  %v1520 = vpack.c.b16 %v953, %v950
  %v1521 = vpack.c.b16 %v954, %v951
  %v1522 = vpack.c.b16 %v958, %v955
  %v1523 = vpack.c.b16 %v959, %v956
  %v1524 = vpack.c.b16 %v960, %v957
  %v1525 = vpack.c.b16 %v964, %v961
  %v1526 = vpack.c.b16 %v965, %v962
  %v1527 = vpack.c.b16 %v966, %v963
  %v1528 = vpack.c.b16 %v970, %v967
  %v1529 = vpack.c.b16 %v971, %v968
  %v1530 = vpack.c.b16 %v972, %v969
  %v1531 = vpack.c.b16 %v976, %v973
  %v1532 = vpack.c.b16 %v977, %v974
  %v1533 = vpack.c.b16 %v978, %v975
  %v1534 = vpack.c.b16 %v982, %v979
  %v1535 = vpack.c.b16 %v983, %v980
  %v1536 = vpack.c.b16 %v984, %v981
  %v1537 = vpack.c.b16 %v988, %v985
  %v1538 = vpack.c.b16 %v989, %v986
  %v1539 = vpack.c.b16 %v990, %v987
  %v1540 = vpack.c.b16 %v994, %v991
  %v1541 = vpack.c.b16 %v995, %v992
  %v1542 = vpack.c.b16 %v996, %v993
  %v1543 = vpack.c.b16 %v1000, %v997
  %v1544 = vpack.c.b16 %v1001, %v998
  %v1545 = vpack.c.b16 %v1002, %v999
  %v1546 = vpack.c.b16 %v1006, %v1003
  %v1547 = vpack.c.b16 %v1007, %v1004
  %v1548 = vpack.c.b16 %v1008, %v1005
  %v1549 = vpack.c.b16 %v1012, %v1009
  %v1550 = vpack.c.b16 %v1013, %v1010
  %v1551 = vpack.c.b16 %v1014, %v1011
  %v1552 = vpack.c.b16 %v1018, %v1015
  %v1553 = vpack.c.b16 %v1019, %v1016
  %v1554 = vpack.c.b16 %v1020, %v1017
  %v1555 = vpack.c.b16 %v1024, %v1021
  %v1556 = vpack.c.b16 %v1025, %v1022
  %v1557 = vpack.c.b16 %v1026, %v1023
  %v1558 = vpack.c.b16 %v1030, %v1027
  %v1559 = vpack.c.b16 %v1031, %v1028
  %v1560 = vpack.c.b16 %v1032, %v1029
  %v1561 = vpack.c.b16 %v1036, %v1033
  %v1562 = vpack.c.b16 %v1037, %v1034
  %v1563 = vpack.c.b16 %v1038, %v1035
  %v1564 = vpack.c.b16 %v1042, %v1039
  %v1565 = vpack.c.b16 %v1043, %v1040
  %v1566 = vpack.c.b16 %v1044, %v1041
  %v1567 = vpack.c.b16 %v1048, %v1045
  %v1568 = vpack.c.b16 %v1049, %v1046
  %v1569 = vpack.c.b16 %v1050, %v1047
  %v1570 = vpack.c.b16 %v1054, %v1051
  %v1571 = vpack.c.b16 %v1055, %v1052
  %v1572 = vpack.c.b16 %v1056, %v1053
  %v1573 = vpack.c.b16 %v1060, %v1057
  %v1574 = vpack.c.b16 %v1061, %v1058
  %v1575 = vpack.c.b16 %v1062, %v1059
  %v1576 = vpack.c.b16 %v1066, %v1063
  %v1577 = vpack.c.b16 %v1067, %v1064
  %v1578 = vpack.c.b16 %v1068, %v1065
  %v1579 = vpack.c.b16 %v1072, %v1069
  %v1580 = vpack.c.b16 %v1073, %v1070
  %v1581 = vpack.c.b16 %v1074, %v1071
  %v1582 = vpack.c.b16 %v1078, %v1075
  %v1583 = vpack.c.b16 %v1079, %v1076
  %v1584 = vpack.c.b16 %v1080, %v1077
  %v1585 = vpack.c.b16 %v1084, %v1081
  %v1586 = vpack.c.b16 %v1085, %v1082
  %v1587 = vpack.c.b16 %v1086, %v1083
  %v1588 = vpack.c.b16 %v1090, %v1087
  %v1589 = vpack.c.b16 %v1091, %v1088
  %v1590 = vpack.c.b16 %v1092, %v1089
  %v1591 = vpack.c.b16 %v1096, %v1093
  %v1592 = vpack.c.b16 %v1097, %v1094
  %v1593 = vpack.c.b16 %v1098, %v1095
  %v1594 = vpack.c.b16 %v1102, %v1099
  %v1595 = vpack.c.b16 %v1103, %v1100
  %v1596 = vpack.c.b16 %v1104, %v1101
  %v1597 = vpack.c.b16 %v1108, %v1105
  %v1598 = vpack.c.b16 %v1109, %v1106
  %v1599 = vpack.c.b16 %v1110, %v1107
  %v1600 = vpack.c.b16 %v1114, %v1111
  %v1601 = vpack.c.b16 %v1115, %v1112
  %v1602 = vpack.c.b16 %v1116, %v1113
  %v1603 = vpack.c.b16 %v1120, %v1117
  %v1604 = vpack.c.b16 %v1121, %v1118
  %v1605 = vpack.c.b16 %v1122, %v1119
  %v1606 = vpack.c.b16 %v1126, %v1123
  %v1607 = vpack.c.b16 %v1127, %v1124
  %v1608 = vpack.c.b16 %v1128, %v1125
  %v1609 = vpack.c.b16 %v1132, %v1129
  %v1610 = vpack.c.b16 %v1133, %v1130
  %v1611 = vpack.c.b16 %v1134, %v1131
  %v1612 = vpack.c.b16 %v1138, %v1135
  %v1613 = vpack.c.b16 %v1139, %v1136
  %v1614 = vpack.c.b16 %v1140, %v1137
  %v1615 = vpack.c.b16 %v1144, %v1141
  %v1616 = vpack.c.b16 %v1145, %v1142
  %v1617 = vpack.c.b16 %v1146, %v1143
  %v1618 = vpack.c.b16 %v1150, %v1147
  %v1619 = vpack.c.b16 %v1151, %v1148
  %v1620 = vpack.c.b16 %v1152, %v1149
  %v1621 = vpack.c.b16 %v1156, %v1153
  %v1622 = vpack.c.b16 %v1157, %v1154
  %v1623 = vpack.c.b16 %v1158, %v1155
  %v1624 = vpack.c.b16 %v1162, %v1159
  %v1625 = vpack.c.b16 %v1163, %v1160
  %v1626 = vpack.c.b16 %v1164, %v1161
  %v1627 = vpack.c.b16 %v1168, %v1165
  %v1628 = vpack.c.b16 %v1169, %v1166
  %v1629 = vpack.c.b16 %v1170, %v1167
  %v1630 = vpack.c.b16 %v1174, %v1171
  %v1631 = vpack.c.b16 %v1175, %v1172
  %v1632 = vpack.c.b16 %v1176, %v1173
  %v1633 = vpack.c.b16 %v1180, %v1177
  %v1634 = vpack.c.b16 %v1181, %v1178
  %v1635 = vpack.c.b16 %v1182, %v1179
  %v1636 = vpack.c.b16 %v1186, %v1183
  %v1637 = vpack.c.b16 %v1187, %v1184
  %v1638 = vpack.c.b16 %v1188, %v1185
  %v1639 = vpack.c.b16 %v1192, %v1189
  %v1640 = vpack.c.b16 %v1193, %v1190
  %v1641 = vpack.c.b16 %v1194, %v1191
  %v1642 = vpack.c.b16 %v1198, %v1195
  %v1643 = vpack.c.b16 %v1199, %v1196
  %v1644 = vpack.c.b16 %v1200, %v1197
  %v1645 = vpack.c.b16 %v1204, %v1201
  %v1646 = vpack.c.b16 %v1205, %v1202
  %v1647 = vpack.c.b16 %v1206, %v1203
  %v1648 = vpack.c.b16 %v1210, %v1207
  %v1649 = vpack.c.b16 %v1211, %v1208
  %v1650 = vpack.c.b16 %v1212, %v1209
  %v1651 = vpack.c.b16 %v1216, %v1213
  %v1652 = vpack.c.b16 %v1217, %v1214
  %v1653 = vpack.c.b16 %v1218, %v1215
  %v1654 = vpack.c.b16 %v1222, %v1219
  %v1655 = vpack.c.b16 %v1223, %v1220
  %v1656 = vpack.c.b16 %v1224, %v1221
  %v1657 = vpack.c.b16 %v1228, %v1225
  %v1658 = vpack.c.b16 %v1229, %v1226
  %v1659 = vpack.c.b16 %v1230, %v1227
  %v1660 = vpack.c.b16 %v1234, %v1231
  %v1661 = vpack.c.b16 %v1235, %v1232
  %v1662 = vpack.c.b16 %v1236, %v1233
  %v1663 = vpack.c.b16 %v1240, %v1237
  %v1664 = vpack.c.b16 %v1241, %v1238
  %v1665 = vpack.c.b16 %v1242, %v1239
  %v1666 = vpack.c.b16 %v1246, %v1243
  %v1667 = vpack.c.b16 %v1247, %v1244
  %v1668 = vpack.c.b16 %v1248, %v1245
  %v1669 = vpack.c.b16 %v1252, %v1249
  %v1670 = vpack.c.b16 %v1253, %v1250
  %v1671 = vpack.c.b16 %v1254, %v1251
  %v1672 = vpack.c.b16 %v1258, %v1255
  %v1673 = vpack.c.b16 %v1259, %v1256
  %v1674 = vpack.c.b16 %v1260, %v1257
  %v1675 = vpack.c.b16 %v1264, %v1261
  %v1676 = vpack.c.b16 %v1265, %v1262
  %v1677 = vpack.c.b16 %v1266, %v1263
  %v1678 = vpack.c.b16 %v1270, %v1267
  %v1679 = vpack.c.b16 %v1271, %v1268
  %v1680 = vpack.c.b16 %v1272, %v1269
  %v1681 = vpack.c.b16 %v1276, %v1273
  %v1682 = vpack.c.b16 %v1277, %v1274
  %v1683 = vpack.c.b16 %v1278, %v1275
  %v1684 = vpack.c.b16 %v1282, %v1279
  %v1685 = vpack.c.b16 %v1283, %v1280
  %v1686 = vpack.c.b16 %v1284, %v1281
  %v1687 = vpack.c.b16 %v1288, %v1285
  %v1688 = vpack.c.b16 %v1289, %v1286
  %v1689 = vpack.c.b16 %v1290, %v1287
  %v1690 = vpack.c.b16 %v1294, %v1291
  %v1691 = vpack.c.b16 %v1295, %v1292
  %v1692 = vpack.c.b16 %v1296, %v1293
  %v1693 = vpack.c.b16 %v1300, %v1297
  %v1694 = vpack.c.b16 %v1301, %v1298
  %v1695 = vpack.c.b16 %v1302, %v1299
  %v1696 = vpack.c.b16 %v1306, %v1303
  %v1697 = vpack.c.b16 %v1307, %v1304
  %v1698 = vpack.c.b16 %v1308, %v1305
  %v1699 = vpack.c.b16 %v1312, %v1309
  %v1700 = vpack.c.b16 %v1313, %v1310
  %v1701 = vpack.c.b16 %v1314, %v1311
  %v1702 = vpack.c.b16 %v1318, %v1315
  %v1703 = vpack.c.b16 %v1319, %v1316
  %v1704 = vpack.c.b16 %v1320, %v1317
  %v1705 = vpack.c.b16 %v1324, %v1321
  %v1706 = vpack.c.b16 %v1325, %v1322
  %v1707 = vpack.c.b16 %v1326, %v1323
  %v1708 = vpack.c.b16 %v1330, %v1327
  %v1709 = vpack.c.b16 %v1331, %v1328
  %v1710 = vpack.c.b16 %v1332, %v1329
  %v1711 = vpack.c.b16 %v1336, %v1333
  %v1712 = vpack.c.b16 %v1337, %v1334
  %v1713 = vpack.c.b16 %v1338, %v1335
  %v1714 = vpack.c.b16 %v1342, %v1339
  %v1715 = vpack.c.b16 %v1343, %v1340
  %v1716 = vpack.c.b16 %v1344, %v1341
  %v1717 = vpack.c.b16 %v1348, %v1345
  %v1718 = vpack.c.b16 %v1349, %v1346
  %v1719 = vpack.c.b16 %v1350, %v1347
  %v1720 = vpack.c.b16 %v1354, %v1351
  %v1721 = vpack.c.b16 %v1355, %v1352
  %v1722 = vpack.c.b16 %v1356, %v1353
  %v1723 = vpack.c.b16 %v1360, %v1357
  %v1724 = vpack.c.b16 %v1361, %v1358
  %v1725 = vpack.c.b16 %v1362, %v1359
  %v1726 = vpack.c.b16 %v1366, %v1363
  %v1727 = vpack.c.b16 %v1367, %v1364
  %v1728 = vpack.c.b16 %v1368, %v1365
  %v1729 = vpack.c.b16 %v1372, %v1369
  %v1730 = vpack.c.b16 %v1373, %v1370
  %v1731 = vpack.c.b16 %v1374, %v1371
  %v1732 = vpack.c.b16 %v1378, %v1375
  %v1733 = vpack.c.b16 %v1379, %v1376
  %v1734 = vpack.c.b16 %v1380, %v1377
  %v1735 = vpack.c.b16 %v1384, %v1381
  %v1736 = vpack.c.b16 %v1385, %v1382
  %v1737 = vpack.c.b16 %v1386, %v1383
  %v1738 = vpack.c.b16 %v1390, %v1387
  %v1739 = vpack.c.b16 %v1391, %v1388
  %v1740 = vpack.c.b16 %v1392, %v1389
  %v1741 = vpack.c.b16 %v1396, %v1393
  %v1742 = vpack.c.b16 %v1397, %v1394
  %v1743 = vpack.c.b16 %v1398, %v1395
  %v1744 = vpack.c.b16 %v1402, %v1399
  %v1745 = vpack.c.b16 %v1403, %v1400
  %v1746 = vpack.c.b16 %v1404, %v1401
  %v1747 = vpack.c.b16 %v1408, %v1405
  %v1748 = vpack.c.b16 %v1409, %v1406
  %v1749 = vpack.c.b16 %v1410, %v1407
  %v1750 = vpack.c.b16 %v1414, %v1411
  %v1751 = vpack.c.b16 %v1415, %v1412
  %v1752 = vpack.c.b16 %v1416, %v1413
  %v1753 = vpack.c.b16 %v1420, %v1417
  %v1754 = vpack.c.b16 %v1421, %v1418
  %v1755 = vpack.c.b16 %v1422, %v1419
  %v1756 = vpack.c.b16 %v1426, %v1423
  %v1757 = vpack.c.b16 %v1427, %v1424
  %v1758 = vpack.c.b16 %v1428, %v1425
  %v1759 = vpack.c.b16 %v1432, %v1429
  %v1760 = vpack.c.b16 %v1433, %v1430
  %v1761 = vpack.c.b16 %v1434, %v1431
  %v1762 = vpack.c.b16 %v1438, %v1435
  %v1763 = vpack.c.b16 %v1439, %v1436
  %v1764 = vpack.c.b16 %v1440, %v1437
  %v1765 = vpack.c.b16 %v1444, %v1441
  %v1766 = vpack.c.b16 %v1445, %v1442
  %v1767 = vpack.c.b16 %v1446, %v1443
  %v1768 = vpack.c.b16 %v1450, %v1447
  %v1769 = vpack.c.b16 %v1451, %v1448
  %v1770 = vpack.c.b16 %v1452, %v1449
  %v1771 = vpack.c.b16 %v1456, %v1453
  %v1772 = vpack.c.b16 %v1457, %v1454
  %v1773 = vpack.c.b16 %v1458, %v1455
  %v1774 = vpack.c.b16 %v1462, %v1459
  %v1775 = vpack.c.b16 %v1463, %v1460
  %v1776 = vpack.c.b16 %v1464, %v1461
  %v1777 = vpack.c.b16 %v1468, %v1465
  %v1778 = vpack.c.b16 %v1469, %v1466
  %v1779 = vpack.c.b16 %v1470, %v1467
  %v1780 = vpack.c.b16 %v1474, %v1471
  %v1781 = vpack.c.b16 %v1475, %v1472
  %v1782 = vpack.c.b16 %v1476, %v1473
  %v1783 = vpack.c.b16 %v1480, %v1477
  %v1784 = vpack.c.b16 %v1481, %v1478
  %v1785 = vpack.c.b16 %v1482, %v1479
  %v1786 = vpack.c.b16 %v1486, %v1483
  %v1787 = vpack.c.b16 %v1487, %v1484
  %v1788 = vpack.c.b16 %v1488, %v1485
  %vm2089 = vcmask 523264
  %v2091 = vsel %vm2089, %v476, 0
  %2093 = vmatpush.bf16.msra.mxu0 %v1510
  %2094 = vmatpush.bf16.msra.mxu0 %v1507
  %2095 = vmatpush.bf16.msra.mxu0 %v1504
  %2096 = vmatpush.bf16.msra.mxu0 %v1501
  %2097 = vmatpush.bf16.msra.mxu0 %v1498
  %2098 = vmatpush.bf16.msra.mxu0 %v1495
  %2099 = vmatpush.bf16.msra.mxu0 %v1492
  %2100 = vmatpush.bf16.msra.mxu0 %v1489
  %2101 = vmatmul.bf16.gmra.mxu0 %v464
  %v2102 = vpop.f32.mrf.mxu0
  %v2103 = vadd.f32 %v438, %v2102
  %v2104 = vpop.f32.mrf.mxu0
  %2105 = vdwg.mxu0
  %2106 = vmatpush.bf16.msra.mxu0 %v1534
  %2107 = vmatpush.bf16.msra.mxu0 %v1531
  %2108 = vmatpush.bf16.msra.mxu0 %v1528
  %2109 = vmatpush.bf16.msra.mxu0 %v1525
  %2110 = vmatpush.bf16.msra.mxu0 %v1522
  %2111 = vmatpush.bf16.msra.mxu0 %v1519
  %2112 = vmatpush.bf16.msra.mxu0 %v1516
  %2113 = vmatpush.bf16.msra.mxu0 %v1513
  %2114 = vmatmul.bf16.gmra.mxu0 %v465
  %v2115 = vpop.f32.mrf.mxu0
  %v2116 = vadd.f32 %v2103, %v2115
  %v2117 = vpop.f32.mrf.mxu0
  %2118 = vdwg.mxu0
  %2119 = vmatpush.bf16.msra.mxu0 %v1558
  %2120 = vmatpush.bf16.msra.mxu0 %v1555
  %2121 = vmatpush.bf16.msra.mxu0 %v1552
  %2122 = vmatpush.bf16.msra.mxu0 %v1549
  %2123 = vmatpush.bf16.msra.mxu0 %v1546
  %2124 = vmatpush.bf16.msra.mxu0 %v1543
  %2125 = vmatpush.bf16.msra.mxu0 %v1540
  %2126 = vmatpush.bf16.msra.mxu0 %v1537
  %2127 = vmatmul.bf16.gmra.mxu0 %v466
  %v2128 = vpop.f32.mrf.mxu0
  %v2129 = vadd.f32 %v2116, %v2128
  %v2130 = vpop.f32.mrf.mxu0
  %2131 = vdwg.mxu0
  %2132 = vmatpush.bf16.msra.mxu0 %v1582
  %2133 = vmatpush.bf16.msra.mxu0 %v1579
  %2134 = vmatpush.bf16.msra.mxu0 %v1576
  %2135 = vmatpush.bf16.msra.mxu0 %v1573
  %2136 = vmatpush.bf16.msra.mxu0 %v1570
  %2137 = vmatpush.bf16.msra.mxu0 %v1567
  %2138 = vmatpush.bf16.msra.mxu0 %v1564
  %2139 = vmatpush.bf16.msra.mxu0 %v1561
  %2140 = vmatmul.bf16.gmra.mxu0 %v467
  %v2141 = vpop.f32.mrf.mxu0
  %v2142 = vadd.f32 %v2129, %v2141
  %v2143 = vpop.f32.mrf.mxu0
  %2144 = vdwg.mxu0
  %2145 = vmatpush.bf16.msra.mxu0 %v1606
  %2146 = vmatpush.bf16.msra.mxu0 %v1603
  %2147 = vmatpush.bf16.msra.mxu0 %v1600
  %2148 = vmatpush.bf16.msra.mxu0 %v1597
  %2149 = vmatpush.bf16.msra.mxu0 %v1594
  %2150 = vmatpush.bf16.msra.mxu0 %v1591
  %2151 = vmatpush.bf16.msra.mxu0 %v1588
  %2152 = vmatpush.bf16.msra.mxu0 %v1585
  %2153 = vmatmul.bf16.gmra.mxu0 %v468
  %v2154 = vpop.f32.mrf.mxu0
  %v2155 = vadd.f32 %v2142, %v2154
  %v2156 = vpop.f32.mrf.mxu0
  %2157 = vdwg.mxu0
  %2158 = vmatpush.bf16.msra.mxu0 %v1630
  %2159 = vmatpush.bf16.msra.mxu0 %v1627
  %2160 = vmatpush.bf16.msra.mxu0 %v1624
  %2161 = vmatpush.bf16.msra.mxu0 %v1621
  %2162 = vmatpush.bf16.msra.mxu0 %v1618
  %2163 = vmatpush.bf16.msra.mxu0 %v1615
  %2164 = vmatpush.bf16.msra.mxu0 %v1612
  %2165 = vmatpush.bf16.msra.mxu0 %v1609
  %2166 = vmatmul.bf16.gmra.mxu0 %v469
  %v2167 = vpop.f32.mrf.mxu0
  %v2168 = vadd.f32 %v2155, %v2167
  %v2169 = vpop.f32.mrf.mxu0
  %2170 = vdwg.mxu0
  %2171 = vmatpush.bf16.msra.mxu0 %v1654
  %2172 = vmatpush.bf16.msra.mxu0 %v1651
  %2173 = vmatpush.bf16.msra.mxu0 %v1648
  %2174 = vmatpush.bf16.msra.mxu0 %v1645
  %2175 = vmatpush.bf16.msra.mxu0 %v1642
  %2176 = vmatpush.bf16.msra.mxu0 %v1639
  %2177 = vmatpush.bf16.msra.mxu0 %v1636
  %2178 = vmatpush.bf16.msra.mxu0 %v1633
  %2179 = vmatmul.bf16.gmra.mxu0 %v470
  %v2180 = vpop.f32.mrf.mxu0
  %v2181 = vadd.f32 %v2168, %v2180
  %v2182 = vpop.f32.mrf.mxu0
  %2183 = vdwg.mxu0
  %2184 = vmatpush.bf16.msra.mxu0 %v1678
  %2185 = vmatpush.bf16.msra.mxu0 %v1675
  %2186 = vmatpush.bf16.msra.mxu0 %v1672
  %2187 = vmatpush.bf16.msra.mxu0 %v1669
  %2188 = vmatpush.bf16.msra.mxu0 %v1666
  %2189 = vmatpush.bf16.msra.mxu0 %v1663
  %2190 = vmatpush.bf16.msra.mxu0 %v1660
  %2191 = vmatpush.bf16.msra.mxu0 %v1657
  %2192 = vmatmul.bf16.gmra.mxu0 %v471
  %v2193 = vpop.f32.mrf.mxu0
  %v2194 = vadd.f32 %v2181, %v2193
  %v2195 = vpop.f32.mrf.mxu0
  %2196 = vdwg.mxu0
  %2197 = vmatpush.bf16.msra.mxu0 %v1702
  %2198 = vmatpush.bf16.msra.mxu0 %v1699
  %2199 = vmatpush.bf16.msra.mxu0 %v1696
  %2200 = vmatpush.bf16.msra.mxu0 %v1693
  %2201 = vmatpush.bf16.msra.mxu0 %v1690
  %2202 = vmatpush.bf16.msra.mxu0 %v1687
  %2203 = vmatpush.bf16.msra.mxu0 %v1684
  %2204 = vmatpush.bf16.msra.mxu0 %v1681
  %2205 = vmatmul.bf16.gmra.mxu0 %v472
  %v2206 = vpop.f32.mrf.mxu0
  %v2207 = vadd.f32 %v2194, %v2206
  %v2208 = vpop.f32.mrf.mxu0
  %2209 = vdwg.mxu0
  %2210 = vmatpush.bf16.msra.mxu0 %v1726
  %2211 = vmatpush.bf16.msra.mxu0 %v1723
  %2212 = vmatpush.bf16.msra.mxu0 %v1720
  %2213 = vmatpush.bf16.msra.mxu0 %v1717
  %2214 = vmatpush.bf16.msra.mxu0 %v1714
  %2215 = vmatpush.bf16.msra.mxu0 %v1711
  %2216 = vmatpush.bf16.msra.mxu0 %v1708
  %2217 = vmatpush.bf16.msra.mxu0 %v1705
  %2218 = vmatmul.bf16.gmra.mxu0 %v473
  %v2219 = vpop.f32.mrf.mxu0
  %v2220 = vadd.f32 %v2207, %v2219
  %v2221 = vpop.f32.mrf.mxu0
  %2222 = vdwg.mxu0
  %2223 = vmatpush.bf16.msra.mxu0 %v1750
  %2224 = vmatpush.bf16.msra.mxu0 %v1747
  %2225 = vmatpush.bf16.msra.mxu0 %v1744
  %2226 = vmatpush.bf16.msra.mxu0 %v1741
  %2227 = vmatpush.bf16.msra.mxu0 %v1738
  %2228 = vmatpush.bf16.msra.mxu0 %v1735
  %2229 = vmatpush.bf16.msra.mxu0 %v1732
  %2230 = vmatpush.bf16.msra.mxu0 %v1729
  %2231 = vmatmul.bf16.gmra.mxu0 %v474
  %v2232 = vpop.f32.mrf.mxu0
  %v2233 = vadd.f32 %v2220, %v2232
  %v2234 = vpop.f32.mrf.mxu0
  %2235 = vdwg.mxu0
  %2236 = vmatpush.bf16.msra.mxu0 %v1774
  %2237 = vmatpush.bf16.msra.mxu0 %v1771
  %2238 = vmatpush.bf16.msra.mxu0 %v1768
  %2239 = vmatpush.bf16.msra.mxu0 %v1765
  %2240 = vmatpush.bf16.msra.mxu0 %v1762
  %2241 = vmatpush.bf16.msra.mxu0 %v1759
  %2242 = vmatpush.bf16.msra.mxu0 %v1756
  %2243 = vmatpush.bf16.msra.mxu0 %v1753
  %2244 = vmatmul.bf16.gmra.mxu0 %v475
  %v2245 = vpop.f32.mrf.mxu0
  %v2246 = vadd.f32 %v2233, %v2245
  %v2247 = vpop.f32.mrf.mxu0
  %2248 = vdwg.mxu0
  %2249 = vmatpush.bf16.msra.mxu0 0
  %2250 = vmatpush.bf16.msra.mxu0 0
  %2251 = vmatpush.bf16.msra.mxu0 0
  %2252 = vmatpush.bf16.msra.mxu0 0
  %2253 = vmatpush.bf16.msra.mxu0 %v1786
  %2254 = vmatpush.bf16.msra.mxu0 %v1783
  %2255 = vmatpush.bf16.msra.mxu0 %v1780
  %2256 = vmatpush.bf16.msra.mxu0 %v1777
  %2257 = vmatmul.bf16.gmra.mxu0 %v2091
  %v2258 = vpop.f32.mrf.mxu0
  %v2259 = vadd.f32 %v2246, %v2258
  %v2260 = vpop.f32.mrf.mxu0
  %2261 = vdwg.mxu0
  %2262 = vmatpush.bf16.msra.mxu0 %v1511
  %2263 = vmatpush.bf16.msra.mxu0 %v1508
  %2264 = vmatpush.bf16.msra.mxu0 %v1505
  %2265 = vmatpush.bf16.msra.mxu0 %v1502
  %2266 = vmatpush.bf16.msra.mxu0 %v1499
  %2267 = vmatpush.bf16.msra.mxu0 %v1496
  %2268 = vmatpush.bf16.msra.mxu0 %v1493
  %2269 = vmatpush.bf16.msra.mxu0 %v1490
  %2270 = vmatmul.bf16.gmra.mxu0 %v464
  %v2271 = vpop.f32.mrf.mxu0
  %v2272 = vadd.f32 %v439, %v2271
  %v2273 = vpop.f32.mrf.mxu0
  %2274 = vdwg.mxu0
  %2275 = vmatpush.bf16.msra.mxu0 %v1535
  %2276 = vmatpush.bf16.msra.mxu0 %v1532
  %2277 = vmatpush.bf16.msra.mxu0 %v1529
  %2278 = vmatpush.bf16.msra.mxu0 %v1526
  %2279 = vmatpush.bf16.msra.mxu0 %v1523
  %2280 = vmatpush.bf16.msra.mxu0 %v1520
  %2281 = vmatpush.bf16.msra.mxu0 %v1517
  %2282 = vmatpush.bf16.msra.mxu0 %v1514
  %2283 = vmatmul.bf16.gmra.mxu0 %v465
  %v2284 = vpop.f32.mrf.mxu0
  %v2285 = vadd.f32 %v2272, %v2284
  %v2286 = vpop.f32.mrf.mxu0
  %2287 = vdwg.mxu0
  %2288 = vmatpush.bf16.msra.mxu0 %v1559
  %2289 = vmatpush.bf16.msra.mxu0 %v1556
  %2290 = vmatpush.bf16.msra.mxu0 %v1553
  %2291 = vmatpush.bf16.msra.mxu0 %v1550
  %2292 = vmatpush.bf16.msra.mxu0 %v1547
  %2293 = vmatpush.bf16.msra.mxu0 %v1544
  %2294 = vmatpush.bf16.msra.mxu0 %v1541
  %2295 = vmatpush.bf16.msra.mxu0 %v1538
  %2296 = vmatmul.bf16.gmra.mxu0 %v466
  %v2297 = vpop.f32.mrf.mxu0
  %v2298 = vadd.f32 %v2285, %v2297
  %v2299 = vpop.f32.mrf.mxu0
  %2300 = vdwg.mxu0
  %2301 = vmatpush.bf16.msra.mxu0 %v1583
  %2302 = vmatpush.bf16.msra.mxu0 %v1580
  %2303 = vmatpush.bf16.msra.mxu0 %v1577
  %2304 = vmatpush.bf16.msra.mxu0 %v1574
  %2305 = vmatpush.bf16.msra.mxu0 %v1571
  %2306 = vmatpush.bf16.msra.mxu0 %v1568
  %2307 = vmatpush.bf16.msra.mxu0 %v1565
  %2308 = vmatpush.bf16.msra.mxu0 %v1562
  %2309 = vmatmul.bf16.gmra.mxu0 %v467
  %v2310 = vpop.f32.mrf.mxu0
  %v2311 = vadd.f32 %v2298, %v2310
  %v2312 = vpop.f32.mrf.mxu0
  %2313 = vdwg.mxu0
  %2314 = vmatpush.bf16.msra.mxu0 %v1607
  %2315 = vmatpush.bf16.msra.mxu0 %v1604
  %2316 = vmatpush.bf16.msra.mxu0 %v1601
  %2317 = vmatpush.bf16.msra.mxu0 %v1598
  %2318 = vmatpush.bf16.msra.mxu0 %v1595
  %2319 = vmatpush.bf16.msra.mxu0 %v1592
  %2320 = vmatpush.bf16.msra.mxu0 %v1589
  %2321 = vmatpush.bf16.msra.mxu0 %v1586
  %2322 = vmatmul.bf16.gmra.mxu0 %v468
  %v2323 = vpop.f32.mrf.mxu0
  %v2324 = vadd.f32 %v2311, %v2323
  %v2325 = vpop.f32.mrf.mxu0
  %2326 = vdwg.mxu0
  %2327 = vmatpush.bf16.msra.mxu0 %v1631
  %2328 = vmatpush.bf16.msra.mxu0 %v1628
  %2329 = vmatpush.bf16.msra.mxu0 %v1625
  %2330 = vmatpush.bf16.msra.mxu0 %v1622
  %2331 = vmatpush.bf16.msra.mxu0 %v1619
  %2332 = vmatpush.bf16.msra.mxu0 %v1616
  %2333 = vmatpush.bf16.msra.mxu0 %v1613
  %2334 = vmatpush.bf16.msra.mxu0 %v1610
  %2335 = vmatmul.bf16.gmra.mxu0 %v469
  %v2336 = vpop.f32.mrf.mxu0
  %v2337 = vadd.f32 %v2324, %v2336
  %v2338 = vpop.f32.mrf.mxu0
  %2339 = vdwg.mxu0
  %2340 = vmatpush.bf16.msra.mxu0 %v1655
  %2341 = vmatpush.bf16.msra.mxu0 %v1652
  %2342 = vmatpush.bf16.msra.mxu0 %v1649
  %2343 = vmatpush.bf16.msra.mxu0 %v1646
  %2344 = vmatpush.bf16.msra.mxu0 %v1643
  %2345 = vmatpush.bf16.msra.mxu0 %v1640
  %2346 = vmatpush.bf16.msra.mxu0 %v1637
  %2347 = vmatpush.bf16.msra.mxu0 %v1634
  %2348 = vmatmul.bf16.gmra.mxu0 %v470
  %v2349 = vpop.f32.mrf.mxu0
  %v2350 = vadd.f32 %v2337, %v2349
  %v2351 = vpop.f32.mrf.mxu0
  %2352 = vdwg.mxu0
  %2353 = vmatpush.bf16.msra.mxu0 %v1679
  %2354 = vmatpush.bf16.msra.mxu0 %v1676
  %2355 = vmatpush.bf16.msra.mxu0 %v1673
  %2356 = vmatpush.bf16.msra.mxu0 %v1670
  %2357 = vmatpush.bf16.msra.mxu0 %v1667
  %2358 = vmatpush.bf16.msra.mxu0 %v1664
  %2359 = vmatpush.bf16.msra.mxu0 %v1661
  %2360 = vmatpush.bf16.msra.mxu0 %v1658
  %2361 = vmatmul.bf16.gmra.mxu0 %v471
  %v2362 = vpop.f32.mrf.mxu0
  %v2363 = vadd.f32 %v2350, %v2362
  %v2364 = vpop.f32.mrf.mxu0
  %2365 = vdwg.mxu0
  %2366 = vmatpush.bf16.msra.mxu0 %v1703
  %2367 = vmatpush.bf16.msra.mxu0 %v1700
  %2368 = vmatpush.bf16.msra.mxu0 %v1697
  %2369 = vmatpush.bf16.msra.mxu0 %v1694
  %2370 = vmatpush.bf16.msra.mxu0 %v1691
  %2371 = vmatpush.bf16.msra.mxu0 %v1688
  %2372 = vmatpush.bf16.msra.mxu0 %v1685
  %2373 = vmatpush.bf16.msra.mxu0 %v1682
  %2374 = vmatmul.bf16.gmra.mxu0 %v472
  %v2375 = vpop.f32.mrf.mxu0
  %v2376 = vadd.f32 %v2363, %v2375
  %v2377 = vpop.f32.mrf.mxu0
  %2378 = vdwg.mxu0
  %2379 = vmatpush.bf16.msra.mxu0 %v1727
  %2380 = vmatpush.bf16.msra.mxu0 %v1724
  %2381 = vmatpush.bf16.msra.mxu0 %v1721
  %2382 = vmatpush.bf16.msra.mxu0 %v1718
  %2383 = vmatpush.bf16.msra.mxu0 %v1715
  %2384 = vmatpush.bf16.msra.mxu0 %v1712
  %2385 = vmatpush.bf16.msra.mxu0 %v1709
  %2386 = vmatpush.bf16.msra.mxu0 %v1706
  %2387 = vmatmul.bf16.gmra.mxu0 %v473
  %v2388 = vpop.f32.mrf.mxu0
  %v2389 = vadd.f32 %v2376, %v2388
  %v2390 = vpop.f32.mrf.mxu0
  %2391 = vdwg.mxu0
  %2392 = vmatpush.bf16.msra.mxu0 %v1751
  %2393 = vmatpush.bf16.msra.mxu0 %v1748
  %2394 = vmatpush.bf16.msra.mxu0 %v1745
  %2395 = vmatpush.bf16.msra.mxu0 %v1742
  %2396 = vmatpush.bf16.msra.mxu0 %v1739
  %2397 = vmatpush.bf16.msra.mxu0 %v1736
  %2398 = vmatpush.bf16.msra.mxu0 %v1733
  %2399 = vmatpush.bf16.msra.mxu0 %v1730
  %2400 = vmatmul.bf16.gmra.mxu0 %v474
  %v2401 = vpop.f32.mrf.mxu0
  %v2402 = vadd.f32 %v2389, %v2401
  %v2403 = vpop.f32.mrf.mxu0
  %2404 = vdwg.mxu0
  %2405 = vmatpush.bf16.msra.mxu0 %v1775
  %2406 = vmatpush.bf16.msra.mxu0 %v1772
  %2407 = vmatpush.bf16.msra.mxu0 %v1769
  %2408 = vmatpush.bf16.msra.mxu0 %v1766
  %2409 = vmatpush.bf16.msra.mxu0 %v1763
  %2410 = vmatpush.bf16.msra.mxu0 %v1760
  %2411 = vmatpush.bf16.msra.mxu0 %v1757
  %2412 = vmatpush.bf16.msra.mxu0 %v1754
  %2413 = vmatmul.bf16.gmra.mxu0 %v475
  %v2414 = vpop.f32.mrf.mxu0
  %v2415 = vadd.f32 %v2402, %v2414
  %v2416 = vpop.f32.mrf.mxu0
  %2417 = vdwg.mxu0
  %2418 = vmatpush.bf16.msra.mxu0 0
  %2419 = vmatpush.bf16.msra.mxu0 0
  %2420 = vmatpush.bf16.msra.mxu0 0
  %2421 = vmatpush.bf16.msra.mxu0 0
  %2422 = vmatpush.bf16.msra.mxu0 %v1787
  %2423 = vmatpush.bf16.msra.mxu0 %v1784
  %2424 = vmatpush.bf16.msra.mxu0 %v1781
  %2425 = vmatpush.bf16.msra.mxu0 %v1778
  %2426 = vmatmul.bf16.gmra.mxu0 %v2091
  %v2427 = vpop.f32.mrf.mxu0
  %v2428 = vadd.f32 %v2415, %v2427
  %v2429 = vpop.f32.mrf.mxu0
  %2430 = vdwg.mxu0
  %2431 = vmatpush.bf16.msra.mxu0 %v1512
  %2432 = vmatpush.bf16.msra.mxu0 %v1509
  %2433 = vmatpush.bf16.msra.mxu0 %v1506
  %2434 = vmatpush.bf16.msra.mxu0 %v1503
  %2435 = vmatpush.bf16.msra.mxu0 %v1500
  %2436 = vmatpush.bf16.msra.mxu0 %v1497
  %2437 = vmatpush.bf16.msra.mxu0 %v1494
  %2438 = vmatpush.bf16.msra.mxu0 %v1491
  %2439 = vmatmul.bf16.gmra.mxu0 %v464
  %v2440 = vpop.f32.mrf.mxu0
  %v2441 = vadd.f32 %v440, %v2440
  %v2442 = vpop.f32.mrf.mxu0
  %2443 = vdwg.mxu0
  %2444 = vmatpush.bf16.msra.mxu0 %v1536
  %2445 = vmatpush.bf16.msra.mxu0 %v1533
  %2446 = vmatpush.bf16.msra.mxu0 %v1530
  %2447 = vmatpush.bf16.msra.mxu0 %v1527
  %2448 = vmatpush.bf16.msra.mxu0 %v1524
  %2449 = vmatpush.bf16.msra.mxu0 %v1521
  %2450 = vmatpush.bf16.msra.mxu0 %v1518
  %2451 = vmatpush.bf16.msra.mxu0 %v1515
  %2452 = vmatmul.bf16.gmra.mxu0 %v465
  %v2453 = vpop.f32.mrf.mxu0
  %v2454 = vadd.f32 %v2441, %v2453
  %v2455 = vpop.f32.mrf.mxu0
  %2456 = vdwg.mxu0
  %2457 = vmatpush.bf16.msra.mxu0 %v1560
  %2458 = vmatpush.bf16.msra.mxu0 %v1557
  %2459 = vmatpush.bf16.msra.mxu0 %v1554
  %2460 = vmatpush.bf16.msra.mxu0 %v1551
  %2461 = vmatpush.bf16.msra.mxu0 %v1548
  %2462 = vmatpush.bf16.msra.mxu0 %v1545
  %2463 = vmatpush.bf16.msra.mxu0 %v1542
  %2464 = vmatpush.bf16.msra.mxu0 %v1539
  %2465 = vmatmul.bf16.gmra.mxu0 %v466
  %v2466 = vpop.f32.mrf.mxu0
  %v2467 = vadd.f32 %v2454, %v2466
  %v2468 = vpop.f32.mrf.mxu0
  %2469 = vdwg.mxu0
  %2470 = vmatpush.bf16.msra.mxu0 %v1584
  %2471 = vmatpush.bf16.msra.mxu0 %v1581
  %2472 = vmatpush.bf16.msra.mxu0 %v1578
  %2473 = vmatpush.bf16.msra.mxu0 %v1575
  %2474 = vmatpush.bf16.msra.mxu0 %v1572
  %2475 = vmatpush.bf16.msra.mxu0 %v1569
  %2476 = vmatpush.bf16.msra.mxu0 %v1566
  %2477 = vmatpush.bf16.msra.mxu0 %v1563
  %2478 = vmatmul.bf16.gmra.mxu0 %v467
  %v2479 = vpop.f32.mrf.mxu0
  %v2480 = vadd.f32 %v2467, %v2479
  %v2481 = vpop.f32.mrf.mxu0
  %2482 = vdwg.mxu0
  %2483 = vmatpush.bf16.msra.mxu0 %v1608
  %2484 = vmatpush.bf16.msra.mxu0 %v1605
  %2485 = vmatpush.bf16.msra.mxu0 %v1602
  %2486 = vmatpush.bf16.msra.mxu0 %v1599
  %2487 = vmatpush.bf16.msra.mxu0 %v1596
  %2488 = vmatpush.bf16.msra.mxu0 %v1593
  %2489 = vmatpush.bf16.msra.mxu0 %v1590
  %2490 = vmatpush.bf16.msra.mxu0 %v1587
  %2491 = vmatmul.bf16.gmra.mxu0 %v468
  %v2492 = vpop.f32.mrf.mxu0
  %v2493 = vadd.f32 %v2480, %v2492
  %v2494 = vpop.f32.mrf.mxu0
  %2495 = vdwg.mxu0
  %2496 = vmatpush.bf16.msra.mxu0 %v1632
  %2497 = vmatpush.bf16.msra.mxu0 %v1629
  %2498 = vmatpush.bf16.msra.mxu0 %v1626
  %2499 = vmatpush.bf16.msra.mxu0 %v1623
  %2500 = vmatpush.bf16.msra.mxu0 %v1620
  %2501 = vmatpush.bf16.msra.mxu0 %v1617
  %2502 = vmatpush.bf16.msra.mxu0 %v1614
  %2503 = vmatpush.bf16.msra.mxu0 %v1611
  %2504 = vmatmul.bf16.gmra.mxu0 %v469
  %v2505 = vpop.f32.mrf.mxu0
  %v2506 = vadd.f32 %v2493, %v2505
  %v2507 = vpop.f32.mrf.mxu0
  %2508 = vdwg.mxu0
  %2509 = vmatpush.bf16.msra.mxu0 %v1656
  %2510 = vmatpush.bf16.msra.mxu0 %v1653
  %2511 = vmatpush.bf16.msra.mxu0 %v1650
  %2512 = vmatpush.bf16.msra.mxu0 %v1647
  %2513 = vmatpush.bf16.msra.mxu0 %v1644
  %2514 = vmatpush.bf16.msra.mxu0 %v1641
  %2515 = vmatpush.bf16.msra.mxu0 %v1638
  %2516 = vmatpush.bf16.msra.mxu0 %v1635
  %2517 = vmatmul.bf16.gmra.mxu0 %v470
  %v2518 = vpop.f32.mrf.mxu0
  %v2519 = vadd.f32 %v2506, %v2518
  %v2520 = vpop.f32.mrf.mxu0
  %2521 = vdwg.mxu0
  %2522 = vmatpush.bf16.msra.mxu0 %v1680
  %2523 = vmatpush.bf16.msra.mxu0 %v1677
  %2524 = vmatpush.bf16.msra.mxu0 %v1674
  %2525 = vmatpush.bf16.msra.mxu0 %v1671
  %2526 = vmatpush.bf16.msra.mxu0 %v1668
  %2527 = vmatpush.bf16.msra.mxu0 %v1665
  %2528 = vmatpush.bf16.msra.mxu0 %v1662
  %2529 = vmatpush.bf16.msra.mxu0 %v1659
  %2530 = vmatmul.bf16.gmra.mxu0 %v471
  %v2531 = vpop.f32.mrf.mxu0
  %v2532 = vadd.f32 %v2519, %v2531
  %v2533 = vpop.f32.mrf.mxu0
  %2534 = vdwg.mxu0
  %2535 = vmatpush.bf16.msra.mxu0 %v1704
  %2536 = vmatpush.bf16.msra.mxu0 %v1701
  %2537 = vmatpush.bf16.msra.mxu0 %v1698
  %2538 = vmatpush.bf16.msra.mxu0 %v1695
  %2539 = vmatpush.bf16.msra.mxu0 %v1692
  %2540 = vmatpush.bf16.msra.mxu0 %v1689
  %2541 = vmatpush.bf16.msra.mxu0 %v1686
  %2542 = vmatpush.bf16.msra.mxu0 %v1683
  %2543 = vmatmul.bf16.gmra.mxu0 %v472
  %v2544 = vpop.f32.mrf.mxu0
  %v2545 = vadd.f32 %v2532, %v2544
  %v2546 = vpop.f32.mrf.mxu0
  %2547 = vdwg.mxu0
  %2548 = vmatpush.bf16.msra.mxu0 %v1728
  %2549 = vmatpush.bf16.msra.mxu0 %v1725
  %2550 = vmatpush.bf16.msra.mxu0 %v1722
  %2551 = vmatpush.bf16.msra.mxu0 %v1719
  %2552 = vmatpush.bf16.msra.mxu0 %v1716
  %2553 = vmatpush.bf16.msra.mxu0 %v1713
  %2554 = vmatpush.bf16.msra.mxu0 %v1710
  %2555 = vmatpush.bf16.msra.mxu0 %v1707
  %2556 = vmatmul.bf16.gmra.mxu0 %v473
  %v2557 = vpop.f32.mrf.mxu0
  %v2558 = vadd.f32 %v2545, %v2557
  %v2559 = vpop.f32.mrf.mxu0
  %2560 = vdwg.mxu0
  %2561 = vmatpush.bf16.msra.mxu0 %v1752
  %2562 = vmatpush.bf16.msra.mxu0 %v1749
  %2563 = vmatpush.bf16.msra.mxu0 %v1746
  %2564 = vmatpush.bf16.msra.mxu0 %v1743
  %2565 = vmatpush.bf16.msra.mxu0 %v1740
  %2566 = vmatpush.bf16.msra.mxu0 %v1737
  %2567 = vmatpush.bf16.msra.mxu0 %v1734
  %2568 = vmatpush.bf16.msra.mxu0 %v1731
  %2569 = vmatmul.bf16.gmra.mxu0 %v474
  %v2570 = vpop.f32.mrf.mxu0
  %v2571 = vadd.f32 %v2558, %v2570
  %v2572 = vpop.f32.mrf.mxu0
  %2573 = vdwg.mxu0
  %2574 = vmatpush.bf16.msra.mxu0 %v1776
  %2575 = vmatpush.bf16.msra.mxu0 %v1773
  %2576 = vmatpush.bf16.msra.mxu0 %v1770
  %2577 = vmatpush.bf16.msra.mxu0 %v1767
  %2578 = vmatpush.bf16.msra.mxu0 %v1764
  %2579 = vmatpush.bf16.msra.mxu0 %v1761
  %2580 = vmatpush.bf16.msra.mxu0 %v1758
  %2581 = vmatpush.bf16.msra.mxu0 %v1755
  %2582 = vmatmul.bf16.gmra.mxu0 %v475
  %v2583 = vpop.f32.mrf.mxu0
  %v2584 = vadd.f32 %v2571, %v2583
  %v2585 = vpop.f32.mrf.mxu0
  %2586 = vdwg.mxu0
  %2587 = vmatpush.bf16.msra.mxu0 0
  %2588 = vmatpush.bf16.msra.mxu0 0
  %2589 = vmatpush.bf16.msra.mxu0 0
  %2590 = vmatpush.bf16.msra.mxu0 0
  %2591 = vmatpush.bf16.msra.mxu0 %v1788
  %2592 = vmatpush.bf16.msra.mxu0 %v1785
  %2593 = vmatpush.bf16.msra.mxu0 %v1782
  %2594 = vmatpush.bf16.msra.mxu0 %v1779
  %2595 = vmatmul.bf16.gmra.mxu0 %v2091
  %v2596 = vpop.f32.mrf.mxu0
  %v2597 = vadd.f32 %v2584, %v2596
  %v2598 = vpop.f32.mrf.mxu0
  %2599 = vdwg.mxu0
  %v2600 = vmax.f32 %v2259, 0.0
  %v2601 = vmax.f32 %v2428, 0.0
  %v2602 = vmax.f32 %v2597, 0.0
  %v2603 = vpack.c.bf16 %v2600, %v2600
  %v2604 = vpack.c.bf16 %v2601, %v2601
  %v2605 = vpack.c.bf16 %v2602, %v2602
  %v2606 = vld [vmem:[%s3] sm:$0xff]
  %v2607 = vld [vmem:[%s3 + $0x8] sm:$0xff]
  %v2608 = vld [vmem:[%s3 + $0x10] sm:$0xff]
  %v2609 = vld [vmem:[%s3 + $0x18] sm:$0xff]
  %v2610 = vld [vmem:[%s3 + $0x20] sm:$0xff]
  %v2611 = vld [vmem:[%s3 + $0x28] sm:$0xff]
  %v2612 = vld [vmem:[%s3 + $0x30] sm:$0xff]
  %v2613 = vld [vmem:[%s3 + $0x38] sm:$0xff]
  %v2614 = vld [vmem:[%s3 + $0x40] sm:$0xff]
  %v2615 = vld [vmem:[%s3 + $0x48] sm:$0xff]
  %v2616 = vld [vmem:[%s3 + $0x50] sm:$0xff]
  %v2617 = vld [vmem:[%s3 + $0x58] sm:$0xff]
  %v2618 = vld [vmem:[%s3 + $0x60] sm:$0xff]
  %v2619 = vld [vmem:[%s3 + $0x68] sm:$0xff]
  %v2620 = vld [vmem:[%s3 + $0x70] sm:$0xff]
  %v2621 = vld [vmem:[%s3 + $0x78] sm:$0xff]
  %v2622 = vld [vmem:[%s3 + $0x80] sm:$0xff]
  %v2623 = vld [vmem:[%s3 + $0x88] sm:$0xff]
  %v2624 = vld [vmem:[%s3 + $0x90] sm:$0xff]
  %v2625 = vld [vmem:[%s3 + $0x98] sm:$0xff]
  %v2626 = vld [vmem:[%s3 + $0xa0] sm:$0xff]
  %v2627 = vld [vmem:[%s3 + $0xa8] sm:$0xff]
  %v2628 = vld [vmem:[%s3 + $0xb0] sm:$0xff]
  %v2629 = vld [vmem:[%s3 + $0xb8] sm:$0xff]
  %v2630 = vld [vmem:[%s3 + $0xc0] sm:$0xff]
  %v2631 = vld [vmem:[%s3 + $0xc8] sm:$0xff]
  %v2632 = vld [vmem:[%s3 + $0xd0] sm:$0xff]
  %v2633 = vld [vmem:[%s3 + $0xd8] sm:$0xff]
  %v2634 = vld [vmem:[%s3 + $0xe0] sm:$0xff]
  %v2635 = vld [vmem:[%s3 + $0xe8] sm:$0xff]
  %v2636 = vld [vmem:[%s3 + $0xf0] sm:$0xff]
  %v2637 = vld [vmem:[%s3 + $0xf8] sm:$0xff]
  %v2638 = vld [vmem:[%s3 + $0x100] sm:$0xff]
  %v2639 = vld [vmem:[%s3 + $0x108] sm:$0xff]
  %v2640 = vld [vmem:[%s3 + $0x110] sm:$0xff]
  %v2641 = vld [vmem:[%s3 + $0x118] sm:$0xff]
  %v2642 = vld [vmem:[%s3 + $0x120] sm:$0xff]
  %v2643 = vld [vmem:[%s3 + $0x128] sm:$0xff]
  %v2644 = vld [vmem:[%s3 + $0x130] sm:$0xff]
  %v2645 = vld [vmem:[%s3 + $0x138] sm:$0xff]
  %v2646 = vld [vmem:[%s3 + $0x140] sm:$0xff]
  %v2647 = vld [vmem:[%s3 + $0x148] sm:$0xff]
  %v2648 = vld [vmem:[%s3 + $0x150] sm:$0xff]
  %v2649 = vld [vmem:[%s3 + $0x158] sm:$0xff]
  %v2650 = vld [vmem:[%s3 + $0x160] sm:$0xff]
  %v2651 = vld [vmem:[%s3 + $0x168] sm:$0xff]
  %v2652 = vld [vmem:[%s3 + $0x170] sm:$0xff]
  %v2653 = vld [vmem:[%s3 + $0x178] sm:$0xff]
  %v2654 = vld [vmem:[%s4] sm:$0x3]
  %v2656 = vperm.slane %v2654, 0
  %v2657 = vperm.slane %v2654, 1
  %v2708 = vunpack.c.l.b16 %v2606
  %v2709 = vunpack.c.h.b16 %v2606
  %v2710 = vunpack.c.l.b16 %v2607
  %v2711 = vunpack.c.h.b16 %v2607
  %v2712 = vunpack.c.l.b16 %v2608
  %v2713 = vunpack.c.h.b16 %v2608
  %v2714 = vunpack.c.l.b16 %v2609
  %v2715 = vunpack.c.h.b16 %v2609
  %v2716 = vunpack.c.l.b16 %v2610
  %v2717 = vunpack.c.h.b16 %v2610
  %v2718 = vunpack.c.l.b16 %v2611
  %v2719 = vunpack.c.h.b16 %v2611
  %v2720 = vunpack.c.l.b16 %v2612
  %v2721 = vunpack.c.h.b16 %v2612
  %v2722 = vunpack.c.l.b16 %v2613
  %v2723 = vunpack.c.h.b16 %v2613
  %v2724 = vunpack.c.l.b16 %v2614
  %v2725 = vunpack.c.h.b16 %v2614
  %v2726 = vunpack.c.l.b16 %v2615
  %v2727 = vunpack.c.h.b16 %v2615
  %v2728 = vunpack.c.l.b16 %v2616
  %v2729 = vunpack.c.h.b16 %v2616
  %v2730 = vunpack.c.l.b16 %v2617
  %v2731 = vunpack.c.h.b16 %v2617
  %v2732 = vunpack.c.l.b16 %v2618
  %v2733 = vunpack.c.h.b16 %v2618
  %v2734 = vunpack.c.l.b16 %v2619
  %v2735 = vunpack.c.h.b16 %v2619
  %v2736 = vunpack.c.l.b16 %v2620
  %v2737 = vunpack.c.h.b16 %v2620
  %v2738 = vunpack.c.l.b16 %v2621
  %v2739 = vunpack.c.h.b16 %v2621
  %v2740 = vunpack.c.l.b16 %v2622
  %v2741 = vunpack.c.h.b16 %v2622
  %v2742 = vunpack.c.l.b16 %v2623
  %v2743 = vunpack.c.h.b16 %v2623
  %v2744 = vunpack.c.l.b16 %v2624
  %v2745 = vunpack.c.h.b16 %v2624
  %v2746 = vunpack.c.l.b16 %v2625
  %v2747 = vunpack.c.h.b16 %v2625
  %v2748 = vunpack.c.l.b16 %v2626
  %v2749 = vunpack.c.h.b16 %v2626
  %v2750 = vunpack.c.l.b16 %v2627
  %v2751 = vunpack.c.h.b16 %v2627
  %v2752 = vunpack.c.l.b16 %v2628
  %v2753 = vunpack.c.h.b16 %v2628
  %v2754 = vunpack.c.l.b16 %v2629
  %v2755 = vunpack.c.h.b16 %v2629
  %v2756 = vunpack.c.l.b16 %v2630
  %v2757 = vunpack.c.h.b16 %v2630
  %v2758 = vunpack.c.l.b16 %v2631
  %v2759 = vunpack.c.h.b16 %v2631
  %v2760 = vunpack.c.l.b16 %v2632
  %v2761 = vunpack.c.h.b16 %v2632
  %v2762 = vunpack.c.l.b16 %v2633
  %v2763 = vunpack.c.h.b16 %v2633
  %v2764 = vunpack.c.l.b16 %v2634
  %v2765 = vunpack.c.h.b16 %v2634
  %v2766 = vunpack.c.l.b16 %v2635
  %v2767 = vunpack.c.h.b16 %v2635
  %v2768 = vunpack.c.l.b16 %v2636
  %v2769 = vunpack.c.h.b16 %v2636
  %v2770 = vunpack.c.l.b16 %v2637
  %v2771 = vunpack.c.h.b16 %v2637
  %v2772 = vunpack.c.l.b16 %v2638
  %v2773 = vunpack.c.h.b16 %v2638
  %v2774 = vunpack.c.l.b16 %v2639
  %v2775 = vunpack.c.h.b16 %v2639
  %v2776 = vunpack.c.l.b16 %v2640
  %v2777 = vunpack.c.h.b16 %v2640
  %v2778 = vunpack.c.l.b16 %v2641
  %v2779 = vunpack.c.h.b16 %v2641
  %v2780 = vunpack.c.l.b16 %v2642
  %v2781 = vunpack.c.h.b16 %v2642
  %v2782 = vunpack.c.l.b16 %v2643
  %v2783 = vunpack.c.h.b16 %v2643
  %v2784 = vunpack.c.l.b16 %v2644
  %v2785 = vunpack.c.h.b16 %v2644
  %v2786 = vunpack.c.l.b16 %v2645
  %v2787 = vunpack.c.h.b16 %v2645
  %v2788 = vunpack.c.l.b16 %v2646
  %v2789 = vunpack.c.h.b16 %v2646
  %v2790 = vunpack.c.l.b16 %v2647
  %v2791 = vunpack.c.h.b16 %v2647
  %v2792 = vunpack.c.l.b16 %v2648
  %v2793 = vunpack.c.h.b16 %v2648
  %v2794 = vunpack.c.l.b16 %v2649
  %v2795 = vunpack.c.h.b16 %v2649
  %v2796 = vunpack.c.l.b16 %v2650
  %v2797 = vunpack.c.h.b16 %v2650
  %v2798 = vunpack.c.l.b16 %v2651
  %v2799 = vunpack.c.h.b16 %v2651
  %v2800 = vunpack.c.l.b16 %v2652
  %v2801 = vunpack.c.h.b16 %v2652
  %v2802 = vunpack.c.l.b16 %v2653
  %v2803 = vunpack.c.h.b16 %v2653
  %v2804 = vpack.c.b16 %v2710, %v2708
  %v2805 = vpack.c.b16 %v2711, %v2709
  %v2806 = vpack.c.b16 %v2714, %v2712
  %v2807 = vpack.c.b16 %v2715, %v2713
  %v2808 = vpack.c.b16 %v2718, %v2716
  %v2809 = vpack.c.b16 %v2719, %v2717
  %v2810 = vpack.c.b16 %v2722, %v2720
  %v2811 = vpack.c.b16 %v2723, %v2721
  %v2812 = vpack.c.b16 %v2726, %v2724
  %v2813 = vpack.c.b16 %v2727, %v2725
  %v2814 = vpack.c.b16 %v2730, %v2728
  %v2815 = vpack.c.b16 %v2731, %v2729
  %v2816 = vpack.c.b16 %v2734, %v2732
  %v2817 = vpack.c.b16 %v2735, %v2733
  %v2818 = vpack.c.b16 %v2738, %v2736
  %v2819 = vpack.c.b16 %v2739, %v2737
  %v2820 = vpack.c.b16 %v2742, %v2740
  %v2821 = vpack.c.b16 %v2743, %v2741
  %v2822 = vpack.c.b16 %v2746, %v2744
  %v2823 = vpack.c.b16 %v2747, %v2745
  %v2824 = vpack.c.b16 %v2750, %v2748
  %v2825 = vpack.c.b16 %v2751, %v2749
  %v2826 = vpack.c.b16 %v2754, %v2752
  %v2827 = vpack.c.b16 %v2755, %v2753
  %v2828 = vpack.c.b16 %v2758, %v2756
  %v2829 = vpack.c.b16 %v2759, %v2757
  %v2830 = vpack.c.b16 %v2762, %v2760
  %v2831 = vpack.c.b16 %v2763, %v2761
  %v2832 = vpack.c.b16 %v2766, %v2764
  %v2833 = vpack.c.b16 %v2767, %v2765
  %v2834 = vpack.c.b16 %v2770, %v2768
  %v2835 = vpack.c.b16 %v2771, %v2769
  %v2836 = vpack.c.b16 %v2774, %v2772
  %v2837 = vpack.c.b16 %v2775, %v2773
  %v2838 = vpack.c.b16 %v2778, %v2776
  %v2839 = vpack.c.b16 %v2779, %v2777
  %v2840 = vpack.c.b16 %v2782, %v2780
  %v2841 = vpack.c.b16 %v2783, %v2781
  %v2842 = vpack.c.b16 %v2786, %v2784
  %v2843 = vpack.c.b16 %v2787, %v2785
  %v2844 = vpack.c.b16 %v2790, %v2788
  %v2845 = vpack.c.b16 %v2791, %v2789
  %v2846 = vpack.c.b16 %v2794, %v2792
  %v2847 = vpack.c.b16 %v2795, %v2793
  %v2848 = vpack.c.b16 %v2798, %v2796
  %v2849 = vpack.c.b16 %v2799, %v2797
  %v2850 = vpack.c.b16 %v2802, %v2800
  %v2851 = vpack.c.b16 %v2803, %v2801
  %2900 = vmatpush.bf16.msra.mxu0 %v2818
  %2901 = vmatpush.bf16.msra.mxu0 %v2816
  %2902 = vmatpush.bf16.msra.mxu0 %v2814
  %2903 = vmatpush.bf16.msra.mxu0 %v2812
  %2904 = vmatpush.bf16.msra.mxu0 %v2810
  %2905 = vmatpush.bf16.msra.mxu0 %v2808
  %2906 = vmatpush.bf16.msra.mxu0 %v2806
  %2907 = vmatpush.bf16.msra.mxu0 %v2804
  %2908 = vmatmul.bf16.gmra.mxu0 %v2603
  %v2909 = vpop.f32.mrf.mxu0
  %v2910 = vadd.f32 %v2656, %v2909
  %v2911 = vpop.f32.mrf.mxu0
  %2912 = vdwg.mxu0
  %2913 = vmatpush.bf16.msra.mxu0 %v2834
  %2914 = vmatpush.bf16.msra.mxu0 %v2832
  %2915 = vmatpush.bf16.msra.mxu0 %v2830
  %2916 = vmatpush.bf16.msra.mxu0 %v2828
  %2917 = vmatpush.bf16.msra.mxu0 %v2826
  %2918 = vmatpush.bf16.msra.mxu0 %v2824
  %2919 = vmatpush.bf16.msra.mxu0 %v2822
  %2920 = vmatpush.bf16.msra.mxu0 %v2820
  %2921 = vmatmul.bf16.gmra.mxu0 %v2604
  %v2922 = vpop.f32.mrf.mxu0
  %v2923 = vadd.f32 %v2910, %v2922
  %v2924 = vpop.f32.mrf.mxu0
  %2925 = vdwg.mxu0
  %2926 = vmatpush.bf16.msra.mxu0 %v2850
  %2927 = vmatpush.bf16.msra.mxu0 %v2848
  %2928 = vmatpush.bf16.msra.mxu0 %v2846
  %2929 = vmatpush.bf16.msra.mxu0 %v2844
  %2930 = vmatpush.bf16.msra.mxu0 %v2842
  %2931 = vmatpush.bf16.msra.mxu0 %v2840
  %2932 = vmatpush.bf16.msra.mxu0 %v2838
  %2933 = vmatpush.bf16.msra.mxu0 %v2836
  %2934 = vmatmul.bf16.gmra.mxu0 %v2605
  %v2935 = vpop.f32.mrf.mxu0
  %v2936 = vadd.f32 %v2923, %v2935
  %v2937 = vpop.f32.mrf.mxu0
  %2938 = vdwg.mxu0
  %2939 = vmatpush.bf16.msra.mxu0 %v2819
  %2940 = vmatpush.bf16.msra.mxu0 %v2817
  %2941 = vmatpush.bf16.msra.mxu0 %v2815
  %2942 = vmatpush.bf16.msra.mxu0 %v2813
  %2943 = vmatpush.bf16.msra.mxu0 %v2811
  %2944 = vmatpush.bf16.msra.mxu0 %v2809
  %2945 = vmatpush.bf16.msra.mxu0 %v2807
  %2946 = vmatpush.bf16.msra.mxu0 %v2805
  %2947 = vmatmul.bf16.gmra.mxu0 %v2603
  %v2948 = vpop.f32.mrf.mxu0
  %v2949 = vadd.f32 %v2657, %v2948
  %v2950 = vpop.f32.mrf.mxu0
  %2951 = vdwg.mxu0
  %2952 = vmatpush.bf16.msra.mxu0 %v2835
  %2953 = vmatpush.bf16.msra.mxu0 %v2833
  %2954 = vmatpush.bf16.msra.mxu0 %v2831
  %2955 = vmatpush.bf16.msra.mxu0 %v2829
  %2956 = vmatpush.bf16.msra.mxu0 %v2827
  %2957 = vmatpush.bf16.msra.mxu0 %v2825
  %2958 = vmatpush.bf16.msra.mxu0 %v2823
  %2959 = vmatpush.bf16.msra.mxu0 %v2821
  %2960 = vmatmul.bf16.gmra.mxu0 %v2604
  %v2961 = vpop.f32.mrf.mxu0
  %v2962 = vadd.f32 %v2949, %v2961
  %v2963 = vpop.f32.mrf.mxu0
  %2964 = vdwg.mxu0
  %2965 = vmatpush.bf16.msra.mxu0 %v2851
  %2966 = vmatpush.bf16.msra.mxu0 %v2849
  %2967 = vmatpush.bf16.msra.mxu0 %v2847
  %2968 = vmatpush.bf16.msra.mxu0 %v2845
  %2969 = vmatpush.bf16.msra.mxu0 %v2843
  %2970 = vmatpush.bf16.msra.mxu0 %v2841
  %2971 = vmatpush.bf16.msra.mxu0 %v2839
  %2972 = vmatpush.bf16.msra.mxu0 %v2837
  %2973 = vmatmul.bf16.gmra.mxu0 %v2605
  %v2974 = vpop.f32.mrf.mxu0
  %v2975 = vadd.f32 %v2962, %v2974
  %v2976 = vpop.f32.mrf.mxu0
  %2977 = vdwg.mxu0
  %v2978 = vmax.f32 %v2936, 0.0
  %v2979 = vmax.f32 %v2975, 0.0
  %v2980 = vpack.c.bf16 %v2978, %v2978
  %v2981 = vpack.c.bf16 %v2979, %v2979
  %v2982 = vld [vmem:[%s5] sm:$0xf]
  %v2983 = vld [vmem:[%s5 + $0x4] sm:$0xf]
  %v2984 = vld [vmem:[%s5 + $0x8] sm:$0xf]
  %v2985 = vld [vmem:[%s5 + $0xc] sm:$0xf]
  %v2986 = vld [vmem:[%s5 + $0x10] sm:$0xf]
  %v2987 = vld [vmem:[%s5 + $0x14] sm:$0xf]
  %v2988 = vld [vmem:[%s5 + $0x18] sm:$0xf]
  %v2989 = vld [vmem:[%s5 + $0x1c] sm:$0xf]
  %v2990 = vld [vmem:[%s5 + $0x20] sm:$0xf]
  %v2991 = vld [vmem:[%s5 + $0x24] sm:$0xf]
  %v2992 = vld [vmem:[%s5 + $0x28] sm:$0xf]
  %v2993 = vld [vmem:[%s5 + $0x2c] sm:$0xf]
  %v2994 = vld [vmem:[%s5 + $0x30] sm:$0xf]
  %v2995 = vld [vmem:[%s5 + $0x34] sm:$0xf]
  %v2996 = vld [vmem:[%s5 + $0x38] sm:$0xf]
  %v2997 = vld [vmem:[%s5 + $0x3c] sm:$0xf]
  %v2998 = vld [vmem:[%s5 + $0x40] sm:$0xf]
  %v2999 = vld [vmem:[%s5 + $0x44] sm:$0xf]
  %v3000 = vld [vmem:[%s5 + $0x48] sm:$0xf]
  %v3001 = vld [vmem:[%s5 + $0x4c] sm:$0xf]
  %v3002 = vld [vmem:[%s5 + $0x50] sm:$0xf]
  %v3003 = vld [vmem:[%s5 + $0x54] sm:$0xf]
  %v3004 = vld [vmem:[%s5 + $0x58] sm:$0xf]
  %v3005 = vld [vmem:[%s5 + $0x5c] sm:$0xf]
  %v3006 = vld [vmem:[%s6] sm:$0x1]
  %v3008 = vperm.slane %v3006, 0
  %v3034 = vunpack.c.l.b16 %v2982
  %v3035 = vunpack.c.l.b16 %v2983
  %v3036 = vunpack.c.l.b16 %v2984
  %v3037 = vunpack.c.l.b16 %v2985
  %v3038 = vunpack.c.l.b16 %v2986
  %v3039 = vunpack.c.l.b16 %v2987
  %v3040 = vunpack.c.l.b16 %v2988
  %v3041 = vunpack.c.l.b16 %v2989
  %v3042 = vunpack.c.l.b16 %v2990
  %v3043 = vunpack.c.l.b16 %v2991
  %v3044 = vunpack.c.l.b16 %v2992
  %v3045 = vunpack.c.l.b16 %v2993
  %v3046 = vunpack.c.l.b16 %v2994
  %v3047 = vunpack.c.l.b16 %v2995
  %v3048 = vunpack.c.l.b16 %v2996
  %v3049 = vunpack.c.l.b16 %v2997
  %v3050 = vunpack.c.l.b16 %v2998
  %v3051 = vunpack.c.l.b16 %v2999
  %v3052 = vunpack.c.l.b16 %v3000
  %v3053 = vunpack.c.l.b16 %v3001
  %v3054 = vunpack.c.l.b16 %v3002
  %v3055 = vunpack.c.l.b16 %v3003
  %v3056 = vunpack.c.l.b16 %v3004
  %v3057 = vunpack.c.l.b16 %v3005
  %v3058 = vpack.c.b16 %v3035, %v3034
  %v3059 = vpack.c.b16 %v3037, %v3036
  %v3060 = vpack.c.b16 %v3039, %v3038
  %v3061 = vpack.c.b16 %v3041, %v3040
  %v3062 = vpack.c.b16 %v3043, %v3042
  %v3063 = vpack.c.b16 %v3045, %v3044
  %v3064 = vpack.c.b16 %v3047, %v3046
  %v3065 = vpack.c.b16 %v3049, %v3048
  %v3066 = vpack.c.b16 %v3051, %v3050
  %v3067 = vpack.c.b16 %v3053, %v3052
  %v3068 = vpack.c.b16 %v3055, %v3054
  %v3069 = vpack.c.b16 %v3057, %v3056
  %v3083 = vsel %vm2089, %v2981, 0
  %3085 = vmatpush.bf16.msra.mxu0 %v3065
  %3086 = vmatpush.bf16.msra.mxu0 %v3064
  %3087 = vmatpush.bf16.msra.mxu0 %v3063
  %3088 = vmatpush.bf16.msra.mxu0 %v3062
  %3089 = vmatpush.bf16.msra.mxu0 %v3061
  %3090 = vmatpush.bf16.msra.mxu0 %v3060
  %3091 = vmatpush.bf16.msra.mxu0 %v3059
  %3092 = vmatpush.bf16.msra.mxu0 %v3058
  %3093 = vmatmul.bf16.gmra.mxu0 %v2980
  %v3094 = vpop.f32.mrf.mxu0
  %v3095 = vadd.f32 %v3008, %v3094
  %v3096 = vpop.f32.mrf.mxu0
  %3097 = vdwg.mxu0
  %3098 = vmatpush.bf16.msra.mxu0 0
  %3099 = vmatpush.bf16.msra.mxu0 0
  %3100 = vmatpush.bf16.msra.mxu0 0
  %3101 = vmatpush.bf16.msra.mxu0 0
  %3102 = vmatpush.bf16.msra.mxu0 %v3069
  %3103 = vmatpush.bf16.msra.mxu0 %v3068
  %3104 = vmatpush.bf16.msra.mxu0 %v3067
  %3105 = vmatpush.bf16.msra.mxu0 %v3066
  %3106 = vmatmul.bf16.gmra.mxu0 %v3083
  %v3107 = vpop.f32.mrf.mxu0
  %v3108 = vadd.f32 %v3095, %v3107
  %v3109 = vpop.f32.mrf.mxu0
  %3110 = vdwg.mxu0
  %vm3111 = vcmask 80896
  %3112 = vst.msk [vmem:[%s7] sm:$0xff] %vm3111, %v3108
  %v3113 = vsel %vm3111, %v3108, -inf
  %3114 = vmax.xlane.f32.xlu0 %v3113
  %v3115 = vpop.xlane.xlu0 %3114
  %v3116 = vsub.f32 %v3108, %v3115
  %v3117 = vmul.f32 %v3116, 1.442695
  %v3118 = vpow.pop %v3117
  %v3119 = vsel %vm3111, %v3118, 0.0
  %3120 = vadd.xlane.f32.xlu0 %v3119
  %v3121 = vpop.xlane.xlu0 %3120
  %v3122 = vrcp.pop %v3121
  %v3123 = vmul.f32 %v3121, %v3122
  %v3124 = vsub.f32 1.0, %v3123
  %v3125 = vmul.f32 %v3122, %v3124
  %v3126 = vadd.f32 %v3122, %v3125
  %vm3127 = vweird.f32 %v3121
  %vm3128 = vweird.f32 %v3122
  %vm3129 = vmor %vm3127, %vm3128
  %v3130 = vsel %vm3129, %v3122, %v3126
  %v3131 = vand.u32 2147483647, %v3121
  %vm3132 = vcmp.eq.f32.partialorder %v3131, 8.507059e+37
  %v3133 = vand.u32 %v3121, 2147483648
  %v3134 = vor.u32 1.1754944e-38, %v3133
  %v3135 = vsel %vm3132, %v3134, %v3130
  %v3136 = vmul.f32 %v3118, %v3135
  %3137 = vst.msk [vmem:[%s8] sm:$0xff] %vm3111, %v3136
  // Predicated region
  $region30: #{lenet_forward.5} parent=0 // pred_check
    _
  $region31: #{lenet_forward.5} parent=0 // pred_check_branch
    %3139 = sbr.rel (0) target = $region33
  $region32: #{lenet_forward.5} parent=0 // pred_region
    _
  $region33: #{lenet_forward.5} parent=0 // pred_fallthru
    _
  // Predicated region
  $region34: #{lenet_forward.5} parent=0 // pred_check
    _
  $region35: #{lenet_forward.5} parent=0 // pred_check_branch
    %3141 = sbr.rel (0) target = $region37
  $region36: #{lenet_forward.5} parent=0 // pred_region
    _
  $region37: #{lenet_forward.5} parent=0 // pred_fallthru
    _
  // Predicated region
  $region38: #{lenet_forward.5} parent=0 // pred_check
    _
  $region39: #{lenet_forward.5} parent=0 // pred_check_branch
    %3143 = sbr.rel (0) target = $region41
  $region40: #{lenet_forward.5} parent=0 // pred_region
    _
  $region41: #{lenet_forward.5} parent=0 // pred_fallthru
    _
  // Predicated region
  $region42: #{lenet_forward.5} parent=0 // pred_check
    _
  $region43: #{lenet_forward.5} parent=0 // pred_check_branch
    %3145 = sbr.rel (0) target = $region45
  $region44: #{lenet_forward.5} parent=0 // pred_region
    _
  $region45: #{lenet_forward.5} parent=0 // pred_fallthru
    _

</llo_original>
